<compile_context>
chip_gen: v7x
topology: tpu7x:2x2x1
jax: 0.10.0
libtpu: 0.0.40
codegen_flags: <defaults>
</compile_context>

<pallas_src>
import numpy as np
import jax
import jax.numpy as jnp
from jax.experimental import pallas as pl
from jax.experimental.pallas import tpu as pltpu


PACK = 2  # images packed side-by-side along the lane axis per conv grid step


def _round_up(n, m):
    return ((n + m - 1) // m) * m


# ----------------------------------------------------------------------------
# Host-side constant-matrix construction (numpy, runs once outside jit)
# ----------------------------------------------------------------------------
def _shift_band(n, d):
    """[n, n] 0/1 matrix with B[i, i+d] = 1 (in-bounds only)."""
    B = np.zeros((n, n), np.float32)
    i = np.arange(n)
    v = (i + d >= 0) & (i + d < n)
    B[i[v], i[v] + d] = 1.0
    return B


def _conv_row_mats(w, H):
    """M_kw [Cout*H, Cin*H] with M_kw[co*H+i, ci*H+(i+kh-1)] = w[co,ci,kh,kw]."""
    w = np.asarray(w, np.float32)
    Cout, Cin = w.shape[:2]
    bands = [_shift_band(H, kh - 1) for kh in range(3)]
    mats = []
    for kw in range(3):
        M = np.zeros((Cout * H, Cin * H), np.float32)
        for co in range(Cout):
            for ci in range(Cin):
                blk = sum(w[co, ci, kh, kw] * bands[kh] for kh in range(3))
                M[co * H:(co + 1) * H, ci * H:(ci + 1) * H] = blk
        mats.append(M)
    return mats


def _col_shift(W, kw, pack):
    """Block-diag (over packed images) column-shift matrix: (X@C)[.,j]=X[.,j+kw-1]."""
    C = _shift_band(W, kw - 1).T            # C[c, j] = 1 iff c == j + kw - 1
    return np.kron(np.eye(pack, dtype=np.float32), C)


def _row_pool_sel(C, H, parity):
    """[C*H/2, C*H] 0/1 selector picking row co*H + 2*oi + parity."""
    S = np.zeros((C * (H // 2), C * H), np.float32)
    oi = np.arange(H // 2)
    for c in range(C):
        S[c * (H // 2) + oi, c * H + 2 * oi + parity] = 1.0
    return S


def _col_pool_sel(W, parity, pack):
    """Block-diag [pack*W, pack*W/2] selector picking column 2*oj + parity."""
    S = np.zeros((W, W // 2), np.float32)
    oj = np.arange(W // 2)
    S[2 * oj + parity, oj] = 1.0
    return np.kron(np.eye(pack, dtype=np.float32), S)


_CONV_CONST_NAMES = (
    "m1_0", "m1_1", "m1_2", "c1_0", "c1_2", "b1s",
    "re1", "ro1", "pe1", "po1",
    "m2_0", "m2_1", "m2_2", "c2_0", "c2_2", "b2s",
    "re2", "ro2", "pe2", "po2",
)


# ----------------------------------------------------------------------------
# Kernel A: fused conv1 + ReLU + pool + conv2 + ReLU + pool (MXU matmuls only)
# ----------------------------------------------------------------------------
def _conv_stack_kernel(x_ref,
                       m1_0, m1_1, m1_2, c1_0, c1_2, b1s,
                       re1, ro1, pe1, po1,
                       m2_0, m2_1, m2_2, c2_0, c2_2, b2s,
                       re2, ro2, pe2, po2,
                       out_ref):
    f32 = jnp.float32

    def dot(a, b):
        return jnp.dot(a, b, preferred_element_type=f32)

    x = x_ref[0, :, :]                                        # [3*64, PACK*64]

    # conv1 (3 -> 6), padding 1: one matmul per horizontal tap (kw=1 is identity)
    y = dot(m1_1[...], x)
    y = y + dot(m1_0[...], dot(x, c1_0[...]))
    y = y + dot(m1_2[...], dot(x, c1_2[...]))
    y = jnp.maximum(y + b1s[...], 0.0)                        # [6*64, PACK*64]

    # 2x2 / stride-2 max pool
    r = jnp.maximum(dot(re1[...], y), dot(ro1[...], y))       # [6*32, PACK*64]
    p1 = jnp.maximum(dot(r, pe1[...]), dot(r, po1[...]))      # [6*32, PACK*32]

    # conv2 (6 -> 12), padding 1
    y2 = dot(m2_1[...], p1)
    y2 = y2 + dot(m2_0[...], dot(p1, c2_0[...]))
    y2 = y2 + dot(m2_2[...], dot(p1, c2_2[...]))
    y2 = jnp.maximum(y2 + b2s[...], 0.0)                      # [12*32, PACK*32]

    # 2x2 / stride-2 max pool
    r2 = jnp.maximum(dot(re2[...], y2), dot(ro2[...], y2))    # [12*16, PACK*32]
    p2 = jnp.maximum(dot(r2, pe2[...]), dot(r2, po2[...]))    # [12*16, PACK*16]

    out_ref[0, :, :] = p2


def conv_stack(x, kp):
    """x: [N, 3, 64, 64] -> flattened pooled features [N, 3072] (NCHW order)."""
    N = x.shape[0]
    assert x.shape[1:] == (3, 64, 64), x.shape
    Np = _round_up(N, PACK)
    x = x.astype(jnp.float32)
    if Np != N:
        x = jnp.pad(x, ((0, Np - N), (0, 0), (0, 0), (0, 0)))
    Nb = Np // PACK

    # Pack PACK images side-by-side along the lane axis (free XLA reshuffle):
    # rows = ci*64 + i, cols = img*64 + j.
    xp = x.reshape(Nb, PACK, 3, 64, 64).transpose(0, 2, 3, 1, 4)
    xp = xp.reshape(Nb, 3 * 64, PACK * 64)

    consts = [kp[name] for name in _CONV_CONST_NAMES]
    const_specs = [pl.BlockSpec(c.shape, lambda i: (0, 0)) for c in consts]

    out = pl.pallas_call(
        _conv_stack_kernel,
        out_shape=jax.ShapeDtypeStruct((Nb, 12 * 16, PACK * 16), jnp.float32),
        grid=(Nb,),
        in_specs=[pl.BlockSpec((1, 3 * 64, PACK * 64), lambda i: (i, 0, 0))]
        + const_specs,
        out_specs=pl.BlockSpec((1, 12 * 16, PACK * 16), lambda i: (i, 0, 0)),
        compiler_params=pltpu.CompilerParams(dimension_semantics=("parallel",)),
    )(xp, *consts)

    # Unpack to [Np, 3072] in PyTorch view(-1, 16*16*12) order, trim batch pad.
    feat = out.reshape(Nb, 12, 16, PACK, 16).transpose(0, 3, 1, 2, 4)
    feat = feat.reshape(Np, 12 * 16 * 16)
    return feat[:N]


# ----------------------------------------------------------------------------
# Kernel B: fused fc1 + ReLU + fc2 + ReLU + fc3 (weights resident in VMEM)
# ----------------------------------------------------------------------------
def _fc_stack_kernel(x_ref, w1_ref, b1_ref, w2_ref, b2_ref, w3_ref, b3_ref, o_ref):
    h = jnp.dot(x_ref[...], w1_ref[...], preferred_element_type=jnp.float32)
    h = jnp.maximum(h + b1_ref[...], 0.0)
    h = jnp.dot(h, w2_ref[...], preferred_element_type=jnp.float32)
    h = jnp.maximum(h + b2_ref[...], 0.0)
    o = jnp.dot(h, w3_ref[...], preferred_element_type=jnp.float32) + b3_ref[...]
    o_ref[...] = o.astype(o_ref.dtype)


def fc_stack(flat, kp):
    """flat: [N, 3072] f32 -> logits [N, 5] f32."""
    N, K = flat.shape
    n1 = kp["fc1_w"].shape[1]
    n2 = kp["fc2_w"].shape[1]
    n3 = kp["fc3_w"].shape[1]

    TB = min(128, _round_up(N, 8))          # batch block (sublane-aligned)
    Nf = _round_up(N, TB)
    if Nf != N:
        flat = jnp.pad(flat, ((0, Nf - N), (0, 0)))

    out = pl.pallas_call(
        _fc_stack_kernel,
        out_shape=jax.ShapeDtypeStruct((Nf, n3), jnp.float32),
        grid=(Nf // TB,),
        in_specs=[
            pl.BlockSpec((TB, K), lambda i: (i, 0)),
            pl.BlockSpec((K, n1), lambda i: (0, 0)),    # resident weights
            pl.BlockSpec((1, n1), lambda i: (0, 0)),
            pl.BlockSpec((n1, n2), lambda i: (0, 0)),
            pl.BlockSpec((1, n2), lambda i: (0, 0)),
            pl.BlockSpec((n2, n3), lambda i: (0, 0)),
            pl.BlockSpec((1, n3), lambda i: (0, 0)),
        ],
        out_specs=pl.BlockSpec((TB, n3), lambda i: (i, 0)),
        compiler_params=pltpu.CompilerParams(dimension_semantics=("parallel",)),
    )(flat, kp["fc1_w"], kp["fc1_b"], kp["fc2_w"], kp["fc2_b"],
      kp["fc3_w"], kp["fc3_b"])
    return out[:N]


# ----------------------------------------------------------------------------
# Parameters (PyTorch-style layouts) and one-time kernel-friendly preparation
# ----------------------------------------------------------------------------
def init_params(key):
    ks = jax.random.split(key, 10)

    def norm(k, shape, fan_in):
        return jax.random.normal(k, shape, jnp.float32) / jnp.sqrt(fan_in)

    return {
        "w1": norm(ks[0], (6, 3, 3, 3), 27),          # OIHW (PyTorch conv layout)
        "b1": norm(ks[1], (6,), 27),
        "w2": norm(ks[2], (12, 6, 3, 3), 54),
        "b2": norm(ks[3], (12,), 54),
        "fc1_w": norm(ks[4], (12 * 16 * 16, 256), 12 * 16 * 16),  # [in, out]
        "fc1_b": norm(ks[5], (256,), 12 * 16 * 16),
        "fc2_w": norm(ks[6], (256, 64), 256),
        "fc2_b": norm(ks[7], (64,), 256),
        "fc3_w": norm(ks[8], (64, 5), 64),
        "fc3_b": norm(ks[9], (5,), 64),
    }


def prepare_params(p):
    """One-time host-side repack of conv weights into MXU-friendly banded
    matrices + pool/shift selectors; FC params kept f32 (exact)."""
    H1, H2 = 64, 32
    w1 = np.asarray(p["w1"], np.float32)
    b1 = np.asarray(p["b1"], np.float32)
    w2 = np.asarray(p["w2"], np.float32)
    b2 = np.asarray(p["b2"], np.float32)
    m1 = _conv_row_mats(w1, H1)
    m2 = _conv_row_mats(w2, H2)

    kp = {
        "m1_0": m1[0], "m1_1": m1[1], "m1_2": m1[2],
        "c1_0": _col_shift(H1, 0, PACK), "c1_2": _col_shift(H1, 2, PACK),
        "b1s": np.repeat(b1, H1)[:, None].astype(np.float32),
        "re1": _row_pool_sel(6, H1, 0), "ro1": _row_pool_sel(6, H1, 1),
        "pe1": _col_pool_sel(H1, 0, PACK), "po1": _col_pool_sel(H1, 1, PACK),
        "m2_0": m2[0], "m2_1": m2[1], "m2_2": m2[2],
        "c2_0": _col_shift(H2, 0, PACK), "c2_2": _col_shift(H2, 2, PACK),
        "b2s": np.repeat(b2, H2)[:, None].astype(np.float32),
        "re2": _row_pool_sel(12, H2, 0), "ro2": _row_pool_sel(12, H2, 1),
        "pe2": _col_pool_sel(H2, 0, PACK), "po2": _col_pool_sel(H2, 1, PACK),
        "fc1_w": np.asarray(p["fc1_w"], np.float32),
        "fc1_b": np.asarray(p["fc1_b"], np.float32).reshape(1, -1),
        "fc2_w": np.asarray(p["fc2_w"], np.float32),
        "fc2_b": np.asarray(p["fc2_b"], np.float32).reshape(1, -1),
        "fc3_w": np.asarray(p["fc3_w"], np.float32),
        "fc3_b": np.asarray(p["fc3_b"], np.float32).reshape(1, -1),
    }
    return {k: jnp.asarray(v) for k, v in kp.items()}


def ecnn_forward(x_nchw, kparams):
    """x_nchw: [N, 3, 64, 64] f32 -> logits [N, 5] f32 (Pallas path)."""
    flat = conv_stack(x_nchw, kparams)     # [N, 3072] lane-dense handoff
    return fc_stack(flat, kparams)


# ----------------------------------------------------------------------------
# Pure-JAX f32 reference (PyTorch semantics) for the correctness check
# ----------------------------------------------------------------------------
def ecnn_reference(x, p):
    dn = ("NCHW", "OIHW", "NCHW")

    def conv_relu_pool(h, w, b):
        y = jax.lax.conv_general_dilated(
            h, w, window_strides=(1, 1), padding=((1, 1), (1, 1)),
            dimension_numbers=dn)
        y = jnp.maximum(y + b[None, :, None, None], 0.0)
        n, c, hh, ww = y.shape
        return y.reshape(n, c, hh // 2, 2, ww // 2, 2).max(axis=(3, 5))

    p1 = conv_relu_pool(x, p["w1"], p["b1"])
    p2 = conv_relu_pool(p1, p["w2"], p["b2"])
    flat = p2.reshape(x.shape[0], 12 * 16 * 16)
    h1 = jnp.maximum(flat @ p["fc1_w"] + p["fc1_b"], 0.0)
    h2 = jnp.maximum(h1 @ p["fc2_w"] + p["fc2_b"], 0.0)
    return h2 @ p["fc3_w"] + p["fc3_b"]


# ----------------------------------------------------------------------------
if __name__ == "__main__":
    key = jax.random.PRNGKey(0)
    kx, kp = jax.random.split(key)

    # Spatial must be 64x64 so two /2 pools give 16*16*12 = fc1 input size.
    x = jax.random.normal(kx, (2, 3, 64, 64), jnp.float32)
    params = init_params(kp)
    kparams = prepare_params(params)

    out = jax.jit(ecnn_forward)(x, kparams)
    out = jax.block_until_ready(out)
    assert out.shape == (2, 5), out.shape

    ref = jax.jit(ecnn_reference)(x, params)
    ref = jax.block_until_ready(ref)
    max_err = float(jnp.max(jnp.abs(out - ref)))
    if not jnp.allclose(out, ref, atol=3e-2, rtol=3e-2):
        raise AssertionError(f"Pallas output does not match reference (max err {max_err})")

    print("KERNEL_OK")
</pallas_src>

<mosaic_0001>
module attributes {stable_mosaic.version = 11 : i64} {
  func.func @_conv_stack_kernel(%arg0: i32, %arg1: memref<1x192x128xf32, #tpu.memory_space<vmem>>, %arg2: memref<384x192xf32, #tpu.memory_space<vmem>>, %arg3: memref<384x192xf32, #tpu.memory_space<vmem>>, %arg4: memref<384x192xf32, #tpu.memory_space<vmem>>, %arg5: memref<128x128xf32, #tpu.memory_space<vmem>>, %arg6: memref<128x128xf32, #tpu.memory_space<vmem>>, %arg7: memref<384x1xf32, #tpu.memory_space<vmem>>, %arg8: memref<192x384xf32, #tpu.memory_space<vmem>>, %arg9: memref<192x384xf32, #tpu.memory_space<vmem>>, %arg10: memref<128x64xf32, #tpu.memory_space<vmem>>, %arg11: memref<128x64xf32, #tpu.memory_space<vmem>>, %arg12: memref<384x192xf32, #tpu.memory_space<vmem>>, %arg13: memref<384x192xf32, #tpu.memory_space<vmem>>, %arg14: memref<384x192xf32, #tpu.memory_space<vmem>>, %arg15: memref<64x64xf32, #tpu.memory_space<vmem>>, %arg16: memref<64x64xf32, #tpu.memory_space<vmem>>, %arg17: memref<384x1xf32, #tpu.memory_space<vmem>>, %arg18: memref<192x384xf32, #tpu.memory_space<vmem>>, %arg19: memref<192x384xf32, #tpu.memory_space<vmem>>, %arg20: memref<64x32xf32, #tpu.memory_space<vmem>>, %arg21: memref<64x32xf32, #tpu.memory_space<vmem>>, %arg22: memref<1x192x32xf32, #tpu.memory_space<vmem>>) attributes {dimension_semantics = [#tpu.dimension_semantics<parallel>], iteration_bounds = array<i64: 1>, scalar_prefetch = 0 : i64, scratch_operands = 0 : i64, tpu.core_type = #tpu.core_type<tc>, window_params = [{transform_indices = @transform_0, window_bounds = array<i64: 1, 192, 128>}, {pipeline_mode = #tpu.pipeline_mode<synchronous>, transform_indices = @transform_1, window_bounds = array<i64: 384, 192>}, {pipeline_mode = #tpu.pipeline_mode<synchronous>, transform_indices = @transform_2, window_bounds = array<i64: 384, 192>}, {pipeline_mode = #tpu.pipeline_mode<synchronous>, transform_indices = @transform_3, window_bounds = array<i64: 384, 192>}, {pipeline_mode = #tpu.pipeline_mode<synchronous>, transform_indices = @transform_4, window_bounds = array<i64: 128, 128>}, {pipeline_mode = #tpu.pipeline_mode<synchronous>, transform_indices = @transform_5, window_bounds = array<i64: 128, 128>}, {pipeline_mode = #tpu.pipeline_mode<synchronous>, transform_indices = @transform_6, window_bounds = array<i64: 384, 1>}, {pipeline_mode = #tpu.pipeline_mode<synchronous>, transform_indices = @transform_7, window_bounds = array<i64: 192, 384>}, {pipeline_mode = #tpu.pipeline_mode<synchronous>, transform_indices = @transform_8, window_bounds = array<i64: 192, 384>}, {pipeline_mode = #tpu.pipeline_mode<synchronous>, transform_indices = @transform_9, window_bounds = array<i64: 128, 64>}, {pipeline_mode = #tpu.pipeline_mode<synchronous>, transform_indices = @transform_10, window_bounds = array<i64: 128, 64>}, {pipeline_mode = #tpu.pipeline_mode<synchronous>, transform_indices = @transform_11, window_bounds = array<i64: 384, 192>}, {pipeline_mode = #tpu.pipeline_mode<synchronous>, transform_indices = @transform_12, window_bounds = array<i64: 384, 192>}, {pipeline_mode = #tpu.pipeline_mode<synchronous>, transform_indices = @transform_13, window_bounds = array<i64: 384, 192>}, {pipeline_mode = #tpu.pipeline_mode<synchronous>, transform_indices = @transform_14, window_bounds = array<i64: 64, 64>}, {pipeline_mode = #tpu.pipeline_mode<synchronous>, transform_indices = @transform_15, window_bounds = array<i64: 64, 64>}, {pipeline_mode = #tpu.pipeline_mode<synchronous>, transform_indices = @transform_16, window_bounds = array<i64: 384, 1>}, {pipeline_mode = #tpu.pipeline_mode<synchronous>, transform_indices = @transform_17, window_bounds = array<i64: 192, 384>}, {pipeline_mode = #tpu.pipeline_mode<synchronous>, transform_indices = @transform_18, window_bounds = array<i64: 192, 384>}, {pipeline_mode = #tpu.pipeline_mode<synchronous>, transform_indices = @transform_19, window_bounds = array<i64: 64, 32>}, {pipeline_mode = #tpu.pipeline_mode<synchronous>, transform_indices = @transform_20, window_bounds = array<i64: 64, 32>}, {transform_indices = @transform_21, window_bounds = array<i64: 1, 192, 32>}]} {
    %c0 = arith.constant 0 : index
    %c0_0 = arith.constant 0 : index
    %c0_1 = arith.constant 0 : index
    %0 = vector.load %arg1[%c0, %c0_0, %c0_1] : memref<1x192x128xf32, #tpu.memory_space<vmem>>, vector<1x192x128xf32>
    %1 = vector.shape_cast %0 : vector<1x192x128xf32> to vector<192x128xf32>
    %c0_2 = arith.constant 0 : index
    %c0_3 = arith.constant 0 : index
    %2 = vector.load %arg3[%c0_2, %c0_3] : memref<384x192xf32, #tpu.memory_space<vmem>>, vector<384x192xf32>
    %cst = arith.constant dense<0.000000e+00> : vector<384x128xf32>
    %3 = tpu.matmul %2, %1, %cst {dimension_numbers = #tpu.dot_dimension_numbers<[1], [0], [0], [1], [0, 0, 1, 1], [], []>} : vector<384x192xf32>, vector<192x128xf32>, vector<384x128xf32> -> vector<384x128xf32>
    %c0_4 = arith.constant 0 : index
    %c0_5 = arith.constant 0 : index
    %4 = vector.load %arg2[%c0_4, %c0_5] : memref<384x192xf32, #tpu.memory_space<vmem>>, vector<384x192xf32>
    %c0_6 = arith.constant 0 : index
    %c0_7 = arith.constant 0 : index
    %5 = vector.load %arg5[%c0_6, %c0_7] : memref<128x128xf32, #tpu.memory_space<vmem>>, vector<128x128xf32>
    %cst_8 = arith.constant dense<0.000000e+00> : vector<192x128xf32>
    %6 = tpu.matmul %1, %5, %cst_8 {dimension_numbers = #tpu.dot_dimension_numbers<[1], [0], [0], [1], [0, 0, 1, 1], [], []>} : vector<192x128xf32>, vector<128x128xf32>, vector<192x128xf32> -> vector<192x128xf32>
    %cst_9 = arith.constant dense<0.000000e+00> : vector<384x128xf32>
    %7 = tpu.matmul %4, %6, %cst_9 {dimension_numbers = #tpu.dot_dimension_numbers<[1], [0], [0], [1], [0, 0, 1, 1], [], []>} : vector<384x192xf32>, vector<192x128xf32>, vector<384x128xf32> -> vector<384x128xf32>
    %8 = arith.addf %3, %7 : vector<384x128xf32>
    %c0_10 = arith.constant 0 : index
    %c0_11 = arith.constant 0 : index
    %9 = vector.load %arg4[%c0_10, %c0_11] : memref<384x192xf32, #tpu.memory_space<vmem>>, vector<384x192xf32>
    %c0_12 = arith.constant 0 : index
    %c0_13 = arith.constant 0 : index
    %10 = vector.load %arg6[%c0_12, %c0_13] : memref<128x128xf32, #tpu.memory_space<vmem>>, vector<128x128xf32>
    %cst_14 = arith.constant dense<0.000000e+00> : vector<192x128xf32>
    %11 = tpu.matmul %1, %10, %cst_14 {dimension_numbers = #tpu.dot_dimension_numbers<[1], [0], [0], [1], [0, 0, 1, 1], [], []>} : vector<192x128xf32>, vector<128x128xf32>, vector<192x128xf32> -> vector<192x128xf32>
    %cst_15 = arith.constant dense<0.000000e+00> : vector<384x128xf32>
    %12 = tpu.matmul %9, %11, %cst_15 {dimension_numbers = #tpu.dot_dimension_numbers<[1], [0], [0], [1], [0, 0, 1, 1], [], []>} : vector<384x192xf32>, vector<192x128xf32>, vector<384x128xf32> -> vector<384x128xf32>
    %13 = arith.addf %8, %12 : vector<384x128xf32>
    %c0_16 = arith.constant 0 : index
    %c0_17 = arith.constant 0 : index
    %14 = vector.load %arg7[%c0_16, %c0_17] : memref<384x1xf32, #tpu.memory_space<vmem>>, vector<384x1xf32>
    %15 = vector.broadcast %14 : vector<384x1xf32> to vector<384x128xf32>
    %16 = arith.addf %13, %15 : vector<384x128xf32>
    %cst_18 = arith.constant 0.000000e+00 : f32
    %17 = vector.broadcast %cst_18 : f32 to vector<384x128xf32>
    %18 = arith.maximumf %16, %17 : vector<384x128xf32>
    %c0_19 = arith.constant 0 : index
    %c0_20 = arith.constant 0 : index
    %19 = vector.load %arg8[%c0_19, %c0_20] : memref<192x384xf32, #tpu.memory_space<vmem>>, vector<192x384xf32>
    %cst_21 = arith.constant dense<0.000000e+00> : vector<192x128xf32>
    %20 = tpu.matmul %19, %18, %cst_21 {dimension_numbers = #tpu.dot_dimension_numbers<[1], [0], [0], [1], [0, 0, 1, 1], [], []>} : vector<192x384xf32>, vector<384x128xf32>, vector<192x128xf32> -> vector<192x128xf32>
    %c0_22 = arith.constant 0 : index
    %c0_23 = arith.constant 0 : index
    %21 = vector.load %arg9[%c0_22, %c0_23] : memref<192x384xf32, #tpu.memory_space<vmem>>, vector<192x384xf32>
    %cst_24 = arith.constant dense<0.000000e+00> : vector<192x128xf32>
    %22 = tpu.matmul %21, %18, %cst_24 {dimension_numbers = #tpu.dot_dimension_numbers<[1], [0], [0], [1], [0, 0, 1, 1], [], []>} : vector<192x384xf32>, vector<384x128xf32>, vector<192x128xf32> -> vector<192x128xf32>
    %23 = arith.maximumf %20, %22 : vector<192x128xf32>
    %c0_25 = arith.constant 0 : index
    %c0_26 = arith.constant 0 : index
    %24 = vector.load %arg10[%c0_25, %c0_26] : memref<128x64xf32, #tpu.memory_space<vmem>>, vector<128x64xf32>
    %cst_27 = arith.constant dense<0.000000e+00> : vector<192x64xf32>
    %25 = tpu.matmul %23, %24, %cst_27 {dimension_numbers = #tpu.dot_dimension_numbers<[1], [0], [0], [1], [0, 0, 1, 1], [], []>} : vector<192x128xf32>, vector<128x64xf32>, vector<192x64xf32> -> vector<192x64xf32>
    %c0_28 = arith.constant 0 : index
    %c0_29 = arith.constant 0 : index
    %26 = vector.load %arg11[%c0_28, %c0_29] : memref<128x64xf32, #tpu.memory_space<vmem>>, vector<128x64xf32>
    %cst_30 = arith.constant dense<0.000000e+00> : vector<192x64xf32>
    %27 = tpu.matmul %23, %26, %cst_30 {dimension_numbers = #tpu.dot_dimension_numbers<[1], [0], [0], [1], [0, 0, 1, 1], [], []>} : vector<192x128xf32>, vector<128x64xf32>, vector<192x64xf32> -> vector<192x64xf32>
    %28 = arith.maximumf %25, %27 : vector<192x64xf32>
    %c0_31 = arith.constant 0 : index
    %c0_32 = arith.constant 0 : index
    %29 = vector.load %arg13[%c0_31, %c0_32] : memref<384x192xf32, #tpu.memory_space<vmem>>, vector<384x192xf32>
    %cst_33 = arith.constant dense<0.000000e+00> : vector<384x64xf32>
    %30 = tpu.matmul %29, %28, %cst_33 {dimension_numbers = #tpu.dot_dimension_numbers<[1], [0], [0], [1], [0, 0, 1, 1], [], []>} : vector<384x192xf32>, vector<192x64xf32>, vector<384x64xf32> -> vector<384x64xf32>
    %c0_34 = arith.constant 0 : index
    %c0_35 = arith.constant 0 : index
    %31 = vector.load %arg12[%c0_34, %c0_35] : memref<384x192xf32, #tpu.memory_space<vmem>>, vector<384x192xf32>
    %c0_36 = arith.constant 0 : index
    %c0_37 = arith.constant 0 : index
    %32 = vector.load %arg15[%c0_36, %c0_37] : memref<64x64xf32, #tpu.memory_space<vmem>>, vector<64x64xf32>
    %cst_38 = arith.constant dense<0.000000e+00> : vector<192x64xf32>
    %33 = tpu.matmul %28, %32, %cst_38 {dimension_numbers = #tpu.dot_dimension_numbers<[1], [0], [0], [1], [0, 0, 1, 1], [], []>} : vector<192x64xf32>, vector<64x64xf32>, vector<192x64xf32> -> vector<192x64xf32>
    %cst_39 = arith.constant dense<0.000000e+00> : vector<384x64xf32>
    %34 = tpu.matmul %31, %33, %cst_39 {dimension_numbers = #tpu.dot_dimension_numbers<[1], [0], [0], [1], [0, 0, 1, 1], [], []>} : vector<384x192xf32>, vector<192x64xf32>, vector<384x64xf32> -> vector<384x64xf32>
    %35 = arith.addf %30, %34 : vector<384x64xf32>
    %c0_40 = arith.constant 0 : index
    %c0_41 = arith.constant 0 : index
    %36 = vector.load %arg14[%c0_40, %c0_41] : memref<384x192xf32, #tpu.memory_space<vmem>>, vector<384x192xf32>
    %c0_42 = arith.constant 0 : index
    %c0_43 = arith.constant 0 : index
    %37 = vector.load %arg16[%c0_42, %c0_43] : memref<64x64xf32, #tpu.memory_space<vmem>>, vector<64x64xf32>
    %cst_44 = arith.constant dense<0.000000e+00> : vector<192x64xf32>
    %38 = tpu.matmul %28, %37, %cst_44 {dimension_numbers = #tpu.dot_dimension_numbers<[1], [0], [0], [1], [0, 0, 1, 1], [], []>} : vector<192x64xf32>, vector<64x64xf32>, vector<192x64xf32> -> vector<192x64xf32>
    %cst_45 = arith.constant dense<0.000000e+00> : vector<384x64xf32>
    %39 = tpu.matmul %36, %38, %cst_45 {dimension_numbers = #tpu.dot_dimension_numbers<[1], [0], [0], [1], [0, 0, 1, 1], [], []>} : vector<384x192xf32>, vector<192x64xf32>, vector<384x64xf32> -> vector<384x64xf32>
    %40 = arith.addf %35, %39 : vector<384x64xf32>
    %c0_46 = arith.constant 0 : index
    %c0_47 = arith.constant 0 : index
    %41 = vector.load %arg17[%c0_46, %c0_47] : memref<384x1xf32, #tpu.memory_space<vmem>>, vector<384x1xf32>
    %42 = vector.broadcast %41 : vector<384x1xf32> to vector<384x64xf32>
    %43 = arith.addf %40, %42 : vector<384x64xf32>
    %cst_48 = arith.constant 0.000000e+00 : f32
    %44 = vector.broadcast %cst_48 : f32 to vector<384x64xf32>
    %45 = arith.maximumf %43, %44 : vector<384x64xf32>
    %c0_49 = arith.constant 0 : index
    %c0_50 = arith.constant 0 : index
    %46 = vector.load %arg18[%c0_49, %c0_50] : memref<192x384xf32, #tpu.memory_space<vmem>>, vector<192x384xf32>
    %cst_51 = arith.constant dense<0.000000e+00> : vector<192x64xf32>
    %47 = tpu.matmul %46, %45, %cst_51 {dimension_numbers = #tpu.dot_dimension_numbers<[1], [0], [0], [1], [0, 0, 1, 1], [], []>} : vector<192x384xf32>, vector<384x64xf32>, vector<192x64xf32> -> vector<192x64xf32>
    %c0_52 = arith.constant 0 : index
    %c0_53 = arith.constant 0 : index
    %48 = vector.load %arg19[%c0_52, %c0_53] : memref<192x384xf32, #tpu.memory_space<vmem>>, vector<192x384xf32>
    %cst_54 = arith.constant dense<0.000000e+00> : vector<192x64xf32>
    %49 = tpu.matmul %48, %45, %cst_54 {dimension_numbers = #tpu.dot_dimension_numbers<[1], [0], [0], [1], [0, 0, 1, 1], [], []>} : vector<192x384xf32>, vector<384x64xf32>, vector<192x64xf32> -> vector<192x64xf32>
    %50 = arith.maximumf %47, %49 : vector<192x64xf32>
    %c0_55 = arith.constant 0 : index
    %c0_56 = arith.constant 0 : index
    %51 = vector.load %arg20[%c0_55, %c0_56] : memref<64x32xf32, #tpu.memory_space<vmem>>, vector<64x32xf32>
    %cst_57 = arith.constant dense<0.000000e+00> : vector<192x32xf32>
    %52 = tpu.matmul %50, %51, %cst_57 {dimension_numbers = #tpu.dot_dimension_numbers<[1], [0], [0], [1], [0, 0, 1, 1], [], []>} : vector<192x64xf32>, vector<64x32xf32>, vector<192x32xf32> -> vector<192x32xf32>
    %c0_58 = arith.constant 0 : index
    %c0_59 = arith.constant 0 : index
    %53 = vector.load %arg21[%c0_58, %c0_59] : memref<64x32xf32, #tpu.memory_space<vmem>>, vector<64x32xf32>
    %cst_60 = arith.constant dense<0.000000e+00> : vector<192x32xf32>
    %54 = tpu.matmul %50, %53, %cst_60 {dimension_numbers = #tpu.dot_dimension_numbers<[1], [0], [0], [1], [0, 0, 1, 1], [], []>} : vector<192x64xf32>, vector<64x32xf32>, vector<192x32xf32> -> vector<192x32xf32>
    %55 = arith.maximumf %52, %54 : vector<192x32xf32>
    %c0_61 = arith.constant 0 : index
    %c0_62 = arith.constant 0 : index
    %c0_63 = arith.constant 0 : index
    %56 = vector.load %arg22[%c0_61, %c0_62, %c0_63] : memref<1x192x32xf32, #tpu.memory_space<vmem>>, vector<1x192x32xf32>
    %57 = vector.shape_cast %56 : vector<1x192x32xf32> to vector<192x32xf32>
    %58 = vector.shape_cast %55 : vector<192x32xf32> to vector<1x192x32xf32>
    tpu.vector_store %arg22[%c0_61, %c0_62, %c0_63], %58 {strides = array<i32>} : memref<1x192x32xf32, #tpu.memory_space<vmem>>, vector<1x192x32xf32>,
    return
  }
  func.func @transform_0(%arg0: i32) -> (i32, i32, i32) {
    %c0_i32 = arith.constant 0 : i32
    %c0_i32_0 = arith.constant 0 : i32
    %c0_i32_1 = arith.constant 0 : i32
    return %arg0, %c0_i32, %c0_i32_0 : i32, i32, i32
  }
  func.func @transform_1(%arg0: i32) -> (i32, i32) {
    %c0_i32 = arith.constant 0 : i32
    %c0_i32_0 = arith.constant 0 : i32
    %c0_i32_1 = arith.constant 0 : i32
    return %c0_i32, %c0_i32_0 : i32, i32
  }
  func.func @transform_2(%arg0: i32) -> (i32, i32) {
    %c0_i32 = arith.constant 0 : i32
    %c0_i32_0 = arith.constant 0 : i32
    %c0_i32_1 = arith.constant 0 : i32
    return %c0_i32, %c0_i32_0 : i32, i32
  }
  func.func @transform_3(%arg0: i32) -> (i32, i32) {
    %c0_i32 = arith.constant 0 : i32
    %c0_i32_0 = arith.constant 0 : i32
    %c0_i32_1 = arith.constant 0 : i32
    return %c0_i32, %c0_i32_0 : i32, i32
  }
  func.func @transform_4(%arg0: i32) -> (i32, i32) {
    %c0_i32 = arith.constant 0 : i32
    %c0_i32_0 = arith.constant 0 : i32
    %c0_i32_1 = arith.constant 0 : i32
    return %c0_i32, %c0_i32_0 : i32, i32
  }
  func.func @transform_5(%arg0: i32) -> (i32, i32) {
    %c0_i32 = arith.constant 0 : i32
    %c0_i32_0 = arith.constant 0 : i32
    %c0_i32_1 = arith.constant 0 : i32
    return %c0_i32, %c0_i32_0 : i32, i32
  }
  func.func @transform_6(%arg0: i32) -> (i32, i32) {
    %c0_i32 = arith.constant 0 : i32
    %c0_i32_0 = arith.constant 0 : i32
    %c0_i32_1 = arith.constant 0 : i32
    return %c0_i32, %c0_i32_0 : i32, i32
  }
  func.func @transform_7(%arg0: i32) -> (i32, i32) {
    %c0_i32 = arith.constant 0 : i32
    %c0_i32_0 = arith.constant 0 : i32
    %c0_i32_1 = arith.constant 0 : i32
    return %c0_i32, %c0_i32_0 : i32, i32
  }
  func.func @transform_8(%arg0: i32) -> (i32, i32) {
    %c0_i32 = arith.constant 0 : i32
    %c0_i32_0 = arith.constant 0 : i32
    %c0_i32_1 = arith.constant 0 : i32
    return %c0_i32, %c0_i32_0 : i32, i32
  }
  func.func @transform_9(%arg0: i32) -> (i32, i32) {
    %c0_i32 = arith.constant 0 : i32
    %c0_i32_0 = arith.constant 0 : i32
    %c0_i32_1 = arith.constant 0 : i32
    return %c0_i32, %c0_i32_0 : i32, i32
  }
  func.func @transform_10(%arg0: i32) -> (i32, i32) {
    %c0_i32 = arith.constant 0 : i32
    %c0_i32_0 = arith.constant 0 : i32
    %c0_i32_1 = arith.constant 0 : i32
    return %c0_i32, %c0_i32_0 : i32, i32
  }
  func.func @transform_11(%arg0: i32) -> (i32, i32) {
    %c0_i32 = arith.constant 0 : i32
    %c0_i32_0 = arith.constant 0 : i32
    %c0_i32_1 = arith.constant 0 : i32
    return %c0_i32, %c0_i32_0 : i32, i32
  }
  func.func @transform_12(%arg0: i32) -> (i32, i32) {
    %c0_i32 = arith.constant 0 : i32
    %c0_i32_0 = arith.constant 0 : i32
    %c0_i32_1 = arith.constant 0 : i32
    return %c0_i32, %c0_i32_0 : i32, i32
  }
  func.func @transform_13(%arg0: i32) -> (i32, i32) {
    %c0_i32 = arith.constant 0 : i32
    %c0_i32_0 = arith.constant 0 : i32
    %c0_i32_1 = arith.constant 0 : i32
    return %c0_i32, %c0_i32_0 : i32, i32
  }
  func.func @transform_14(%arg0: i32) -> (i32, i32) {
    %c0_i32 = arith.constant 0 : i32
    %c0_i32_0 = arith.constant 0 : i32
    %c0_i32_1 = arith.constant 0 : i32
    return %c0_i32, %c0_i32_0 : i32, i32
  }
  func.func @transform_15(%arg0: i32) -> (i32, i32) {
    %c0_i32 = arith.constant 0 : i32
    %c0_i32_0 = arith.constant 0 : i32
    %c0_i32_1 = arith.constant 0 : i32
    return %c0_i32, %c0_i32_0 : i32, i32
  }
  func.func @transform_16(%arg0: i32) -> (i32, i32) {
    %c0_i32 = arith.constant 0 : i32
    %c0_i32_0 = arith.constant 0 : i32
    %c0_i32_1 = arith.constant 0 : i32
    return %c0_i32, %c0_i32_0 : i32, i32
  }
  func.func @transform_17(%arg0: i32) -> (i32, i32) {
    %c0_i32 = arith.constant 0 : i32
    %c0_i32_0 = arith.constant 0 : i32
    %c0_i32_1 = arith.constant 0 : i32
    return %c0_i32, %c0_i32_0 : i32, i32
  }
  func.func @transform_18(%arg0: i32) -> (i32, i32) {
    %c0_i32 = arith.constant 0 : i32
    %c0_i32_0 = arith.constant 0 : i32
    %c0_i32_1 = arith.constant 0 : i32
    return %c0_i32, %c0_i32_0 : i32, i32
  }
  func.func @transform_19(%arg0: i32) -> (i32, i32) {
    %c0_i32 = arith.constant 0 : i32
    %c0_i32_0 = arith.constant 0 : i32
    %c0_i32_1 = arith.constant 0 : i32
    return %c0_i32, %c0_i32_0 : i32, i32
  }
  func.func @transform_20(%arg0: i32) -> (i32, i32) {
    %c0_i32 = arith.constant 0 : i32
    %c0_i32_0 = arith.constant 0 : i32
    %c0_i32_1 = arith.constant 0 : i32
    return %c0_i32, %c0_i32_0 : i32, i32
  }
  func.func @transform_21(%arg0: i32) -> (i32, i32, i32) {
    %c0_i32 = arith.constant 0 : i32
    %c0_i32_0 = arith.constant 0 : i32
    %c0_i32_1 = arith.constant 0 : i32
    return %arg0, %c0_i32, %c0_i32_0 : i32, i32, i32
  }
}

module attributes {stable_mosaic.version = 11 : i64} {
  func.func @_fc_stack_kernel(%arg0: i32, %arg1: memref<8x3072xf32, #tpu.memory_space<vmem>>, %arg2: memref<3072x256xf32, #tpu.memory_space<vmem>>, %arg3: memref<1x256xf32, #tpu.memory_space<vmem>>, %arg4: memref<256x64xf32, #tpu.memory_space<vmem>>, %arg5: memref<1x64xf32, #tpu.memory_space<vmem>>, %arg6: memref<64x5xf32, #tpu.memory_space<vmem>>, %arg7: memref<1x5xf32, #tpu.memory_space<vmem>>, %arg8: memref<8x5xf32, #tpu.memory_space<vmem>>) attributes {dimension_semantics = [#tpu.dimension_semantics<parallel>], iteration_bounds = array<i64: 1>, scalar_prefetch = 0 : i64, scratch_operands = 0 : i64, tpu.core_type = #tpu.core_type<tc>, window_params = [{transform_indices = @transform_0, window_bounds = array<i64: 8, 3072>}, {pipeline_mode = #tpu.pipeline_mode<synchronous>, transform_indices = @transform_1, window_bounds = array<i64: 3072, 256>}, {pipeline_mode = #tpu.pipeline_mode<synchronous>, transform_indices = @transform_2, window_bounds = array<i64: 1, 256>}, {pipeline_mode = #tpu.pipeline_mode<synchronous>, transform_indices = @transform_3, window_bounds = array<i64: 256, 64>}, {pipeline_mode = #tpu.pipeline_mode<synchronous>, transform_indices = @transform_4, window_bounds = array<i64: 1, 64>}, {pipeline_mode = #tpu.pipeline_mode<synchronous>, transform_indices = @transform_5, window_bounds = array<i64: 64, 5>}, {pipeline_mode = #tpu.pipeline_mode<synchronous>, transform_indices = @transform_6, window_bounds = array<i64: 1, 5>}, {transform_indices = @transform_7, window_bounds = array<i64: 8, 5>}]} {
    %c0 = arith.constant 0 : index
    %c0_0 = arith.constant 0 : index
    %0 = vector.load %arg1[%c0, %c0_0] : memref<8x3072xf32, #tpu.memory_space<vmem>>, vector<8x3072xf32>
    %c0_1 = arith.constant 0 : index
    %c0_2 = arith.constant 0 : index
    %1 = vector.load %arg2[%c0_1, %c0_2] : memref<3072x256xf32, #tpu.memory_space<vmem>>, vector<3072x256xf32>
    %cst = arith.constant dense<0.000000e+00> : vector<8x256xf32>
    %2 = tpu.matmul %0, %1, %cst {dimension_numbers = #tpu.dot_dimension_numbers<[1], [0], [0], [1], [0, 0, 1, 1], [], []>} : vector<8x3072xf32>, vector<3072x256xf32>, vector<8x256xf32> -> vector<8x256xf32>
    %c0_3 = arith.constant 0 : index
    %c0_4 = arith.constant 0 : index
    %3 = vector.load %arg3[%c0_3, %c0_4] : memref<1x256xf32, #tpu.memory_space<vmem>>, vector<1x256xf32>
    %4 = vector.broadcast %3 : vector<1x256xf32> to vector<8x256xf32>
    %5 = arith.addf %2, %4 : vector<8x256xf32>
    %cst_5 = arith.constant 0.000000e+00 : f32
    %6 = vector.broadcast %cst_5 : f32 to vector<8x256xf32>
    %7 = arith.maximumf %5, %6 : vector<8x256xf32>
    %c0_6 = arith.constant 0 : index
    %c0_7 = arith.constant 0 : index
    %8 = vector.load %arg4[%c0_6, %c0_7] : memref<256x64xf32, #tpu.memory_space<vmem>>, vector<256x64xf32>
    %cst_8 = arith.constant dense<0.000000e+00> : vector<8x64xf32>
    %9 = tpu.matmul %7, %8, %cst_8 {dimension_numbers = #tpu.dot_dimension_numbers<[1], [0], [0], [1], [0, 0, 1, 1], [], []>} : vector<8x256xf32>, vector<256x64xf32>, vector<8x64xf32> -> vector<8x64xf32>
    %c0_9 = arith.constant 0 : index
    %c0_10 = arith.constant 0 : index
    %10 = vector.load %arg5[%c0_9, %c0_10] : memref<1x64xf32, #tpu.memory_space<vmem>>, vector<1x64xf32>
    %11 = vector.broadcast %10 : vector<1x64xf32> to vector<8x64xf32>
    %12 = arith.addf %9, %11 : vector<8x64xf32>
    %cst_11 = arith.constant 0.000000e+00 : f32
    %13 = vector.broadcast %cst_11 : f32 to vector<8x64xf32>
    %14 = arith.maximumf %12, %13 : vector<8x64xf32>
    %c0_12 = arith.constant 0 : index
    %c0_13 = arith.constant 0 : index
    %15 = vector.load %arg6[%c0_12, %c0_13] : memref<64x5xf32, #tpu.memory_space<vmem>>, vector<64x5xf32>
    %cst_14 = arith.constant dense<0.000000e+00> : vector<8x5xf32>
    %16 = tpu.matmul %14, %15, %cst_14 {dimension_numbers = #tpu.dot_dimension_numbers<[1], [0], [0], [1], [0, 0, 1, 1], [], []>} : vector<8x64xf32>, vector<64x5xf32>, vector<8x5xf32> -> vector<8x5xf32>
    %c0_15 = arith.constant 0 : index
    %c0_16 = arith.constant 0 : index
    %17 = vector.load %arg7[%c0_15, %c0_16] : memref<1x5xf32, #tpu.memory_space<vmem>>, vector<1x5xf32>
    %18 = vector.broadcast %17 : vector<1x5xf32> to vector<8x5xf32>
    %19 = arith.addf %16, %18 : vector<8x5xf32>
    %c0_17 = arith.constant 0 : index
    %c0_18 = arith.constant 0 : index
    %20 = vector.load %arg8[%c0_17, %c0_18] : memref<8x5xf32, #tpu.memory_space<vmem>>, vector<8x5xf32>
    tpu.vector_store %arg8[%c0_17, %c0_18], %19 {strides = array<i32>} : memref<8x5xf32, #tpu.memory_space<vmem>>, vector<8x5xf32>,
    return
  }
  func.func @transform_0(%arg0: i32) -> (i32, i32) {
    %c0_i32 = arith.constant 0 : i32
    %c0_i32_0 = arith.constant 0 : i32
    return %arg0, %c0_i32 : i32, i32
  }
  func.func @transform_1(%arg0: i32) -> (i32, i32) {
    %c0_i32 = arith.constant 0 : i32
    %c0_i32_0 = arith.constant 0 : i32
    %c0_i32_1 = arith.constant 0 : i32
    return %c0_i32, %c0_i32_0 : i32, i32
  }
  func.func @transform_2(%arg0: i32) -> (i32, i32) {
    %c0_i32 = arith.constant 0 : i32
    %c0_i32_0 = arith.constant 0 : i32
    %c0_i32_1 = arith.constant 0 : i32
    return %c0_i32, %c0_i32_0 : i32, i32
  }
  func.func @transform_3(%arg0: i32) -> (i32, i32) {
    %c0_i32 = arith.constant 0 : i32
    %c0_i32_0 = arith.constant 0 : i32
    %c0_i32_1 = arith.constant 0 : i32
    return %c0_i32, %c0_i32_0 : i32, i32
  }
  func.func @transform_4(%arg0: i32) -> (i32, i32) {
    %c0_i32 = arith.constant 0 : i32
    %c0_i32_0 = arith.constant 0 : i32
    %c0_i32_1 = arith.constant 0 : i32
    return %c0_i32, %c0_i32_0 : i32, i32
  }
  func.func @transform_5(%arg0: i32) -> (i32, i32) {
    %c0_i32 = arith.constant 0 : i32
    %c0_i32_0 = arith.constant 0 : i32
    %c0_i32_1 = arith.constant 0 : i32
    return %c0_i32, %c0_i32_0 : i32, i32
  }
  func.func @transform_6(%arg0: i32) -> (i32, i32) {
    %c0_i32 = arith.constant 0 : i32
    %c0_i32_0 = arith.constant 0 : i32
    %c0_i32_1 = arith.constant 0 : i32
    return %c0_i32, %c0_i32_0 : i32, i32
  }
  func.func @transform_7(%arg0: i32) -> (i32, i32) {
    %c0_i32 = arith.constant 0 : i32
    %c0_i32_0 = arith.constant 0 : i32
    return %arg0, %c0_i32 : i32, i32
  }
}

</mosaic_0001>

<llo_original>
// kernel: ecnn_forward.3
$region0: #{ecnn_forward.3}
  #allocation0 [shape = 'u32[]', space=smem, size = 0x4, offset = 0x4, fixed_abs, tag = 'smem constant byte address 0x4 - core index']
  #allocation1 [shape = 'u32[144,128]{1,0:T(1,128)}', space=vmem, size = 0x12000, scoped, tag = 'internal scratch']
  %s0 = inlined_call_operand.vmem [shape: f32[8,3072], index: 0, kind: input, shape index: {}]
  %s1 = inlined_call_operand.vmem [shape: f32[3072,256], index: 1, kind: input, shape index: {}]
  %s2 = inlined_call_operand.vmem [shape: f32[1,256], index: 2, kind: input, shape index: {}]
  %s3 = inlined_call_operand.vmem [shape: f32[256,64], index: 3, kind: input, shape index: {}]
  %s4 = inlined_call_operand.vmem [shape: f32[1,64], index: 4, kind: input, shape index: {}]
  %s5 = inlined_call_operand.vmem [shape: f32[64,5], index: 5, kind: input, shape index: {}]
  %s6 = inlined_call_operand.vmem [shape: f32[1,5], index: 6, kind: input, shape index: {}]
  %s7 = inlined_call_operand.vmem [shape: f32[8,5], index: 7, kind: output, shape index: {}]
  %s8 = sld [smem:[#allocation0]]
  $region38: #{ecnn_forward.3} parent=0
    _
  %s10 = ssub.s32 1, %s8
  %s11 = scalar_select 0, %s10, %s8
  // Predicated region
  $region2: #{ecnn_forward.3} parent=0 // pred_check
    _
  $region3: #{ecnn_forward.3} parent=0 // pred_check_branch
    %13 = sbr.rel (0) target = $region5
  $region4: #{ecnn_forward.3} parent=0 // pred_region
    _
  $region5: #{ecnn_forward.3} parent=0 // pred_fallthru
    _
  // Predicated region
  $region6: #{ecnn_forward.3} parent=0 // pred_check
    _
  $region7: #{ecnn_forward.3} parent=0 // pred_check_branch
    %15 = sbr.rel (0) target = $region9
  $region8: #{ecnn_forward.3} parent=0 // pred_region
    _
  $region9: #{ecnn_forward.3} parent=0 // pred_fallthru
    _
  // Predicated region
  $region10: #{ecnn_forward.3} parent=0 // pred_check
    _
  $region11: #{ecnn_forward.3} parent=0 // pred_check_branch
    %17 = sbr.rel (0) target = $region13
  $region12: #{ecnn_forward.3} parent=0 // pred_region
    _
  $region13: #{ecnn_forward.3} parent=0 // pred_fallthru
    _
  // Predicated region
  $region14: #{ecnn_forward.3} parent=0 // pred_check
    _
  $region15: #{ecnn_forward.3} parent=0 // pred_check_branch
    %19 = sbr.rel (0) target = $region17
  $region16: #{ecnn_forward.3} parent=0 // pred_region
    _
  $region17: #{ecnn_forward.3} parent=0 // pred_fallthru
    _
  // Predicated region
  $region18: #{ecnn_forward.3} parent=0 // pred_check
    _
  $region19: #{ecnn_forward.3} parent=0 // pred_check_branch
    %21 = sbr.rel (0) target = $region21
  $region20: #{ecnn_forward.3} parent=0 // pred_region
    _
  $region21: #{ecnn_forward.3} parent=0 // pred_fallthru
    _
  // Predicated region
  $region22: #{ecnn_forward.3} parent=0 // pred_check
    _
  $region23: #{ecnn_forward.3} parent=0 // pred_check_branch
    %23 = sbr.rel (0) target = $region25
  $region24: #{ecnn_forward.3} parent=0 // pred_region
    _
  $region25: #{ecnn_forward.3} parent=0 // pred_fallthru
    _
  // Predicated region
  $region26: #{ecnn_forward.3} parent=0 // pred_check
    _
  $region27: #{ecnn_forward.3} parent=0 // pred_check_branch
    %25 = sbr.rel (0) target = $region29
  $region28: #{ecnn_forward.3} parent=0 // pred_region
    _
  $region29: #{ecnn_forward.3} parent=0 // pred_fallthru
    _
  %v26 = vld [vmem:[%s0] sm:$0xff]
  %v27 = vld [vmem:[%s0 + $0x8] sm:$0xff]
  %v28 = vld [vmem:[%s0 + $0x10] sm:$0xff]
  %v29 = vld [vmem:[%s0 + $0x18] sm:$0xff]
  %v30 = vld [vmem:[%s0 + $0x20] sm:$0xff]
  %v31 = vld [vmem:[%s0 + $0x28] sm:$0xff]
  %v32 = vld [vmem:[%s0 + $0x30] sm:$0xff]
  %v33 = vld [vmem:[%s0 + $0x38] sm:$0xff]
  %v34 = vld [vmem:[%s0 + $0x40] sm:$0xff]
  %v35 = vld [vmem:[%s0 + $0x48] sm:$0xff]
  %v36 = vld [vmem:[%s0 + $0x50] sm:$0xff]
  %v37 = vld [vmem:[%s0 + $0x58] sm:$0xff]
  %v38 = vld [vmem:[%s0 + $0x60] sm:$0xff]
  %v39 = vld [vmem:[%s0 + $0x68] sm:$0xff]
  %v40 = vld [vmem:[%s0 + $0x70] sm:$0xff]
  %v41 = vld [vmem:[%s0 + $0x78] sm:$0xff]
  %v42 = vld [vmem:[%s0 + $0x80] sm:$0xff]
  %v43 = vld [vmem:[%s0 + $0x88] sm:$0xff]
  %v44 = vld [vmem:[%s0 + $0x90] sm:$0xff]
  %v45 = vld [vmem:[%s0 + $0x98] sm:$0xff]
  %v46 = vld [vmem:[%s0 + $0xa0] sm:$0xff]
  %v47 = vld [vmem:[%s0 + $0xa8] sm:$0xff]
  %v48 = vld [vmem:[%s0 + $0xb0] sm:$0xff]
  %v49 = vld [vmem:[%s0 + $0xb8] sm:$0xff]
  %v50 = vld [vmem:[%s1] sm:$0xff]
  %v51 = vld [vmem:[%s1 + $0x8] sm:$0xff]
  %v52 = vld [vmem:[%s1 + $0x10] sm:$0xff]
  %v53 = vld [vmem:[%s1 + $0x18] sm:$0xff]
  %v54 = vld [vmem:[%s1 + $0x20] sm:$0xff]
  %v55 = vld [vmem:[%s1 + $0x28] sm:$0xff]
  %v56 = vld [vmem:[%s1 + $0x30] sm:$0xff]
  %v57 = vld [vmem:[%s1 + $0x38] sm:$0xff]
  %v58 = vld [vmem:[%s1 + $0x40] sm:$0xff]
  %v59 = vld [vmem:[%s1 + $0x48] sm:$0xff]
  %v60 = vld [vmem:[%s1 + $0x50] sm:$0xff]
  %v61 = vld [vmem:[%s1 + $0x58] sm:$0xff]
  %v62 = vld [vmem:[%s1 + $0x60] sm:$0xff]
  %v63 = vld [vmem:[%s1 + $0x68] sm:$0xff]
  %v64 = vld [vmem:[%s1 + $0x70] sm:$0xff]
  %v65 = vld [vmem:[%s1 + $0x78] sm:$0xff]
  %v66 = vld [vmem:[%s1 + $0x80] sm:$0xff]
  %v67 = vld [vmem:[%s1 + $0x88] sm:$0xff]
  %v68 = vld [vmem:[%s1 + $0x90] sm:$0xff]
  %v69 = vld [vmem:[%s1 + $0x98] sm:$0xff]
  %v70 = vld [vmem:[%s1 + $0xa0] sm:$0xff]
  %v71 = vld [vmem:[%s1 + $0xa8] sm:$0xff]
  %v72 = vld [vmem:[%s1 + $0xb0] sm:$0xff]
  %v73 = vld [vmem:[%s1 + $0xb8] sm:$0xff]
  %v74 = vld [vmem:[%s1 + $0xc0] sm:$0xff]
  %v75 = vld [vmem:[%s1 + $0xc8] sm:$0xff]
  %v76 = vld [vmem:[%s1 + $0xd0] sm:$0xff]
  %v77 = vld [vmem:[%s1 + $0xd8] sm:$0xff]
  %v78 = vld [vmem:[%s1 + $0xe0] sm:$0xff]
  %v79 = vld [vmem:[%s1 + $0xe8] sm:$0xff]
  %v80 = vld [vmem:[%s1 + $0xf0] sm:$0xff]
  %v81 = vld [vmem:[%s1 + $0xf8] sm:$0xff]
  %v82 = vld [vmem:[%s1 + $0x100] sm:$0xff]
  %v83 = vld [vmem:[%s1 + $0x108] sm:$0xff]
  %v84 = vld [vmem:[%s1 + $0x110] sm:$0xff]
  %v85 = vld [vmem:[%s1 + $0x118] sm:$0xff]
  %v86 = vld [vmem:[%s1 + $0x120] sm:$0xff]
  %v87 = vld [vmem:[%s1 + $0x128] sm:$0xff]
  %v88 = vld [vmem:[%s1 + $0x130] sm:$0xff]
  %v89 = vld [vmem:[%s1 + $0x138] sm:$0xff]
  %v90 = vld [vmem:[%s1 + $0x140] sm:$0xff]
  %v91 = vld [vmem:[%s1 + $0x148] sm:$0xff]
  %v92 = vld [vmem:[%s1 + $0x150] sm:$0xff]
  %v93 = vld [vmem:[%s1 + $0x158] sm:$0xff]
  %v94 = vld [vmem:[%s1 + $0x160] sm:$0xff]
  %v95 = vld [vmem:[%s1 + $0x168] sm:$0xff]
  %v96 = vld [vmem:[%s1 + $0x170] sm:$0xff]
  %v97 = vld [vmem:[%s1 + $0x178] sm:$0xff]
  %v98 = vld [vmem:[%s1 + $0x180] sm:$0xff]
  %v99 = vld [vmem:[%s1 + $0x188] sm:$0xff]
  %v100 = vld [vmem:[%s1 + $0x190] sm:$0xff]
  %v101 = vld [vmem:[%s1 + $0x198] sm:$0xff]
  %v102 = vld [vmem:[%s1 + $0x1a0] sm:$0xff]
  %v103 = vld [vmem:[%s1 + $0x1a8] sm:$0xff]
  %v104 = vld [vmem:[%s1 + $0x1b0] sm:$0xff]
  %v105 = vld [vmem:[%s1 + $0x1b8] sm:$0xff]
  %v106 = vld [vmem:[%s1 + $0x1c0] sm:$0xff]
  %v107 = vld [vmem:[%s1 + $0x1c8] sm:$0xff]
  %v108 = vld [vmem:[%s1 + $0x1d0] sm:$0xff]
  %v109 = vld [vmem:[%s1 + $0x1d8] sm:$0xff]
  %v110 = vld [vmem:[%s1 + $0x1e0] sm:$0xff]
  %v111 = vld [vmem:[%s1 + $0x1e8] sm:$0xff]
  %v112 = vld [vmem:[%s1 + $0x1f0] sm:$0xff]
  %v113 = vld [vmem:[%s1 + $0x1f8] sm:$0xff]
  %v114 = vld [vmem:[%s1 + $0x200] sm:$0xff]
  %v115 = vld [vmem:[%s1 + $0x208] sm:$0xff]
  %v116 = vld [vmem:[%s1 + $0x210] sm:$0xff]
  %v117 = vld [vmem:[%s1 + $0x218] sm:$0xff]
  %v118 = vld [vmem:[%s1 + $0x220] sm:$0xff]
  %v119 = vld [vmem:[%s1 + $0x228] sm:$0xff]
  %v120 = vld [vmem:[%s1 + $0x230] sm:$0xff]
  %v121 = vld [vmem:[%s1 + $0x238] sm:$0xff]
  %v122 = vld [vmem:[%s1 + $0x240] sm:$0xff]
  %v123 = vld [vmem:[%s1 + $0x248] sm:$0xff]
  %v124 = vld [vmem:[%s1 + $0x250] sm:$0xff]
  %v125 = vld [vmem:[%s1 + $0x258] sm:$0xff]
  %v126 = vld [vmem:[%s1 + $0x260] sm:$0xff]
  %v127 = vld [vmem:[%s1 + $0x268] sm:$0xff]
  %v128 = vld [vmem:[%s1 + $0x270] sm:$0xff]
  %v129 = vld [vmem:[%s1 + $0x278] sm:$0xff]
  %v130 = vld [vmem:[%s1 + $0x280] sm:$0xff]
  %v131 = vld [vmem:[%s1 + $0x288] sm:$0xff]
  %v132 = vld [vmem:[%s1 + $0x290] sm:$0xff]
  %v133 = vld [vmem:[%s1 + $0x298] sm:$0xff]
  %v134 = vld [vmem:[%s1 + $0x2a0] sm:$0xff]
  %v135 = vld [vmem:[%s1 + $0x2a8] sm:$0xff]
  %v136 = vld [vmem:[%s1 + $0x2b0] sm:$0xff]
  %v137 = vld [vmem:[%s1 + $0x2b8] sm:$0xff]
  %v138 = vld [vmem:[%s1 + $0x2c0] sm:$0xff]
  %v139 = vld [vmem:[%s1 + $0x2c8] sm:$0xff]
  %v140 = vld [vmem:[%s1 + $0x2d0] sm:$0xff]
  %v141 = vld [vmem:[%s1 + $0x2d8] sm:$0xff]
  %v142 = vld [vmem:[%s1 + $0x2e0] sm:$0xff]
  %v143 = vld [vmem:[%s1 + $0x2e8] sm:$0xff]
  %v144 = vld [vmem:[%s1 + $0x2f0] sm:$0xff]
  %v145 = vld [vmem:[%s1 + $0x2f8] sm:$0xff]
  %v146 = vld [vmem:[%s1 + $0x300] sm:$0xff]
  %v147 = vld [vmem:[%s1 + $0x308] sm:$0xff]
  %v148 = vld [vmem:[%s1 + $0x310] sm:$0xff]
  %v149 = vld [vmem:[%s1 + $0x318] sm:$0xff]
  %v150 = vld [vmem:[%s1 + $0x320] sm:$0xff]
  %v151 = vld [vmem:[%s1 + $0x328] sm:$0xff]
  %v152 = vld [vmem:[%s1 + $0x330] sm:$0xff]
  %v153 = vld [vmem:[%s1 + $0x338] sm:$0xff]
  %v154 = vld [vmem:[%s1 + $0x340] sm:$0xff]
  %v155 = vld [vmem:[%s1 + $0x348] sm:$0xff]
  %v156 = vld [vmem:[%s1 + $0x350] sm:$0xff]
  %v157 = vld [vmem:[%s1 + $0x358] sm:$0xff]
  %v158 = vld [vmem:[%s1 + $0x360] sm:$0xff]
  %v159 = vld [vmem:[%s1 + $0x368] sm:$0xff]
  %v160 = vld [vmem:[%s1 + $0x370] sm:$0xff]
  %v161 = vld [vmem:[%s1 + $0x378] sm:$0xff]
  %v162 = vld [vmem:[%s1 + $0x380] sm:$0xff]
  %v163 = vld [vmem:[%s1 + $0x388] sm:$0xff]
  %v164 = vld [vmem:[%s1 + $0x390] sm:$0xff]
  %v165 = vld [vmem:[%s1 + $0x398] sm:$0xff]
  %v166 = vld [vmem:[%s1 + $0x3a0] sm:$0xff]
  %v167 = vld [vmem:[%s1 + $0x3a8] sm:$0xff]
  %v168 = vld [vmem:[%s1 + $0x3b0] sm:$0xff]
  %v169 = vld [vmem:[%s1 + $0x3b8] sm:$0xff]
  %v170 = vld [vmem:[%s1 + $0x3c0] sm:$0xff]
  %v171 = vld [vmem:[%s1 + $0x3c8] sm:$0xff]
  %v172 = vld [vmem:[%s1 + $0x3d0] sm:$0xff]
  %v173 = vld [vmem:[%s1 + $0x3d8] sm:$0xff]
  %v174 = vld [vmem:[%s1 + $0x3e0] sm:$0xff]
  %v175 = vld [vmem:[%s1 + $0x3e8] sm:$0xff]
  %v176 = vld [vmem:[%s1 + $0x3f0] sm:$0xff]
  %v177 = vld [vmem:[%s1 + $0x3f8] sm:$0xff]
  %v178 = vld [vmem:[%s1 + $0x400] sm:$0xff]
  %v179 = vld [vmem:[%s1 + $0x408] sm:$0xff]
  %v180 = vld [vmem:[%s1 + $0x410] sm:$0xff]
  %v181 = vld [vmem:[%s1 + $0x418] sm:$0xff]
  %v182 = vld [vmem:[%s1 + $0x420] sm:$0xff]
  %v183 = vld [vmem:[%s1 + $0x428] sm:$0xff]
  %v184 = vld [vmem:[%s1 + $0x430] sm:$0xff]
  %v185 = vld [vmem:[%s1 + $0x438] sm:$0xff]
  %v186 = vld [vmem:[%s1 + $0x440] sm:$0xff]
  %v187 = vld [vmem:[%s1 + $0x448] sm:$0xff]
  %v188 = vld [vmem:[%s1 + $0x450] sm:$0xff]
  %v189 = vld [vmem:[%s1 + $0x458] sm:$0xff]
  %v190 = vld [vmem:[%s1 + $0x460] sm:$0xff]
  %v191 = vld [vmem:[%s1 + $0x468] sm:$0xff]
  %v192 = vld [vmem:[%s1 + $0x470] sm:$0xff]
  %v193 = vld [vmem:[%s1 + $0x478] sm:$0xff]
  %v194 = vld [vmem:[%s1 + $0x480] sm:$0xff]
  %v195 = vld [vmem:[%s1 + $0x488] sm:$0xff]
  %v196 = vld [vmem:[%s1 + $0x490] sm:$0xff]
  %v197 = vld [vmem:[%s1 + $0x498] sm:$0xff]
  %v198 = vld [vmem:[%s1 + $0x4a0] sm:$0xff]
  %v199 = vld [vmem:[%s1 + $0x4a8] sm:$0xff]
  %v200 = vld [vmem:[%s1 + $0x4b0] sm:$0xff]
  %v201 = vld [vmem:[%s1 + $0x4b8] sm:$0xff]
  %v202 = vld [vmem:[%s1 + $0x4c0] sm:$0xff]
  %v203 = vld [vmem:[%s1 + $0x4c8] sm:$0xff]
  %v204 = vld [vmem:[%s1 + $0x4d0] sm:$0xff]
  %v205 = vld [vmem:[%s1 + $0x4d8] sm:$0xff]
  %v206 = vld [vmem:[%s1 + $0x4e0] sm:$0xff]
  %v207 = vld [vmem:[%s1 + $0x4e8] sm:$0xff]
  %v208 = vld [vmem:[%s1 + $0x4f0] sm:$0xff]
  %v209 = vld [vmem:[%s1 + $0x4f8] sm:$0xff]
  %v210 = vld [vmem:[%s1 + $0x500] sm:$0xff]
  %v211 = vld [vmem:[%s1 + $0x508] sm:$0xff]
  %v212 = vld [vmem:[%s1 + $0x510] sm:$0xff]
  %v213 = vld [vmem:[%s1 + $0x518] sm:$0xff]
  %v214 = vld [vmem:[%s1 + $0x520] sm:$0xff]
  %v215 = vld [vmem:[%s1 + $0x528] sm:$0xff]
  %v216 = vld [vmem:[%s1 + $0x530] sm:$0xff]
  %v217 = vld [vmem:[%s1 + $0x538] sm:$0xff]
  %v218 = vld [vmem:[%s1 + $0x540] sm:$0xff]
  %v219 = vld [vmem:[%s1 + $0x548] sm:$0xff]
  %v220 = vld [vmem:[%s1 + $0x550] sm:$0xff]
  %v221 = vld [vmem:[%s1 + $0x558] sm:$0xff]
  %v222 = vld [vmem:[%s1 + $0x560] sm:$0xff]
  %v223 = vld [vmem:[%s1 + $0x568] sm:$0xff]
  %v224 = vld [vmem:[%s1 + $0x570] sm:$0xff]
  %v225 = vld [vmem:[%s1 + $0x578] sm:$0xff]
  %v226 = vld [vmem:[%s1 + $0x580] sm:$0xff]
  %v227 = vld [vmem:[%s1 + $0x588] sm:$0xff]
  %v228 = vld [vmem:[%s1 + $0x590] sm:$0xff]
  %v229 = vld [vmem:[%s1 + $0x598] sm:$0xff]
  %v230 = vld [vmem:[%s1 + $0x5a0] sm:$0xff]
  %v231 = vld [vmem:[%s1 + $0x5a8] sm:$0xff]
  %v232 = vld [vmem:[%s1 + $0x5b0] sm:$0xff]
  %v233 = vld [vmem:[%s1 + $0x5b8] sm:$0xff]
  %v234 = vld [vmem:[%s1 + $0x5c0] sm:$0xff]
  %v235 = vld [vmem:[%s1 + $0x5c8] sm:$0xff]
  %v236 = vld [vmem:[%s1 + $0x5d0] sm:$0xff]
  %v237 = vld [vmem:[%s1 + $0x5d8] sm:$0xff]
  %v238 = vld [vmem:[%s1 + $0x5e0] sm:$0xff]
  %v239 = vld [vmem:[%s1 + $0x5e8] sm:$0xff]
  %v240 = vld [vmem:[%s1 + $0x5f0] sm:$0xff]
  %v241 = vld [vmem:[%s1 + $0x5f8] sm:$0xff]
  %v242 = vld [vmem:[%s1 + $0x600] sm:$0xff]
  %v243 = vld [vmem:[%s1 + $0x608] sm:$0xff]
  %v244 = vld [vmem:[%s1 + $0x610] sm:$0xff]
  %v245 = vld [vmem:[%s1 + $0x618] sm:$0xff]
  %v246 = vld [vmem:[%s1 + $0x620] sm:$0xff]
  %v247 = vld [vmem:[%s1 + $0x628] sm:$0xff]
  %v248 = vld [vmem:[%s1 + $0x630] sm:$0xff]
  %v249 = vld [vmem:[%s1 + $0x638] sm:$0xff]
  %v250 = vld [vmem:[%s1 + $0x640] sm:$0xff]
  %v251 = vld [vmem:[%s1 + $0x648] sm:$0xff]
  %v252 = vld [vmem:[%s1 + $0x650] sm:$0xff]
  %v253 = vld [vmem:[%s1 + $0x658] sm:$0xff]
  %v254 = vld [vmem:[%s1 + $0x660] sm:$0xff]
  %v255 = vld [vmem:[%s1 + $0x668] sm:$0xff]
  %v256 = vld [vmem:[%s1 + $0x670] sm:$0xff]
  %v257 = vld [vmem:[%s1 + $0x678] sm:$0xff]
  %v258 = vld [vmem:[%s1 + $0x680] sm:$0xff]
  %v259 = vld [vmem:[%s1 + $0x688] sm:$0xff]
  %v260 = vld [vmem:[%s1 + $0x690] sm:$0xff]
  %v261 = vld [vmem:[%s1 + $0x698] sm:$0xff]
  %v262 = vld [vmem:[%s1 + $0x6a0] sm:$0xff]
  %v263 = vld [vmem:[%s1 + $0x6a8] sm:$0xff]
  %v264 = vld [vmem:[%s1 + $0x6b0] sm:$0xff]
  %v265 = vld [vmem:[%s1 + $0x6b8] sm:$0xff]
  %v266 = vld [vmem:[%s1 + $0x6c0] sm:$0xff]
  %v267 = vld [vmem:[%s1 + $0x6c8] sm:$0xff]
  %v268 = vld [vmem:[%s1 + $0x6d0] sm:$0xff]
  %v269 = vld [vmem:[%s1 + $0x6d8] sm:$0xff]
  %v270 = vld [vmem:[%s1 + $0x6e0] sm:$0xff]
  %v271 = vld [vmem:[%s1 + $0x6e8] sm:$0xff]
  %v272 = vld [vmem:[%s1 + $0x6f0] sm:$0xff]
  %v273 = vld [vmem:[%s1 + $0x6f8] sm:$0xff]
  %v274 = vld [vmem:[%s1 + $0x700] sm:$0xff]
  %v275 = vld [vmem:[%s1 + $0x708] sm:$0xff]
  %v276 = vld [vmem:[%s1 + $0x710] sm:$0xff]
  %v277 = vld [vmem:[%s1 + $0x718] sm:$0xff]
  %v278 = vld [vmem:[%s1 + $0x720] sm:$0xff]
  %v279 = vld [vmem:[%s1 + $0x728] sm:$0xff]
  %v280 = vld [vmem:[%s1 + $0x730] sm:$0xff]
  %v281 = vld [vmem:[%s1 + $0x738] sm:$0xff]
  %v282 = vld [vmem:[%s1 + $0x740] sm:$0xff]
  %v283 = vld [vmem:[%s1 + $0x748] sm:$0xff]
  %v284 = vld [vmem:[%s1 + $0x750] sm:$0xff]
  %v285 = vld [vmem:[%s1 + $0x758] sm:$0xff]
  %v286 = vld [vmem:[%s1 + $0x760] sm:$0xff]
  %v287 = vld [vmem:[%s1 + $0x768] sm:$0xff]
  %v288 = vld [vmem:[%s1 + $0x770] sm:$0xff]
  %v289 = vld [vmem:[%s1 + $0x778] sm:$0xff]
  %v290 = vld [vmem:[%s1 + $0x780] sm:$0xff]
  %v291 = vld [vmem:[%s1 + $0x788] sm:$0xff]
  %v292 = vld [vmem:[%s1 + $0x790] sm:$0xff]
  %v293 = vld [vmem:[%s1 + $0x798] sm:$0xff]
  %v294 = vld [vmem:[%s1 + $0x7a0] sm:$0xff]
  %v295 = vld [vmem:[%s1 + $0x7a8] sm:$0xff]
  %v296 = vld [vmem:[%s1 + $0x7b0] sm:$0xff]
  %v297 = vld [vmem:[%s1 + $0x7b8] sm:$0xff]
  %v298 = vld [vmem:[%s1 + $0x7c0] sm:$0xff]
  %v299 = vld [vmem:[%s1 + $0x7c8] sm:$0xff]
  %v300 = vld [vmem:[%s1 + $0x7d0] sm:$0xff]
  %v301 = vld [vmem:[%s1 + $0x7d8] sm:$0xff]
  %v302 = vld [vmem:[%s1 + $0x7e0] sm:$0xff]
  %v303 = vld [vmem:[%s1 + $0x7e8] sm:$0xff]
  %v304 = vld [vmem:[%s1 + $0x7f0] sm:$0xff]
  %v305 = vld [vmem:[%s1 + $0x7f8] sm:$0xff]
  %v306 = vld [vmem:[%s1 + $0x800] sm:$0xff]
  %v307 = vld [vmem:[%s1 + $0x808] sm:$0xff]
  %v308 = vld [vmem:[%s1 + $0x810] sm:$0xff]
  %v309 = vld [vmem:[%s1 + $0x818] sm:$0xff]
  %v310 = vld [vmem:[%s1 + $0x820] sm:$0xff]
  %v311 = vld [vmem:[%s1 + $0x828] sm:$0xff]
  %v312 = vld [vmem:[%s1 + $0x830] sm:$0xff]
  %v313 = vld [vmem:[%s1 + $0x838] sm:$0xff]
  %v314 = vld [vmem:[%s1 + $0x840] sm:$0xff]
  %v315 = vld [vmem:[%s1 + $0x848] sm:$0xff]
  %v316 = vld [vmem:[%s1 + $0x850] sm:$0xff]
  %v317 = vld [vmem:[%s1 + $0x858] sm:$0xff]
  %v318 = vld [vmem:[%s1 + $0x860] sm:$0xff]
  %v319 = vld [vmem:[%s1 + $0x868] sm:$0xff]
  %v320 = vld [vmem:[%s1 + $0x870] sm:$0xff]
  %v321 = vld [vmem:[%s1 + $0x878] sm:$0xff]
  %v322 = vld [vmem:[%s1 + $0x880] sm:$0xff]
  %v323 = vld [vmem:[%s1 + $0x888] sm:$0xff]
  %v324 = vld [vmem:[%s1 + $0x890] sm:$0xff]
  %v325 = vld [vmem:[%s1 + $0x898] sm:$0xff]
  %v326 = vld [vmem:[%s1 + $0x8a0] sm:$0xff]
  %v327 = vld [vmem:[%s1 + $0x8a8] sm:$0xff]
  %v328 = vld [vmem:[%s1 + $0x8b0] sm:$0xff]
  %v329 = vld [vmem:[%s1 + $0x8b8] sm:$0xff]
  %v330 = vld [vmem:[%s1 + $0x8c0] sm:$0xff]
  %v331 = vld [vmem:[%s1 + $0x8c8] sm:$0xff]
  %v332 = vld [vmem:[%s1 + $0x8d0] sm:$0xff]
  %v333 = vld [vmem:[%s1 + $0x8d8] sm:$0xff]
  %v334 = vld [vmem:[%s1 + $0x8e0] sm:$0xff]
  %v335 = vld [vmem:[%s1 + $0x8e8] sm:$0xff]
  %v336 = vld [vmem:[%s1 + $0x8f0] sm:$0xff]
  %v337 = vld [vmem:[%s1 + $0x8f8] sm:$0xff]
  %v338 = vld [vmem:[%s1 + $0x900] sm:$0xff]
  %v339 = vld [vmem:[%s1 + $0x908] sm:$0xff]
  %v340 = vld [vmem:[%s1 + $0x910] sm:$0xff]
  %v341 = vld [vmem:[%s1 + $0x918] sm:$0xff]
  %v342 = vld [vmem:[%s1 + $0x920] sm:$0xff]
  %v343 = vld [vmem:[%s1 + $0x928] sm:$0xff]
  %v344 = vld [vmem:[%s1 + $0x930] sm:$0xff]
  %v345 = vld [vmem:[%s1 + $0x938] sm:$0xff]
  %v346 = vld [vmem:[%s1 + $0x940] sm:$0xff]
  %v347 = vld [vmem:[%s1 + $0x948] sm:$0xff]
  %v348 = vld [vmem:[%s1 + $0x950] sm:$0xff]
  %v349 = vld [vmem:[%s1 + $0x958] sm:$0xff]
  %v350 = vld [vmem:[%s1 + $0x960] sm:$0xff]
  %v351 = vld [vmem:[%s1 + $0x968] sm:$0xff]
  %v352 = vld [vmem:[%s1 + $0x970] sm:$0xff]
  %v353 = vld [vmem:[%s1 + $0x978] sm:$0xff]
  %v354 = vld [vmem:[%s1 + $0x980] sm:$0xff]
  %v355 = vld [vmem:[%s1 + $0x988] sm:$0xff]
  %v356 = vld [vmem:[%s1 + $0x990] sm:$0xff]
  %v357 = vld [vmem:[%s1 + $0x998] sm:$0xff]
  %v358 = vld [vmem:[%s1 + $0x9a0] sm:$0xff]
  %v359 = vld [vmem:[%s1 + $0x9a8] sm:$0xff]
  %v360 = vld [vmem:[%s1 + $0x9b0] sm:$0xff]
  %v361 = vld [vmem:[%s1 + $0x9b8] sm:$0xff]
  %v362 = vld [vmem:[%s1 + $0x9c0] sm:$0xff]
  %v363 = vld [vmem:[%s1 + $0x9c8] sm:$0xff]
  %v364 = vld [vmem:[%s1 + $0x9d0] sm:$0xff]
  %v365 = vld [vmem:[%s1 + $0x9d8] sm:$0xff]
  %v366 = vld [vmem:[%s1 + $0x9e0] sm:$0xff]
  %v367 = vld [vmem:[%s1 + $0x9e8] sm:$0xff]
  %v368 = vld [vmem:[%s1 + $0x9f0] sm:$0xff]
  %v369 = vld [vmem:[%s1 + $0x9f8] sm:$0xff]
  %v370 = vld [vmem:[%s1 + $0xa00] sm:$0xff]
  %v371 = vld [vmem:[%s1 + $0xa08] sm:$0xff]
  %v372 = vld [vmem:[%s1 + $0xa10] sm:$0xff]
  %v373 = vld [vmem:[%s1 + $0xa18] sm:$0xff]
  %v374 = vld [vmem:[%s1 + $0xa20] sm:$0xff]
  %v375 = vld [vmem:[%s1 + $0xa28] sm:$0xff]
  %v376 = vld [vmem:[%s1 + $0xa30] sm:$0xff]
  %v377 = vld [vmem:[%s1 + $0xa38] sm:$0xff]
  %v378 = vld [vmem:[%s1 + $0xa40] sm:$0xff]
  %v379 = vld [vmem:[%s1 + $0xa48] sm:$0xff]
  %v380 = vld [vmem:[%s1 + $0xa50] sm:$0xff]
  %v381 = vld [vmem:[%s1 + $0xa58] sm:$0xff]
  %v382 = vld [vmem:[%s1 + $0xa60] sm:$0xff]
  %v383 = vld [vmem:[%s1 + $0xa68] sm:$0xff]
  %v384 = vld [vmem:[%s1 + $0xa70] sm:$0xff]
  %v385 = vld [vmem:[%s1 + $0xa78] sm:$0xff]
  %v386 = vld [vmem:[%s1 + $0xa80] sm:$0xff]
  %v387 = vld [vmem:[%s1 + $0xa88] sm:$0xff]
  %v388 = vld [vmem:[%s1 + $0xa90] sm:$0xff]
  %v389 = vld [vmem:[%s1 + $0xa98] sm:$0xff]
  %v390 = vld [vmem:[%s1 + $0xaa0] sm:$0xff]
  %v391 = vld [vmem:[%s1 + $0xaa8] sm:$0xff]
  %v392 = vld [vmem:[%s1 + $0xab0] sm:$0xff]
  %v393 = vld [vmem:[%s1 + $0xab8] sm:$0xff]
  %v394 = vld [vmem:[%s1 + $0xac0] sm:$0xff]
  %v395 = vld [vmem:[%s1 + $0xac8] sm:$0xff]
  %v396 = vld [vmem:[%s1 + $0xad0] sm:$0xff]
  %v397 = vld [vmem:[%s1 + $0xad8] sm:$0xff]
  %v398 = vld [vmem:[%s1 + $0xae0] sm:$0xff]
  %v399 = vld [vmem:[%s1 + $0xae8] sm:$0xff]
  %v400 = vld [vmem:[%s1 + $0xaf0] sm:$0xff]
  %v401 = vld [vmem:[%s1 + $0xaf8] sm:$0xff]
  %v402 = vld [vmem:[%s1 + $0xb00] sm:$0xff]
  %v403 = vld [vmem:[%s1 + $0xb08] sm:$0xff]
  %v404 = vld [vmem:[%s1 + $0xb10] sm:$0xff]
  %v405 = vld [vmem:[%s1 + $0xb18] sm:$0xff]
  %v406 = vld [vmem:[%s1 + $0xb20] sm:$0xff]
  %v407 = vld [vmem:[%s1 + $0xb28] sm:$0xff]
  %v408 = vld [vmem:[%s1 + $0xb30] sm:$0xff]
  %v409 = vld [vmem:[%s1 + $0xb38] sm:$0xff]
  %v410 = vld [vmem:[%s1 + $0xb40] sm:$0xff]
  %v411 = vld [vmem:[%s1 + $0xb48] sm:$0xff]
  %v412 = vld [vmem:[%s1 + $0xb50] sm:$0xff]
  %v413 = vld [vmem:[%s1 + $0xb58] sm:$0xff]
  %v414 = vld [vmem:[%s1 + $0xb60] sm:$0xff]
  %v415 = vld [vmem:[%s1 + $0xb68] sm:$0xff]
  %v416 = vld [vmem:[%s1 + $0xb70] sm:$0xff]
  %v417 = vld [vmem:[%s1 + $0xb78] sm:$0xff]
  %v418 = vld [vmem:[%s1 + $0xb80] sm:$0xff]
  %v419 = vld [vmem:[%s1 + $0xb88] sm:$0xff]
  %v420 = vld [vmem:[%s1 + $0xb90] sm:$0xff]
  %v421 = vld [vmem:[%s1 + $0xb98] sm:$0xff]
  %v422 = vld [vmem:[%s1 + $0xba0] sm:$0xff]
  %v423 = vld [vmem:[%s1 + $0xba8] sm:$0xff]
  %v424 = vld [vmem:[%s1 + $0xbb0] sm:$0xff]
  %v425 = vld [vmem:[%s1 + $0xbb8] sm:$0xff]
  %v426 = vld [vmem:[%s1 + $0xbc0] sm:$0xff]
  %v427 = vld [vmem:[%s1 + $0xbc8] sm:$0xff]
  %v428 = vld [vmem:[%s1 + $0xbd0] sm:$0xff]
  %v429 = vld [vmem:[%s1 + $0xbd8] sm:$0xff]
  %v430 = vld [vmem:[%s1 + $0xbe0] sm:$0xff]
  %v431 = vld [vmem:[%s1 + $0xbe8] sm:$0xff]
  %v432 = vld [vmem:[%s1 + $0xbf0] sm:$0xff]
  %v433 = vld [vmem:[%s1 + $0xbf8] sm:$0xff]
  %v434 = vld [vmem:[%s1 + $0xc00] sm:$0xff]
  %v435 = vld [vmem:[%s1 + $0xc08] sm:$0xff]
  %v436 = vld [vmem:[%s1 + $0xc10] sm:$0xff]
  %v437 = vld [vmem:[%s1 + $0xc18] sm:$0xff]
  %v438 = vld [vmem:[%s1 + $0xc20] sm:$0xff]
  %v439 = vld [vmem:[%s1 + $0xc28] sm:$0xff]
  %v440 = vld [vmem:[%s1 + $0xc30] sm:$0xff]
  %v441 = vld [vmem:[%s1 + $0xc38] sm:$0xff]
  %v442 = vld [vmem:[%s1 + $0xc40] sm:$0xff]
  %v443 = vld [vmem:[%s1 + $0xc48] sm:$0xff]
  %v444 = vld [vmem:[%s1 + $0xc50] sm:$0xff]
  %v445 = vld [vmem:[%s1 + $0xc58] sm:$0xff]
  %v446 = vld [vmem:[%s1 + $0xc60] sm:$0xff]
  %v447 = vld [vmem:[%s1 + $0xc68] sm:$0xff]
  %v448 = vld [vmem:[%s1 + $0xc70] sm:$0xff]
  %v449 = vld [vmem:[%s1 + $0xc78] sm:$0xff]
  %v450 = vld [vmem:[%s1 + $0xc80] sm:$0xff]
  %v451 = vld [vmem:[%s1 + $0xc88] sm:$0xff]
  %v452 = vld [vmem:[%s1 + $0xc90] sm:$0xff]
  %v453 = vld [vmem:[%s1 + $0xc98] sm:$0xff]
  %v454 = vld [vmem:[%s1 + $0xca0] sm:$0xff]
  %v455 = vld [vmem:[%s1 + $0xca8] sm:$0xff]
  %v456 = vld [vmem:[%s1 + $0xcb0] sm:$0xff]
  %v457 = vld [vmem:[%s1 + $0xcb8] sm:$0xff]
  %v458 = vld [vmem:[%s1 + $0xcc0] sm:$0xff]
  %v459 = vld [vmem:[%s1 + $0xcc8] sm:$0xff]
  %v460 = vld [vmem:[%s1 + $0xcd0] sm:$0xff]
  %v461 = vld [vmem:[%s1 + $0xcd8] sm:$0xff]
  %v462 = vld [vmem:[%s1 + $0xce0] sm:$0xff]
  %v463 = vld [vmem:[%s1 + $0xce8] sm:$0xff]
  %v464 = vld [vmem:[%s1 + $0xcf0] sm:$0xff]
  %v465 = vld [vmem:[%s1 + $0xcf8] sm:$0xff]
  %v466 = vld [vmem:[%s1 + $0xd00] sm:$0xff]
  %v467 = vld [vmem:[%s1 + $0xd08] sm:$0xff]
  %v468 = vld [vmem:[%s1 + $0xd10] sm:$0xff]
  %v469 = vld [vmem:[%s1 + $0xd18] sm:$0xff]
  %v470 = vld [vmem:[%s1 + $0xd20] sm:$0xff]
  %v471 = vld [vmem:[%s1 + $0xd28] sm:$0xff]
  %v472 = vld [vmem:[%s1 + $0xd30] sm:$0xff]
  %v473 = vld [vmem:[%s1 + $0xd38] sm:$0xff]
  %v474 = vld [vmem:[%s1 + $0xd40] sm:$0xff]
  %v475 = vld [vmem:[%s1 + $0xd48] sm:$0xff]
  %v476 = vld [vmem:[%s1 + $0xd50] sm:$0xff]
  %v477 = vld [vmem:[%s1 + $0xd58] sm:$0xff]
  %v478 = vld [vmem:[%s1 + $0xd60] sm:$0xff]
  %v479 = vld [vmem:[%s1 + $0xd68] sm:$0xff]
  %v480 = vld [vmem:[%s1 + $0xd70] sm:$0xff]
  %v481 = vld [vmem:[%s1 + $0xd78] sm:$0xff]
  %v482 = vld [vmem:[%s1 + $0xd80] sm:$0xff]
  %v483 = vld [vmem:[%s1 + $0xd88] sm:$0xff]
  %v484 = vld [vmem:[%s1 + $0xd90] sm:$0xff]
  %v485 = vld [vmem:[%s1 + $0xd98] sm:$0xff]
  %v486 = vld [vmem:[%s1 + $0xda0] sm:$0xff]
  %v487 = vld [vmem:[%s1 + $0xda8] sm:$0xff]
  %v488 = vld [vmem:[%s1 + $0xdb0] sm:$0xff]
  %v489 = vld [vmem:[%s1 + $0xdb8] sm:$0xff]
  %v490 = vld [vmem:[%s1 + $0xdc0] sm:$0xff]
  %v491 = vld [vmem:[%s1 + $0xdc8] sm:$0xff]
  %v492 = vld [vmem:[%s1 + $0xdd0] sm:$0xff]
  %v493 = vld [vmem:[%s1 + $0xdd8] sm:$0xff]
  %v494 = vld [vmem:[%s1 + $0xde0] sm:$0xff]
  %v495 = vld [vmem:[%s1 + $0xde8] sm:$0xff]
  %v496 = vld [vmem:[%s1 + $0xdf0] sm:$0xff]
  %v497 = vld [vmem:[%s1 + $0xdf8] sm:$0xff]
  %v498 = vld [vmem:[%s1 + $0xe00] sm:$0xff]
  %v499 = vld [vmem:[%s1 + $0xe08] sm:$0xff]
  %v500 = vld [vmem:[%s1 + $0xe10] sm:$0xff]
  %v501 = vld [vmem:[%s1 + $0xe18] sm:$0xff]
  %v502 = vld [vmem:[%s1 + $0xe20] sm:$0xff]
  %v503 = vld [vmem:[%s1 + $0xe28] sm:$0xff]
  %v504 = vld [vmem:[%s1 + $0xe30] sm:$0xff]
  %v505 = vld [vmem:[%s1 + $0xe38] sm:$0xff]
  %v506 = vld [vmem:[%s1 + $0xe40] sm:$0xff]
  %v507 = vld [vmem:[%s1 + $0xe48] sm:$0xff]
  %v508 = vld [vmem:[%s1 + $0xe50] sm:$0xff]
  %v509 = vld [vmem:[%s1 + $0xe58] sm:$0xff]
  %v510 = vld [vmem:[%s1 + $0xe60] sm:$0xff]
  %v511 = vld [vmem:[%s1 + $0xe68] sm:$0xff]
  %v512 = vld [vmem:[%s1 + $0xe70] sm:$0xff]
  %v513 = vld [vmem:[%s1 + $0xe78] sm:$0xff]
  %v514 = vld [vmem:[%s1 + $0xe80] sm:$0xff]
  %v515 = vld [vmem:[%s1 + $0xe88] sm:$0xff]
  %v516 = vld [vmem:[%s1 + $0xe90] sm:$0xff]
  %v517 = vld [vmem:[%s1 + $0xe98] sm:$0xff]
  %v518 = vld [vmem:[%s1 + $0xea0] sm:$0xff]
  %v519 = vld [vmem:[%s1 + $0xea8] sm:$0xff]
  %v520 = vld [vmem:[%s1 + $0xeb0] sm:$0xff]
  %v521 = vld [vmem:[%s1 + $0xeb8] sm:$0xff]
  %v522 = vld [vmem:[%s1 + $0xec0] sm:$0xff]
  %v523 = vld [vmem:[%s1 + $0xec8] sm:$0xff]
  %v524 = vld [vmem:[%s1 + $0xed0] sm:$0xff]
  %v525 = vld [vmem:[%s1 + $0xed8] sm:$0xff]
  %v526 = vld [vmem:[%s1 + $0xee0] sm:$0xff]
  %v527 = vld [vmem:[%s1 + $0xee8] sm:$0xff]
  %v528 = vld [vmem:[%s1 + $0xef0] sm:$0xff]
  %v529 = vld [vmem:[%s1 + $0xef8] sm:$0xff]
  %v530 = vld [vmem:[%s1 + $0xf00] sm:$0xff]
  %v531 = vld [vmem:[%s1 + $0xf08] sm:$0xff]
  %v532 = vld [vmem:[%s1 + $0xf10] sm:$0xff]
  %v533 = vld [vmem:[%s1 + $0xf18] sm:$0xff]
  %v534 = vld [vmem:[%s1 + $0xf20] sm:$0xff]
  %v535 = vld [vmem:[%s1 + $0xf28] sm:$0xff]
  %v536 = vld [vmem:[%s1 + $0xf30] sm:$0xff]
  %v537 = vld [vmem:[%s1 + $0xf38] sm:$0xff]
  %v538 = vld [vmem:[%s1 + $0xf40] sm:$0xff]
  %v539 = vld [vmem:[%s1 + $0xf48] sm:$0xff]
  %v540 = vld [vmem:[%s1 + $0xf50] sm:$0xff]
  %v541 = vld [vmem:[%s1 + $0xf58] sm:$0xff]
  %v542 = vld [vmem:[%s1 + $0xf60] sm:$0xff]
  %v543 = vld [vmem:[%s1 + $0xf68] sm:$0xff]
  %v544 = vld [vmem:[%s1 + $0xf70] sm:$0xff]
  %v545 = vld [vmem:[%s1 + $0xf78] sm:$0xff]
  %v546 = vld [vmem:[%s1 + $0xf80] sm:$0xff]
  %v547 = vld [vmem:[%s1 + $0xf88] sm:$0xff]
  %v548 = vld [vmem:[%s1 + $0xf90] sm:$0xff]
  %v549 = vld [vmem:[%s1 + $0xf98] sm:$0xff]
  %v550 = vld [vmem:[%s1 + $0xfa0] sm:$0xff]
  %v551 = vld [vmem:[%s1 + $0xfa8] sm:$0xff]
  %v552 = vld [vmem:[%s1 + $0xfb0] sm:$0xff]
  %v553 = vld [vmem:[%s1 + $0xfb8] sm:$0xff]
  %v554 = vld [vmem:[%s1 + $0xfc0] sm:$0xff]
  %v555 = vld [vmem:[%s1 + $0xfc8] sm:$0xff]
  %v556 = vld [vmem:[%s1 + $0xfd0] sm:$0xff]
  %v557 = vld [vmem:[%s1 + $0xfd8] sm:$0xff]
  %v558 = vld [vmem:[%s1 + $0xfe0] sm:$0xff]
  %v559 = vld [vmem:[%s1 + $0xfe8] sm:$0xff]
  %v560 = vld [vmem:[%s1 + $0xff0] sm:$0xff]
  %v561 = vld [vmem:[%s1 + $0xff8] sm:$0xff]
  %v562 = vld [vmem:[%s1 + $0x1000] sm:$0xff]
  %v563 = vld [vmem:[%s1 + $0x1008] sm:$0xff]
  %v564 = vld [vmem:[%s1 + $0x1010] sm:$0xff]
  %v565 = vld [vmem:[%s1 + $0x1018] sm:$0xff]
  %v566 = vld [vmem:[%s1 + $0x1020] sm:$0xff]
  %v567 = vld [vmem:[%s1 + $0x1028] sm:$0xff]
  %v568 = vld [vmem:[%s1 + $0x1030] sm:$0xff]
  %v569 = vld [vmem:[%s1 + $0x1038] sm:$0xff]
  %v570 = vld [vmem:[%s1 + $0x1040] sm:$0xff]
  %v571 = vld [vmem:[%s1 + $0x1048] sm:$0xff]
  %v572 = vld [vmem:[%s1 + $0x1050] sm:$0xff]
  %v573 = vld [vmem:[%s1 + $0x1058] sm:$0xff]
  %v574 = vld [vmem:[%s1 + $0x1060] sm:$0xff]
  %v575 = vld [vmem:[%s1 + $0x1068] sm:$0xff]
  %v576 = vld [vmem:[%s1 + $0x1070] sm:$0xff]
  %v577 = vld [vmem:[%s1 + $0x1078] sm:$0xff]
  %v578 = vld [vmem:[%s1 + $0x1080] sm:$0xff]
  %v579 = vld [vmem:[%s1 + $0x1088] sm:$0xff]
  %v580 = vld [vmem:[%s1 + $0x1090] sm:$0xff]
  %v581 = vld [vmem:[%s1 + $0x1098] sm:$0xff]
  %v582 = vld [vmem:[%s1 + $0x10a0] sm:$0xff]
  %v583 = vld [vmem:[%s1 + $0x10a8] sm:$0xff]
  %v584 = vld [vmem:[%s1 + $0x10b0] sm:$0xff]
  %v585 = vld [vmem:[%s1 + $0x10b8] sm:$0xff]
  %v586 = vld [vmem:[%s1 + $0x10c0] sm:$0xff]
  %v587 = vld [vmem:[%s1 + $0x10c8] sm:$0xff]
  %v588 = vld [vmem:[%s1 + $0x10d0] sm:$0xff]
  %v589 = vld [vmem:[%s1 + $0x10d8] sm:$0xff]
  %v590 = vld [vmem:[%s1 + $0x10e0] sm:$0xff]
  %v591 = vld [vmem:[%s1 + $0x10e8] sm:$0xff]
  %v592 = vld [vmem:[%s1 + $0x10f0] sm:$0xff]
  %v593 = vld [vmem:[%s1 + $0x10f8] sm:$0xff]
  %v594 = vld [vmem:[%s1 + $0x1100] sm:$0xff]
  %v595 = vld [vmem:[%s1 + $0x1108] sm:$0xff]
  %v596 = vld [vmem:[%s1 + $0x1110] sm:$0xff]
  %v597 = vld [vmem:[%s1 + $0x1118] sm:$0xff]
  %v598 = vld [vmem:[%s1 + $0x1120] sm:$0xff]
  %v599 = vld [vmem:[%s1 + $0x1128] sm:$0xff]
  %v600 = vld [vmem:[%s1 + $0x1130] sm:$0xff]
  %v601 = vld [vmem:[%s1 + $0x1138] sm:$0xff]
  %v602 = vld [vmem:[%s1 + $0x1140] sm:$0xff]
  %v603 = vld [vmem:[%s1 + $0x1148] sm:$0xff]
  %v604 = vld [vmem:[%s1 + $0x1150] sm:$0xff]
  %v605 = vld [vmem:[%s1 + $0x1158] sm:$0xff]
  %v606 = vld [vmem:[%s1 + $0x1160] sm:$0xff]
  %v607 = vld [vmem:[%s1 + $0x1168] sm:$0xff]
  %v608 = vld [vmem:[%s1 + $0x1170] sm:$0xff]
  %v609 = vld [vmem:[%s1 + $0x1178] sm:$0xff]
  %v610 = vld [vmem:[%s1 + $0x1180] sm:$0xff]
  %v611 = vld [vmem:[%s1 + $0x1188] sm:$0xff]
  %v612 = vld [vmem:[%s1 + $0x1190] sm:$0xff]
  %v613 = vld [vmem:[%s1 + $0x1198] sm:$0xff]
  %v614 = vld [vmem:[%s1 + $0x11a0] sm:$0xff]
  %v615 = vld [vmem:[%s1 + $0x11a8] sm:$0xff]
  %v616 = vld [vmem:[%s1 + $0x11b0] sm:$0xff]
  %v617 = vld [vmem:[%s1 + $0x11b8] sm:$0xff]
  %v618 = vld [vmem:[%s1 + $0x11c0] sm:$0xff]
  %v619 = vld [vmem:[%s1 + $0x11c8] sm:$0xff]
  %v620 = vld [vmem:[%s1 + $0x11d0] sm:$0xff]
  %v621 = vld [vmem:[%s1 + $0x11d8] sm:$0xff]
  %v622 = vld [vmem:[%s1 + $0x11e0] sm:$0xff]
  %v623 = vld [vmem:[%s1 + $0x11e8] sm:$0xff]
  %v624 = vld [vmem:[%s1 + $0x11f0] sm:$0xff]
  %v625 = vld [vmem:[%s1 + $0x11f8] sm:$0xff]
  %v626 = vld [vmem:[%s1 + $0x1200] sm:$0xff]
  %v627 = vld [vmem:[%s1 + $0x1208] sm:$0xff]
  %v628 = vld [vmem:[%s1 + $0x1210] sm:$0xff]
  %v629 = vld [vmem:[%s1 + $0x1218] sm:$0xff]
  %v630 = vld [vmem:[%s1 + $0x1220] sm:$0xff]
  %v631 = vld [vmem:[%s1 + $0x1228] sm:$0xff]
  %v632 = vld [vmem:[%s1 + $0x1230] sm:$0xff]
  %v633 = vld [vmem:[%s1 + $0x1238] sm:$0xff]
  %v634 = vld [vmem:[%s1 + $0x1240] sm:$0xff]
  %v635 = vld [vmem:[%s1 + $0x1248] sm:$0xff]
  %v636 = vld [vmem:[%s1 + $0x1250] sm:$0xff]
  %v637 = vld [vmem:[%s1 + $0x1258] sm:$0xff]
  %v638 = vld [vmem:[%s1 + $0x1260] sm:$0xff]
  %v639 = vld [vmem:[%s1 + $0x1268] sm:$0xff]
  %v640 = vld [vmem:[%s1 + $0x1270] sm:$0xff]
  %v641 = vld [vmem:[%s1 + $0x1278] sm:$0xff]
  %v642 = vld [vmem:[%s1 + $0x1280] sm:$0xff]
  %v643 = vld [vmem:[%s1 + $0x1288] sm:$0xff]
  %v644 = vld [vmem:[%s1 + $0x1290] sm:$0xff]
  %v645 = vld [vmem:[%s1 + $0x1298] sm:$0xff]
  %v646 = vld [vmem:[%s1 + $0x12a0] sm:$0xff]
  %v647 = vld [vmem:[%s1 + $0x12a8] sm:$0xff]
  %v648 = vld [vmem:[%s1 + $0x12b0] sm:$0xff]
  %v649 = vld [vmem:[%s1 + $0x12b8] sm:$0xff]
  %v650 = vld [vmem:[%s1 + $0x12c0] sm:$0xff]
  %v651 = vld [vmem:[%s1 + $0x12c8] sm:$0xff]
  %v652 = vld [vmem:[%s1 + $0x12d0] sm:$0xff]
  %v653 = vld [vmem:[%s1 + $0x12d8] sm:$0xff]
  %v654 = vld [vmem:[%s1 + $0x12e0] sm:$0xff]
  %v655 = vld [vmem:[%s1 + $0x12e8] sm:$0xff]
  %v656 = vld [vmem:[%s1 + $0x12f0] sm:$0xff]
  %v657 = vld [vmem:[%s1 + $0x12f8] sm:$0xff]
  %v658 = vld [vmem:[%s1 + $0x1300] sm:$0xff]
  %v659 = vld [vmem:[%s1 + $0x1308] sm:$0xff]
  %v660 = vld [vmem:[%s1 + $0x1310] sm:$0xff]
  %v661 = vld [vmem:[%s1 + $0x1318] sm:$0xff]
  %v662 = vld [vmem:[%s1 + $0x1320] sm:$0xff]
  %v663 = vld [vmem:[%s1 + $0x1328] sm:$0xff]
  %v664 = vld [vmem:[%s1 + $0x1330] sm:$0xff]
  %v665 = vld [vmem:[%s1 + $0x1338] sm:$0xff]
  %v666 = vld [vmem:[%s1 + $0x1340] sm:$0xff]
  %v667 = vld [vmem:[%s1 + $0x1348] sm:$0xff]
  %v668 = vld [vmem:[%s1 + $0x1350] sm:$0xff]
  %v669 = vld [vmem:[%s1 + $0x1358] sm:$0xff]
  %v670 = vld [vmem:[%s1 + $0x1360] sm:$0xff]
  %v671 = vld [vmem:[%s1 + $0x1368] sm:$0xff]
  %v672 = vld [vmem:[%s1 + $0x1370] sm:$0xff]
  %v673 = vld [vmem:[%s1 + $0x1378] sm:$0xff]
  %v674 = vld [vmem:[%s1 + $0x1380] sm:$0xff]
  %v675 = vld [vmem:[%s1 + $0x1388] sm:$0xff]
  %v676 = vld [vmem:[%s1 + $0x1390] sm:$0xff]
  %v677 = vld [vmem:[%s1 + $0x1398] sm:$0xff]
  %v678 = vld [vmem:[%s1 + $0x13a0] sm:$0xff]
  %v679 = vld [vmem:[%s1 + $0x13a8] sm:$0xff]
  %v680 = vld [vmem:[%s1 + $0x13b0] sm:$0xff]
  %v681 = vld [vmem:[%s1 + $0x13b8] sm:$0xff]
  %v682 = vld [vmem:[%s1 + $0x13c0] sm:$0xff]
  %v683 = vld [vmem:[%s1 + $0x13c8] sm:$0xff]
  %v684 = vld [vmem:[%s1 + $0x13d0] sm:$0xff]
  %v685 = vld [vmem:[%s1 + $0x13d8] sm:$0xff]
  %v686 = vld [vmem:[%s1 + $0x13e0] sm:$0xff]
  %v687 = vld [vmem:[%s1 + $0x13e8] sm:$0xff]
  %v688 = vld [vmem:[%s1 + $0x13f0] sm:$0xff]
  %v689 = vld [vmem:[%s1 + $0x13f8] sm:$0xff]
  %v690 = vld [vmem:[%s1 + $0x1400] sm:$0xff]
  %v691 = vld [vmem:[%s1 + $0x1408] sm:$0xff]
  %v692 = vld [vmem:[%s1 + $0x1410] sm:$0xff]
  %v693 = vld [vmem:[%s1 + $0x1418] sm:$0xff]
  %v694 = vld [vmem:[%s1 + $0x1420] sm:$0xff]
  %v695 = vld [vmem:[%s1 + $0x1428] sm:$0xff]
  %v696 = vld [vmem:[%s1 + $0x1430] sm:$0xff]
  %v697 = vld [vmem:[%s1 + $0x1438] sm:$0xff]
  %v698 = vld [vmem:[%s1 + $0x1440] sm:$0xff]
  %v699 = vld [vmem:[%s1 + $0x1448] sm:$0xff]
  %v700 = vld [vmem:[%s1 + $0x1450] sm:$0xff]
  %v701 = vld [vmem:[%s1 + $0x1458] sm:$0xff]
  %v702 = vld [vmem:[%s1 + $0x1460] sm:$0xff]
  %v703 = vld [vmem:[%s1 + $0x1468] sm:$0xff]
  %v704 = vld [vmem:[%s1 + $0x1470] sm:$0xff]
  %v705 = vld [vmem:[%s1 + $0x1478] sm:$0xff]
  %v706 = vld [vmem:[%s1 + $0x1480] sm:$0xff]
  %v707 = vld [vmem:[%s1 + $0x1488] sm:$0xff]
  %v708 = vld [vmem:[%s1 + $0x1490] sm:$0xff]
  %v709 = vld [vmem:[%s1 + $0x1498] sm:$0xff]
  %v710 = vld [vmem:[%s1 + $0x14a0] sm:$0xff]
  %v711 = vld [vmem:[%s1 + $0x14a8] sm:$0xff]
  %v712 = vld [vmem:[%s1 + $0x14b0] sm:$0xff]
  %v713 = vld [vmem:[%s1 + $0x14b8] sm:$0xff]
  %v714 = vld [vmem:[%s1 + $0x14c0] sm:$0xff]
  %v715 = vld [vmem:[%s1 + $0x14c8] sm:$0xff]
  %v716 = vld [vmem:[%s1 + $0x14d0] sm:$0xff]
  %v717 = vld [vmem:[%s1 + $0x14d8] sm:$0xff]
  %v718 = vld [vmem:[%s1 + $0x14e0] sm:$0xff]
  %v719 = vld [vmem:[%s1 + $0x14e8] sm:$0xff]
  %v720 = vld [vmem:[%s1 + $0x14f0] sm:$0xff]
  %v721 = vld [vmem:[%s1 + $0x14f8] sm:$0xff]
  %v722 = vld [vmem:[%s1 + $0x1500] sm:$0xff]
  %v723 = vld [vmem:[%s1 + $0x1508] sm:$0xff]
  %v724 = vld [vmem:[%s1 + $0x1510] sm:$0xff]
  %v725 = vld [vmem:[%s1 + $0x1518] sm:$0xff]
  %v726 = vld [vmem:[%s1 + $0x1520] sm:$0xff]
  %v727 = vld [vmem:[%s1 + $0x1528] sm:$0xff]
  %v728 = vld [vmem:[%s1 + $0x1530] sm:$0xff]
  %v729 = vld [vmem:[%s1 + $0x1538] sm:$0xff]
  %v730 = vld [vmem:[%s1 + $0x1540] sm:$0xff]
  %v731 = vld [vmem:[%s1 + $0x1548] sm:$0xff]
  %v732 = vld [vmem:[%s1 + $0x1550] sm:$0xff]
  %v733 = vld [vmem:[%s1 + $0x1558] sm:$0xff]
  %v734 = vld [vmem:[%s1 + $0x1560] sm:$0xff]
  %v735 = vld [vmem:[%s1 + $0x1568] sm:$0xff]
  %v736 = vld [vmem:[%s1 + $0x1570] sm:$0xff]
  %v737 = vld [vmem:[%s1 + $0x1578] sm:$0xff]
  %v738 = vld [vmem:[%s1 + $0x1580] sm:$0xff]
  %v739 = vld [vmem:[%s1 + $0x1588] sm:$0xff]
  %v740 = vld [vmem:[%s1 + $0x1590] sm:$0xff]
  %v741 = vld [vmem:[%s1 + $0x1598] sm:$0xff]
  %v742 = vld [vmem:[%s1 + $0x15a0] sm:$0xff]
  %v743 = vld [vmem:[%s1 + $0x15a8] sm:$0xff]
  %v744 = vld [vmem:[%s1 + $0x15b0] sm:$0xff]
  %v745 = vld [vmem:[%s1 + $0x15b8] sm:$0xff]
  %v746 = vld [vmem:[%s1 + $0x15c0] sm:$0xff]
  %v747 = vld [vmem:[%s1 + $0x15c8] sm:$0xff]
  %v748 = vld [vmem:[%s1 + $0x15d0] sm:$0xff]
  %v749 = vld [vmem:[%s1 + $0x15d8] sm:$0xff]
  %v750 = vld [vmem:[%s1 + $0x15e0] sm:$0xff]
  %v751 = vld [vmem:[%s1 + $0x15e8] sm:$0xff]
  %v752 = vld [vmem:[%s1 + $0x15f0] sm:$0xff]
  %v753 = vld [vmem:[%s1 + $0x15f8] sm:$0xff]
  %v754 = vld [vmem:[%s1 + $0x1600] sm:$0xff]
  %v755 = vld [vmem:[%s1 + $0x1608] sm:$0xff]
  %v756 = vld [vmem:[%s1 + $0x1610] sm:$0xff]
  %v757 = vld [vmem:[%s1 + $0x1618] sm:$0xff]
  %v758 = vld [vmem:[%s1 + $0x1620] sm:$0xff]
  %v759 = vld [vmem:[%s1 + $0x1628] sm:$0xff]
  %v760 = vld [vmem:[%s1 + $0x1630] sm:$0xff]
  %v761 = vld [vmem:[%s1 + $0x1638] sm:$0xff]
  %v762 = vld [vmem:[%s1 + $0x1640] sm:$0xff]
  %v763 = vld [vmem:[%s1 + $0x1648] sm:$0xff]
  %v764 = vld [vmem:[%s1 + $0x1650] sm:$0xff]
  %v765 = vld [vmem:[%s1 + $0x1658] sm:$0xff]
  %v766 = vld [vmem:[%s1 + $0x1660] sm:$0xff]
  %v767 = vld [vmem:[%s1 + $0x1668] sm:$0xff]
  %v768 = vld [vmem:[%s1 + $0x1670] sm:$0xff]
  %v769 = vld [vmem:[%s1 + $0x1678] sm:$0xff]
  %v770 = vld [vmem:[%s1 + $0x1680] sm:$0xff]
  %v771 = vld [vmem:[%s1 + $0x1688] sm:$0xff]
  %v772 = vld [vmem:[%s1 + $0x1690] sm:$0xff]
  %v773 = vld [vmem:[%s1 + $0x1698] sm:$0xff]
  %v774 = vld [vmem:[%s1 + $0x16a0] sm:$0xff]
  %v775 = vld [vmem:[%s1 + $0x16a8] sm:$0xff]
  %v776 = vld [vmem:[%s1 + $0x16b0] sm:$0xff]
  %v777 = vld [vmem:[%s1 + $0x16b8] sm:$0xff]
  %v778 = vld [vmem:[%s1 + $0x16c0] sm:$0xff]
  %v779 = vld [vmem:[%s1 + $0x16c8] sm:$0xff]
  %v780 = vld [vmem:[%s1 + $0x16d0] sm:$0xff]
  %v781 = vld [vmem:[%s1 + $0x16d8] sm:$0xff]
  %v782 = vld [vmem:[%s1 + $0x16e0] sm:$0xff]
  %v783 = vld [vmem:[%s1 + $0x16e8] sm:$0xff]
  %v784 = vld [vmem:[%s1 + $0x16f0] sm:$0xff]
  %v785 = vld [vmem:[%s1 + $0x16f8] sm:$0xff]
  %v786 = vld [vmem:[%s1 + $0x1700] sm:$0xff]
  %v787 = vld [vmem:[%s1 + $0x1708] sm:$0xff]
  %v788 = vld [vmem:[%s1 + $0x1710] sm:$0xff]
  %v789 = vld [vmem:[%s1 + $0x1718] sm:$0xff]
  %v790 = vld [vmem:[%s1 + $0x1720] sm:$0xff]
  %v791 = vld [vmem:[%s1 + $0x1728] sm:$0xff]
  %v792 = vld [vmem:[%s1 + $0x1730] sm:$0xff]
  %v793 = vld [vmem:[%s1 + $0x1738] sm:$0xff]
  %v794 = vld [vmem:[%s1 + $0x1740] sm:$0xff]
  %v795 = vld [vmem:[%s1 + $0x1748] sm:$0xff]
  %v796 = vld [vmem:[%s1 + $0x1750] sm:$0xff]
  %v797 = vld [vmem:[%s1 + $0x1758] sm:$0xff]
  %v798 = vld [vmem:[%s1 + $0x1760] sm:$0xff]
  %v799 = vld [vmem:[%s1 + $0x1768] sm:$0xff]
  %v800 = vld [vmem:[%s1 + $0x1770] sm:$0xff]
  %v801 = vld [vmem:[%s1 + $0x1778] sm:$0xff]
  %v802 = vld [vmem:[%s1 + $0x1780] sm:$0xff]
  %v803 = vld [vmem:[%s1 + $0x1788] sm:$0xff]
  %v804 = vld [vmem:[%s1 + $0x1790] sm:$0xff]
  %v805 = vld [vmem:[%s1 + $0x1798] sm:$0xff]
  %v806 = vld [vmem:[%s1 + $0x17a0] sm:$0xff]
  %v807 = vld [vmem:[%s1 + $0x17a8] sm:$0xff]
  %v808 = vld [vmem:[%s1 + $0x17b0] sm:$0xff]
  %v809 = vld [vmem:[%s1 + $0x17b8] sm:$0xff]
  %v810 = vld [vmem:[%s1 + $0x17c0] sm:$0xff]
  %v811 = vld [vmem:[%s1 + $0x17c8] sm:$0xff]
  %v812 = vld [vmem:[%s1 + $0x17d0] sm:$0xff]
  %v813 = vld [vmem:[%s1 + $0x17d8] sm:$0xff]
  %v814 = vld [vmem:[%s1 + $0x17e0] sm:$0xff]
  %v815 = vld [vmem:[%s1 + $0x17e8] sm:$0xff]
  %v816 = vld [vmem:[%s1 + $0x17f0] sm:$0xff]
  %v817 = vld [vmem:[%s1 + $0x17f8] sm:$0xff]
  %v818 = vld [vmem:[%s2] sm:$0x3]
  %v820 = vlaneseq
  %v821 = vshrl.u32 %v820, 7
  %v822 = vsub.s32 0, %v821
  %v823 = vrot.slane %v818, %v822
  %v824 = vlaneseq
  %v825 = vshrl.u32 %v824, 7
  %v826 = vsub.s32 1, %v825
  %v827 = vrot.slane %v818, %v826
  %830 = vmatprep.subr.mxu0 %v51
  %831 = vmatpush1.msra.mxu0 %v50
  %832 = vmatprep.subr.mxu0 %v53
  %833 = vmatpush1.msra.mxu0 %v52
  %834 = vmatprep.subr.mxu0 %v55
  %835 = vmatpush1.msra.mxu0 %v54
  %836 = vmatprep.subr.mxu0 %v57
  %837 = vmatpush1.msra.mxu0 %v56
  %838 = vmatprep.subr.mxu0 %v59
  %839 = vmatpush1.msra.mxu0 %v58
  %840 = vmatprep.subr.mxu0 %v61
  %841 = vmatpush1.msra.mxu0 %v60
  %842 = vmatprep.subr.mxu0 %v63
  %843 = vmatpush1.msra.mxu0 %v62
  %844 = vmatprep.subr.mxu0 %v65
  %845 = vmatpush1.msra.mxu0 %v64
  %846 = vmatprep.subr.mxu0 %v67
  %847 = vmatpush1.msra.mxu0 %v66
  %848 = vmatprep.subr.mxu0 %v69
  %849 = vmatpush1.msra.mxu0 %v68
  %850 = vmatprep.subr.mxu0 %v71
  %851 = vmatpush1.msra.mxu0 %v70
  %852 = vmatprep.subr.mxu0 %v73
  %853 = vmatpush1.msra.mxu0 %v72
  %854 = vmatprep.subr.mxu0 %v75
  %855 = vmatpush1.msra.mxu0 %v74
  %856 = vmatprep.subr.mxu0 %v77
  %857 = vmatpush1.msra.mxu0 %v76
  %858 = vmatprep.subr.mxu0 %v79
  %859 = vmatpush1.msra.mxu0 %v78
  %860 = vmatprep.subr.mxu0 %v81
  %861 = vmatpush1.msra.mxu0 %v80
  %862 = vmatprep.subr.mxu0 %v83
  %863 = vmatpush1.msra.mxu0 %v82
  %864 = vmatprep.subr.mxu0 %v85
  %865 = vmatpush1.msra.mxu0 %v84
  %866 = vmatprep.subr.mxu0 %v87
  %867 = vmatpush1.msra.mxu0 %v86
  %868 = vmatprep.subr.mxu0 %v89
  %869 = vmatpush1.msra.mxu0 %v88
  %870 = vmatprep.subr.mxu0 %v91
  %871 = vmatpush1.msra.mxu0 %v90
  %872 = vmatprep.subr.mxu0 %v93
  %873 = vmatpush1.msra.mxu0 %v92
  %874 = vmatprep.subr.mxu0 %v95
  %875 = vmatpush1.msra.mxu0 %v94
  %876 = vmatprep.subr.mxu0 %v97
  %877 = vmatpush1.msra.mxu0 %v96
  %878 = vmatprep.subr.mxu0 %v99
  %879 = vmatpush1.msra.mxu0 %v98
  %880 = vmatprep.subr.mxu0 %v101
  %881 = vmatpush1.msra.mxu0 %v100
  %882 = vmatprep.subr.mxu0 %v103
  %883 = vmatpush1.msra.mxu0 %v102
  %884 = vmatprep.subr.mxu0 %v105
  %885 = vmatpush1.msra.mxu0 %v104
  %886 = vmatprep.subr.mxu0 %v107
  %887 = vmatpush1.msra.mxu0 %v106
  %888 = vmatprep.subr.mxu0 %v109
  %889 = vmatpush1.msra.mxu0 %v108
  %890 = vmatprep.subr.mxu0 %v111
  %891 = vmatpush1.msra.mxu0 %v110
  %892 = vmatprep.subr.mxu0 %v113
  %893 = vmatpush1.msra.mxu0 %v112
  %894 = vmatprep.mubr.f32.mxu0 %v27
  %895 = vmatmul.mubr.f32.gmra.mrb[0].mxu0 %v26
  %v896 = vpop.f32.mrb[0].mxu0
  %v897 = vadd.f32 %v823, %v896
  %v898 = vpop.f32.mrb[0].mxu0
  %v899 = vadd.f32 %v827, %v898
  %900 = vdwg.mxu0
  %901 = vmatprep.subr.mxu0 %v115
  %902 = vmatpush1.msra.mxu0 %v114
  %903 = vmatprep.subr.mxu0 %v117
  %904 = vmatpush1.msra.mxu0 %v116
  %905 = vmatprep.subr.mxu0 %v119
  %906 = vmatpush1.msra.mxu0 %v118
  %907 = vmatprep.subr.mxu0 %v121
  %908 = vmatpush1.msra.mxu0 %v120
  %909 = vmatprep.subr.mxu0 %v123
  %910 = vmatpush1.msra.mxu0 %v122
  %911 = vmatprep.subr.mxu0 %v125
  %912 = vmatpush1.msra.mxu0 %v124
  %913 = vmatprep.subr.mxu0 %v127
  %914 = vmatpush1.msra.mxu0 %v126
  %915 = vmatprep.subr.mxu0 %v129
  %916 = vmatpush1.msra.mxu0 %v128
  %917 = vmatprep.subr.mxu0 %v131
  %918 = vmatpush1.msra.mxu0 %v130
  %919 = vmatprep.subr.mxu0 %v133
  %920 = vmatpush1.msra.mxu0 %v132
  %921 = vmatprep.subr.mxu0 %v135
  %922 = vmatpush1.msra.mxu0 %v134
  %923 = vmatprep.subr.mxu0 %v137
  %924 = vmatpush1.msra.mxu0 %v136
  %925 = vmatprep.subr.mxu0 %v139
  %926 = vmatpush1.msra.mxu0 %v138
  %927 = vmatprep.subr.mxu0 %v141
  %928 = vmatpush1.msra.mxu0 %v140
  %929 = vmatprep.subr.mxu0 %v143
  %930 = vmatpush1.msra.mxu0 %v142
  %931 = vmatprep.subr.mxu0 %v145
  %932 = vmatpush1.msra.mxu0 %v144
  %933 = vmatprep.subr.mxu0 %v147
  %934 = vmatpush1.msra.mxu0 %v146
  %935 = vmatprep.subr.mxu0 %v149
  %936 = vmatpush1.msra.mxu0 %v148
  %937 = vmatprep.subr.mxu0 %v151
  %938 = vmatpush1.msra.mxu0 %v150
  %939 = vmatprep.subr.mxu0 %v153
  %940 = vmatpush1.msra.mxu0 %v152
  %941 = vmatprep.subr.mxu0 %v155
  %942 = vmatpush1.msra.mxu0 %v154
  %943 = vmatprep.subr.mxu0 %v157
  %944 = vmatpush1.msra.mxu0 %v156
  %945 = vmatprep.subr.mxu0 %v159
  %946 = vmatpush1.msra.mxu0 %v158
  %947 = vmatprep.subr.mxu0 %v161
  %948 = vmatpush1.msra.mxu0 %v160
  %949 = vmatprep.subr.mxu0 %v163
  %950 = vmatpush1.msra.mxu0 %v162
  %951 = vmatprep.subr.mxu0 %v165
  %952 = vmatpush1.msra.mxu0 %v164
  %953 = vmatprep.subr.mxu0 %v167
  %954 = vmatpush1.msra.mxu0 %v166
  %955 = vmatprep.subr.mxu0 %v169
  %956 = vmatpush1.msra.mxu0 %v168
  %957 = vmatprep.subr.mxu0 %v171
  %958 = vmatpush1.msra.mxu0 %v170
  %959 = vmatprep.subr.mxu0 %v173
  %960 = vmatpush1.msra.mxu0 %v172
  %961 = vmatprep.subr.mxu0 %v175
  %962 = vmatpush1.msra.mxu0 %v174
  %963 = vmatprep.subr.mxu0 %v177
  %964 = vmatpush1.msra.mxu0 %v176
  %965 = vmatprep.mubr.f32.mxu0 %v29
  %966 = vmatmul.mubr.f32.gmra.mrb[0].mxu0 %v28
  %v967 = vpop.f32.mrb[0].mxu0
  %v968 = vadd.f32 %v897, %v967
  %v969 = vpop.f32.mrb[0].mxu0
  %v970 = vadd.f32 %v899, %v969
  %971 = vdwg.mxu0
  %972 = vmatprep.subr.mxu0 %v179
  %973 = vmatpush1.msra.mxu0 %v178
  %974 = vmatprep.subr.mxu0 %v181
  %975 = vmatpush1.msra.mxu0 %v180
  %976 = vmatprep.subr.mxu0 %v183
  %977 = vmatpush1.msra.mxu0 %v182
  %978 = vmatprep.subr.mxu0 %v185
  %979 = vmatpush1.msra.mxu0 %v184
  %980 = vmatprep.subr.mxu0 %v187
  %981 = vmatpush1.msra.mxu0 %v186
  %982 = vmatprep.subr.mxu0 %v189
  %983 = vmatpush1.msra.mxu0 %v188
  %984 = vmatprep.subr.mxu0 %v191
  %985 = vmatpush1.msra.mxu0 %v190
  %986 = vmatprep.subr.mxu0 %v193
  %987 = vmatpush1.msra.mxu0 %v192
  %988 = vmatprep.subr.mxu0 %v195
  %989 = vmatpush1.msra.mxu0 %v194
  %990 = vmatprep.subr.mxu0 %v197
  %991 = vmatpush1.msra.mxu0 %v196
  %992 = vmatprep.subr.mxu0 %v199
  %993 = vmatpush1.msra.mxu0 %v198
  %994 = vmatprep.subr.mxu0 %v201
  %995 = vmatpush1.msra.mxu0 %v200
  %996 = vmatprep.subr.mxu0 %v203
  %997 = vmatpush1.msra.mxu0 %v202
  %998 = vmatprep.subr.mxu0 %v205
  %999 = vmatpush1.msra.mxu0 %v204
  %1000 = vmatprep.subr.mxu0 %v207
  %1001 = vmatpush1.msra.mxu0 %v206
  %1002 = vmatprep.subr.mxu0 %v209
  %1003 = vmatpush1.msra.mxu0 %v208
  %1004 = vmatprep.subr.mxu0 %v211
  %1005 = vmatpush1.msra.mxu0 %v210
  %1006 = vmatprep.subr.mxu0 %v213
  %1007 = vmatpush1.msra.mxu0 %v212
  %1008 = vmatprep.subr.mxu0 %v215
  %1009 = vmatpush1.msra.mxu0 %v214
  %1010 = vmatprep.subr.mxu0 %v217
  %1011 = vmatpush1.msra.mxu0 %v216
  %1012 = vmatprep.subr.mxu0 %v219
  %1013 = vmatpush1.msra.mxu0 %v218
  %1014 = vmatprep.subr.mxu0 %v221
  %1015 = vmatpush1.msra.mxu0 %v220
  %1016 = vmatprep.subr.mxu0 %v223
  %1017 = vmatpush1.msra.mxu0 %v222
  %1018 = vmatprep.subr.mxu0 %v225
  %1019 = vmatpush1.msra.mxu0 %v224
  %1020 = vmatprep.subr.mxu0 %v227
  %1021 = vmatpush1.msra.mxu0 %v226
  %1022 = vmatprep.subr.mxu0 %v229
  %1023 = vmatpush1.msra.mxu0 %v228
  %1024 = vmatprep.subr.mxu0 %v231
  %1025 = vmatpush1.msra.mxu0 %v230
  %1026 = vmatprep.subr.mxu0 %v233
  %1027 = vmatpush1.msra.mxu0 %v232
  %1028 = vmatprep.subr.mxu0 %v235
  %1029 = vmatpush1.msra.mxu0 %v234
  %1030 = vmatprep.subr.mxu0 %v237
  %1031 = vmatpush1.msra.mxu0 %v236
  %1032 = vmatprep.subr.mxu0 %v239
  %1033 = vmatpush1.msra.mxu0 %v238
  %1034 = vmatprep.subr.mxu0 %v241
  %1035 = vmatpush1.msra.mxu0 %v240
  %1036 = vmatprep.mubr.f32.mxu0 %v31
  %1037 = vmatmul.mubr.f32.gmra.mrb[0].mxu0 %v30
  %v1038 = vpop.f32.mrb[0].mxu0
  %v1039 = vadd.f32 %v968, %v1038
  %v1040 = vpop.f32.mrb[0].mxu0
  %v1041 = vadd.f32 %v970, %v1040
  %1042 = vdwg.mxu0
  %1043 = vmatprep.subr.mxu0 %v243
  %1044 = vmatpush1.msra.mxu0 %v242
  %1045 = vmatprep.subr.mxu0 %v245
  %1046 = vmatpush1.msra.mxu0 %v244
  %1047 = vmatprep.subr.mxu0 %v247
  %1048 = vmatpush1.msra.mxu0 %v246
  %1049 = vmatprep.subr.mxu0 %v249
  %1050 = vmatpush1.msra.mxu0 %v248
  %1051 = vmatprep.subr.mxu0 %v251
  %1052 = vmatpush1.msra.mxu0 %v250
  %1053 = vmatprep.subr.mxu0 %v253
  %1054 = vmatpush1.msra.mxu0 %v252
  %1055 = vmatprep.subr.mxu0 %v255
  %1056 = vmatpush1.msra.mxu0 %v254
  %1057 = vmatprep.subr.mxu0 %v257
  %1058 = vmatpush1.msra.mxu0 %v256
  %1059 = vmatprep.subr.mxu0 %v259
  %1060 = vmatpush1.msra.mxu0 %v258
  %1061 = vmatprep.subr.mxu0 %v261
  %1062 = vmatpush1.msra.mxu0 %v260
  %1063 = vmatprep.subr.mxu0 %v263
  %1064 = vmatpush1.msra.mxu0 %v262
  %1065 = vmatprep.subr.mxu0 %v265
  %1066 = vmatpush1.msra.mxu0 %v264
  %1067 = vmatprep.subr.mxu0 %v267
  %1068 = vmatpush1.msra.mxu0 %v266
  %1069 = vmatprep.subr.mxu0 %v269
  %1070 = vmatpush1.msra.mxu0 %v268
  %1071 = vmatprep.subr.mxu0 %v271
  %1072 = vmatpush1.msra.mxu0 %v270
  %1073 = vmatprep.subr.mxu0 %v273
  %1074 = vmatpush1.msra.mxu0 %v272
  %1075 = vmatprep.subr.mxu0 %v275
  %1076 = vmatpush1.msra.mxu0 %v274
  %1077 = vmatprep.subr.mxu0 %v277
  %1078 = vmatpush1.msra.mxu0 %v276
  %1079 = vmatprep.subr.mxu0 %v279
  %1080 = vmatpush1.msra.mxu0 %v278
  %1081 = vmatprep.subr.mxu0 %v281
  %1082 = vmatpush1.msra.mxu0 %v280
  %1083 = vmatprep.subr.mxu0 %v283
  %1084 = vmatpush1.msra.mxu0 %v282
  %1085 = vmatprep.subr.mxu0 %v285
  %1086 = vmatpush1.msra.mxu0 %v284
  %1087 = vmatprep.subr.mxu0 %v287
  %1088 = vmatpush1.msra.mxu0 %v286
  %1089 = vmatprep.subr.mxu0 %v289
  %1090 = vmatpush1.msra.mxu0 %v288
  %1091 = vmatprep.subr.mxu0 %v291
  %1092 = vmatpush1.msra.mxu0 %v290
  %1093 = vmatprep.subr.mxu0 %v293
  %1094 = vmatpush1.msra.mxu0 %v292
  %1095 = vmatprep.subr.mxu0 %v295
  %1096 = vmatpush1.msra.mxu0 %v294
  %1097 = vmatprep.subr.mxu0 %v297
  %1098 = vmatpush1.msra.mxu0 %v296
  %1099 = vmatprep.subr.mxu0 %v299
  %1100 = vmatpush1.msra.mxu0 %v298
  %1101 = vmatprep.subr.mxu0 %v301
  %1102 = vmatpush1.msra.mxu0 %v300
  %1103 = vmatprep.subr.mxu0 %v303
  %1104 = vmatpush1.msra.mxu0 %v302
  %1105 = vmatprep.subr.mxu0 %v305
  %1106 = vmatpush1.msra.mxu0 %v304
  %1107 = vmatprep.mubr.f32.mxu0 %v33
  %1108 = vmatmul.mubr.f32.gmra.mrb[0].mxu0 %v32
  %v1109 = vpop.f32.mrb[0].mxu0
  %v1110 = vadd.f32 %v1039, %v1109
  %v1111 = vpop.f32.mrb[0].mxu0
  %v1112 = vadd.f32 %v1041, %v1111
  %1113 = vdwg.mxu0
  %1114 = vmatprep.subr.mxu0 %v307
  %1115 = vmatpush1.msra.mxu0 %v306
  %1116 = vmatprep.subr.mxu0 %v309
  %1117 = vmatpush1.msra.mxu0 %v308
  %1118 = vmatprep.subr.mxu0 %v311
  %1119 = vmatpush1.msra.mxu0 %v310
  %1120 = vmatprep.subr.mxu0 %v313
  %1121 = vmatpush1.msra.mxu0 %v312
  %1122 = vmatprep.subr.mxu0 %v315
  %1123 = vmatpush1.msra.mxu0 %v314
  %1124 = vmatprep.subr.mxu0 %v317
  %1125 = vmatpush1.msra.mxu0 %v316
  %1126 = vmatprep.subr.mxu0 %v319
  %1127 = vmatpush1.msra.mxu0 %v318
  %1128 = vmatprep.subr.mxu0 %v321
  %1129 = vmatpush1.msra.mxu0 %v320
  %1130 = vmatprep.subr.mxu0 %v323
  %1131 = vmatpush1.msra.mxu0 %v322
  %1132 = vmatprep.subr.mxu0 %v325
  %1133 = vmatpush1.msra.mxu0 %v324
  %1134 = vmatprep.subr.mxu0 %v327
  %1135 = vmatpush1.msra.mxu0 %v326
  %1136 = vmatprep.subr.mxu0 %v329
  %1137 = vmatpush1.msra.mxu0 %v328
  %1138 = vmatprep.subr.mxu0 %v331
  %1139 = vmatpush1.msra.mxu0 %v330
  %1140 = vmatprep.subr.mxu0 %v333
  %1141 = vmatpush1.msra.mxu0 %v332
  %1142 = vmatprep.subr.mxu0 %v335
  %1143 = vmatpush1.msra.mxu0 %v334
  %1144 = vmatprep.subr.mxu0 %v337
  %1145 = vmatpush1.msra.mxu0 %v336
  %1146 = vmatprep.subr.mxu0 %v339
  %1147 = vmatpush1.msra.mxu0 %v338
  %1148 = vmatprep.subr.mxu0 %v341
  %1149 = vmatpush1.msra.mxu0 %v340
  %1150 = vmatprep.subr.mxu0 %v343
  %1151 = vmatpush1.msra.mxu0 %v342
  %1152 = vmatprep.subr.mxu0 %v345
  %1153 = vmatpush1.msra.mxu0 %v344
  %1154 = vmatprep.subr.mxu0 %v347
  %1155 = vmatpush1.msra.mxu0 %v346
  %1156 = vmatprep.subr.mxu0 %v349
  %1157 = vmatpush1.msra.mxu0 %v348
  %1158 = vmatprep.subr.mxu0 %v351
  %1159 = vmatpush1.msra.mxu0 %v350
  %1160 = vmatprep.subr.mxu0 %v353
  %1161 = vmatpush1.msra.mxu0 %v352
  %1162 = vmatprep.subr.mxu0 %v355
  %1163 = vmatpush1.msra.mxu0 %v354
  %1164 = vmatprep.subr.mxu0 %v357
  %1165 = vmatpush1.msra.mxu0 %v356
  %1166 = vmatprep.subr.mxu0 %v359
  %1167 = vmatpush1.msra.mxu0 %v358
  %1168 = vmatprep.subr.mxu0 %v361
  %1169 = vmatpush1.msra.mxu0 %v360
  %1170 = vmatprep.subr.mxu0 %v363
  %1171 = vmatpush1.msra.mxu0 %v362
  %1172 = vmatprep.subr.mxu0 %v365
  %1173 = vmatpush1.msra.mxu0 %v364
  %1174 = vmatprep.subr.mxu0 %v367
  %1175 = vmatpush1.msra.mxu0 %v366
  %1176 = vmatprep.subr.mxu0 %v369
  %1177 = vmatpush1.msra.mxu0 %v368
  %1178 = vmatprep.mubr.f32.mxu0 %v35
  %1179 = vmatmul.mubr.f32.gmra.mrb[0].mxu0 %v34
  %v1180 = vpop.f32.mrb[0].mxu0
  %v1181 = vadd.f32 %v1110, %v1180
  %v1182 = vpop.f32.mrb[0].mxu0
  %v1183 = vadd.f32 %v1112, %v1182
  %1184 = vdwg.mxu0
  %1185 = vmatprep.subr.mxu0 %v371
  %1186 = vmatpush1.msra.mxu0 %v370
  %1187 = vmatprep.subr.mxu0 %v373
  %1188 = vmatpush1.msra.mxu0 %v372
  %1189 = vmatprep.subr.mxu0 %v375
  %1190 = vmatpush1.msra.mxu0 %v374
  %1191 = vmatprep.subr.mxu0 %v377
  %1192 = vmatpush1.msra.mxu0 %v376
  %1193 = vmatprep.subr.mxu0 %v379
  %1194 = vmatpush1.msra.mxu0 %v378
  %1195 = vmatprep.subr.mxu0 %v381
  %1196 = vmatpush1.msra.mxu0 %v380
  %1197 = vmatprep.subr.mxu0 %v383
  %1198 = vmatpush1.msra.mxu0 %v382
  %1199 = vmatprep.subr.mxu0 %v385
  %1200 = vmatpush1.msra.mxu0 %v384
  %1201 = vmatprep.subr.mxu0 %v387
  %1202 = vmatpush1.msra.mxu0 %v386
  %1203 = vmatprep.subr.mxu0 %v389
  %1204 = vmatpush1.msra.mxu0 %v388
  %1205 = vmatprep.subr.mxu0 %v391
  %1206 = vmatpush1.msra.mxu0 %v390
  %1207 = vmatprep.subr.mxu0 %v393
  %1208 = vmatpush1.msra.mxu0 %v392
  %1209 = vmatprep.subr.mxu0 %v395
  %1210 = vmatpush1.msra.mxu0 %v394
  %1211 = vmatprep.subr.mxu0 %v397
  %1212 = vmatpush1.msra.mxu0 %v396
  %1213 = vmatprep.subr.mxu0 %v399
  %1214 = vmatpush1.msra.mxu0 %v398
  %1215 = vmatprep.subr.mxu0 %v401
  %1216 = vmatpush1.msra.mxu0 %v400
  %1217 = vmatprep.subr.mxu0 %v403
  %1218 = vmatpush1.msra.mxu0 %v402
  %1219 = vmatprep.subr.mxu0 %v405
  %1220 = vmatpush1.msra.mxu0 %v404
  %1221 = vmatprep.subr.mxu0 %v407
  %1222 = vmatpush1.msra.mxu0 %v406
  %1223 = vmatprep.subr.mxu0 %v409
  %1224 = vmatpush1.msra.mxu0 %v408
  %1225 = vmatprep.subr.mxu0 %v411
  %1226 = vmatpush1.msra.mxu0 %v410
  %1227 = vmatprep.subr.mxu0 %v413
  %1228 = vmatpush1.msra.mxu0 %v412
  %1229 = vmatprep.subr.mxu0 %v415
  %1230 = vmatpush1.msra.mxu0 %v414
  %1231 = vmatprep.subr.mxu0 %v417
  %1232 = vmatpush1.msra.mxu0 %v416
  %1233 = vmatprep.subr.mxu0 %v419
  %1234 = vmatpush1.msra.mxu0 %v418
  %1235 = vmatprep.subr.mxu0 %v421
  %1236 = vmatpush1.msra.mxu0 %v420
  %1237 = vmatprep.subr.mxu0 %v423
  %1238 = vmatpush1.msra.mxu0 %v422
  %1239 = vmatprep.subr.mxu0 %v425
  %1240 = vmatpush1.msra.mxu0 %v424
  %1241 = vmatprep.subr.mxu0 %v427
  %1242 = vmatpush1.msra.mxu0 %v426
  %1243 = vmatprep.subr.mxu0 %v429
  %1244 = vmatpush1.msra.mxu0 %v428
  %1245 = vmatprep.subr.mxu0 %v431
  %1246 = vmatpush1.msra.mxu0 %v430
  %1247 = vmatprep.subr.mxu0 %v433
  %1248 = vmatpush1.msra.mxu0 %v432
  %1249 = vmatprep.mubr.f32.mxu0 %v37
  %1250 = vmatmul.mubr.f32.gmra.mrb[0].mxu0 %v36
  %v1251 = vpop.f32.mrb[0].mxu0
  %v1252 = vadd.f32 %v1181, %v1251
  %v1253 = vpop.f32.mrb[0].mxu0
  %v1254 = vadd.f32 %v1183, %v1253
  %1255 = vdwg.mxu0
  %1256 = vmatprep.subr.mxu0 %v435
  %1257 = vmatpush1.msra.mxu0 %v434
  %1258 = vmatprep.subr.mxu0 %v437
  %1259 = vmatpush1.msra.mxu0 %v436
  %1260 = vmatprep.subr.mxu0 %v439
  %1261 = vmatpush1.msra.mxu0 %v438
  %1262 = vmatprep.subr.mxu0 %v441
  %1263 = vmatpush1.msra.mxu0 %v440
  %1264 = vmatprep.subr.mxu0 %v443
  %1265 = vmatpush1.msra.mxu0 %v442
  %1266 = vmatprep.subr.mxu0 %v445
  %1267 = vmatpush1.msra.mxu0 %v444
  %1268 = vmatprep.subr.mxu0 %v447
  %1269 = vmatpush1.msra.mxu0 %v446
  %1270 = vmatprep.subr.mxu0 %v449
  %1271 = vmatpush1.msra.mxu0 %v448
  %1272 = vmatprep.subr.mxu0 %v451
  %1273 = vmatpush1.msra.mxu0 %v450
  %1274 = vmatprep.subr.mxu0 %v453
  %1275 = vmatpush1.msra.mxu0 %v452
  %1276 = vmatprep.subr.mxu0 %v455
  %1277 = vmatpush1.msra.mxu0 %v454
  %1278 = vmatprep.subr.mxu0 %v457
  %1279 = vmatpush1.msra.mxu0 %v456
  %1280 = vmatprep.subr.mxu0 %v459
  %1281 = vmatpush1.msra.mxu0 %v458
  %1282 = vmatprep.subr.mxu0 %v461
  %1283 = vmatpush1.msra.mxu0 %v460
  %1284 = vmatprep.subr.mxu0 %v463
  %1285 = vmatpush1.msra.mxu0 %v462
  %1286 = vmatprep.subr.mxu0 %v465
  %1287 = vmatpush1.msra.mxu0 %v464
  %1288 = vmatprep.subr.mxu0 %v467
  %1289 = vmatpush1.msra.mxu0 %v466
  %1290 = vmatprep.subr.mxu0 %v469
  %1291 = vmatpush1.msra.mxu0 %v468
  %1292 = vmatprep.subr.mxu0 %v471
  %1293 = vmatpush1.msra.mxu0 %v470
  %1294 = vmatprep.subr.mxu0 %v473
  %1295 = vmatpush1.msra.mxu0 %v472
  %1296 = vmatprep.subr.mxu0 %v475
  %1297 = vmatpush1.msra.mxu0 %v474
  %1298 = vmatprep.subr.mxu0 %v477
  %1299 = vmatpush1.msra.mxu0 %v476
  %1300 = vmatprep.subr.mxu0 %v479
  %1301 = vmatpush1.msra.mxu0 %v478
  %1302 = vmatprep.subr.mxu0 %v481
  %1303 = vmatpush1.msra.mxu0 %v480
  %1304 = vmatprep.subr.mxu0 %v483
  %1305 = vmatpush1.msra.mxu0 %v482
  %1306 = vmatprep.subr.mxu0 %v485
  %1307 = vmatpush1.msra.mxu0 %v484
  %1308 = vmatprep.subr.mxu0 %v487
  %1309 = vmatpush1.msra.mxu0 %v486
  %1310 = vmatprep.subr.mxu0 %v489
  %1311 = vmatpush1.msra.mxu0 %v488
  %1312 = vmatprep.subr.mxu0 %v491
  %1313 = vmatpush1.msra.mxu0 %v490
  %1314 = vmatprep.subr.mxu0 %v493
  %1315 = vmatpush1.msra.mxu0 %v492
  %1316 = vmatprep.subr.mxu0 %v495
  %1317 = vmatpush1.msra.mxu0 %v494
  %1318 = vmatprep.subr.mxu0 %v497
  %1319 = vmatpush1.msra.mxu0 %v496
  %1320 = vmatprep.mubr.f32.mxu0 %v39
  %1321 = vmatmul.mubr.f32.gmra.mrb[0].mxu0 %v38
  %v1322 = vpop.f32.mrb[0].mxu0
  %v1323 = vadd.f32 %v1252, %v1322
  %v1324 = vpop.f32.mrb[0].mxu0
  %v1325 = vadd.f32 %v1254, %v1324
  %1326 = vdwg.mxu0
  %1327 = vmatprep.subr.mxu0 %v499
  %1328 = vmatpush1.msra.mxu0 %v498
  %1329 = vmatprep.subr.mxu0 %v501
  %1330 = vmatpush1.msra.mxu0 %v500
  %1331 = vmatprep.subr.mxu0 %v503
  %1332 = vmatpush1.msra.mxu0 %v502
  %1333 = vmatprep.subr.mxu0 %v505
  %1334 = vmatpush1.msra.mxu0 %v504
  %1335 = vmatprep.subr.mxu0 %v507
  %1336 = vmatpush1.msra.mxu0 %v506
  %1337 = vmatprep.subr.mxu0 %v509
  %1338 = vmatpush1.msra.mxu0 %v508
  %1339 = vmatprep.subr.mxu0 %v511
  %1340 = vmatpush1.msra.mxu0 %v510
  %1341 = vmatprep.subr.mxu0 %v513
  %1342 = vmatpush1.msra.mxu0 %v512
  %1343 = vmatprep.subr.mxu0 %v515
  %1344 = vmatpush1.msra.mxu0 %v514
  %1345 = vmatprep.subr.mxu0 %v517
  %1346 = vmatpush1.msra.mxu0 %v516
  %1347 = vmatprep.subr.mxu0 %v519
  %1348 = vmatpush1.msra.mxu0 %v518
  %1349 = vmatprep.subr.mxu0 %v521
  %1350 = vmatpush1.msra.mxu0 %v520
  %1351 = vmatprep.subr.mxu0 %v523
  %1352 = vmatpush1.msra.mxu0 %v522
  %1353 = vmatprep.subr.mxu0 %v525
  %1354 = vmatpush1.msra.mxu0 %v524
  %1355 = vmatprep.subr.mxu0 %v527
  %1356 = vmatpush1.msra.mxu0 %v526
  %1357 = vmatprep.subr.mxu0 %v529
  %1358 = vmatpush1.msra.mxu0 %v528
  %1359 = vmatprep.subr.mxu0 %v531
  %1360 = vmatpush1.msra.mxu0 %v530
  %1361 = vmatprep.subr.mxu0 %v533
  %1362 = vmatpush1.msra.mxu0 %v532
  %1363 = vmatprep.subr.mxu0 %v535
  %1364 = vmatpush1.msra.mxu0 %v534
  %1365 = vmatprep.subr.mxu0 %v537
  %1366 = vmatpush1.msra.mxu0 %v536
  %1367 = vmatprep.subr.mxu0 %v539
  %1368 = vmatpush1.msra.mxu0 %v538
  %1369 = vmatprep.subr.mxu0 %v541
  %1370 = vmatpush1.msra.mxu0 %v540
  %1371 = vmatprep.subr.mxu0 %v543
  %1372 = vmatpush1.msra.mxu0 %v542
  %1373 = vmatprep.subr.mxu0 %v545
  %1374 = vmatpush1.msra.mxu0 %v544
  %1375 = vmatprep.subr.mxu0 %v547
  %1376 = vmatpush1.msra.mxu0 %v546
  %1377 = vmatprep.subr.mxu0 %v549
  %1378 = vmatpush1.msra.mxu0 %v548
  %1379 = vmatprep.subr.mxu0 %v551
  %1380 = vmatpush1.msra.mxu0 %v550
  %1381 = vmatprep.subr.mxu0 %v553
  %1382 = vmatpush1.msra.mxu0 %v552
  %1383 = vmatprep.subr.mxu0 %v555
  %1384 = vmatpush1.msra.mxu0 %v554
  %1385 = vmatprep.subr.mxu0 %v557
  %1386 = vmatpush1.msra.mxu0 %v556
  %1387 = vmatprep.subr.mxu0 %v559
  %1388 = vmatpush1.msra.mxu0 %v558
  %1389 = vmatprep.subr.mxu0 %v561
  %1390 = vmatpush1.msra.mxu0 %v560
  %1391 = vmatprep.mubr.f32.mxu0 %v41
  %1392 = vmatmul.mubr.f32.gmra.mrb[0].mxu0 %v40
  %v1393 = vpop.f32.mrb[0].mxu0
  %v1394 = vadd.f32 %v1323, %v1393
  %v1395 = vpop.f32.mrb[0].mxu0
  %v1396 = vadd.f32 %v1325, %v1395
  %1397 = vdwg.mxu0
  %1398 = vmatprep.subr.mxu0 %v563
  %1399 = vmatpush1.msra.mxu0 %v562
  %1400 = vmatprep.subr.mxu0 %v565
  %1401 = vmatpush1.msra.mxu0 %v564
  %1402 = vmatprep.subr.mxu0 %v567
  %1403 = vmatpush1.msra.mxu0 %v566
  %1404 = vmatprep.subr.mxu0 %v569
  %1405 = vmatpush1.msra.mxu0 %v568
  %1406 = vmatprep.subr.mxu0 %v571
  %1407 = vmatpush1.msra.mxu0 %v570
  %1408 = vmatprep.subr.mxu0 %v573
  %1409 = vmatpush1.msra.mxu0 %v572
  %1410 = vmatprep.subr.mxu0 %v575
  %1411 = vmatpush1.msra.mxu0 %v574
  %1412 = vmatprep.subr.mxu0 %v577
  %1413 = vmatpush1.msra.mxu0 %v576
  %1414 = vmatprep.subr.mxu0 %v579
  %1415 = vmatpush1.msra.mxu0 %v578
  %1416 = vmatprep.subr.mxu0 %v581
  %1417 = vmatpush1.msra.mxu0 %v580
  %1418 = vmatprep.subr.mxu0 %v583
  %1419 = vmatpush1.msra.mxu0 %v582
  %1420 = vmatprep.subr.mxu0 %v585
  %1421 = vmatpush1.msra.mxu0 %v584
  %1422 = vmatprep.subr.mxu0 %v587
  %1423 = vmatpush1.msra.mxu0 %v586
  %1424 = vmatprep.subr.mxu0 %v589
  %1425 = vmatpush1.msra.mxu0 %v588
  %1426 = vmatprep.subr.mxu0 %v591
  %1427 = vmatpush1.msra.mxu0 %v590
  %1428 = vmatprep.subr.mxu0 %v593
  %1429 = vmatpush1.msra.mxu0 %v592
  %1430 = vmatprep.subr.mxu0 %v595
  %1431 = vmatpush1.msra.mxu0 %v594
  %1432 = vmatprep.subr.mxu0 %v597
  %1433 = vmatpush1.msra.mxu0 %v596
  %1434 = vmatprep.subr.mxu0 %v599
  %1435 = vmatpush1.msra.mxu0 %v598
  %1436 = vmatprep.subr.mxu0 %v601
  %1437 = vmatpush1.msra.mxu0 %v600
  %1438 = vmatprep.subr.mxu0 %v603
  %1439 = vmatpush1.msra.mxu0 %v602
  %1440 = vmatprep.subr.mxu0 %v605
  %1441 = vmatpush1.msra.mxu0 %v604
  %1442 = vmatprep.subr.mxu0 %v607
  %1443 = vmatpush1.msra.mxu0 %v606
  %1444 = vmatprep.subr.mxu0 %v609
  %1445 = vmatpush1.msra.mxu0 %v608
  %1446 = vmatprep.subr.mxu0 %v611
  %1447 = vmatpush1.msra.mxu0 %v610
  %1448 = vmatprep.subr.mxu0 %v613
  %1449 = vmatpush1.msra.mxu0 %v612
  %1450 = vmatprep.subr.mxu0 %v615
  %1451 = vmatpush1.msra.mxu0 %v614
  %1452 = vmatprep.subr.mxu0 %v617
  %1453 = vmatpush1.msra.mxu0 %v616
  %1454 = vmatprep.subr.mxu0 %v619
  %1455 = vmatpush1.msra.mxu0 %v618
  %1456 = vmatprep.subr.mxu0 %v621
  %1457 = vmatpush1.msra.mxu0 %v620
  %1458 = vmatprep.subr.mxu0 %v623
  %1459 = vmatpush1.msra.mxu0 %v622
  %1460 = vmatprep.subr.mxu0 %v625
  %1461 = vmatpush1.msra.mxu0 %v624
  %1462 = vmatprep.mubr.f32.mxu0 %v43
  %1463 = vmatmul.mubr.f32.gmra.mrb[0].mxu0 %v42
  %v1464 = vpop.f32.mrb[0].mxu0
  %v1465 = vadd.f32 %v1394, %v1464
  %v1466 = vpop.f32.mrb[0].mxu0
  %v1467 = vadd.f32 %v1396, %v1466
  %1468 = vdwg.mxu0
  %1469 = vmatprep.subr.mxu0 %v627
  %1470 = vmatpush1.msra.mxu0 %v626
  %1471 = vmatprep.subr.mxu0 %v629
  %1472 = vmatpush1.msra.mxu0 %v628
  %1473 = vmatprep.subr.mxu0 %v631
  %1474 = vmatpush1.msra.mxu0 %v630
  %1475 = vmatprep.subr.mxu0 %v633
  %1476 = vmatpush1.msra.mxu0 %v632
  %1477 = vmatprep.subr.mxu0 %v635
  %1478 = vmatpush1.msra.mxu0 %v634
  %1479 = vmatprep.subr.mxu0 %v637
  %1480 = vmatpush1.msra.mxu0 %v636
  %1481 = vmatprep.subr.mxu0 %v639
  %1482 = vmatpush1.msra.mxu0 %v638
  %1483 = vmatprep.subr.mxu0 %v641
  %1484 = vmatpush1.msra.mxu0 %v640
  %1485 = vmatprep.subr.mxu0 %v643
  %1486 = vmatpush1.msra.mxu0 %v642
  %1487 = vmatprep.subr.mxu0 %v645
  %1488 = vmatpush1.msra.mxu0 %v644
  %1489 = vmatprep.subr.mxu0 %v647
  %1490 = vmatpush1.msra.mxu0 %v646
  %1491 = vmatprep.subr.mxu0 %v649
  %1492 = vmatpush1.msra.mxu0 %v648
  %1493 = vmatprep.subr.mxu0 %v651
  %1494 = vmatpush1.msra.mxu0 %v650
  %1495 = vmatprep.subr.mxu0 %v653
  %1496 = vmatpush1.msra.mxu0 %v652
  %1497 = vmatprep.subr.mxu0 %v655
  %1498 = vmatpush1.msra.mxu0 %v654
  %1499 = vmatprep.subr.mxu0 %v657
  %1500 = vmatpush1.msra.mxu0 %v656
  %1501 = vmatprep.subr.mxu0 %v659
  %1502 = vmatpush1.msra.mxu0 %v658
  %1503 = vmatprep.subr.mxu0 %v661
  %1504 = vmatpush1.msra.mxu0 %v660
  %1505 = vmatprep.subr.mxu0 %v663
  %1506 = vmatpush1.msra.mxu0 %v662
  %1507 = vmatprep.subr.mxu0 %v665
  %1508 = vmatpush1.msra.mxu0 %v664
  %1509 = vmatprep.subr.mxu0 %v667
  %1510 = vmatpush1.msra.mxu0 %v666
  %1511 = vmatprep.subr.mxu0 %v669
  %1512 = vmatpush1.msra.mxu0 %v668
  %1513 = vmatprep.subr.mxu0 %v671
  %1514 = vmatpush1.msra.mxu0 %v670
  %1515 = vmatprep.subr.mxu0 %v673
  %1516 = vmatpush1.msra.mxu0 %v672
  %1517 = vmatprep.subr.mxu0 %v675
  %1518 = vmatpush1.msra.mxu0 %v674
  %1519 = vmatprep.subr.mxu0 %v677
  %1520 = vmatpush1.msra.mxu0 %v676
  %1521 = vmatprep.subr.mxu0 %v679
  %1522 = vmatpush1.msra.mxu0 %v678
  %1523 = vmatprep.subr.mxu0 %v681
  %1524 = vmatpush1.msra.mxu0 %v680
  %1525 = vmatprep.subr.mxu0 %v683
  %1526 = vmatpush1.msra.mxu0 %v682
  %1527 = vmatprep.subr.mxu0 %v685
  %1528 = vmatpush1.msra.mxu0 %v684
  %1529 = vmatprep.subr.mxu0 %v687
  %1530 = vmatpush1.msra.mxu0 %v686
  %1531 = vmatprep.subr.mxu0 %v689
  %1532 = vmatpush1.msra.mxu0 %v688
  %1533 = vmatprep.mubr.f32.mxu0 %v45
  %1534 = vmatmul.mubr.f32.gmra.mrb[0].mxu0 %v44
  %v1535 = vpop.f32.mrb[0].mxu0
  %v1536 = vadd.f32 %v1465, %v1535
  %v1537 = vpop.f32.mrb[0].mxu0
  %v1538 = vadd.f32 %v1467, %v1537
  %1539 = vdwg.mxu0
  %1540 = vmatprep.subr.mxu0 %v691
  %1541 = vmatpush1.msra.mxu0 %v690
  %1542 = vmatprep.subr.mxu0 %v693
  %1543 = vmatpush1.msra.mxu0 %v692
  %1544 = vmatprep.subr.mxu0 %v695
  %1545 = vmatpush1.msra.mxu0 %v694
  %1546 = vmatprep.subr.mxu0 %v697
  %1547 = vmatpush1.msra.mxu0 %v696
  %1548 = vmatprep.subr.mxu0 %v699
  %1549 = vmatpush1.msra.mxu0 %v698
  %1550 = vmatprep.subr.mxu0 %v701
  %1551 = vmatpush1.msra.mxu0 %v700
  %1552 = vmatprep.subr.mxu0 %v703
  %1553 = vmatpush1.msra.mxu0 %v702
  %1554 = vmatprep.subr.mxu0 %v705
  %1555 = vmatpush1.msra.mxu0 %v704
  %1556 = vmatprep.subr.mxu0 %v707
  %1557 = vmatpush1.msra.mxu0 %v706
  %1558 = vmatprep.subr.mxu0 %v709
  %1559 = vmatpush1.msra.mxu0 %v708
  %1560 = vmatprep.subr.mxu0 %v711
  %1561 = vmatpush1.msra.mxu0 %v710
  %1562 = vmatprep.subr.mxu0 %v713
  %1563 = vmatpush1.msra.mxu0 %v712
  %1564 = vmatprep.subr.mxu0 %v715
  %1565 = vmatpush1.msra.mxu0 %v714
  %1566 = vmatprep.subr.mxu0 %v717
  %1567 = vmatpush1.msra.mxu0 %v716
  %1568 = vmatprep.subr.mxu0 %v719
  %1569 = vmatpush1.msra.mxu0 %v718
  %1570 = vmatprep.subr.mxu0 %v721
  %1571 = vmatpush1.msra.mxu0 %v720
  %1572 = vmatprep.subr.mxu0 %v723
  %1573 = vmatpush1.msra.mxu0 %v722
  %1574 = vmatprep.subr.mxu0 %v725
  %1575 = vmatpush1.msra.mxu0 %v724
  %1576 = vmatprep.subr.mxu0 %v727
  %1577 = vmatpush1.msra.mxu0 %v726
  %1578 = vmatprep.subr.mxu0 %v729
  %1579 = vmatpush1.msra.mxu0 %v728
  %1580 = vmatprep.subr.mxu0 %v731
  %1581 = vmatpush1.msra.mxu0 %v730
  %1582 = vmatprep.subr.mxu0 %v733
  %1583 = vmatpush1.msra.mxu0 %v732
  %1584 = vmatprep.subr.mxu0 %v735
  %1585 = vmatpush1.msra.mxu0 %v734
  %1586 = vmatprep.subr.mxu0 %v737
  %1587 = vmatpush1.msra.mxu0 %v736
  %1588 = vmatprep.subr.mxu0 %v739
  %1589 = vmatpush1.msra.mxu0 %v738
  %1590 = vmatprep.subr.mxu0 %v741
  %1591 = vmatpush1.msra.mxu0 %v740
  %1592 = vmatprep.subr.mxu0 %v743
  %1593 = vmatpush1.msra.mxu0 %v742
  %1594 = vmatprep.subr.mxu0 %v745
  %1595 = vmatpush1.msra.mxu0 %v744
  %1596 = vmatprep.subr.mxu0 %v747
  %1597 = vmatpush1.msra.mxu0 %v746
  %1598 = vmatprep.subr.mxu0 %v749
  %1599 = vmatpush1.msra.mxu0 %v748
  %1600 = vmatprep.subr.mxu0 %v751
  %1601 = vmatpush1.msra.mxu0 %v750
  %1602 = vmatprep.subr.mxu0 %v753
  %1603 = vmatpush1.msra.mxu0 %v752
  %1604 = vmatprep.mubr.f32.mxu0 %v47
  %1605 = vmatmul.mubr.f32.gmra.mrb[0].mxu0 %v46
  %v1606 = vpop.f32.mrb[0].mxu0
  %v1607 = vadd.f32 %v1536, %v1606
  %v1608 = vpop.f32.mrb[0].mxu0
  %v1609 = vadd.f32 %v1538, %v1608
  %1610 = vdwg.mxu0
  %1611 = vmatprep.subr.mxu0 %v755
  %1612 = vmatpush1.msra.mxu0 %v754
  %1613 = vmatprep.subr.mxu0 %v757
  %1614 = vmatpush1.msra.mxu0 %v756
  %1615 = vmatprep.subr.mxu0 %v759
  %1616 = vmatpush1.msra.mxu0 %v758
  %1617 = vmatprep.subr.mxu0 %v761
  %1618 = vmatpush1.msra.mxu0 %v760
  %1619 = vmatprep.subr.mxu0 %v763
  %1620 = vmatpush1.msra.mxu0 %v762
  %1621 = vmatprep.subr.mxu0 %v765
  %1622 = vmatpush1.msra.mxu0 %v764
  %1623 = vmatprep.subr.mxu0 %v767
  %1624 = vmatpush1.msra.mxu0 %v766
  %1625 = vmatprep.subr.mxu0 %v769
  %1626 = vmatpush1.msra.mxu0 %v768
  %1627 = vmatprep.subr.mxu0 %v771
  %1628 = vmatpush1.msra.mxu0 %v770
  %1629 = vmatprep.subr.mxu0 %v773
  %1630 = vmatpush1.msra.mxu0 %v772
  %1631 = vmatprep.subr.mxu0 %v775
  %1632 = vmatpush1.msra.mxu0 %v774
  %1633 = vmatprep.subr.mxu0 %v777
  %1634 = vmatpush1.msra.mxu0 %v776
  %1635 = vmatprep.subr.mxu0 %v779
  %1636 = vmatpush1.msra.mxu0 %v778
  %1637 = vmatprep.subr.mxu0 %v781
  %1638 = vmatpush1.msra.mxu0 %v780
  %1639 = vmatprep.subr.mxu0 %v783
  %1640 = vmatpush1.msra.mxu0 %v782
  %1641 = vmatprep.subr.mxu0 %v785
  %1642 = vmatpush1.msra.mxu0 %v784
  %1643 = vmatprep.subr.mxu0 %v787
  %1644 = vmatpush1.msra.mxu0 %v786
  %1645 = vmatprep.subr.mxu0 %v789
  %1646 = vmatpush1.msra.mxu0 %v788
  %1647 = vmatprep.subr.mxu0 %v791
  %1648 = vmatpush1.msra.mxu0 %v790
  %1649 = vmatprep.subr.mxu0 %v793
  %1650 = vmatpush1.msra.mxu0 %v792
  %1651 = vmatprep.subr.mxu0 %v795
  %1652 = vmatpush1.msra.mxu0 %v794
  %1653 = vmatprep.subr.mxu0 %v797
  %1654 = vmatpush1.msra.mxu0 %v796
  %1655 = vmatprep.subr.mxu0 %v799
  %1656 = vmatpush1.msra.mxu0 %v798
  %1657 = vmatprep.subr.mxu0 %v801
  %1658 = vmatpush1.msra.mxu0 %v800
  %1659 = vmatprep.subr.mxu0 %v803
  %1660 = vmatpush1.msra.mxu0 %v802
  %1661 = vmatprep.subr.mxu0 %v805
  %1662 = vmatpush1.msra.mxu0 %v804
  %1663 = vmatprep.subr.mxu0 %v807
  %1664 = vmatpush1.msra.mxu0 %v806
  %1665 = vmatprep.subr.mxu0 %v809
  %1666 = vmatpush1.msra.mxu0 %v808
  %1667 = vmatprep.subr.mxu0 %v811
  %1668 = vmatpush1.msra.mxu0 %v810
  %1669 = vmatprep.subr.mxu0 %v813
  %1670 = vmatpush1.msra.mxu0 %v812
  %1671 = vmatprep.subr.mxu0 %v815
  %1672 = vmatpush1.msra.mxu0 %v814
  %1673 = vmatprep.subr.mxu0 %v817
  %1674 = vmatpush1.msra.mxu0 %v816
  %1675 = vmatprep.mubr.f32.mxu0 %v49
  %1676 = vmatmul.mubr.f32.gmra.mrb[0].mxu0 %v48
  %v1677 = vpop.f32.mrb[0].mxu0
  %v1678 = vadd.f32 %v1607, %v1677
  %v1679 = vpop.f32.mrb[0].mxu0
  %v1680 = vadd.f32 %v1609, %v1679
  %1681 = vdwg.mxu0
  %v1682 = vmax.f32 %v1678, 0.0
  %v1683 = vmax.f32 %v1680, 0.0
  %v1684 = vld [vmem:[%s3] sm:$0xff]
  %v1685 = vld [vmem:[%s3 + $0x8] sm:$0xff]
  %v1686 = vld [vmem:[%s3 + $0x10] sm:$0xff]
  %v1687 = vld [vmem:[%s3 + $0x18] sm:$0xff]
  %v1688 = vld [vmem:[%s3 + $0x20] sm:$0xff]
  %v1689 = vld [vmem:[%s3 + $0x28] sm:$0xff]
  %v1690 = vld [vmem:[%s3 + $0x30] sm:$0xff]
  %v1691 = vld [vmem:[%s3 + $0x38] sm:$0xff]
  %v1692 = vld [vmem:[%s3 + $0x40] sm:$0xff]
  %v1693 = vld [vmem:[%s3 + $0x48] sm:$0xff]
  %v1694 = vld [vmem:[%s3 + $0x50] sm:$0xff]
  %v1695 = vld [vmem:[%s3 + $0x58] sm:$0xff]
  %v1696 = vld [vmem:[%s3 + $0x60] sm:$0xff]
  %v1697 = vld [vmem:[%s3 + $0x68] sm:$0xff]
  %v1698 = vld [vmem:[%s3 + $0x70] sm:$0xff]
  %v1699 = vld [vmem:[%s3 + $0x78] sm:$0xff]
  %v1700 = vld [vmem:[%s3 + $0x80] sm:$0xff]
  %v1701 = vld [vmem:[%s3 + $0x88] sm:$0xff]
  %v1702 = vld [vmem:[%s3 + $0x90] sm:$0xff]
  %v1703 = vld [vmem:[%s3 + $0x98] sm:$0xff]
  %v1704 = vld [vmem:[%s3 + $0xa0] sm:$0xff]
  %v1705 = vld [vmem:[%s3 + $0xa8] sm:$0xff]
  %v1706 = vld [vmem:[%s3 + $0xb0] sm:$0xff]
  %v1707 = vld [vmem:[%s3 + $0xb8] sm:$0xff]
  %v1708 = vld [vmem:[%s3 + $0xc0] sm:$0xff]
  %v1709 = vld [vmem:[%s3 + $0xc8] sm:$0xff]
  %v1710 = vld [vmem:[%s3 + $0xd0] sm:$0xff]
  %v1711 = vld [vmem:[%s3 + $0xd8] sm:$0xff]
  %v1712 = vld [vmem:[%s3 + $0xe0] sm:$0xff]
  %v1713 = vld [vmem:[%s3 + $0xe8] sm:$0xff]
  %v1714 = vld [vmem:[%s3 + $0xf0] sm:$0xff]
  %v1715 = vld [vmem:[%s3 + $0xf8] sm:$0xff]
  %v1716 = vld [vmem:[%s4] sm:$0x1]
  %v1718 = vlaneseq
  %v1719 = vshrl.u32 %v1718, 7
  %v1720 = vsub.s32 0, %v1719
  %v1721 = vrot.slane %v1716, %v1720
  %1723 = vmatprep.subr.mxu0 0.0
  %1724 = vmatpush1.msra.mxu0 %v1684
  %1725 = vmatprep.subr.mxu0 0.0
  %1726 = vmatpush1.msra.mxu0 %v1685
  %1727 = vmatprep.subr.mxu0 0.0
  %1728 = vmatpush1.msra.mxu0 %v1686
  %1729 = vmatprep.subr.mxu0 0.0
  %1730 = vmatpush1.msra.mxu0 %v1687
  %1731 = vmatprep.subr.mxu0 0.0
  %1732 = vmatpush1.msra.mxu0 %v1688
  %1733 = vmatprep.subr.mxu0 0.0
  %1734 = vmatpush1.msra.mxu0 %v1689
  %1735 = vmatprep.subr.mxu0 0.0
  %1736 = vmatpush1.msra.mxu0 %v1690
  %1737 = vmatprep.subr.mxu0 0.0
  %1738 = vmatpush1.msra.mxu0 %v1691
  %1739 = vmatprep.subr.mxu0 0.0
  %1740 = vmatpush1.msra.mxu0 %v1692
  %1741 = vmatprep.subr.mxu0 0.0
  %1742 = vmatpush1.msra.mxu0 %v1693
  %1743 = vmatprep.subr.mxu0 0.0
  %1744 = vmatpush1.msra.mxu0 %v1694
  %1745 = vmatprep.subr.mxu0 0.0
  %1746 = vmatpush1.msra.mxu0 %v1695
  %1747 = vmatprep.subr.mxu0 0.0
  %1748 = vmatpush1.msra.mxu0 %v1696
  %1749 = vmatprep.subr.mxu0 0.0
  %1750 = vmatpush1.msra.mxu0 %v1697
  %1751 = vmatprep.subr.mxu0 0.0
  %1752 = vmatpush1.msra.mxu0 %v1698
  %1753 = vmatprep.subr.mxu0 0.0
  %1754 = vmatpush1.msra.mxu0 %v1699
  %1755 = vmatprep.subr.mxu0 0.0
  %1756 = vmatpush1.msra.mxu0 %v1700
  %1757 = vmatprep.subr.mxu0 0.0
  %1758 = vmatpush1.msra.mxu0 %v1701
  %1759 = vmatprep.subr.mxu0 0.0
  %1760 = vmatpush1.msra.mxu0 %v1702
  %1761 = vmatprep.subr.mxu0 0.0
  %1762 = vmatpush1.msra.mxu0 %v1703
  %1763 = vmatprep.subr.mxu0 0.0
  %1764 = vmatpush1.msra.mxu0 %v1704
  %1765 = vmatprep.subr.mxu0 0.0
  %1766 = vmatpush1.msra.mxu0 %v1705
  %1767 = vmatprep.subr.mxu0 0.0
  %1768 = vmatpush1.msra.mxu0 %v1706
  %1769 = vmatprep.subr.mxu0 0.0
  %1770 = vmatpush1.msra.mxu0 %v1707
  %1771 = vmatprep.subr.mxu0 0.0
  %1772 = vmatpush1.msra.mxu0 %v1708
  %1773 = vmatprep.subr.mxu0 0.0
  %1774 = vmatpush1.msra.mxu0 %v1709
  %1775 = vmatprep.subr.mxu0 0.0
  %1776 = vmatpush1.msra.mxu0 %v1710
  %1777 = vmatprep.subr.mxu0 0.0
  %1778 = vmatpush1.msra.mxu0 %v1711
  %1779 = vmatprep.subr.mxu0 0.0
  %1780 = vmatpush1.msra.mxu0 %v1712
  %1781 = vmatprep.subr.mxu0 0.0
  %1782 = vmatpush1.msra.mxu0 %v1713
  %1783 = vmatprep.subr.mxu0 0.0
  %1784 = vmatpush1.msra.mxu0 %v1714
  %1785 = vmatprep.subr.mxu0 0.0
  %1786 = vmatpush1.msra.mxu0 %v1715
  %1787 = vmatprep.mubr.f32.mxu0 %v1683
  %1788 = vmatmul.mubr.f32.gmra.mrb[0].mxu0 %v1682
  %v1789 = vpop.f32.mrb[0].mxu0
  %v1790 = vadd.f32 %v1721, %v1789
  %v1791 = vpop.f32.mrb[0].mxu0
  %1792 = vdwg.mxu0
  %v1793 = vmax.f32 %v1790, 0.0
  %v1794 = vld [vmem:[%s5] sm:$0xff]
  %v1795 = vld [vmem:[%s5 + $0x8] sm:$0xff]
  %v1796 = vld [vmem:[%s5 + $0x10] sm:$0xff]
  %v1797 = vld [vmem:[%s5 + $0x18] sm:$0xff]
  %v1798 = vld [vmem:[%s5 + $0x20] sm:$0xff]
  %v1799 = vld [vmem:[%s5 + $0x28] sm:$0xff]
  %v1800 = vld [vmem:[%s5 + $0x30] sm:$0xff]
  %v1801 = vld [vmem:[%s5 + $0x38] sm:$0xff]
  %v1802 = vld [vmem:[%s6] sm:$0x1]
  %v1804 = vlaneseq
  %v1805 = vshrl.u32 %v1804, 7
  %v1806 = vsub.s32 0, %v1805
  %v1807 = vrot.slane %v1802, %v1806
  %vm1809 = vcmask 523264
  %v1811 = vsel %vm1809, %v1793, 0
  %1813 = vmatprep.subr.mxu0 0.0
  %1814 = vmatpush1.msra.mxu0 %v1794
  %1815 = vmatprep.subr.mxu0 0.0
  %1816 = vmatpush1.msra.mxu0 %v1795
  %1817 = vmatprep.subr.mxu0 0.0
  %1818 = vmatpush1.msra.mxu0 %v1796
  %1819 = vmatprep.subr.mxu0 0.0
  %1820 = vmatpush1.msra.mxu0 %v1797
  %1821 = vmatprep.subr.mxu0 0.0
  %1822 = vmatpush1.msra.mxu0 %v1798
  %1823 = vmatprep.subr.mxu0 0.0
  %1824 = vmatpush1.msra.mxu0 %v1799
  %1825 = vmatprep.subr.mxu0 0.0
  %1826 = vmatpush1.msra.mxu0 %v1800
  %1827 = vmatprep.subr.mxu0 0.0
  %1828 = vmatpush1.msra.mxu0 %v1801
  %1829 = vmatprep.subr.mxu0 0.0
  %1830 = vmatpush1.msra.mxu0 0.0
  %1831 = vmatprep.subr.mxu0 0.0
  %1832 = vmatpush1.msra.mxu0 0.0
  %1833 = vmatprep.subr.mxu0 0.0
  %1834 = vmatpush1.msra.mxu0 0.0
  %1835 = vmatprep.subr.mxu0 0.0
  %1836 = vmatpush1.msra.mxu0 0.0
  %1837 = vmatprep.subr.mxu0 0.0
  %1838 = vmatpush1.msra.mxu0 0.0
  %1839 = vmatprep.subr.mxu0 0.0
  %1840 = vmatpush1.msra.mxu0 0.0
  %1841 = vmatprep.subr.mxu0 0.0
  %1842 = vmatpush1.msra.mxu0 0.0
  %1843 = vmatprep.subr.mxu0 0.0
  %1844 = vmatpush1.msra.mxu0 0.0
  %1845 = vmatprep.subr.mxu0 0.0
  %1846 = vmatpush1.msra.mxu0 0.0
  %1847 = vmatprep.subr.mxu0 0.0
  %1848 = vmatpush1.msra.mxu0 0.0
  %1849 = vmatprep.subr.mxu0 0.0
  %1850 = vmatpush1.msra.mxu0 0.0
  %1851 = vmatprep.subr.mxu0 0.0
  %1852 = vmatpush1.msra.mxu0 0.0
  %1853 = vmatprep.subr.mxu0 0.0
  %1854 = vmatpush1.msra.mxu0 0.0
  %1855 = vmatprep.subr.mxu0 0.0
  %1856 = vmatpush1.msra.mxu0 0.0
  %1857 = vmatprep.subr.mxu0 0.0
  %1858 = vmatpush1.msra.mxu0 0.0
  %1859 = vmatprep.subr.mxu0 0.0
  %1860 = vmatpush1.msra.mxu0 0.0
  %1861 = vmatprep.subr.mxu0 0.0
  %1862 = vmatpush1.msra.mxu0 0.0
  %1863 = vmatprep.subr.mxu0 0.0
  %1864 = vmatpush1.msra.mxu0 0.0
  %1865 = vmatprep.subr.mxu0 0.0
  %1866 = vmatpush1.msra.mxu0 0.0
  %1867 = vmatprep.subr.mxu0 0.0
  %1868 = vmatpush1.msra.mxu0 0.0
  %1869 = vmatprep.subr.mxu0 0.0
  %1870 = vmatpush1.msra.mxu0 0.0
  %1871 = vmatprep.subr.mxu0 0.0
  %1872 = vmatpush1.msra.mxu0 0.0
  %1873 = vmatprep.subr.mxu0 0.0
  %1874 = vmatpush1.msra.mxu0 0.0
  %1875 = vmatprep.subr.mxu0 0.0
  %1876 = vmatpush1.msra.mxu0 0.0
  %1877 = vmatprep.mubr.f32.mxu0 0.0
  %1878 = vmatmul.mubr.f32.gmra.mrb[0].mxu0 %v1811
  %v1879 = vpop.f32.mrb[0].mxu0
  %v1880 = vadd.f32 %v1807, %v1879
  %v1881 = vpop.f32.mrb[0].mxu0
  %1882 = vdwg.mxu0
  %vm1883 = vcmask 39936
  %1884 = vst.msk [vmem:[%s7] sm:$0xff] %vm1883, %v1880
  // Predicated region
  $region30: #{ecnn_forward.3} parent=0 // pred_check
    _
  $region31: #{ecnn_forward.3} parent=0 // pred_check_branch
    %1886 = sbr.rel (0) target = $region33
  $region32: #{ecnn_forward.3} parent=0 // pred_region
    _
  $region33: #{ecnn_forward.3} parent=0 // pred_fallthru
    _
  // Predicated region
  $region34: #{ecnn_forward.3} parent=0 // pred_check
    _
  $region35: #{ecnn_forward.3} parent=0 // pred_check_branch
    %1888 = sbr.rel (0) target = $region37
  $region36: #{ecnn_forward.3} parent=0 // pred_region
    _
  $region37: #{ecnn_forward.3} parent=0 // pred_fallthru
    _

// kernel: ecnn_forward.2
$region0: #{ecnn_forward.2}
  #allocation0 [shape = 'u32[]', space=smem, size = 0x4, offset = 0x4, fixed_abs, tag = 'smem constant byte address 0x4 - core index']
  #allocation1 [shape = 'u32[144,128]{1,0:T(1,128)}', space=vmem, size = 0x12000, scoped, tag = 'internal scratch']
  %s0 = inlined_call_operand.vmem [shape: f32[1,192,128], index: 0, kind: input, shape index: {}]
  %s1 = inlined_call_operand.vmem [shape: f32[384,192], index: 1, kind: input, shape index: {}]
  %s2 = inlined_call_operand.vmem [shape: f32[384,192], index: 2, kind: input, shape index: {}]
  %s3 = inlined_call_operand.vmem [shape: f32[384,192], index: 3, kind: input, shape index: {}]
  %s4 = inlined_call_operand.vmem [shape: f32[128,128], index: 4, kind: input, shape index: {}]
  %s5 = inlined_call_operand.vmem [shape: f32[128,128], index: 5, kind: input, shape index: {}]
  %s6 = inlined_call_operand.vmem [shape: f32[384,1], index: 6, kind: input, shape index: {}]
  %s7 = inlined_call_operand.vmem [shape: f32[192,384], index: 7, kind: input, shape index: {}]
  %s8 = inlined_call_operand.vmem [shape: f32[192,384], index: 8, kind: input, shape index: {}]
  %s9 = inlined_call_operand.vmem [shape: f32[128,64], index: 9, kind: input, shape index: {}]
  %s10 = inlined_call_operand.vmem [shape: f32[128,64], index: 10, kind: input, shape index: {}]
  %s11 = inlined_call_operand.vmem [shape: f32[384,192], index: 11, kind: input, shape index: {}]
  %s12 = inlined_call_operand.vmem [shape: f32[384,192], index: 12, kind: input, shape index: {}]
  %s13 = inlined_call_operand.vmem [shape: f32[384,192], index: 13, kind: input, shape index: {}]
  %s14 = inlined_call_operand.vmem [shape: f32[64,64], index: 14, kind: input, shape index: {}]
  %s15 = inlined_call_operand.vmem [shape: f32[64,64], index: 15, kind: input, shape index: {}]
  %s16 = inlined_call_operand.vmem [shape: f32[384,1], index: 16, kind: input, shape index: {}]
  %s17 = inlined_call_operand.vmem [shape: f32[192,384], index: 17, kind: input, shape index: {}]
  %s18 = inlined_call_operand.vmem [shape: f32[192,384], index: 18, kind: input, shape index: {}]
  %s19 = inlined_call_operand.vmem [shape: f32[64,32], index: 19, kind: input, shape index: {}]
  %s20 = inlined_call_operand.vmem [shape: f32[64,32], index: 20, kind: input, shape index: {}]
  %s21 = inlined_call_operand.vmem [shape: f32[1,192,32], index: 21, kind: output, shape index: {}]
  %s22 = sld [smem:[#allocation0]]
  $region94: #{ecnn_forward.2} parent=0
    _
  %s24 = ssub.s32 1, %s22
  %s25 = scalar_select 0, %s24, %s22
  // Predicated region
  $region2: #{ecnn_forward.2} parent=0 // pred_check
    _
  $region3: #{ecnn_forward.2} parent=0 // pred_check_branch
    %27 = sbr.rel (0) target = $region5
  $region4: #{ecnn_forward.2} parent=0 // pred_region
    _
  $region5: #{ecnn_forward.2} parent=0 // pred_fallthru
    _
  // Predicated region
  $region6: #{ecnn_forward.2} parent=0 // pred_check
    _
  $region7: #{ecnn_forward.2} parent=0 // pred_check_branch
    %29 = sbr.rel (0) target = $region9
  $region8: #{ecnn_forward.2} parent=0 // pred_region
    _
  $region9: #{ecnn_forward.2} parent=0 // pred_fallthru
    _
  // Predicated region
  $region10: #{ecnn_forward.2} parent=0 // pred_check
    _
  $region11: #{ecnn_forward.2} parent=0 // pred_check_branch
    %31 = sbr.rel (0) target = $region13
  $region12: #{ecnn_forward.2} parent=0 // pred_region
    _
  $region13: #{ecnn_forward.2} parent=0 // pred_fallthru
    _
  // Predicated region
  $region14: #{ecnn_forward.2} parent=0 // pred_check
    _
  $region15: #{ecnn_forward.2} parent=0 // pred_check_branch
    %33 = sbr.rel (0) target = $region17
  $region16: #{ecnn_forward.2} parent=0 // pred_region
    _
  $region17: #{ecnn_forward.2} parent=0 // pred_fallthru
    _
  // Predicated region
  $region18: #{ecnn_forward.2} parent=0 // pred_check
    _
  $region19: #{ecnn_forward.2} parent=0 // pred_check_branch
    %35 = sbr.rel (0) target = $region21
  $region20: #{ecnn_forward.2} parent=0 // pred_region
    _
  $region21: #{ecnn_forward.2} parent=0 // pred_fallthru
    _
  // Predicated region
  $region22: #{ecnn_forward.2} parent=0 // pred_check
    _
  $region23: #{ecnn_forward.2} parent=0 // pred_check_branch
    %37 = sbr.rel (0) target = $region25
  $region24: #{ecnn_forward.2} parent=0 // pred_region
    _
  $region25: #{ecnn_forward.2} parent=0 // pred_fallthru
    _
  // Predicated region
  $region26: #{ecnn_forward.2} parent=0 // pred_check
    _
  $region27: #{ecnn_forward.2} parent=0 // pred_check_branch
    %39 = sbr.rel (0) target = $region29
  $region28: #{ecnn_forward.2} parent=0 // pred_region
    _
  $region29: #{ecnn_forward.2} parent=0 // pred_fallthru
    _
  // Predicated region
  $region30: #{ecnn_forward.2} parent=0 // pred_check
    _
  $region31: #{ecnn_forward.2} parent=0 // pred_check_branch
    %41 = sbr.rel (0) target = $region33
  $region32: #{ecnn_forward.2} parent=0 // pred_region
    _
  $region33: #{ecnn_forward.2} parent=0 // pred_fallthru
    _
  // Predicated region
  $region34: #{ecnn_forward.2} parent=0 // pred_check
    _
  $region35: #{ecnn_forward.2} parent=0 // pred_check_branch
    %43 = sbr.rel (0) target = $region37
  $region36: #{ecnn_forward.2} parent=0 // pred_region
    _
  $region37: #{ecnn_forward.2} parent=0 // pred_fallthru
    _
  // Predicated region
  $region38: #{ecnn_forward.2} parent=0 // pred_check
    _
  $region39: #{ecnn_forward.2} parent=0 // pred_check_branch
    %45 = sbr.rel (0) target = $region41
  $region40: #{ecnn_forward.2} parent=0 // pred_region
    _
  $region41: #{ecnn_forward.2} parent=0 // pred_fallthru
    _
  // Predicated region
  $region42: #{ecnn_forward.2} parent=0 // pred_check
    _
  $region43: #{ecnn_forward.2} parent=0 // pred_check_branch
    %47 = sbr.rel (0) target = $region45
  $region44: #{ecnn_forward.2} parent=0 // pred_region
    _
  $region45: #{ecnn_forward.2} parent=0 // pred_fallthru
    _
  // Predicated region
  $region46: #{ecnn_forward.2} parent=0 // pred_check
    _
  $region47: #{ecnn_forward.2} parent=0 // pred_check_branch
    %49 = sbr.rel (0) target = $region49
  $region48: #{ecnn_forward.2} parent=0 // pred_region
    _
  $region49: #{ecnn_forward.2} parent=0 // pred_fallthru
    _
  // Predicated region
  $region50: #{ecnn_forward.2} parent=0 // pred_check
    _
  $region51: #{ecnn_forward.2} parent=0 // pred_check_branch
    %51 = sbr.rel (0) target = $region53
  $region52: #{ecnn_forward.2} parent=0 // pred_region
    _
  $region53: #{ecnn_forward.2} parent=0 // pred_fallthru
    _
  // Predicated region
  $region54: #{ecnn_forward.2} parent=0 // pred_check
    _
  $region55: #{ecnn_forward.2} parent=0 // pred_check_branch
    %53 = sbr.rel (0) target = $region57
  $region56: #{ecnn_forward.2} parent=0 // pred_region
    _
  $region57: #{ecnn_forward.2} parent=0 // pred_fallthru
    _
  // Predicated region
  $region58: #{ecnn_forward.2} parent=0 // pred_check
    _
  $region59: #{ecnn_forward.2} parent=0 // pred_check_branch
    %55 = sbr.rel (0) target = $region61
  $region60: #{ecnn_forward.2} parent=0 // pred_region
    _
  $region61: #{ecnn_forward.2} parent=0 // pred_fallthru
    _
  // Predicated region
  $region62: #{ecnn_forward.2} parent=0 // pred_check
    _
  $region63: #{ecnn_forward.2} parent=0 // pred_check_branch
    %57 = sbr.rel (0) target = $region65
  $region64: #{ecnn_forward.2} parent=0 // pred_region
    _
  $region65: #{ecnn_forward.2} parent=0 // pred_fallthru
    _
  // Predicated region
  $region66: #{ecnn_forward.2} parent=0 // pred_check
    _
  $region67: #{ecnn_forward.2} parent=0 // pred_check_branch
    %59 = sbr.rel (0) target = $region69
  $region68: #{ecnn_forward.2} parent=0 // pred_region
    _
  $region69: #{ecnn_forward.2} parent=0 // pred_fallthru
    _
  // Predicated region
  $region70: #{ecnn_forward.2} parent=0 // pred_check
    _
  $region71: #{ecnn_forward.2} parent=0 // pred_check_branch
    %61 = sbr.rel (0) target = $region73
  $region72: #{ecnn_forward.2} parent=0 // pred_region
    _
  $region73: #{ecnn_forward.2} parent=0 // pred_fallthru
    _
  // Predicated region
  $region74: #{ecnn_forward.2} parent=0 // pred_check
    _
  $region75: #{ecnn_forward.2} parent=0 // pred_check_branch
    %63 = sbr.rel (0) target = $region77
  $region76: #{ecnn_forward.2} parent=0 // pred_region
    _
  $region77: #{ecnn_forward.2} parent=0 // pred_fallthru
    _
  // Predicated region
  $region78: #{ecnn_forward.2} parent=0 // pred_check
    _
  $region79: #{ecnn_forward.2} parent=0 // pred_check_branch
    %65 = sbr.rel (0) target = $region81
  $region80: #{ecnn_forward.2} parent=0 // pred_region
    _
  $region81: #{ecnn_forward.2} parent=0 // pred_fallthru
    _
  // Predicated region
  $region82: #{ecnn_forward.2} parent=0 // pred_check
    _
  $region83: #{ecnn_forward.2} parent=0 // pred_check_branch
    %67 = sbr.rel (0) target = $region85
  $region84: #{ecnn_forward.2} parent=0 // pred_region
    _
  $region85: #{ecnn_forward.2} parent=0 // pred_fallthru
    _
  %v68 = vld [vmem:[%s0] sm:$0xff]
  %v69 = vld [vmem:[%s0 + $0x8] sm:$0xff]
  %v70 = vld [vmem:[%s0 + $0x10] sm:$0xff]
  %v71 = vld [vmem:[%s0 + $0x18] sm:$0xff]
  %v72 = vld [vmem:[%s0 + $0x20] sm:$0xff]
  %v73 = vld [vmem:[%s0 + $0x28] sm:$0xff]
  %v74 = vld [vmem:[%s0 + $0x30] sm:$0xff]
  %v75 = vld [vmem:[%s0 + $0x38] sm:$0xff]
  %v76 = vld [vmem:[%s0 + $0x40] sm:$0xff]
  %v77 = vld [vmem:[%s0 + $0x48] sm:$0xff]
  %v78 = vld [vmem:[%s0 + $0x50] sm:$0xff]
  %v79 = vld [vmem:[%s0 + $0x58] sm:$0xff]
  %v80 = vld [vmem:[%s0 + $0x60] sm:$0xff]
  %v81 = vld [vmem:[%s0 + $0x68] sm:$0xff]
  %v82 = vld [vmem:[%s0 + $0x70] sm:$0xff]
  %v83 = vld [vmem:[%s0 + $0x78] sm:$0xff]
  %v84 = vld [vmem:[%s0 + $0x80] sm:$0xff]
  %v85 = vld [vmem:[%s0 + $0x88] sm:$0xff]
  %v86 = vld [vmem:[%s0 + $0x90] sm:$0xff]
  %v87 = vld [vmem:[%s0 + $0x98] sm:$0xff]
  %v88 = vld [vmem:[%s0 + $0xa0] sm:$0xff]
  %v89 = vld [vmem:[%s0 + $0xa8] sm:$0xff]
  %v90 = vld [vmem:[%s0 + $0xb0] sm:$0xff]
  %v91 = vld [vmem:[%s0 + $0xb8] sm:$0xff]
  %v92 = vld [vmem:[%s2] sm:$0xff]
  %v93 = vld [vmem:[%s2 + $0x8] sm:$0xff]
  %v94 = vld [vmem:[%s2 + $0x10] sm:$0xff]
  %v95 = vld [vmem:[%s2 + $0x18] sm:$0xff]
  %v96 = vld [vmem:[%s2 + $0x20] sm:$0xff]
  %v97 = vld [vmem:[%s2 + $0x28] sm:$0xff]
  %v98 = vld [vmem:[%s2 + $0x30] sm:$0xff]
  %v99 = vld [vmem:[%s2 + $0x38] sm:$0xff]
  %v100 = vld [vmem:[%s2 + $0x40] sm:$0xff]
  %v101 = vld [vmem:[%s2 + $0x48] sm:$0xff]
  %v102 = vld [vmem:[%s2 + $0x50] sm:$0xff]
  %v103 = vld [vmem:[%s2 + $0x58] sm:$0xff]
  %v104 = vld [vmem:[%s2 + $0x60] sm:$0xff]
  %v105 = vld [vmem:[%s2 + $0x68] sm:$0xff]
  %v106 = vld [vmem:[%s2 + $0x70] sm:$0xff]
  %v107 = vld [vmem:[%s2 + $0x78] sm:$0xff]
  %v108 = vld [vmem:[%s2 + $0x80] sm:$0xff]
  %v109 = vld [vmem:[%s2 + $0x88] sm:$0xff]
  %v110 = vld [vmem:[%s2 + $0x90] sm:$0xff]
  %v111 = vld [vmem:[%s2 + $0x98] sm:$0xff]
  %v112 = vld [vmem:[%s2 + $0xa0] sm:$0xff]
  %v113 = vld [vmem:[%s2 + $0xa8] sm:$0xff]
  %v114 = vld [vmem:[%s2 + $0xb0] sm:$0xff]
  %v115 = vld [vmem:[%s2 + $0xb8] sm:$0xff]
  %v116 = vld [vmem:[%s2 + $0xc0] sm:$0xff]
  %v117 = vld [vmem:[%s2 + $0xc8] sm:$0xff]
  %v118 = vld [vmem:[%s2 + $0xd0] sm:$0xff]
  %v119 = vld [vmem:[%s2 + $0xd8] sm:$0xff]
  %v120 = vld [vmem:[%s2 + $0xe0] sm:$0xff]
  %v121 = vld [vmem:[%s2 + $0xe8] sm:$0xff]
  %v122 = vld [vmem:[%s2 + $0xf0] sm:$0xff]
  %v123 = vld [vmem:[%s2 + $0xf8] sm:$0xff]
  %v124 = vld [vmem:[%s2 + $0x100] sm:$0xff]
  %v125 = vld [vmem:[%s2 + $0x108] sm:$0xff]
  %v126 = vld [vmem:[%s2 + $0x110] sm:$0xff]
  %v127 = vld [vmem:[%s2 + $0x118] sm:$0xff]
  %v128 = vld [vmem:[%s2 + $0x120] sm:$0xff]
  %v129 = vld [vmem:[%s2 + $0x128] sm:$0xff]
  %v130 = vld [vmem:[%s2 + $0x130] sm:$0xff]
  %v131 = vld [vmem:[%s2 + $0x138] sm:$0xff]
  %v132 = vld [vmem:[%s2 + $0x140] sm:$0xff]
  %v133 = vld [vmem:[%s2 + $0x148] sm:$0xff]
  %v134 = vld [vmem:[%s2 + $0x150] sm:$0xff]
  %v135 = vld [vmem:[%s2 + $0x158] sm:$0xff]
  %v136 = vld [vmem:[%s2 + $0x160] sm:$0xff]
  %v137 = vld [vmem:[%s2 + $0x168] sm:$0xff]
  %v138 = vld [vmem:[%s2 + $0x170] sm:$0xff]
  %v139 = vld [vmem:[%s2 + $0x178] sm:$0xff]
  %v140 = vld [vmem:[%s2 + $0x180] sm:$0xff]
  %v141 = vld [vmem:[%s2 + $0x188] sm:$0xff]
  %v142 = vld [vmem:[%s2 + $0x190] sm:$0xff]
  %v143 = vld [vmem:[%s2 + $0x198] sm:$0xff]
  %v144 = vld [vmem:[%s2 + $0x1a0] sm:$0xff]
  %v145 = vld [vmem:[%s2 + $0x1a8] sm:$0xff]
  %v146 = vld [vmem:[%s2 + $0x1b0] sm:$0xff]
  %v147 = vld [vmem:[%s2 + $0x1b8] sm:$0xff]
  %v148 = vld [vmem:[%s2 + $0x1c0] sm:$0xff]
  %v149 = vld [vmem:[%s2 + $0x1c8] sm:$0xff]
  %v150 = vld [vmem:[%s2 + $0x1d0] sm:$0xff]
  %v151 = vld [vmem:[%s2 + $0x1d8] sm:$0xff]
  %v152 = vld [vmem:[%s2 + $0x1e0] sm:$0xff]
  %v153 = vld [vmem:[%s2 + $0x1e8] sm:$0xff]
  %v154 = vld [vmem:[%s2 + $0x1f0] sm:$0xff]
  %v155 = vld [vmem:[%s2 + $0x1f8] sm:$0xff]
  %v156 = vld [vmem:[%s2 + $0x200] sm:$0xff]
  %v157 = vld [vmem:[%s2 + $0x208] sm:$0xff]
  %v158 = vld [vmem:[%s2 + $0x210] sm:$0xff]
  %v159 = vld [vmem:[%s2 + $0x218] sm:$0xff]
  %v160 = vld [vmem:[%s2 + $0x220] sm:$0xff]
  %v161 = vld [vmem:[%s2 + $0x228] sm:$0xff]
  %v162 = vld [vmem:[%s2 + $0x230] sm:$0xff]
  %v163 = vld [vmem:[%s2 + $0x238] sm:$0xff]
  %v164 = vld [vmem:[%s2 + $0x240] sm:$0xff]
  %v165 = vld [vmem:[%s2 + $0x248] sm:$0xff]
  %v166 = vld [vmem:[%s2 + $0x250] sm:$0xff]
  %v167 = vld [vmem:[%s2 + $0x258] sm:$0xff]
  %v168 = vld [vmem:[%s2 + $0x260] sm:$0xff]
  %v169 = vld [vmem:[%s2 + $0x268] sm:$0xff]
  %v170 = vld [vmem:[%s2 + $0x270] sm:$0xff]
  %v171 = vld [vmem:[%s2 + $0x278] sm:$0xff]
  %v172 = vld [vmem:[%s2 + $0x280] sm:$0xff]
  %v173 = vld [vmem:[%s2 + $0x288] sm:$0xff]
  %v174 = vld [vmem:[%s2 + $0x290] sm:$0xff]
  %v175 = vld [vmem:[%s2 + $0x298] sm:$0xff]
  %v176 = vld [vmem:[%s2 + $0x2a0] sm:$0xff]
  %v177 = vld [vmem:[%s2 + $0x2a8] sm:$0xff]
  %v178 = vld [vmem:[%s2 + $0x2b0] sm:$0xff]
  %v179 = vld [vmem:[%s2 + $0x2b8] sm:$0xff]
  %v180 = vld [vmem:[%s2 + $0x2c0] sm:$0xff]
  %v181 = vld [vmem:[%s2 + $0x2c8] sm:$0xff]
  %v182 = vld [vmem:[%s2 + $0x2d0] sm:$0xff]
  %v183 = vld [vmem:[%s2 + $0x2d8] sm:$0xff]
  %v184 = vld [vmem:[%s2 + $0x2e0] sm:$0xff]
  %v185 = vld [vmem:[%s2 + $0x2e8] sm:$0xff]
  %v186 = vld [vmem:[%s2 + $0x2f0] sm:$0xff]
  %v187 = vld [vmem:[%s2 + $0x2f8] sm:$0xff]
  %v188 = vld [vmem:[%s1] sm:$0xff]
  %v189 = vld [vmem:[%s1 + $0x8] sm:$0xff]
  %v190 = vld [vmem:[%s1 + $0x10] sm:$0xff]
  %v191 = vld [vmem:[%s1 + $0x18] sm:$0xff]
  %v192 = vld [vmem:[%s1 + $0x20] sm:$0xff]
  %v193 = vld [vmem:[%s1 + $0x28] sm:$0xff]
  %v194 = vld [vmem:[%s1 + $0x30] sm:$0xff]
  %v195 = vld [vmem:[%s1 + $0x38] sm:$0xff]
  %v196 = vld [vmem:[%s1 + $0x40] sm:$0xff]
  %v197 = vld [vmem:[%s1 + $0x48] sm:$0xff]
  %v198 = vld [vmem:[%s1 + $0x50] sm:$0xff]
  %v199 = vld [vmem:[%s1 + $0x58] sm:$0xff]
  %v200 = vld [vmem:[%s1 + $0x60] sm:$0xff]
  %v201 = vld [vmem:[%s1 + $0x68] sm:$0xff]
  %v202 = vld [vmem:[%s1 + $0x70] sm:$0xff]
  %v203 = vld [vmem:[%s1 + $0x78] sm:$0xff]
  %v204 = vld [vmem:[%s1 + $0x80] sm:$0xff]
  %v205 = vld [vmem:[%s1 + $0x88] sm:$0xff]
  %v206 = vld [vmem:[%s1 + $0x90] sm:$0xff]
  %v207 = vld [vmem:[%s1 + $0x98] sm:$0xff]
  %v208 = vld [vmem:[%s1 + $0xa0] sm:$0xff]
  %v209 = vld [vmem:[%s1 + $0xa8] sm:$0xff]
  %v210 = vld [vmem:[%s1 + $0xb0] sm:$0xff]
  %v211 = vld [vmem:[%s1 + $0xb8] sm:$0xff]
  %v212 = vld [vmem:[%s1 + $0xc0] sm:$0xff]
  %v213 = vld [vmem:[%s1 + $0xc8] sm:$0xff]
  %v214 = vld [vmem:[%s1 + $0xd0] sm:$0xff]
  %v215 = vld [vmem:[%s1 + $0xd8] sm:$0xff]
  %v216 = vld [vmem:[%s1 + $0xe0] sm:$0xff]
  %v217 = vld [vmem:[%s1 + $0xe8] sm:$0xff]
  %v218 = vld [vmem:[%s1 + $0xf0] sm:$0xff]
  %v219 = vld [vmem:[%s1 + $0xf8] sm:$0xff]
  %v220 = vld [vmem:[%s1 + $0x100] sm:$0xff]
  %v221 = vld [vmem:[%s1 + $0x108] sm:$0xff]
  %v222 = vld [vmem:[%s1 + $0x110] sm:$0xff]
  %v223 = vld [vmem:[%s1 + $0x118] sm:$0xff]
  %v224 = vld [vmem:[%s1 + $0x120] sm:$0xff]
  %v225 = vld [vmem:[%s1 + $0x128] sm:$0xff]
  %v226 = vld [vmem:[%s1 + $0x130] sm:$0xff]
  %v227 = vld [vmem:[%s1 + $0x138] sm:$0xff]
  %v228 = vld [vmem:[%s1 + $0x140] sm:$0xff]
  %v229 = vld [vmem:[%s1 + $0x148] sm:$0xff]
  %v230 = vld [vmem:[%s1 + $0x150] sm:$0xff]
  %v231 = vld [vmem:[%s1 + $0x158] sm:$0xff]
  %v232 = vld [vmem:[%s1 + $0x160] sm:$0xff]
  %v233 = vld [vmem:[%s1 + $0x168] sm:$0xff]
  %v234 = vld [vmem:[%s1 + $0x170] sm:$0xff]
  %v235 = vld [vmem:[%s1 + $0x178] sm:$0xff]
  %v236 = vld [vmem:[%s1 + $0x180] sm:$0xff]
  %v237 = vld [vmem:[%s1 + $0x188] sm:$0xff]
  %v238 = vld [vmem:[%s1 + $0x190] sm:$0xff]
  %v239 = vld [vmem:[%s1 + $0x198] sm:$0xff]
  %v240 = vld [vmem:[%s1 + $0x1a0] sm:$0xff]
  %v241 = vld [vmem:[%s1 + $0x1a8] sm:$0xff]
  %v242 = vld [vmem:[%s1 + $0x1b0] sm:$0xff]
  %v243 = vld [vmem:[%s1 + $0x1b8] sm:$0xff]
  %v244 = vld [vmem:[%s1 + $0x1c0] sm:$0xff]
  %v245 = vld [vmem:[%s1 + $0x1c8] sm:$0xff]
  %v246 = vld [vmem:[%s1 + $0x1d0] sm:$0xff]
  %v247 = vld [vmem:[%s1 + $0x1d8] sm:$0xff]
  %v248 = vld [vmem:[%s1 + $0x1e0] sm:$0xff]
  %v249 = vld [vmem:[%s1 + $0x1e8] sm:$0xff]
  %v250 = vld [vmem:[%s1 + $0x1f0] sm:$0xff]
  %v251 = vld [vmem:[%s1 + $0x1f8] sm:$0xff]
  %v252 = vld [vmem:[%s1 + $0x200] sm:$0xff]
  %v253 = vld [vmem:[%s1 + $0x208] sm:$0xff]
  %v254 = vld [vmem:[%s1 + $0x210] sm:$0xff]
  %v255 = vld [vmem:[%s1 + $0x218] sm:$0xff]
  %v256 = vld [vmem:[%s1 + $0x220] sm:$0xff]
  %v257 = vld [vmem:[%s1 + $0x228] sm:$0xff]
  %v258 = vld [vmem:[%s1 + $0x230] sm:$0xff]
  %v259 = vld [vmem:[%s1 + $0x238] sm:$0xff]
  %v260 = vld [vmem:[%s1 + $0x240] sm:$0xff]
  %v261 = vld [vmem:[%s1 + $0x248] sm:$0xff]
  %v262 = vld [vmem:[%s1 + $0x250] sm:$0xff]
  %v263 = vld [vmem:[%s1 + $0x258] sm:$0xff]
  %v264 = vld [vmem:[%s1 + $0x260] sm:$0xff]
  %v265 = vld [vmem:[%s1 + $0x268] sm:$0xff]
  %v266 = vld [vmem:[%s1 + $0x270] sm:$0xff]
  %v267 = vld [vmem:[%s1 + $0x278] sm:$0xff]
  %v268 = vld [vmem:[%s1 + $0x280] sm:$0xff]
  %v269 = vld [vmem:[%s1 + $0x288] sm:$0xff]
  %v270 = vld [vmem:[%s1 + $0x290] sm:$0xff]
  %v271 = vld [vmem:[%s1 + $0x298] sm:$0xff]
  %v272 = vld [vmem:[%s1 + $0x2a0] sm:$0xff]
  %v273 = vld [vmem:[%s1 + $0x2a8] sm:$0xff]
  %v274 = vld [vmem:[%s1 + $0x2b0] sm:$0xff]
  %v275 = vld [vmem:[%s1 + $0x2b8] sm:$0xff]
  %v276 = vld [vmem:[%s1 + $0x2c0] sm:$0xff]
  %v277 = vld [vmem:[%s1 + $0x2c8] sm:$0xff]
  %v278 = vld [vmem:[%s1 + $0x2d0] sm:$0xff]
  %v279 = vld [vmem:[%s1 + $0x2d8] sm:$0xff]
  %v280 = vld [vmem:[%s1 + $0x2e0] sm:$0xff]
  %v281 = vld [vmem:[%s1 + $0x2e8] sm:$0xff]
  %v282 = vld [vmem:[%s1 + $0x2f0] sm:$0xff]
  %v283 = vld [vmem:[%s1 + $0x2f8] sm:$0xff]
  %v284 = vld [vmem:[%s4] sm:$0xff]
  %v285 = vld [vmem:[%s4 + $0x8] sm:$0xff]
  %v286 = vld [vmem:[%s4 + $0x10] sm:$0xff]
  %v287 = vld [vmem:[%s4 + $0x18] sm:$0xff]
  %v288 = vld [vmem:[%s4 + $0x20] sm:$0xff]
  %v289 = vld [vmem:[%s4 + $0x28] sm:$0xff]
  %v290 = vld [vmem:[%s4 + $0x30] sm:$0xff]
  %v291 = vld [vmem:[%s4 + $0x38] sm:$0xff]
  %v292 = vld [vmem:[%s4 + $0x40] sm:$0xff]
  %v293 = vld [vmem:[%s4 + $0x48] sm:$0xff]
  %v294 = vld [vmem:[%s4 + $0x50] sm:$0xff]
  %v295 = vld [vmem:[%s4 + $0x58] sm:$0xff]
  %v296 = vld [vmem:[%s4 + $0x60] sm:$0xff]
  %v297 = vld [vmem:[%s4 + $0x68] sm:$0xff]
  %v298 = vld [vmem:[%s4 + $0x70] sm:$0xff]
  %v299 = vld [vmem:[%s4 + $0x78] sm:$0xff]
  %300 = vmatprep.subr.mxu0 0.0
  %301 = vmatpush1.msra.mxu0 %v284
  %302 = vmatprep.subr.mxu0 0.0
  %303 = vmatpush1.msra.mxu0 %v285
  %304 = vmatprep.subr.mxu0 0.0
  %305 = vmatpush1.msra.mxu0 %v286
  %306 = vmatprep.subr.mxu0 0.0
  %307 = vmatpush1.msra.mxu0 %v287
  %308 = vmatprep.subr.mxu0 0.0
  %309 = vmatpush1.msra.mxu0 %v288
  %310 = vmatprep.subr.mxu0 0.0
  %311 = vmatpush1.msra.mxu0 %v289
  %312 = vmatprep.subr.mxu0 0.0
  %313 = vmatpush1.msra.mxu0 %v290
  %314 = vmatprep.subr.mxu0 0.0
  %315 = vmatpush1.msra.mxu0 %v291
  %316 = vmatprep.subr.mxu0 0.0
  %317 = vmatpush1.msra.mxu0 %v292
  %318 = vmatprep.subr.mxu0 0.0
  %319 = vmatpush1.msra.mxu0 %v293
  %320 = vmatprep.subr.mxu0 0.0
  %321 = vmatpush1.msra.mxu0 %v294
  %322 = vmatprep.subr.mxu0 0.0
  %323 = vmatpush1.msra.mxu0 %v295
  %324 = vmatprep.subr.mxu0 0.0
  %325 = vmatpush1.msra.mxu0 %v296
  %326 = vmatprep.subr.mxu0 0.0
  %327 = vmatpush1.msra.mxu0 %v297
  %328 = vmatprep.subr.mxu0 0.0
  %329 = vmatpush1.msra.mxu0 %v298
  %330 = vmatprep.subr.mxu0 0.0
  %331 = vmatpush1.msra.mxu0 %v299
  %332 = vmatprep.subr.mxu0 0.0
  %333 = vmatpush1.msra.mxu0 0.0
  %334 = vmatprep.subr.mxu0 0.0
  %335 = vmatpush1.msra.mxu0 0.0
  %336 = vmatprep.subr.mxu0 0.0
  %337 = vmatpush1.msra.mxu0 0.0
  %338 = vmatprep.subr.mxu0 0.0
  %339 = vmatpush1.msra.mxu0 0.0
  %340 = vmatprep.subr.mxu0 0.0
  %341 = vmatpush1.msra.mxu0 0.0
  %342 = vmatprep.subr.mxu0 0.0
  %343 = vmatpush1.msra.mxu0 0.0
  %344 = vmatprep.subr.mxu0 0.0
  %345 = vmatpush1.msra.mxu0 0.0
  %346 = vmatprep.subr.mxu0 0.0
  %347 = vmatpush1.msra.mxu0 0.0
  %348 = vmatprep.subr.mxu0 0.0
  %349 = vmatpush1.msra.mxu0 0.0
  %350 = vmatprep.subr.mxu0 0.0
  %351 = vmatpush1.msra.mxu0 0.0
  %352 = vmatprep.subr.mxu0 0.0
  %353 = vmatpush1.msra.mxu0 0.0
  %354 = vmatprep.subr.mxu0 0.0
  %355 = vmatpush1.msra.mxu0 0.0
  %356 = vmatprep.subr.mxu0 0.0
  %357 = vmatpush1.msra.mxu0 0.0
  %358 = vmatprep.subr.mxu0 0.0
  %359 = vmatpush1.msra.mxu0 0.0
  %360 = vmatprep.subr.mxu0 0.0
  %361 = vmatpush1.msra.mxu0 0.0
  %362 = vmatprep.subr.mxu0 0.0
  %363 = vmatpush1.msra.mxu0 0.0
  %364 = vmatprep.mubr.f32.mxu0 0.0
  %365 = vmatmul.mubr.f32.gmra.mrb[0].mxu0 %v68
  %v366 = vpop.f32.mrb[0].mxu0
  %v367 = vadd.f32 0.0, %v366
  %v368 = vpop.f32.mrb[0].mxu0
  %369 = vmatprep.mubr.f32.mxu0 0.0
  %370 = vmatmul.mubr.f32.gmra.mrb[0].mxu0 %v69
  %v371 = vpop.f32.mrb[0].mxu0
  %v372 = vadd.f32 0.0, %v371
  %v373 = vpop.f32.mrb[0].mxu0
  %374 = vmatprep.mubr.f32.mxu0 0.0
  %375 = vmatmul.mubr.f32.gmra.mrb[0].mxu0 %v70
  %v376 = vpop.f32.mrb[0].mxu0
  %v377 = vadd.f32 0.0, %v376
  %v378 = vpop.f32.mrb[0].mxu0
  %379 = vmatprep.mubr.f32.mxu0 0.0
  %380 = vmatmul.mubr.f32.gmra.mrb[0].mxu0 %v71
  %v381 = vpop.f32.mrb[0].mxu0
  %v382 = vadd.f32 0.0, %v381
  %v383 = vpop.f32.mrb[0].mxu0
  %384 = vmatprep.mubr.f32.mxu0 0.0
  %385 = vmatmul.mubr.f32.gmra.mrb[0].mxu0 %v72
  %v386 = vpop.f32.mrb[0].mxu0
  %v387 = vadd.f32 0.0, %v386
  %v388 = vpop.f32.mrb[0].mxu0
  %389 = vmatprep.mubr.f32.mxu0 0.0
  %390 = vmatmul.mubr.f32.gmra.mrb[0].mxu0 %v73
  %v391 = vpop.f32.mrb[0].mxu0
  %v392 = vadd.f32 0.0, %v391
  %v393 = vpop.f32.mrb[0].mxu0
  %394 = vmatprep.mubr.f32.mxu0 0.0
  %395 = vmatmul.mubr.f32.gmra.mrb[0].mxu0 %v74
  %v396 = vpop.f32.mrb[0].mxu0
  %v397 = vadd.f32 0.0, %v396
  %v398 = vpop.f32.mrb[0].mxu0
  %399 = vmatprep.mubr.f32.mxu0 0.0
  %400 = vmatmul.mubr.f32.gmra.mrb[0].mxu0 %v75
  %v401 = vpop.f32.mrb[0].mxu0
  %v402 = vadd.f32 0.0, %v401
  %v403 = vpop.f32.mrb[0].mxu0
  %404 = vmatprep.mubr.f32.mxu0 0.0
  %405 = vmatmul.mubr.f32.gmra.mrb[0].mxu0 %v76
  %v406 = vpop.f32.mrb[0].mxu0
  %v407 = vadd.f32 0.0, %v406
  %v408 = vpop.f32.mrb[0].mxu0
  %409 = vmatprep.mubr.f32.mxu0 0.0
  %410 = vmatmul.mubr.f32.gmra.mrb[0].mxu0 %v77
  %v411 = vpop.f32.mrb[0].mxu0
  %v412 = vadd.f32 0.0, %v411
  %v413 = vpop.f32.mrb[0].mxu0
  %414 = vmatprep.mubr.f32.mxu0 0.0
  %415 = vmatmul.mubr.f32.gmra.mrb[0].mxu0 %v78
  %v416 = vpop.f32.mrb[0].mxu0
  %v417 = vadd.f32 0.0, %v416
  %v418 = vpop.f32.mrb[0].mxu0
  %419 = vmatprep.mubr.f32.mxu0 0.0
  %420 = vmatmul.mubr.f32.gmra.mrb[0].mxu0 %v79
  %v421 = vpop.f32.mrb[0].mxu0
  %v422 = vadd.f32 0.0, %v421
  %v423 = vpop.f32.mrb[0].mxu0
  %424 = vmatprep.mubr.f32.mxu0 0.0
  %425 = vmatmul.mubr.f32.gmra.mrb[0].mxu0 %v80
  %v426 = vpop.f32.mrb[0].mxu0
  %v427 = vadd.f32 0.0, %v426
  %v428 = vpop.f32.mrb[0].mxu0
  %429 = vmatprep.mubr.f32.mxu0 0.0
  %430 = vmatmul.mubr.f32.gmra.mrb[0].mxu0 %v81
  %v431 = vpop.f32.mrb[0].mxu0
  %v432 = vadd.f32 0.0, %v431
  %v433 = vpop.f32.mrb[0].mxu0
  %434 = vmatprep.mubr.f32.mxu0 0.0
  %435 = vmatmul.mubr.f32.gmra.mrb[0].mxu0 %v82
  %v436 = vpop.f32.mrb[0].mxu0
  %v437 = vadd.f32 0.0, %v436
  %v438 = vpop.f32.mrb[0].mxu0
  %439 = vmatprep.mubr.f32.mxu0 0.0
  %440 = vmatmul.mubr.f32.gmra.mrb[0].mxu0 %v83
  %v441 = vpop.f32.mrb[0].mxu0
  %v442 = vadd.f32 0.0, %v441
  %v443 = vpop.f32.mrb[0].mxu0
  %444 = vmatprep.mubr.f32.mxu0 0.0
  %445 = vmatmul.mubr.f32.gmra.mrb[0].mxu0 %v84
  %v446 = vpop.f32.mrb[0].mxu0
  %v447 = vadd.f32 0.0, %v446
  %v448 = vpop.f32.mrb[0].mxu0
  %449 = vmatprep.mubr.f32.mxu0 0.0
  %450 = vmatmul.mubr.f32.gmra.mrb[0].mxu0 %v85
  %v451 = vpop.f32.mrb[0].mxu0
  %v452 = vadd.f32 0.0, %v451
  %v453 = vpop.f32.mrb[0].mxu0
  %454 = vmatprep.mubr.f32.mxu0 0.0
  %455 = vmatmul.mubr.f32.gmra.mrb[0].mxu0 %v86
  %v456 = vpop.f32.mrb[0].mxu0
  %v457 = vadd.f32 0.0, %v456
  %v458 = vpop.f32.mrb[0].mxu0
  %459 = vmatprep.mubr.f32.mxu0 0.0
  %460 = vmatmul.mubr.f32.gmra.mrb[0].mxu0 %v87
  %v461 = vpop.f32.mrb[0].mxu0
  %v462 = vadd.f32 0.0, %v461
  %v463 = vpop.f32.mrb[0].mxu0
  %464 = vmatprep.mubr.f32.mxu0 0.0
  %465 = vmatmul.mubr.f32.gmra.mrb[0].mxu0 %v88
  %v466 = vpop.f32.mrb[0].mxu0
  %v467 = vadd.f32 0.0, %v466
  %v468 = vpop.f32.mrb[0].mxu0
  %469 = vmatprep.mubr.f32.mxu0 0.0
  %470 = vmatmul.mubr.f32.gmra.mrb[0].mxu0 %v89
  %v471 = vpop.f32.mrb[0].mxu0
  %v472 = vadd.f32 0.0, %v471
  %v473 = vpop.f32.mrb[0].mxu0
  %474 = vmatprep.mubr.f32.mxu0 0.0
  %475 = vmatmul.mubr.f32.gmra.mrb[0].mxu0 %v90
  %v476 = vpop.f32.mrb[0].mxu0
  %v477 = vadd.f32 0.0, %v476
  %v478 = vpop.f32.mrb[0].mxu0
  %479 = vmatprep.mubr.f32.mxu0 0.0
  %480 = vmatmul.mubr.f32.gmra.mrb[0].mxu0 %v91
  %v481 = vpop.f32.mrb[0].mxu0
  %v482 = vadd.f32 0.0, %v481
  %v483 = vpop.f32.mrb[0].mxu0
  %484 = vdwg.mxu0
  %vm485 = vcmask 523264
  %v487 = vsel %vm485, %v189, 0
  %v490 = vsel %vm485, %v191, 0
  %v493 = vsel %vm485, %v193, 0
  %v496 = vsel %vm485, %v195, 0
  %v499 = vsel %vm485, %v197, 0
  %v502 = vsel %vm485, %v199, 0
  %v505 = vsel %vm485, %v201, 0
  %v508 = vsel %vm485, %v203, 0
  %v511 = vsel %vm485, %v205, 0
  %v514 = vsel %vm485, %v207, 0
  %v517 = vsel %vm485, %v209, 0
  %v520 = vsel %vm485, %v211, 0
  %v523 = vsel %vm485, %v213, 0
  %v526 = vsel %vm485, %v215, 0
  %v529 = vsel %vm485, %v217, 0
  %v532 = vsel %vm485, %v219, 0
  %v535 = vsel %vm485, %v221, 0
  %v538 = vsel %vm485, %v223, 0
  %v541 = vsel %vm485, %v225, 0
  %v544 = vsel %vm485, %v227, 0
  %v547 = vsel %vm485, %v229, 0
  %v550 = vsel %vm485, %v231, 0
  %v553 = vsel %vm485, %v233, 0
  %v556 = vsel %vm485, %v235, 0
  %v559 = vsel %vm485, %v237, 0
  %v562 = vsel %vm485, %v239, 0
  %v565 = vsel %vm485, %v241, 0
  %v568 = vsel %vm485, %v243, 0
  %v571 = vsel %vm485, %v245, 0
  %v574 = vsel %vm485, %v247, 0
  %v577 = vsel %vm485, %v249, 0
  %v580 = vsel %vm485, %v251, 0
  %v583 = vsel %vm485, %v253, 0
  %v586 = vsel %vm485, %v255, 0
  %v589 = vsel %vm485, %v257, 0
  %v592 = vsel %vm485, %v259, 0
  %v595 = vsel %vm485, %v261, 0
  %v598 = vsel %vm485, %v263, 0
  %v601 = vsel %vm485, %v265, 0
  %v604 = vsel %vm485, %v267, 0
  %v607 = vsel %vm485, %v269, 0
  %v610 = vsel %vm485, %v271, 0
  %v613 = vsel %vm485, %v273, 0
  %v616 = vsel %vm485, %v275, 0
  %v619 = vsel %vm485, %v277, 0
  %v622 = vsel %vm485, %v279, 0
  %v625 = vsel %vm485, %v281, 0
  %v628 = vsel %vm485, %v283, 0
  %630 = vmatprep.subr.mxu0 0.0
  %631 = vmatpush1.msra.mxu0 %v367
  %632 = vmatprep.subr.mxu0 0.0
  %633 = vmatpush1.msra.mxu0 %v372
  %634 = vmatprep.subr.mxu0 0.0
  %635 = vmatpush1.msra.mxu0 %v377
  %636 = vmatprep.subr.mxu0 0.0
  %637 = vmatpush1.msra.mxu0 %v382
  %638 = vmatprep.subr.mxu0 0.0
  %639 = vmatpush1.msra.mxu0 %v387
  %640 = vmatprep.subr.mxu0 0.0
  %641 = vmatpush1.msra.mxu0 %v392
  %642 = vmatprep.subr.mxu0 0.0
  %643 = vmatpush1.msra.mxu0 %v397
  %644 = vmatprep.subr.mxu0 0.0
  %645 = vmatpush1.msra.mxu0 %v402
  %646 = vmatprep.subr.mxu0 0.0
  %647 = vmatpush1.msra.mxu0 %v407
  %648 = vmatprep.subr.mxu0 0.0
  %649 = vmatpush1.msra.mxu0 %v412
  %650 = vmatprep.subr.mxu0 0.0
  %651 = vmatpush1.msra.mxu0 %v417
  %652 = vmatprep.subr.mxu0 0.0
  %653 = vmatpush1.msra.mxu0 %v422
  %654 = vmatprep.subr.mxu0 0.0
  %655 = vmatpush1.msra.mxu0 %v427
  %656 = vmatprep.subr.mxu0 0.0
  %657 = vmatpush1.msra.mxu0 %v432
  %658 = vmatprep.subr.mxu0 0.0
  %659 = vmatpush1.msra.mxu0 %v437
  %660 = vmatprep.subr.mxu0 0.0
  %661 = vmatpush1.msra.mxu0 %v442
  %662 = vmatprep.subr.mxu0 0.0
  %663 = vmatpush1.msra.mxu0 %v447
  %664 = vmatprep.subr.mxu0 0.0
  %665 = vmatpush1.msra.mxu0 %v452
  %666 = vmatprep.subr.mxu0 0.0
  %667 = vmatpush1.msra.mxu0 %v457
  %668 = vmatprep.subr.mxu0 0.0
  %669 = vmatpush1.msra.mxu0 %v462
  %670 = vmatprep.subr.mxu0 0.0
  %671 = vmatpush1.msra.mxu0 %v467
  %672 = vmatprep.subr.mxu0 0.0
  %673 = vmatpush1.msra.mxu0 %v472
  %674 = vmatprep.subr.mxu0 0.0
  %675 = vmatpush1.msra.mxu0 %v477
  %676 = vmatprep.subr.mxu0 0.0
  %677 = vmatpush1.msra.mxu0 %v482
  %678 = vmatprep.subr.mxu0 0.0
  %679 = vmatpush1.msra.mxu0 0.0
  %680 = vmatprep.subr.mxu0 0.0
  %681 = vmatpush1.msra.mxu0 0.0
  %682 = vmatprep.subr.mxu0 0.0
  %683 = vmatpush1.msra.mxu0 0.0
  %684 = vmatprep.subr.mxu0 0.0
  %685 = vmatpush1.msra.mxu0 0.0
  %686 = vmatprep.subr.mxu0 0.0
  %687 = vmatpush1.msra.mxu0 0.0
  %688 = vmatprep.subr.mxu0 0.0
  %689 = vmatpush1.msra.mxu0 0.0
  %690 = vmatprep.subr.mxu0 0.0
  %691 = vmatpush1.msra.mxu0 0.0
  %692 = vmatprep.subr.mxu0 0.0
  %693 = vmatpush1.msra.mxu0 0.0
  %694 = vmatprep.mubr.f32.mxu0 %v487
  %695 = vmatmul.mubr.f32.gmra.mrb[0].mxu0 %v188
  %v696 = vpop.f32.mrb[0].mxu0
  %v697 = vadd.f32 0.0, %v696
  %v698 = vpop.f32.mrb[0].mxu0
  %699 = vmatprep.mubr.f32.mxu0 %v490
  %700 = vmatmul.mubr.f32.gmra.mrb[0].mxu0 %v190
  %v701 = vpop.f32.mrb[0].mxu0
  %v702 = vadd.f32 0.0, %v701
  %v703 = vpop.f32.mrb[0].mxu0
  %704 = vmatprep.mubr.f32.mxu0 %v493
  %705 = vmatmul.mubr.f32.gmra.mrb[0].mxu0 %v192
  %v706 = vpop.f32.mrb[0].mxu0
  %v707 = vadd.f32 0.0, %v706
  %v708 = vpop.f32.mrb[0].mxu0
  %709 = vmatprep.mubr.f32.mxu0 %v496
  %710 = vmatmul.mubr.f32.gmra.mrb[0].mxu0 %v194
  %v711 = vpop.f32.mrb[0].mxu0
  %v712 = vadd.f32 0.0, %v711
  %v713 = vpop.f32.mrb[0].mxu0
  %714 = vmatprep.mubr.f32.mxu0 %v499
  %715 = vmatmul.mubr.f32.gmra.mrb[0].mxu0 %v196
  %v716 = vpop.f32.mrb[0].mxu0
  %v717 = vadd.f32 0.0, %v716
  %v718 = vpop.f32.mrb[0].mxu0
  %719 = vmatprep.mubr.f32.mxu0 %v502
  %720 = vmatmul.mubr.f32.gmra.mrb[0].mxu0 %v198
  %v721 = vpop.f32.mrb[0].mxu0
  %v722 = vadd.f32 0.0, %v721
  %v723 = vpop.f32.mrb[0].mxu0
  %724 = vmatprep.mubr.f32.mxu0 %v505
  %725 = vmatmul.mubr.f32.gmra.mrb[0].mxu0 %v200
  %v726 = vpop.f32.mrb[0].mxu0
  %v727 = vadd.f32 0.0, %v726
  %v728 = vpop.f32.mrb[0].mxu0
  %729 = vmatprep.mubr.f32.mxu0 %v508
  %730 = vmatmul.mubr.f32.gmra.mrb[0].mxu0 %v202
  %v731 = vpop.f32.mrb[0].mxu0
  %v732 = vadd.f32 0.0, %v731
  %v733 = vpop.f32.mrb[0].mxu0
  %734 = vmatprep.mubr.f32.mxu0 %v511
  %735 = vmatmul.mubr.f32.gmra.mrb[0].mxu0 %v204
  %v736 = vpop.f32.mrb[0].mxu0
  %v737 = vadd.f32 0.0, %v736
  %v738 = vpop.f32.mrb[0].mxu0
  %739 = vmatprep.mubr.f32.mxu0 %v514
  %740 = vmatmul.mubr.f32.gmra.mrb[0].mxu0 %v206
  %v741 = vpop.f32.mrb[0].mxu0
  %v742 = vadd.f32 0.0, %v741
  %v743 = vpop.f32.mrb[0].mxu0
  %744 = vmatprep.mubr.f32.mxu0 %v517
  %745 = vmatmul.mubr.f32.gmra.mrb[0].mxu0 %v208
  %v746 = vpop.f32.mrb[0].mxu0
  %v747 = vadd.f32 0.0, %v746
  %v748 = vpop.f32.mrb[0].mxu0
  %749 = vmatprep.mubr.f32.mxu0 %v520
  %750 = vmatmul.mubr.f32.gmra.mrb[0].mxu0 %v210
  %v751 = vpop.f32.mrb[0].mxu0
  %v752 = vadd.f32 0.0, %v751
  %v753 = vpop.f32.mrb[0].mxu0
  %754 = vmatprep.mubr.f32.mxu0 %v523
  %755 = vmatmul.mubr.f32.gmra.mrb[0].mxu0 %v212
  %v756 = vpop.f32.mrb[0].mxu0
  %v757 = vadd.f32 0.0, %v756
  %v758 = vpop.f32.mrb[0].mxu0
  %759 = vmatprep.mubr.f32.mxu0 %v526
  %760 = vmatmul.mubr.f32.gmra.mrb[0].mxu0 %v214
  %v761 = vpop.f32.mrb[0].mxu0
  %v762 = vadd.f32 0.0, %v761
  %v763 = vpop.f32.mrb[0].mxu0
  %764 = vmatprep.mubr.f32.mxu0 %v529
  %765 = vmatmul.mubr.f32.gmra.mrb[0].mxu0 %v216
  %v766 = vpop.f32.mrb[0].mxu0
  %v767 = vadd.f32 0.0, %v766
  %v768 = vpop.f32.mrb[0].mxu0
  %769 = vmatprep.mubr.f32.mxu0 %v532
  %770 = vmatmul.mubr.f32.gmra.mrb[0].mxu0 %v218
  %v771 = vpop.f32.mrb[0].mxu0
  %v772 = vadd.f32 0.0, %v771
  %v773 = vpop.f32.mrb[0].mxu0
  %774 = vmatprep.mubr.f32.mxu0 %v535
  %775 = vmatmul.mubr.f32.gmra.mrb[0].mxu0 %v220
  %v776 = vpop.f32.mrb[0].mxu0
  %v777 = vadd.f32 0.0, %v776
  %v778 = vpop.f32.mrb[0].mxu0
  %779 = vmatprep.mubr.f32.mxu0 %v538
  %780 = vmatmul.mubr.f32.gmra.mrb[0].mxu0 %v222
  %v781 = vpop.f32.mrb[0].mxu0
  %v782 = vadd.f32 0.0, %v781
  %v783 = vpop.f32.mrb[0].mxu0
  %784 = vmatprep.mubr.f32.mxu0 %v541
  %785 = vmatmul.mubr.f32.gmra.mrb[0].mxu0 %v224
  %v786 = vpop.f32.mrb[0].mxu0
  %v787 = vadd.f32 0.0, %v786
  %v788 = vpop.f32.mrb[0].mxu0
  %789 = vmatprep.mubr.f32.mxu0 %v544
  %790 = vmatmul.mubr.f32.gmra.mrb[0].mxu0 %v226
  %v791 = vpop.f32.mrb[0].mxu0
  %v792 = vadd.f32 0.0, %v791
  %v793 = vpop.f32.mrb[0].mxu0
  %794 = vmatprep.mubr.f32.mxu0 %v547
  %795 = vmatmul.mubr.f32.gmra.mrb[0].mxu0 %v228
  %v796 = vpop.f32.mrb[0].mxu0
  %v797 = vadd.f32 0.0, %v796
  %v798 = vpop.f32.mrb[0].mxu0
  %799 = vmatprep.mubr.f32.mxu0 %v550
  %800 = vmatmul.mubr.f32.gmra.mrb[0].mxu0 %v230
  %v801 = vpop.f32.mrb[0].mxu0
  %v802 = vadd.f32 0.0, %v801
  %v803 = vpop.f32.mrb[0].mxu0
  %804 = vmatprep.mubr.f32.mxu0 %v553
  %805 = vmatmul.mubr.f32.gmra.mrb[0].mxu0 %v232
  %v806 = vpop.f32.mrb[0].mxu0
  %v807 = vadd.f32 0.0, %v806
  %v808 = vpop.f32.mrb[0].mxu0
  %809 = vmatprep.mubr.f32.mxu0 %v556
  %810 = vmatmul.mubr.f32.gmra.mrb[0].mxu0 %v234
  %v811 = vpop.f32.mrb[0].mxu0
  %v812 = vadd.f32 0.0, %v811
  %v813 = vpop.f32.mrb[0].mxu0
  %814 = vmatprep.mubr.f32.mxu0 %v559
  %815 = vmatmul.mubr.f32.gmra.mrb[0].mxu0 %v236
  %v816 = vpop.f32.mrb[0].mxu0
  %v817 = vadd.f32 0.0, %v816
  %v818 = vpop.f32.mrb[0].mxu0
  %819 = vmatprep.mubr.f32.mxu0 %v562
  %820 = vmatmul.mubr.f32.gmra.mrb[0].mxu0 %v238
  %v821 = vpop.f32.mrb[0].mxu0
  %v822 = vadd.f32 0.0, %v821
  %v823 = vpop.f32.mrb[0].mxu0
  %824 = vmatprep.mubr.f32.mxu0 %v565
  %825 = vmatmul.mubr.f32.gmra.mrb[0].mxu0 %v240
  %v826 = vpop.f32.mrb[0].mxu0
  %v827 = vadd.f32 0.0, %v826
  %v828 = vpop.f32.mrb[0].mxu0
  %829 = vmatprep.mubr.f32.mxu0 %v568
  %830 = vmatmul.mubr.f32.gmra.mrb[0].mxu0 %v242
  %v831 = vpop.f32.mrb[0].mxu0
  %v832 = vadd.f32 0.0, %v831
  %v833 = vpop.f32.mrb[0].mxu0
  %834 = vmatprep.mubr.f32.mxu0 %v571
  %835 = vmatmul.mubr.f32.gmra.mrb[0].mxu0 %v244
  %v836 = vpop.f32.mrb[0].mxu0
  %v837 = vadd.f32 0.0, %v836
  %v838 = vpop.f32.mrb[0].mxu0
  %839 = vmatprep.mubr.f32.mxu0 %v574
  %840 = vmatmul.mubr.f32.gmra.mrb[0].mxu0 %v246
  %v841 = vpop.f32.mrb[0].mxu0
  %v842 = vadd.f32 0.0, %v841
  %v843 = vpop.f32.mrb[0].mxu0
  %844 = vmatprep.mubr.f32.mxu0 %v577
  %845 = vmatmul.mubr.f32.gmra.mrb[0].mxu0 %v248
  %v846 = vpop.f32.mrb[0].mxu0
  %v847 = vadd.f32 0.0, %v846
  %v848 = vpop.f32.mrb[0].mxu0
  %849 = vmatprep.mubr.f32.mxu0 %v580
  %850 = vmatmul.mubr.f32.gmra.mrb[0].mxu0 %v250
  %v851 = vpop.f32.mrb[0].mxu0
  %v852 = vadd.f32 0.0, %v851
  %v853 = vpop.f32.mrb[0].mxu0
  %854 = vmatprep.mubr.f32.mxu0 %v583
  %855 = vmatmul.mubr.f32.gmra.mrb[0].mxu0 %v252
  %v856 = vpop.f32.mrb[0].mxu0
  %v857 = vadd.f32 0.0, %v856
  %v858 = vpop.f32.mrb[0].mxu0
  %859 = vmatprep.mubr.f32.mxu0 %v586
  %860 = vmatmul.mubr.f32.gmra.mrb[0].mxu0 %v254
  %v861 = vpop.f32.mrb[0].mxu0
  %v862 = vadd.f32 0.0, %v861
  %v863 = vpop.f32.mrb[0].mxu0
  %864 = vmatprep.mubr.f32.mxu0 %v589
  %865 = vmatmul.mubr.f32.gmra.mrb[0].mxu0 %v256
  %v866 = vpop.f32.mrb[0].mxu0
  %v867 = vadd.f32 0.0, %v866
  %v868 = vpop.f32.mrb[0].mxu0
  %869 = vmatprep.mubr.f32.mxu0 %v592
  %870 = vmatmul.mubr.f32.gmra.mrb[0].mxu0 %v258
  %v871 = vpop.f32.mrb[0].mxu0
  %v872 = vadd.f32 0.0, %v871
  %v873 = vpop.f32.mrb[0].mxu0
  %874 = vmatprep.mubr.f32.mxu0 %v595
  %875 = vmatmul.mubr.f32.gmra.mrb[0].mxu0 %v260
  %v876 = vpop.f32.mrb[0].mxu0
  %v877 = vadd.f32 0.0, %v876
  %v878 = vpop.f32.mrb[0].mxu0
  %879 = vmatprep.mubr.f32.mxu0 %v598
  %880 = vmatmul.mubr.f32.gmra.mrb[0].mxu0 %v262
  %v881 = vpop.f32.mrb[0].mxu0
  %v882 = vadd.f32 0.0, %v881
  %v883 = vpop.f32.mrb[0].mxu0
  %884 = vmatprep.mubr.f32.mxu0 %v601
  %885 = vmatmul.mubr.f32.gmra.mrb[0].mxu0 %v264
  %v886 = vpop.f32.mrb[0].mxu0
  %v887 = vadd.f32 0.0, %v886
  %v888 = vpop.f32.mrb[0].mxu0
  %889 = vmatprep.mubr.f32.mxu0 %v604
  %890 = vmatmul.mubr.f32.gmra.mrb[0].mxu0 %v266
  %v891 = vpop.f32.mrb[0].mxu0
  %v892 = vadd.f32 0.0, %v891
  %v893 = vpop.f32.mrb[0].mxu0
  %894 = vmatprep.mubr.f32.mxu0 %v607
  %895 = vmatmul.mubr.f32.gmra.mrb[0].mxu0 %v268
  %v896 = vpop.f32.mrb[0].mxu0
  %v897 = vadd.f32 0.0, %v896
  %v898 = vpop.f32.mrb[0].mxu0
  %899 = vmatprep.mubr.f32.mxu0 %v610
  %900 = vmatmul.mubr.f32.gmra.mrb[0].mxu0 %v270
  %v901 = vpop.f32.mrb[0].mxu0
  %v902 = vadd.f32 0.0, %v901
  %v903 = vpop.f32.mrb[0].mxu0
  %904 = vmatprep.mubr.f32.mxu0 %v613
  %905 = vmatmul.mubr.f32.gmra.mrb[0].mxu0 %v272
  %v906 = vpop.f32.mrb[0].mxu0
  %v907 = vadd.f32 0.0, %v906
  %v908 = vpop.f32.mrb[0].mxu0
  %909 = vmatprep.mubr.f32.mxu0 %v616
  %910 = vmatmul.mubr.f32.gmra.mrb[0].mxu0 %v274
  %v911 = vpop.f32.mrb[0].mxu0
  %v912 = vadd.f32 0.0, %v911
  %v913 = vpop.f32.mrb[0].mxu0
  %914 = vmatprep.mubr.f32.mxu0 %v619
  %915 = vmatmul.mubr.f32.gmra.mrb[0].mxu0 %v276
  %v916 = vpop.f32.mrb[0].mxu0
  %v917 = vadd.f32 0.0, %v916
  %v918 = vpop.f32.mrb[0].mxu0
  %919 = vmatprep.mubr.f32.mxu0 %v622
  %920 = vmatmul.mubr.f32.gmra.mrb[0].mxu0 %v278
  %v921 = vpop.f32.mrb[0].mxu0
  %v922 = vadd.f32 0.0, %v921
  %v923 = vpop.f32.mrb[0].mxu0
  %924 = vmatprep.mubr.f32.mxu0 %v625
  %925 = vmatmul.mubr.f32.gmra.mrb[0].mxu0 %v280
  %v926 = vpop.f32.mrb[0].mxu0
  %v927 = vadd.f32 0.0, %v926
  %v928 = vpop.f32.mrb[0].mxu0
  %929 = vmatprep.mubr.f32.mxu0 %v628
  %930 = vmatmul.mubr.f32.gmra.mrb[0].mxu0 %v282
  %v931 = vpop.f32.mrb[0].mxu0
  %v932 = vadd.f32 0.0, %v931
  %v933 = vpop.f32.mrb[0].mxu0
  %934 = vdwg.mxu0
  %v936 = vsel %vm485, %v93, 0
  %v939 = vsel %vm485, %v95, 0
  %v942 = vsel %vm485, %v97, 0
  %v945 = vsel %vm485, %v99, 0
  %v948 = vsel %vm485, %v101, 0
  %v951 = vsel %vm485, %v103, 0
  %v954 = vsel %vm485, %v105, 0
  %v957 = vsel %vm485, %v107, 0
  %v960 = vsel %vm485, %v109, 0
  %v963 = vsel %vm485, %v111, 0
  %v966 = vsel %vm485, %v113, 0
  %v969 = vsel %vm485, %v115, 0
  %v972 = vsel %vm485, %v117, 0
  %v975 = vsel %vm485, %v119, 0
  %v978 = vsel %vm485, %v121, 0
  %v981 = vsel %vm485, %v123, 0
  %v984 = vsel %vm485, %v125, 0
  %v987 = vsel %vm485, %v127, 0
  %v990 = vsel %vm485, %v129, 0
  %v993 = vsel %vm485, %v131, 0
  %v996 = vsel %vm485, %v133, 0
  %v999 = vsel %vm485, %v135, 0
  %v1002 = vsel %vm485, %v137, 0
  %v1005 = vsel %vm485, %v139, 0
  %v1008 = vsel %vm485, %v141, 0
  %v1011 = vsel %vm485, %v143, 0
  %v1014 = vsel %vm485, %v145, 0
  %v1017 = vsel %vm485, %v147, 0
  %v1020 = vsel %vm485, %v149, 0
  %v1023 = vsel %vm485, %v151, 0
  %v1026 = vsel %vm485, %v153, 0
  %v1029 = vsel %vm485, %v155, 0
  %v1032 = vsel %vm485, %v157, 0
  %v1035 = vsel %vm485, %v159, 0
  %v1038 = vsel %vm485, %v161, 0
  %v1041 = vsel %vm485, %v163, 0
  %v1044 = vsel %vm485, %v165, 0
  %v1047 = vsel %vm485, %v167, 0
  %v1050 = vsel %vm485, %v169, 0
  %v1053 = vsel %vm485, %v171, 0
  %v1056 = vsel %vm485, %v173, 0
  %v1059 = vsel %vm485, %v175, 0
  %v1062 = vsel %vm485, %v177, 0
  %v1065 = vsel %vm485, %v179, 0
  %v1068 = vsel %vm485, %v181, 0
  %v1071 = vsel %vm485, %v183, 0
  %v1074 = vsel %vm485, %v185, 0
  %v1077 = vsel %vm485, %v187, 0
  %1079 = vmatprep.subr.mxu0 0.0
  %1080 = vmatpush1.msra.mxu0 %v68
  %1081 = vmatprep.subr.mxu0 0.0
  %1082 = vmatpush1.msra.mxu0 %v69
  %1083 = vmatprep.subr.mxu0 0.0
  %1084 = vmatpush1.msra.mxu0 %v70
  %1085 = vmatprep.subr.mxu0 0.0
  %1086 = vmatpush1.msra.mxu0 %v71
  %1087 = vmatprep.subr.mxu0 0.0
  %1088 = vmatpush1.msra.mxu0 %v72
  %1089 = vmatprep.subr.mxu0 0.0
  %1090 = vmatpush1.msra.mxu0 %v73
  %1091 = vmatprep.subr.mxu0 0.0
  %1092 = vmatpush1.msra.mxu0 %v74
  %1093 = vmatprep.subr.mxu0 0.0
  %1094 = vmatpush1.msra.mxu0 %v75
  %1095 = vmatprep.subr.mxu0 0.0
  %1096 = vmatpush1.msra.mxu0 %v76
  %1097 = vmatprep.subr.mxu0 0.0
  %1098 = vmatpush1.msra.mxu0 %v77
  %1099 = vmatprep.subr.mxu0 0.0
  %1100 = vmatpush1.msra.mxu0 %v78
  %1101 = vmatprep.subr.mxu0 0.0
  %1102 = vmatpush1.msra.mxu0 %v79
  %1103 = vmatprep.subr.mxu0 0.0
  %1104 = vmatpush1.msra.mxu0 %v80
  %1105 = vmatprep.subr.mxu0 0.0
  %1106 = vmatpush1.msra.mxu0 %v81
  %1107 = vmatprep.subr.mxu0 0.0
  %1108 = vmatpush1.msra.mxu0 %v82
  %1109 = vmatprep.subr.mxu0 0.0
  %1110 = vmatpush1.msra.mxu0 %v83
  %1111 = vmatprep.subr.mxu0 0.0
  %1112 = vmatpush1.msra.mxu0 %v84
  %1113 = vmatprep.subr.mxu0 0.0
  %1114 = vmatpush1.msra.mxu0 %v85
  %1115 = vmatprep.subr.mxu0 0.0
  %1116 = vmatpush1.msra.mxu0 %v86
  %1117 = vmatprep.subr.mxu0 0.0
  %1118 = vmatpush1.msra.mxu0 %v87
  %1119 = vmatprep.subr.mxu0 0.0
  %1120 = vmatpush1.msra.mxu0 %v88
  %1121 = vmatprep.subr.mxu0 0.0
  %1122 = vmatpush1.msra.mxu0 %v89
  %1123 = vmatprep.subr.mxu0 0.0
  %1124 = vmatpush1.msra.mxu0 %v90
  %1125 = vmatprep.subr.mxu0 0.0
  %1126 = vmatpush1.msra.mxu0 %v91
  %1127 = vmatprep.subr.mxu0 0.0
  %1128 = vmatpush1.msra.mxu0 0.0
  %1129 = vmatprep.subr.mxu0 0.0
  %1130 = vmatpush1.msra.mxu0 0.0
  %1131 = vmatprep.subr.mxu0 0.0
  %1132 = vmatpush1.msra.mxu0 0.0
  %1133 = vmatprep.subr.mxu0 0.0
  %1134 = vmatpush1.msra.mxu0 0.0
  %1135 = vmatprep.subr.mxu0 0.0
  %1136 = vmatpush1.msra.mxu0 0.0
  %1137 = vmatprep.subr.mxu0 0.0
  %1138 = vmatpush1.msra.mxu0 0.0
  %1139 = vmatprep.subr.mxu0 0.0
  %1140 = vmatpush1.msra.mxu0 0.0
  %1141 = vmatprep.subr.mxu0 0.0
  %1142 = vmatpush1.msra.mxu0 0.0
  %1143 = vmatprep.mubr.f32.mxu0 %v936
  %1144 = vmatmul.mubr.f32.gmra.mrb[0].mxu0 %v92
  %v1145 = vpop.f32.mrb[0].mxu0
  %v1146 = vadd.f32 %v697, %v1145
  %v1147 = vpop.f32.mrb[0].mxu0
  %1148 = vmatprep.mubr.f32.mxu0 %v939
  %1149 = vmatmul.mubr.f32.gmra.mrb[0].mxu0 %v94
  %v1150 = vpop.f32.mrb[0].mxu0
  %v1151 = vadd.f32 %v702, %v1150
  %v1152 = vpop.f32.mrb[0].mxu0
  %1153 = vmatprep.mubr.f32.mxu0 %v942
  %1154 = vmatmul.mubr.f32.gmra.mrb[0].mxu0 %v96
  %v1155 = vpop.f32.mrb[0].mxu0
  %v1156 = vadd.f32 %v707, %v1155
  %v1157 = vpop.f32.mrb[0].mxu0
  %1158 = vmatprep.mubr.f32.mxu0 %v945
  %1159 = vmatmul.mubr.f32.gmra.mrb[0].mxu0 %v98
  %v1160 = vpop.f32.mrb[0].mxu0
  %v1161 = vadd.f32 %v712, %v1160
  %v1162 = vpop.f32.mrb[0].mxu0
  %1163 = vmatprep.mubr.f32.mxu0 %v948
  %1164 = vmatmul.mubr.f32.gmra.mrb[0].mxu0 %v100
  %v1165 = vpop.f32.mrb[0].mxu0
  %v1166 = vadd.f32 %v717, %v1165
  %v1167 = vpop.f32.mrb[0].mxu0
  %1168 = vmatprep.mubr.f32.mxu0 %v951
  %1169 = vmatmul.mubr.f32.gmra.mrb[0].mxu0 %v102
  %v1170 = vpop.f32.mrb[0].mxu0
  %v1171 = vadd.f32 %v722, %v1170
  %v1172 = vpop.f32.mrb[0].mxu0
  %1173 = vmatprep.mubr.f32.mxu0 %v954
  %1174 = vmatmul.mubr.f32.gmra.mrb[0].mxu0 %v104
  %v1175 = vpop.f32.mrb[0].mxu0
  %v1176 = vadd.f32 %v727, %v1175
  %v1177 = vpop.f32.mrb[0].mxu0
  %1178 = vmatprep.mubr.f32.mxu0 %v957
  %1179 = vmatmul.mubr.f32.gmra.mrb[0].mxu0 %v106
  %v1180 = vpop.f32.mrb[0].mxu0
  %v1181 = vadd.f32 %v732, %v1180
  %v1182 = vpop.f32.mrb[0].mxu0
  %1183 = vmatprep.mubr.f32.mxu0 %v960
  %1184 = vmatmul.mubr.f32.gmra.mrb[0].mxu0 %v108
  %v1185 = vpop.f32.mrb[0].mxu0
  %v1186 = vadd.f32 %v737, %v1185
  %v1187 = vpop.f32.mrb[0].mxu0
  %1188 = vmatprep.mubr.f32.mxu0 %v963
  %1189 = vmatmul.mubr.f32.gmra.mrb[0].mxu0 %v110
  %v1190 = vpop.f32.mrb[0].mxu0
  %v1191 = vadd.f32 %v742, %v1190
  %v1192 = vpop.f32.mrb[0].mxu0
  %1193 = vmatprep.mubr.f32.mxu0 %v966
  %1194 = vmatmul.mubr.f32.gmra.mrb[0].mxu0 %v112
  %v1195 = vpop.f32.mrb[0].mxu0
  %v1196 = vadd.f32 %v747, %v1195
  %v1197 = vpop.f32.mrb[0].mxu0
  %1198 = vmatprep.mubr.f32.mxu0 %v969
  %1199 = vmatmul.mubr.f32.gmra.mrb[0].mxu0 %v114
  %v1200 = vpop.f32.mrb[0].mxu0
  %v1201 = vadd.f32 %v752, %v1200
  %v1202 = vpop.f32.mrb[0].mxu0
  %1203 = vmatprep.mubr.f32.mxu0 %v972
  %1204 = vmatmul.mubr.f32.gmra.mrb[0].mxu0 %v116
  %v1205 = vpop.f32.mrb[0].mxu0
  %v1206 = vadd.f32 %v757, %v1205
  %v1207 = vpop.f32.mrb[0].mxu0
  %1208 = vmatprep.mubr.f32.mxu0 %v975
  %1209 = vmatmul.mubr.f32.gmra.mrb[0].mxu0 %v118
  %v1210 = vpop.f32.mrb[0].mxu0
  %v1211 = vadd.f32 %v762, %v1210
  %v1212 = vpop.f32.mrb[0].mxu0
  %1213 = vmatprep.mubr.f32.mxu0 %v978
  %1214 = vmatmul.mubr.f32.gmra.mrb[0].mxu0 %v120
  %v1215 = vpop.f32.mrb[0].mxu0
  %v1216 = vadd.f32 %v767, %v1215
  %v1217 = vpop.f32.mrb[0].mxu0
  %1218 = vmatprep.mubr.f32.mxu0 %v981
  %1219 = vmatmul.mubr.f32.gmra.mrb[0].mxu0 %v122
  %v1220 = vpop.f32.mrb[0].mxu0
  %v1221 = vadd.f32 %v772, %v1220
  %v1222 = vpop.f32.mrb[0].mxu0
  %1223 = vmatprep.mubr.f32.mxu0 %v984
  %1224 = vmatmul.mubr.f32.gmra.mrb[0].mxu0 %v124
  %v1225 = vpop.f32.mrb[0].mxu0
  %v1226 = vadd.f32 %v777, %v1225
  %v1227 = vpop.f32.mrb[0].mxu0
  %1228 = vmatprep.mubr.f32.mxu0 %v987
  %1229 = vmatmul.mubr.f32.gmra.mrb[0].mxu0 %v126
  %v1230 = vpop.f32.mrb[0].mxu0
  %v1231 = vadd.f32 %v782, %v1230
  %v1232 = vpop.f32.mrb[0].mxu0
  %1233 = vmatprep.mubr.f32.mxu0 %v990
  %1234 = vmatmul.mubr.f32.gmra.mrb[0].mxu0 %v128
  %v1235 = vpop.f32.mrb[0].mxu0
  %v1236 = vadd.f32 %v787, %v1235
  %v1237 = vpop.f32.mrb[0].mxu0
  %1238 = vmatprep.mubr.f32.mxu0 %v993
  %1239 = vmatmul.mubr.f32.gmra.mrb[0].mxu0 %v130
  %v1240 = vpop.f32.mrb[0].mxu0
  %v1241 = vadd.f32 %v792, %v1240
  %v1242 = vpop.f32.mrb[0].mxu0
  %1243 = vmatprep.mubr.f32.mxu0 %v996
  %1244 = vmatmul.mubr.f32.gmra.mrb[0].mxu0 %v132
  %v1245 = vpop.f32.mrb[0].mxu0
  %v1246 = vadd.f32 %v797, %v1245
  %v1247 = vpop.f32.mrb[0].mxu0
  %1248 = vmatprep.mubr.f32.mxu0 %v999
  %1249 = vmatmul.mubr.f32.gmra.mrb[0].mxu0 %v134
  %v1250 = vpop.f32.mrb[0].mxu0
  %v1251 = vadd.f32 %v802, %v1250
  %v1252 = vpop.f32.mrb[0].mxu0
  %1253 = vmatprep.mubr.f32.mxu0 %v1002
  %1254 = vmatmul.mubr.f32.gmra.mrb[0].mxu0 %v136
  %v1255 = vpop.f32.mrb[0].mxu0
  %v1256 = vadd.f32 %v807, %v1255
  %v1257 = vpop.f32.mrb[0].mxu0
  %1258 = vmatprep.mubr.f32.mxu0 %v1005
  %1259 = vmatmul.mubr.f32.gmra.mrb[0].mxu0 %v138
  %v1260 = vpop.f32.mrb[0].mxu0
  %v1261 = vadd.f32 %v812, %v1260
  %v1262 = vpop.f32.mrb[0].mxu0
  %1263 = vmatprep.mubr.f32.mxu0 %v1008
  %1264 = vmatmul.mubr.f32.gmra.mrb[0].mxu0 %v140
  %v1265 = vpop.f32.mrb[0].mxu0
  %v1266 = vadd.f32 %v817, %v1265
  %v1267 = vpop.f32.mrb[0].mxu0
  %1268 = vmatprep.mubr.f32.mxu0 %v1011
  %1269 = vmatmul.mubr.f32.gmra.mrb[0].mxu0 %v142
  %v1270 = vpop.f32.mrb[0].mxu0
  %v1271 = vadd.f32 %v822, %v1270
  %v1272 = vpop.f32.mrb[0].mxu0
  %1273 = vmatprep.mubr.f32.mxu0 %v1014
  %1274 = vmatmul.mubr.f32.gmra.mrb[0].mxu0 %v144
  %v1275 = vpop.f32.mrb[0].mxu0
  %v1276 = vadd.f32 %v827, %v1275
  %v1277 = vpop.f32.mrb[0].mxu0
  %1278 = vmatprep.mubr.f32.mxu0 %v1017
  %1279 = vmatmul.mubr.f32.gmra.mrb[0].mxu0 %v146
  %v1280 = vpop.f32.mrb[0].mxu0
  %v1281 = vadd.f32 %v832, %v1280
  %v1282 = vpop.f32.mrb[0].mxu0
  %1283 = vmatprep.mubr.f32.mxu0 %v1020
  %1284 = vmatmul.mubr.f32.gmra.mrb[0].mxu0 %v148
  %v1285 = vpop.f32.mrb[0].mxu0
  %v1286 = vadd.f32 %v837, %v1285
  %v1287 = vpop.f32.mrb[0].mxu0
  %1288 = vmatprep.mubr.f32.mxu0 %v1023
  %1289 = vmatmul.mubr.f32.gmra.mrb[0].mxu0 %v150
  %v1290 = vpop.f32.mrb[0].mxu0
  %v1291 = vadd.f32 %v842, %v1290
  %v1292 = vpop.f32.mrb[0].mxu0
  %1293 = vmatprep.mubr.f32.mxu0 %v1026
  %1294 = vmatmul.mubr.f32.gmra.mrb[0].mxu0 %v152
  %v1295 = vpop.f32.mrb[0].mxu0
  %v1296 = vadd.f32 %v847, %v1295
  %v1297 = vpop.f32.mrb[0].mxu0
  %1298 = vmatprep.mubr.f32.mxu0 %v1029
  %1299 = vmatmul.mubr.f32.gmra.mrb[0].mxu0 %v154
  %v1300 = vpop.f32.mrb[0].mxu0
  %v1301 = vadd.f32 %v852, %v1300
  %v1302 = vpop.f32.mrb[0].mxu0
  %1303 = vmatprep.mubr.f32.mxu0 %v1032
  %1304 = vmatmul.mubr.f32.gmra.mrb[0].mxu0 %v156
  %v1305 = vpop.f32.mrb[0].mxu0
  %v1306 = vadd.f32 %v857, %v1305
  %v1307 = vpop.f32.mrb[0].mxu0
  %1308 = vmatprep.mubr.f32.mxu0 %v1035
  %1309 = vmatmul.mubr.f32.gmra.mrb[0].mxu0 %v158
  %v1310 = vpop.f32.mrb[0].mxu0
  %v1311 = vadd.f32 %v862, %v1310
  %v1312 = vpop.f32.mrb[0].mxu0
  %1313 = vmatprep.mubr.f32.mxu0 %v1038
  %1314 = vmatmul.mubr.f32.gmra.mrb[0].mxu0 %v160
  %v1315 = vpop.f32.mrb[0].mxu0
  %v1316 = vadd.f32 %v867, %v1315
  %v1317 = vpop.f32.mrb[0].mxu0
  %1318 = vmatprep.mubr.f32.mxu0 %v1041
  %1319 = vmatmul.mubr.f32.gmra.mrb[0].mxu0 %v162
  %v1320 = vpop.f32.mrb[0].mxu0
  %v1321 = vadd.f32 %v872, %v1320
  %v1322 = vpop.f32.mrb[0].mxu0
  %1323 = vmatprep.mubr.f32.mxu0 %v1044
  %1324 = vmatmul.mubr.f32.gmra.mrb[0].mxu0 %v164
  %v1325 = vpop.f32.mrb[0].mxu0
  %v1326 = vadd.f32 %v877, %v1325
  %v1327 = vpop.f32.mrb[0].mxu0
  %1328 = vmatprep.mubr.f32.mxu0 %v1047
  %1329 = vmatmul.mubr.f32.gmra.mrb[0].mxu0 %v166
  %v1330 = vpop.f32.mrb[0].mxu0
  %v1331 = vadd.f32 %v882, %v1330
  %v1332 = vpop.f32.mrb[0].mxu0
  %1333 = vmatprep.mubr.f32.mxu0 %v1050
  %1334 = vmatmul.mubr.f32.gmra.mrb[0].mxu0 %v168
  %v1335 = vpop.f32.mrb[0].mxu0
  %v1336 = vadd.f32 %v887, %v1335
  %v1337 = vpop.f32.mrb[0].mxu0
  %1338 = vmatprep.mubr.f32.mxu0 %v1053
  %1339 = vmatmul.mubr.f32.gmra.mrb[0].mxu0 %v170
  %v1340 = vpop.f32.mrb[0].mxu0
  %v1341 = vadd.f32 %v892, %v1340
  %v1342 = vpop.f32.mrb[0].mxu0
  %1343 = vmatprep.mubr.f32.mxu0 %v1056
  %1344 = vmatmul.mubr.f32.gmra.mrb[0].mxu0 %v172
  %v1345 = vpop.f32.mrb[0].mxu0
  %v1346 = vadd.f32 %v897, %v1345
  %v1347 = vpop.f32.mrb[0].mxu0
  %1348 = vmatprep.mubr.f32.mxu0 %v1059
  %1349 = vmatmul.mubr.f32.gmra.mrb[0].mxu0 %v174
  %v1350 = vpop.f32.mrb[0].mxu0
  %v1351 = vadd.f32 %v902, %v1350
  %v1352 = vpop.f32.mrb[0].mxu0
  %1353 = vmatprep.mubr.f32.mxu0 %v1062
  %1354 = vmatmul.mubr.f32.gmra.mrb[0].mxu0 %v176
  %v1355 = vpop.f32.mrb[0].mxu0
  %v1356 = vadd.f32 %v907, %v1355
  %v1357 = vpop.f32.mrb[0].mxu0
  %1358 = vmatprep.mubr.f32.mxu0 %v1065
  %1359 = vmatmul.mubr.f32.gmra.mrb[0].mxu0 %v178
  %v1360 = vpop.f32.mrb[0].mxu0
  %v1361 = vadd.f32 %v912, %v1360
  %v1362 = vpop.f32.mrb[0].mxu0
  %1363 = vmatprep.mubr.f32.mxu0 %v1068
  %1364 = vmatmul.mubr.f32.gmra.mrb[0].mxu0 %v180
  %v1365 = vpop.f32.mrb[0].mxu0
  %v1366 = vadd.f32 %v917, %v1365
  %v1367 = vpop.f32.mrb[0].mxu0
  %1368 = vmatprep.mubr.f32.mxu0 %v1071
  %1369 = vmatmul.mubr.f32.gmra.mrb[0].mxu0 %v182
  %v1370 = vpop.f32.mrb[0].mxu0
  %v1371 = vadd.f32 %v922, %v1370
  %v1372 = vpop.f32.mrb[0].mxu0
  %1373 = vmatprep.mubr.f32.mxu0 %v1074
  %1374 = vmatmul.mubr.f32.gmra.mrb[0].mxu0 %v184
  %v1375 = vpop.f32.mrb[0].mxu0
  %v1376 = vadd.f32 %v927, %v1375
  %v1377 = vpop.f32.mrb[0].mxu0
  %1378 = vmatprep.mubr.f32.mxu0 %v1077
  %1379 = vmatmul.mubr.f32.gmra.mrb[0].mxu0 %v186
  %v1380 = vpop.f32.mrb[0].mxu0
  %v1381 = vadd.f32 %v932, %v1380
  %v1382 = vpop.f32.mrb[0].mxu0
  %1383 = vdwg.mxu0
  %v1384 = vld [vmem:[%s3] sm:$0xff]
  %v1385 = vld [vmem:[%s3 + $0x8] sm:$0xff]
  %v1386 = vld [vmem:[%s3 + $0x10] sm:$0xff]
  %v1387 = vld [vmem:[%s3 + $0x18] sm:$0xff]
  %v1388 = vld [vmem:[%s3 + $0x20] sm:$0xff]
  %v1389 = vld [vmem:[%s3 + $0x28] sm:$0xff]
  %v1390 = vld [vmem:[%s3 + $0x30] sm:$0xff]
  %v1391 = vld [vmem:[%s3 + $0x38] sm:$0xff]
  %v1392 = vld [vmem:[%s3 + $0x40] sm:$0xff]
  %v1393 = vld [vmem:[%s3 + $0x48] sm:$0xff]
  %v1394 = vld [vmem:[%s3 + $0x50] sm:$0xff]
  %v1395 = vld [vmem:[%s3 + $0x58] sm:$0xff]
  %v1396 = vld [vmem:[%s3 + $0x60] sm:$0xff]
  %v1397 = vld [vmem:[%s3 + $0x68] sm:$0xff]
  %v1398 = vld [vmem:[%s3 + $0x70] sm:$0xff]
  %v1399 = vld [vmem:[%s3 + $0x78] sm:$0xff]
  %v1400 = vld [vmem:[%s3 + $0x80] sm:$0xff]
  %v1401 = vld [vmem:[%s3 + $0x88] sm:$0xff]
  %v1402 = vld [vmem:[%s3 + $0x90] sm:$0xff]
  %v1403 = vld [vmem:[%s3 + $0x98] sm:$0xff]
  %v1404 = vld [vmem:[%s3 + $0xa0] sm:$0xff]
  %v1405 = vld [vmem:[%s3 + $0xa8] sm:$0xff]
  %v1406 = vld [vmem:[%s3 + $0xb0] sm:$0xff]
  %v1407 = vld [vmem:[%s3 + $0xb8] sm:$0xff]
  %v1408 = vld [vmem:[%s3 + $0xc0] sm:$0xff]
  %v1409 = vld [vmem:[%s3 + $0xc8] sm:$0xff]
  %v1410 = vld [vmem:[%s3 + $0xd0] sm:$0xff]
  %v1411 = vld [vmem:[%s3 + $0xd8] sm:$0xff]
  %v1412 = vld [vmem:[%s3 + $0xe0] sm:$0xff]
  %v1413 = vld [vmem:[%s3 + $0xe8] sm:$0xff]
  %v1414 = vld [vmem:[%s3 + $0xf0] sm:$0xff]
  %v1415 = vld [vmem:[%s3 + $0xf8] sm:$0xff]
  %v1416 = vld [vmem:[%s3 + $0x100] sm:$0xff]
  %v1417 = vld [vmem:[%s3 + $0x108] sm:$0xff]
  %v1418 = vld [vmem:[%s3 + $0x110] sm:$0xff]
  %v1419 = vld [vmem:[%s3 + $0x118] sm:$0xff]
  %v1420 = vld [vmem:[%s3 + $0x120] sm:$0xff]
  %v1421 = vld [vmem:[%s3 + $0x128] sm:$0xff]
  %v1422 = vld [vmem:[%s3 + $0x130] sm:$0xff]
  %v1423 = vld [vmem:[%s3 + $0x138] sm:$0xff]
  %v1424 = vld [vmem:[%s3 + $0x140] sm:$0xff]
  %v1425 = vld [vmem:[%s3 + $0x148] sm:$0xff]
  %v1426 = vld [vmem:[%s3 + $0x150] sm:$0xff]
  %v1427 = vld [vmem:[%s3 + $0x158] sm:$0xff]
  %v1428 = vld [vmem:[%s3 + $0x160] sm:$0xff]
  %v1429 = vld [vmem:[%s3 + $0x168] sm:$0xff]
  %v1430 = vld [vmem:[%s3 + $0x170] sm:$0xff]
  %v1431 = vld [vmem:[%s3 + $0x178] sm:$0xff]
  %v1432 = vld [vmem:[%s3 + $0x180] sm:$0xff]
  %v1433 = vld [vmem:[%s3 + $0x188] sm:$0xff]
  %v1434 = vld [vmem:[%s3 + $0x190] sm:$0xff]
  %v1435 = vld [vmem:[%s3 + $0x198] sm:$0xff]
  %v1436 = vld [vmem:[%s3 + $0x1a0] sm:$0xff]
  %v1437 = vld [vmem:[%s3 + $0x1a8] sm:$0xff]
  %v1438 = vld [vmem:[%s3 + $0x1b0] sm:$0xff]
  %v1439 = vld [vmem:[%s3 + $0x1b8] sm:$0xff]
  %v1440 = vld [vmem:[%s3 + $0x1c0] sm:$0xff]
  %v1441 = vld [vmem:[%s3 + $0x1c8] sm:$0xff]
  %v1442 = vld [vmem:[%s3 + $0x1d0] sm:$0xff]
  %v1443 = vld [vmem:[%s3 + $0x1d8] sm:$0xff]
  %v1444 = vld [vmem:[%s3 + $0x1e0] sm:$0xff]
  %v1445 = vld [vmem:[%s3 + $0x1e8] sm:$0xff]
  %v1446 = vld [vmem:[%s3 + $0x1f0] sm:$0xff]
  %v1447 = vld [vmem:[%s3 + $0x1f8] sm:$0xff]
  %v1448 = vld [vmem:[%s3 + $0x200] sm:$0xff]
  %v1449 = vld [vmem:[%s3 + $0x208] sm:$0xff]
  %v1450 = vld [vmem:[%s3 + $0x210] sm:$0xff]
  %v1451 = vld [vmem:[%s3 + $0x218] sm:$0xff]
  %v1452 = vld [vmem:[%s3 + $0x220] sm:$0xff]
  %v1453 = vld [vmem:[%s3 + $0x228] sm:$0xff]
  %v1454 = vld [vmem:[%s3 + $0x230] sm:$0xff]
  %v1455 = vld [vmem:[%s3 + $0x238] sm:$0xff]
  %v1456 = vld [vmem:[%s3 + $0x240] sm:$0xff]
  %v1457 = vld [vmem:[%s3 + $0x248] sm:$0xff]
  %v1458 = vld [vmem:[%s3 + $0x250] sm:$0xff]
  %v1459 = vld [vmem:[%s3 + $0x258] sm:$0xff]
  %v1460 = vld [vmem:[%s3 + $0x260] sm:$0xff]
  %v1461 = vld [vmem:[%s3 + $0x268] sm:$0xff]
  %v1462 = vld [vmem:[%s3 + $0x270] sm:$0xff]
  %v1463 = vld [vmem:[%s3 + $0x278] sm:$0xff]
  %v1464 = vld [vmem:[%s3 + $0x280] sm:$0xff]
  %v1465 = vld [vmem:[%s3 + $0x288] sm:$0xff]
  %v1466 = vld [vmem:[%s3 + $0x290] sm:$0xff]
  %v1467 = vld [vmem:[%s3 + $0x298] sm:$0xff]
  %v1468 = vld [vmem:[%s3 + $0x2a0] sm:$0xff]
  %v1469 = vld [vmem:[%s3 + $0x2a8] sm:$0xff]
  %v1470 = vld [vmem:[%s3 + $0x2b0] sm:$0xff]
  %v1471 = vld [vmem:[%s3 + $0x2b8] sm:$0xff]
  %v1472 = vld [vmem:[%s3 + $0x2c0] sm:$0xff]
  %v1473 = vld [vmem:[%s3 + $0x2c8] sm:$0xff]
  %v1474 = vld [vmem:[%s3 + $0x2d0] sm:$0xff]
  %v1475 = vld [vmem:[%s3 + $0x2d8] sm:$0xff]
  %v1476 = vld [vmem:[%s3 + $0x2e0] sm:$0xff]
  %v1477 = vld [vmem:[%s3 + $0x2e8] sm:$0xff]
  %v1478 = vld [vmem:[%s3 + $0x2f0] sm:$0xff]
  %v1479 = vld [vmem:[%s3 + $0x2f8] sm:$0xff]
  %v1480 = vld [vmem:[%s5] sm:$0xff]
  %v1481 = vld [vmem:[%s5 + $0x8] sm:$0xff]
  %v1482 = vld [vmem:[%s5 + $0x10] sm:$0xff]
  %v1483 = vld [vmem:[%s5 + $0x18] sm:$0xff]
  %v1484 = vld [vmem:[%s5 + $0x20] sm:$0xff]
  %v1485 = vld [vmem:[%s5 + $0x28] sm:$0xff]
  %v1486 = vld [vmem:[%s5 + $0x30] sm:$0xff]
  %v1487 = vld [vmem:[%s5 + $0x38] sm:$0xff]
  %v1488 = vld [vmem:[%s5 + $0x40] sm:$0xff]
  %v1489 = vld [vmem:[%s5 + $0x48] sm:$0xff]
  %v1490 = vld [vmem:[%s5 + $0x50] sm:$0xff]
  %v1491 = vld [vmem:[%s5 + $0x58] sm:$0xff]
  %v1492 = vld [vmem:[%s5 + $0x60] sm:$0xff]
  %v1493 = vld [vmem:[%s5 + $0x68] sm:$0xff]
  %v1494 = vld [vmem:[%s5 + $0x70] sm:$0xff]
  %v1495 = vld [vmem:[%s5 + $0x78] sm:$0xff]
  %1496 = vmatprep.subr.mxu0 0.0
  %1497 = vmatpush1.msra.mxu0 %v1480
  %1498 = vmatprep.subr.mxu0 0.0
  %1499 = vmatpush1.msra.mxu0 %v1481
  %1500 = vmatprep.subr.mxu0 0.0
  %1501 = vmatpush1.msra.mxu0 %v1482
  %1502 = vmatprep.subr.mxu0 0.0
  %1503 = vmatpush1.msra.mxu0 %v1483
  %1504 = vmatprep.subr.mxu0 0.0
  %1505 = vmatpush1.msra.mxu0 %v1484
  %1506 = vmatprep.subr.mxu0 0.0
  %1507 = vmatpush1.msra.mxu0 %v1485
  %1508 = vmatprep.subr.mxu0 0.0
  %1509 = vmatpush1.msra.mxu0 %v1486
  %1510 = vmatprep.subr.mxu0 0.0
  %1511 = vmatpush1.msra.mxu0 %v1487
  %1512 = vmatprep.subr.mxu0 0.0
  %1513 = vmatpush1.msra.mxu0 %v1488
  %1514 = vmatprep.subr.mxu0 0.0
  %1515 = vmatpush1.msra.mxu0 %v1489
  %1516 = vmatprep.subr.mxu0 0.0
  %1517 = vmatpush1.msra.mxu0 %v1490
  %1518 = vmatprep.subr.mxu0 0.0
  %1519 = vmatpush1.msra.mxu0 %v1491
  %1520 = vmatprep.subr.mxu0 0.0
  %1521 = vmatpush1.msra.mxu0 %v1492
  %1522 = vmatprep.subr.mxu0 0.0
  %1523 = vmatpush1.msra.mxu0 %v1493
  %1524 = vmatprep.subr.mxu0 0.0
  %1525 = vmatpush1.msra.mxu0 %v1494
  %1526 = vmatprep.subr.mxu0 0.0
  %1527 = vmatpush1.msra.mxu0 %v1495
  %1528 = vmatprep.subr.mxu0 0.0
  %1529 = vmatpush1.msra.mxu0 0.0
  %1530 = vmatprep.subr.mxu0 0.0
  %1531 = vmatpush1.msra.mxu0 0.0
  %1532 = vmatprep.subr.mxu0 0.0
  %1533 = vmatpush1.msra.mxu0 0.0
  %1534 = vmatprep.subr.mxu0 0.0
  %1535 = vmatpush1.msra.mxu0 0.0
  %1536 = vmatprep.subr.mxu0 0.0
  %1537 = vmatpush1.msra.mxu0 0.0
  %1538 = vmatprep.subr.mxu0 0.0
  %1539 = vmatpush1.msra.mxu0 0.0
  %1540 = vmatprep.subr.mxu0 0.0
  %1541 = vmatpush1.msra.mxu0 0.0
  %1542 = vmatprep.subr.mxu0 0.0
  %1543 = vmatpush1.msra.mxu0 0.0
  %1544 = vmatprep.subr.mxu0 0.0
  %1545 = vmatpush1.msra.mxu0 0.0
  %1546 = vmatprep.subr.mxu0 0.0
  %1547 = vmatpush1.msra.mxu0 0.0
  %1548 = vmatprep.subr.mxu0 0.0
  %1549 = vmatpush1.msra.mxu0 0.0
  %1550 = vmatprep.subr.mxu0 0.0
  %1551 = vmatpush1.msra.mxu0 0.0
  %1552 = vmatprep.subr.mxu0 0.0
  %1553 = vmatpush1.msra.mxu0 0.0
  %1554 = vmatprep.subr.mxu0 0.0
  %1555 = vmatpush1.msra.mxu0 0.0
  %1556 = vmatprep.subr.mxu0 0.0
  %1557 = vmatpush1.msra.mxu0 0.0
  %1558 = vmatprep.subr.mxu0 0.0
  %1559 = vmatpush1.msra.mxu0 0.0
  %1560 = vmatprep.mubr.f32.mxu0 0.0
  %1561 = vmatmul.mubr.f32.gmra.mrb[0].mxu0 %v68
  %v1562 = vpop.f32.mrb[0].mxu0
  %v1563 = vadd.f32 0.0, %v1562
  %v1564 = vpop.f32.mrb[0].mxu0
  %1565 = vmatprep.mubr.f32.mxu0 0.0
  %1566 = vmatmul.mubr.f32.gmra.mrb[0].mxu0 %v69
  %v1567 = vpop.f32.mrb[0].mxu0
  %v1568 = vadd.f32 0.0, %v1567
  %v1569 = vpop.f32.mrb[0].mxu0
  %1570 = vmatprep.mubr.f32.mxu0 0.0
  %1571 = vmatmul.mubr.f32.gmra.mrb[0].mxu0 %v70
  %v1572 = vpop.f32.mrb[0].mxu0
  %v1573 = vadd.f32 0.0, %v1572
  %v1574 = vpop.f32.mrb[0].mxu0
  %1575 = vmatprep.mubr.f32.mxu0 0.0
  %1576 = vmatmul.mubr.f32.gmra.mrb[0].mxu0 %v71
  %v1577 = vpop.f32.mrb[0].mxu0
  %v1578 = vadd.f32 0.0, %v1577
  %v1579 = vpop.f32.mrb[0].mxu0
  %1580 = vmatprep.mubr.f32.mxu0 0.0
  %1581 = vmatmul.mubr.f32.gmra.mrb[0].mxu0 %v72
  %v1582 = vpop.f32.mrb[0].mxu0
  %v1583 = vadd.f32 0.0, %v1582
  %v1584 = vpop.f32.mrb[0].mxu0
  %1585 = vmatprep.mubr.f32.mxu0 0.0
  %1586 = vmatmul.mubr.f32.gmra.mrb[0].mxu0 %v73
  %v1587 = vpop.f32.mrb[0].mxu0
  %v1588 = vadd.f32 0.0, %v1587
  %v1589 = vpop.f32.mrb[0].mxu0
  %1590 = vmatprep.mubr.f32.mxu0 0.0
  %1591 = vmatmul.mubr.f32.gmra.mrb[0].mxu0 %v74
  %v1592 = vpop.f32.mrb[0].mxu0
  %v1593 = vadd.f32 0.0, %v1592
  %v1594 = vpop.f32.mrb[0].mxu0
  %1595 = vmatprep.mubr.f32.mxu0 0.0
  %1596 = vmatmul.mubr.f32.gmra.mrb[0].mxu0 %v75
  %v1597 = vpop.f32.mrb[0].mxu0
  %v1598 = vadd.f32 0.0, %v1597
  %v1599 = vpop.f32.mrb[0].mxu0
  %1600 = vmatprep.mubr.f32.mxu0 0.0
  %1601 = vmatmul.mubr.f32.gmra.mrb[0].mxu0 %v76
  %v1602 = vpop.f32.mrb[0].mxu0
  %v1603 = vadd.f32 0.0, %v1602
  %v1604 = vpop.f32.mrb[0].mxu0
  %1605 = vmatprep.mubr.f32.mxu0 0.0
  %1606 = vmatmul.mubr.f32.gmra.mrb[0].mxu0 %v77
  %v1607 = vpop.f32.mrb[0].mxu0
  %v1608 = vadd.f32 0.0, %v1607
  %v1609 = vpop.f32.mrb[0].mxu0
  %1610 = vmatprep.mubr.f32.mxu0 0.0
  %1611 = vmatmul.mubr.f32.gmra.mrb[0].mxu0 %v78
  %v1612 = vpop.f32.mrb[0].mxu0
  %v1613 = vadd.f32 0.0, %v1612
  %v1614 = vpop.f32.mrb[0].mxu0
  %1615 = vmatprep.mubr.f32.mxu0 0.0
  %1616 = vmatmul.mubr.f32.gmra.mrb[0].mxu0 %v79
  %v1617 = vpop.f32.mrb[0].mxu0
  %v1618 = vadd.f32 0.0, %v1617
  %v1619 = vpop.f32.mrb[0].mxu0
  %1620 = vmatprep.mubr.f32.mxu0 0.0
  %1621 = vmatmul.mubr.f32.gmra.mrb[0].mxu0 %v80
  %v1622 = vpop.f32.mrb[0].mxu0
  %v1623 = vadd.f32 0.0, %v1622
  %v1624 = vpop.f32.mrb[0].mxu0
  %1625 = vmatprep.mubr.f32.mxu0 0.0
  %1626 = vmatmul.mubr.f32.gmra.mrb[0].mxu0 %v81
  %v1627 = vpop.f32.mrb[0].mxu0
  %v1628 = vadd.f32 0.0, %v1627
  %v1629 = vpop.f32.mrb[0].mxu0
  %1630 = vmatprep.mubr.f32.mxu0 0.0
  %1631 = vmatmul.mubr.f32.gmra.mrb[0].mxu0 %v82
  %v1632 = vpop.f32.mrb[0].mxu0
  %v1633 = vadd.f32 0.0, %v1632
  %v1634 = vpop.f32.mrb[0].mxu0
  %1635 = vmatprep.mubr.f32.mxu0 0.0
  %1636 = vmatmul.mubr.f32.gmra.mrb[0].mxu0 %v83
  %v1637 = vpop.f32.mrb[0].mxu0
  %v1638 = vadd.f32 0.0, %v1637
  %v1639 = vpop.f32.mrb[0].mxu0
  %1640 = vmatprep.mubr.f32.mxu0 0.0
  %1641 = vmatmul.mubr.f32.gmra.mrb[0].mxu0 %v84
  %v1642 = vpop.f32.mrb[0].mxu0
  %v1643 = vadd.f32 0.0, %v1642
  %v1644 = vpop.f32.mrb[0].mxu0
  %1645 = vmatprep.mubr.f32.mxu0 0.0
  %1646 = vmatmul.mubr.f32.gmra.mrb[0].mxu0 %v85
  %v1647 = vpop.f32.mrb[0].mxu0
  %v1648 = vadd.f32 0.0, %v1647
  %v1649 = vpop.f32.mrb[0].mxu0
  %1650 = vmatprep.mubr.f32.mxu0 0.0
  %1651 = vmatmul.mubr.f32.gmra.mrb[0].mxu0 %v86
  %v1652 = vpop.f32.mrb[0].mxu0
  %v1653 = vadd.f32 0.0, %v1652
  %v1654 = vpop.f32.mrb[0].mxu0
  %1655 = vmatprep.mubr.f32.mxu0 0.0
  %1656 = vmatmul.mubr.f32.gmra.mrb[0].mxu0 %v87
  %v1657 = vpop.f32.mrb[0].mxu0
  %v1658 = vadd.f32 0.0, %v1657
  %v1659 = vpop.f32.mrb[0].mxu0
  %1660 = vmatprep.mubr.f32.mxu0 0.0
  %1661 = vmatmul.mubr.f32.gmra.mrb[0].mxu0 %v88
  %v1662 = vpop.f32.mrb[0].mxu0
  %v1663 = vadd.f32 0.0, %v1662
  %v1664 = vpop.f32.mrb[0].mxu0
  %1665 = vmatprep.mubr.f32.mxu0 0.0
  %1666 = vmatmul.mubr.f32.gmra.mrb[0].mxu0 %v89
  %v1667 = vpop.f32.mrb[0].mxu0
  %v1668 = vadd.f32 0.0, %v1667
  %v1669 = vpop.f32.mrb[0].mxu0
  %1670 = vmatprep.mubr.f32.mxu0 0.0
  %1671 = vmatmul.mubr.f32.gmra.mrb[0].mxu0 %v90
  %v1672 = vpop.f32.mrb[0].mxu0
  %v1673 = vadd.f32 0.0, %v1672
  %v1674 = vpop.f32.mrb[0].mxu0
  %1675 = vmatprep.mubr.f32.mxu0 0.0
  %1676 = vmatmul.mubr.f32.gmra.mrb[0].mxu0 %v91
  %v1677 = vpop.f32.mrb[0].mxu0
  %v1678 = vadd.f32 0.0, %v1677
  %v1679 = vpop.f32.mrb[0].mxu0
  %1680 = vdwg.mxu0
  %v1682 = vsel %vm485, %v1385, 0
  %v1685 = vsel %vm485, %v1387, 0
  %v1688 = vsel %vm485, %v1389, 0
  %v1691 = vsel %vm485, %v1391, 0
  %v1694 = vsel %vm485, %v1393, 0
  %v1697 = vsel %vm485, %v1395, 0
  %v1700 = vsel %vm485, %v1397, 0
  %v1703 = vsel %vm485, %v1399, 0
  %v1706 = vsel %vm485, %v1401, 0
  %v1709 = vsel %vm485, %v1403, 0
  %v1712 = vsel %vm485, %v1405, 0
  %v1715 = vsel %vm485, %v1407, 0
  %v1718 = vsel %vm485, %v1409, 0
  %v1721 = vsel %vm485, %v1411, 0
  %v1724 = vsel %vm485, %v1413, 0
  %v1727 = vsel %vm485, %v1415, 0
  %v1730 = vsel %vm485, %v1417, 0
  %v1733 = vsel %vm485, %v1419, 0
  %v1736 = vsel %vm485, %v1421, 0
  %v1739 = vsel %vm485, %v1423, 0
  %v1742 = vsel %vm485, %v1425, 0
  %v1745 = vsel %vm485, %v1427, 0
  %v1748 = vsel %vm485, %v1429, 0
  %v1751 = vsel %vm485, %v1431, 0
  %v1754 = vsel %vm485, %v1433, 0
  %v1757 = vsel %vm485, %v1435, 0
  %v1760 = vsel %vm485, %v1437, 0
  %v1763 = vsel %vm485, %v1439, 0
  %v1766 = vsel %vm485, %v1441, 0
  %v1769 = vsel %vm485, %v1443, 0
  %v1772 = vsel %vm485, %v1445, 0
  %v1775 = vsel %vm485, %v1447, 0
  %v1778 = vsel %vm485, %v1449, 0
  %v1781 = vsel %vm485, %v1451, 0
  %v1784 = vsel %vm485, %v1453, 0
  %v1787 = vsel %vm485, %v1455, 0
  %v1790 = vsel %vm485, %v1457, 0
  %v1793 = vsel %vm485, %v1459, 0
  %v1796 = vsel %vm485, %v1461, 0
  %v1799 = vsel %vm485, %v1463, 0
  %v1802 = vsel %vm485, %v1465, 0
  %v1805 = vsel %vm485, %v1467, 0
  %v1808 = vsel %vm485, %v1469, 0
  %v1811 = vsel %vm485, %v1471, 0
  %v1814 = vsel %vm485, %v1473, 0
  %v1817 = vsel %vm485, %v1475, 0
  %v1820 = vsel %vm485, %v1477, 0
  %v1823 = vsel %vm485, %v1479, 0
  %1825 = vmatprep.subr.mxu0 0.0
  %1826 = vmatpush1.msra.mxu0 %v1563
  %1827 = vmatprep.subr.mxu0 0.0
  %1828 = vmatpush1.msra.mxu0 %v1568
  %1829 = vmatprep.subr.mxu0 0.0
  %1830 = vmatpush1.msra.mxu0 %v1573
  %1831 = vmatprep.subr.mxu0 0.0
  %1832 = vmatpush1.msra.mxu0 %v1578
  %1833 = vmatprep.subr.mxu0 0.0
  %1834 = vmatpush1.msra.mxu0 %v1583
  %1835 = vmatprep.subr.mxu0 0.0
  %1836 = vmatpush1.msra.mxu0 %v1588
  %1837 = vmatprep.subr.mxu0 0.0
  %1838 = vmatpush1.msra.mxu0 %v1593
  %1839 = vmatprep.subr.mxu0 0.0
  %1840 = vmatpush1.msra.mxu0 %v1598
  %1841 = vmatprep.subr.mxu0 0.0
  %1842 = vmatpush1.msra.mxu0 %v1603
  %1843 = vmatprep.subr.mxu0 0.0
  %1844 = vmatpush1.msra.mxu0 %v1608
  %1845 = vmatprep.subr.mxu0 0.0
  %1846 = vmatpush1.msra.mxu0 %v1613
  %1847 = vmatprep.subr.mxu0 0.0
  %1848 = vmatpush1.msra.mxu0 %v1618
  %1849 = vmatprep.subr.mxu0 0.0
  %1850 = vmatpush1.msra.mxu0 %v1623
  %1851 = vmatprep.subr.mxu0 0.0
  %1852 = vmatpush1.msra.mxu0 %v1628
  %1853 = vmatprep.subr.mxu0 0.0
  %1854 = vmatpush1.msra.mxu0 %v1633
  %1855 = vmatprep.subr.mxu0 0.0
  %1856 = vmatpush1.msra.mxu0 %v1638
  %1857 = vmatprep.subr.mxu0 0.0
  %1858 = vmatpush1.msra.mxu0 %v1643
  %1859 = vmatprep.subr.mxu0 0.0
  %1860 = vmatpush1.msra.mxu0 %v1648
  %1861 = vmatprep.subr.mxu0 0.0
  %1862 = vmatpush1.msra.mxu0 %v1653
  %1863 = vmatprep.subr.mxu0 0.0
  %1864 = vmatpush1.msra.mxu0 %v1658
  %1865 = vmatprep.subr.mxu0 0.0
  %1866 = vmatpush1.msra.mxu0 %v1663
  %1867 = vmatprep.subr.mxu0 0.0
  %1868 = vmatpush1.msra.mxu0 %v1668
  %1869 = vmatprep.subr.mxu0 0.0
  %1870 = vmatpush1.msra.mxu0 %v1673
  %1871 = vmatprep.subr.mxu0 0.0
  %1872 = vmatpush1.msra.mxu0 %v1678
  %1873 = vmatprep.subr.mxu0 0.0
  %1874 = vmatpush1.msra.mxu0 0.0
  %1875 = vmatprep.subr.mxu0 0.0
  %1876 = vmatpush1.msra.mxu0 0.0
  %1877 = vmatprep.subr.mxu0 0.0
  %1878 = vmatpush1.msra.mxu0 0.0
  %1879 = vmatprep.subr.mxu0 0.0
  %1880 = vmatpush1.msra.mxu0 0.0
  %1881 = vmatprep.subr.mxu0 0.0
  %1882 = vmatpush1.msra.mxu0 0.0
  %1883 = vmatprep.subr.mxu0 0.0
  %1884 = vmatpush1.msra.mxu0 0.0
  %1885 = vmatprep.subr.mxu0 0.0
  %1886 = vmatpush1.msra.mxu0 0.0
  %1887 = vmatprep.subr.mxu0 0.0
  %1888 = vmatpush1.msra.mxu0 0.0
  %1889 = vmatprep.mubr.f32.mxu0 %v1682
  %1890 = vmatmul.mubr.f32.gmra.mrb[0].mxu0 %v1384
  %v1891 = vpop.f32.mrb[0].mxu0
  %v1892 = vadd.f32 0.0, %v1891
  %v1893 = vpop.f32.mrb[0].mxu0
  %1894 = vmatprep.mubr.f32.mxu0 %v1685
  %1895 = vmatmul.mubr.f32.gmra.mrb[0].mxu0 %v1386
  %v1896 = vpop.f32.mrb[0].mxu0
  %v1897 = vadd.f32 0.0, %v1896
  %v1898 = vpop.f32.mrb[0].mxu0
  %1899 = vmatprep.mubr.f32.mxu0 %v1688
  %1900 = vmatmul.mubr.f32.gmra.mrb[0].mxu0 %v1388
  %v1901 = vpop.f32.mrb[0].mxu0
  %v1902 = vadd.f32 0.0, %v1901
  %v1903 = vpop.f32.mrb[0].mxu0
  %1904 = vmatprep.mubr.f32.mxu0 %v1691
  %1905 = vmatmul.mubr.f32.gmra.mrb[0].mxu0 %v1390
  %v1906 = vpop.f32.mrb[0].mxu0
  %v1907 = vadd.f32 0.0, %v1906
  %v1908 = vpop.f32.mrb[0].mxu0
  %1909 = vmatprep.mubr.f32.mxu0 %v1694
  %1910 = vmatmul.mubr.f32.gmra.mrb[0].mxu0 %v1392
  %v1911 = vpop.f32.mrb[0].mxu0
  %v1912 = vadd.f32 0.0, %v1911
  %v1913 = vpop.f32.mrb[0].mxu0
  %1914 = vmatprep.mubr.f32.mxu0 %v1697
  %1915 = vmatmul.mubr.f32.gmra.mrb[0].mxu0 %v1394
  %v1916 = vpop.f32.mrb[0].mxu0
  %v1917 = vadd.f32 0.0, %v1916
  %v1918 = vpop.f32.mrb[0].mxu0
  %1919 = vmatprep.mubr.f32.mxu0 %v1700
  %1920 = vmatmul.mubr.f32.gmra.mrb[0].mxu0 %v1396
  %v1921 = vpop.f32.mrb[0].mxu0
  %v1922 = vadd.f32 0.0, %v1921
  %v1923 = vpop.f32.mrb[0].mxu0
  %1924 = vmatprep.mubr.f32.mxu0 %v1703
  %1925 = vmatmul.mubr.f32.gmra.mrb[0].mxu0 %v1398
  %v1926 = vpop.f32.mrb[0].mxu0
  %v1927 = vadd.f32 0.0, %v1926
  %v1928 = vpop.f32.mrb[0].mxu0
  %1929 = vmatprep.mubr.f32.mxu0 %v1706
  %1930 = vmatmul.mubr.f32.gmra.mrb[0].mxu0 %v1400
  %v1931 = vpop.f32.mrb[0].mxu0
  %v1932 = vadd.f32 0.0, %v1931
  %v1933 = vpop.f32.mrb[0].mxu0
  %1934 = vmatprep.mubr.f32.mxu0 %v1709
  %1935 = vmatmul.mubr.f32.gmra.mrb[0].mxu0 %v1402
  %v1936 = vpop.f32.mrb[0].mxu0
  %v1937 = vadd.f32 0.0, %v1936
  %v1938 = vpop.f32.mrb[0].mxu0
  %1939 = vmatprep.mubr.f32.mxu0 %v1712
  %1940 = vmatmul.mubr.f32.gmra.mrb[0].mxu0 %v1404
  %v1941 = vpop.f32.mrb[0].mxu0
  %v1942 = vadd.f32 0.0, %v1941
  %v1943 = vpop.f32.mrb[0].mxu0
  %1944 = vmatprep.mubr.f32.mxu0 %v1715
  %1945 = vmatmul.mubr.f32.gmra.mrb[0].mxu0 %v1406
  %v1946 = vpop.f32.mrb[0].mxu0
  %v1947 = vadd.f32 0.0, %v1946
  %v1948 = vpop.f32.mrb[0].mxu0
  %1949 = vmatprep.mubr.f32.mxu0 %v1718
  %1950 = vmatmul.mubr.f32.gmra.mrb[0].mxu0 %v1408
  %v1951 = vpop.f32.mrb[0].mxu0
  %v1952 = vadd.f32 0.0, %v1951
  %v1953 = vpop.f32.mrb[0].mxu0
  %1954 = vmatprep.mubr.f32.mxu0 %v1721
  %1955 = vmatmul.mubr.f32.gmra.mrb[0].mxu0 %v1410
  %v1956 = vpop.f32.mrb[0].mxu0
  %v1957 = vadd.f32 0.0, %v1956
  %v1958 = vpop.f32.mrb[0].mxu0
  %1959 = vmatprep.mubr.f32.mxu0 %v1724
  %1960 = vmatmul.mubr.f32.gmra.mrb[0].mxu0 %v1412
  %v1961 = vpop.f32.mrb[0].mxu0
  %v1962 = vadd.f32 0.0, %v1961
  %v1963 = vpop.f32.mrb[0].mxu0
  %1964 = vmatprep.mubr.f32.mxu0 %v1727
  %1965 = vmatmul.mubr.f32.gmra.mrb[0].mxu0 %v1414
  %v1966 = vpop.f32.mrb[0].mxu0
  %v1967 = vadd.f32 0.0, %v1966
  %v1968 = vpop.f32.mrb[0].mxu0
  %1969 = vmatprep.mubr.f32.mxu0 %v1730
  %1970 = vmatmul.mubr.f32.gmra.mrb[0].mxu0 %v1416
  %v1971 = vpop.f32.mrb[0].mxu0
  %v1972 = vadd.f32 0.0, %v1971
  %v1973 = vpop.f32.mrb[0].mxu0
  %1974 = vmatprep.mubr.f32.mxu0 %v1733
  %1975 = vmatmul.mubr.f32.gmra.mrb[0].mxu0 %v1418
  %v1976 = vpop.f32.mrb[0].mxu0
  %v1977 = vadd.f32 0.0, %v1976
  %v1978 = vpop.f32.mrb[0].mxu0
  %1979 = vmatprep.mubr.f32.mxu0 %v1736
  %1980 = vmatmul.mubr.f32.gmra.mrb[0].mxu0 %v1420
  %v1981 = vpop.f32.mrb[0].mxu0
  %v1982 = vadd.f32 0.0, %v1981
  %v1983 = vpop.f32.mrb[0].mxu0
  %1984 = vmatprep.mubr.f32.mxu0 %v1739
  %1985 = vmatmul.mubr.f32.gmra.mrb[0].mxu0 %v1422
  %v1986 = vpop.f32.mrb[0].mxu0
  %v1987 = vadd.f32 0.0, %v1986
  %v1988 = vpop.f32.mrb[0].mxu0
  %1989 = vmatprep.mubr.f32.mxu0 %v1742
  %1990 = vmatmul.mubr.f32.gmra.mrb[0].mxu0 %v1424
  %v1991 = vpop.f32.mrb[0].mxu0
  %v1992 = vadd.f32 0.0, %v1991
  %v1993 = vpop.f32.mrb[0].mxu0
  %1994 = vmatprep.mubr.f32.mxu0 %v1745
  %1995 = vmatmul.mubr.f32.gmra.mrb[0].mxu0 %v1426
  %v1996 = vpop.f32.mrb[0].mxu0
  %v1997 = vadd.f32 0.0, %v1996
  %v1998 = vpop.f32.mrb[0].mxu0
  %1999 = vmatprep.mubr.f32.mxu0 %v1748
  %2000 = vmatmul.mubr.f32.gmra.mrb[0].mxu0 %v1428
  %v2001 = vpop.f32.mrb[0].mxu0
  %v2002 = vadd.f32 0.0, %v2001
  %v2003 = vpop.f32.mrb[0].mxu0
  %2004 = vmatprep.mubr.f32.mxu0 %v1751
  %2005 = vmatmul.mubr.f32.gmra.mrb[0].mxu0 %v1430
  %v2006 = vpop.f32.mrb[0].mxu0
  %v2007 = vadd.f32 0.0, %v2006
  %v2008 = vpop.f32.mrb[0].mxu0
  %2009 = vmatprep.mubr.f32.mxu0 %v1754
  %2010 = vmatmul.mubr.f32.gmra.mrb[0].mxu0 %v1432
  %v2011 = vpop.f32.mrb[0].mxu0
  %v2012 = vadd.f32 0.0, %v2011
  %v2013 = vpop.f32.mrb[0].mxu0
  %2014 = vmatprep.mubr.f32.mxu0 %v1757
  %2015 = vmatmul.mubr.f32.gmra.mrb[0].mxu0 %v1434
  %v2016 = vpop.f32.mrb[0].mxu0
  %v2017 = vadd.f32 0.0, %v2016
  %v2018 = vpop.f32.mrb[0].mxu0
  %2019 = vmatprep.mubr.f32.mxu0 %v1760
  %2020 = vmatmul.mubr.f32.gmra.mrb[0].mxu0 %v1436
  %v2021 = vpop.f32.mrb[0].mxu0
  %v2022 = vadd.f32 0.0, %v2021
  %v2023 = vpop.f32.mrb[0].mxu0
  %2024 = vmatprep.mubr.f32.mxu0 %v1763
  %2025 = vmatmul.mubr.f32.gmra.mrb[0].mxu0 %v1438
  %v2026 = vpop.f32.mrb[0].mxu0
  %v2027 = vadd.f32 0.0, %v2026
  %v2028 = vpop.f32.mrb[0].mxu0
  %2029 = vmatprep.mubr.f32.mxu0 %v1766
  %2030 = vmatmul.mubr.f32.gmra.mrb[0].mxu0 %v1440
  %v2031 = vpop.f32.mrb[0].mxu0
  %v2032 = vadd.f32 0.0, %v2031
  %v2033 = vpop.f32.mrb[0].mxu0
  %2034 = vmatprep.mubr.f32.mxu0 %v1769
  %2035 = vmatmul.mubr.f32.gmra.mrb[0].mxu0 %v1442
  %v2036 = vpop.f32.mrb[0].mxu0
  %v2037 = vadd.f32 0.0, %v2036
  %v2038 = vpop.f32.mrb[0].mxu0
  %2039 = vmatprep.mubr.f32.mxu0 %v1772
  %2040 = vmatmul.mubr.f32.gmra.mrb[0].mxu0 %v1444
  %v2041 = vpop.f32.mrb[0].mxu0
  %v2042 = vadd.f32 0.0, %v2041
  %v2043 = vpop.f32.mrb[0].mxu0
  %2044 = vmatprep.mubr.f32.mxu0 %v1775
  %2045 = vmatmul.mubr.f32.gmra.mrb[0].mxu0 %v1446
  %v2046 = vpop.f32.mrb[0].mxu0
  %v2047 = vadd.f32 0.0, %v2046
  %v2048 = vpop.f32.mrb[0].mxu0
  %2049 = vmatprep.mubr.f32.mxu0 %v1778
  %2050 = vmatmul.mubr.f32.gmra.mrb[0].mxu0 %v1448
  %v2051 = vpop.f32.mrb[0].mxu0
  %v2052 = vadd.f32 0.0, %v2051
  %v2053 = vpop.f32.mrb[0].mxu0
  %2054 = vmatprep.mubr.f32.mxu0 %v1781
  %2055 = vmatmul.mubr.f32.gmra.mrb[0].mxu0 %v1450
  %v2056 = vpop.f32.mrb[0].mxu0
  %v2057 = vadd.f32 0.0, %v2056
  %v2058 = vpop.f32.mrb[0].mxu0
  %2059 = vmatprep.mubr.f32.mxu0 %v1784
  %2060 = vmatmul.mubr.f32.gmra.mrb[0].mxu0 %v1452
  %v2061 = vpop.f32.mrb[0].mxu0
  %v2062 = vadd.f32 0.0, %v2061
  %v2063 = vpop.f32.mrb[0].mxu0
  %2064 = vmatprep.mubr.f32.mxu0 %v1787
  %2065 = vmatmul.mubr.f32.gmra.mrb[0].mxu0 %v1454
  %v2066 = vpop.f32.mrb[0].mxu0
  %v2067 = vadd.f32 0.0, %v2066
  %v2068 = vpop.f32.mrb[0].mxu0
  %2069 = vmatprep.mubr.f32.mxu0 %v1790
  %2070 = vmatmul.mubr.f32.gmra.mrb[0].mxu0 %v1456
  %v2071 = vpop.f32.mrb[0].mxu0
  %v2072 = vadd.f32 0.0, %v2071
  %v2073 = vpop.f32.mrb[0].mxu0
  %2074 = vmatprep.mubr.f32.mxu0 %v1793
  %2075 = vmatmul.mubr.f32.gmra.mrb[0].mxu0 %v1458
  %v2076 = vpop.f32.mrb[0].mxu0
  %v2077 = vadd.f32 0.0, %v2076
  %v2078 = vpop.f32.mrb[0].mxu0
  %2079 = vmatprep.mubr.f32.mxu0 %v1796
  %2080 = vmatmul.mubr.f32.gmra.mrb[0].mxu0 %v1460
  %v2081 = vpop.f32.mrb[0].mxu0
  %v2082 = vadd.f32 0.0, %v2081
  %v2083 = vpop.f32.mrb[0].mxu0
  %2084 = vmatprep.mubr.f32.mxu0 %v1799
  %2085 = vmatmul.mubr.f32.gmra.mrb[0].mxu0 %v1462
  %v2086 = vpop.f32.mrb[0].mxu0
  %v2087 = vadd.f32 0.0, %v2086
  %v2088 = vpop.f32.mrb[0].mxu0
  %2089 = vmatprep.mubr.f32.mxu0 %v1802
  %2090 = vmatmul.mubr.f32.gmra.mrb[0].mxu0 %v1464
  %v2091 = vpop.f32.mrb[0].mxu0
  %v2092 = vadd.f32 0.0, %v2091
  %v2093 = vpop.f32.mrb[0].mxu0
  %2094 = vmatprep.mubr.f32.mxu0 %v1805
  %2095 = vmatmul.mubr.f32.gmra.mrb[0].mxu0 %v1466
  %v2096 = vpop.f32.mrb[0].mxu0
  %v2097 = vadd.f32 0.0, %v2096
  %v2098 = vpop.f32.mrb[0].mxu0
  %2099 = vmatprep.mubr.f32.mxu0 %v1808
  %2100 = vmatmul.mubr.f32.gmra.mrb[0].mxu0 %v1468
  %v2101 = vpop.f32.mrb[0].mxu0
  %v2102 = vadd.f32 0.0, %v2101
  %v2103 = vpop.f32.mrb[0].mxu0
  %2104 = vmatprep.mubr.f32.mxu0 %v1811
  %2105 = vmatmul.mubr.f32.gmra.mrb[0].mxu0 %v1470
  %v2106 = vpop.f32.mrb[0].mxu0
  %v2107 = vadd.f32 0.0, %v2106
  %v2108 = vpop.f32.mrb[0].mxu0
  %2109 = vmatprep.mubr.f32.mxu0 %v1814
  %2110 = vmatmul.mubr.f32.gmra.mrb[0].mxu0 %v1472
  %v2111 = vpop.f32.mrb[0].mxu0
  %v2112 = vadd.f32 0.0, %v2111
  %v2113 = vpop.f32.mrb[0].mxu0
  %2114 = vmatprep.mubr.f32.mxu0 %v1817
  %2115 = vmatmul.mubr.f32.gmra.mrb[0].mxu0 %v1474
  %v2116 = vpop.f32.mrb[0].mxu0
  %v2117 = vadd.f32 0.0, %v2116
  %v2118 = vpop.f32.mrb[0].mxu0
  %2119 = vmatprep.mubr.f32.mxu0 %v1820
  %2120 = vmatmul.mubr.f32.gmra.mrb[0].mxu0 %v1476
  %v2121 = vpop.f32.mrb[0].mxu0
  %v2122 = vadd.f32 0.0, %v2121
  %v2123 = vpop.f32.mrb[0].mxu0
  %2124 = vmatprep.mubr.f32.mxu0 %v1823
  %2125 = vmatmul.mubr.f32.gmra.mrb[0].mxu0 %v1478
  %v2126 = vpop.f32.mrb[0].mxu0
  %v2127 = vadd.f32 0.0, %v2126
  %v2128 = vpop.f32.mrb[0].mxu0
  %2129 = vdwg.mxu0
  %v2130 = vadd.f32 %v1146, %v1892
  %v2131 = vadd.f32 %v1151, %v1897
  %v2132 = vadd.f32 %v1156, %v1902
  %v2133 = vadd.f32 %v1161, %v1907
  %v2134 = vadd.f32 %v1166, %v1912
  %v2135 = vadd.f32 %v1171, %v1917
  %v2136 = vadd.f32 %v1176, %v1922
  %v2137 = vadd.f32 %v1181, %v1927
  %v2138 = vadd.f32 %v1186, %v1932
  %v2139 = vadd.f32 %v1191, %v1937
  %v2140 = vadd.f32 %v1196, %v1942
  %v2141 = vadd.f32 %v1201, %v1947
  %v2142 = vadd.f32 %v1206, %v1952
  %v2143 = vadd.f32 %v1211, %v1957
  %v2144 = vadd.f32 %v1216, %v1962
  %v2145 = vadd.f32 %v1221, %v1967
  %v2146 = vadd.f32 %v1226, %v1972
  %v2147 = vadd.f32 %v1231, %v1977
  %v2148 = vadd.f32 %v1236, %v1982
  %v2149 = vadd.f32 %v1241, %v1987
  %v2150 = vadd.f32 %v1246, %v1992
  %v2151 = vadd.f32 %v1251, %v1997
  %v2152 = vadd.f32 %v1256, %v2002
  %v2153 = vadd.f32 %v1261, %v2007
  %v2154 = vadd.f32 %v1266, %v2012
  %v2155 = vadd.f32 %v1271, %v2017
  %v2156 = vadd.f32 %v1276, %v2022
  %v2157 = vadd.f32 %v1281, %v2027
  %v2158 = vadd.f32 %v1286, %v2032
  %v2159 = vadd.f32 %v1291, %v2037
  %v2160 = vadd.f32 %v1296, %v2042
  %v2161 = vadd.f32 %v1301, %v2047
  %v2162 = vadd.f32 %v1306, %v2052
  %v2163 = vadd.f32 %v1311, %v2057
  %v2164 = vadd.f32 %v1316, %v2062
  %v2165 = vadd.f32 %v1321, %v2067
  %v2166 = vadd.f32 %v1326, %v2072
  %v2167 = vadd.f32 %v1331, %v2077
  %v2168 = vadd.f32 %v1336, %v2082
  %v2169 = vadd.f32 %v1341, %v2087
  %v2170 = vadd.f32 %v1346, %v2092
  %v2171 = vadd.f32 %v1351, %v2097
  %v2172 = vadd.f32 %v1356, %v2102
  %v2173 = vadd.f32 %v1361, %v2107
  %v2174 = vadd.f32 %v1366, %v2112
  %v2175 = vadd.f32 %v1371, %v2117
  %v2176 = vadd.f32 %v1376, %v2122
  %v2177 = vadd.f32 %v1381, %v2127
  %v2178 = vld [vmem:[%s6] sm:$0xff]
  %v2179 = vld [vmem:[%s6 + $0x8] sm:$0xff]
  %v2180 = vld [vmem:[%s6 + $0x10] sm:$0xff]
  %v2181 = vld [vmem:[%s6 + $0x18] sm:$0xff]
  %v2182 = vld [vmem:[%s6 + $0x20] sm:$0xff]
  %v2183 = vld [vmem:[%s6 + $0x28] sm:$0xff]
  %v2184 = vld [vmem:[%s6 + $0x30] sm:$0xff]
  %v2185 = vld [vmem:[%s6 + $0x38] sm:$0xff]
  %v2186 = vld [vmem:[%s6 + $0x40] sm:$0xff]
  %v2187 = vld [vmem:[%s6 + $0x48] sm:$0xff]
  %v2188 = vld [vmem:[%s6 + $0x50] sm:$0xff]
  %v2189 = vld [vmem:[%s6 + $0x58] sm:$0xff]
  %v2190 = vld [vmem:[%s6 + $0x60] sm:$0xff]
  %v2191 = vld [vmem:[%s6 + $0x68] sm:$0xff]
  %v2192 = vld [vmem:[%s6 + $0x70] sm:$0xff]
  %v2193 = vld [vmem:[%s6 + $0x78] sm:$0xff]
  %v2194 = vld [vmem:[%s6 + $0x80] sm:$0xff]
  %v2195 = vld [vmem:[%s6 + $0x88] sm:$0xff]
  %v2196 = vld [vmem:[%s6 + $0x90] sm:$0xff]
  %v2197 = vld [vmem:[%s6 + $0x98] sm:$0xff]
  %v2198 = vld [vmem:[%s6 + $0xa0] sm:$0xff]
  %v2199 = vld [vmem:[%s6 + $0xa8] sm:$0xff]
  %v2200 = vld [vmem:[%s6 + $0xb0] sm:$0xff]
  %v2201 = vld [vmem:[%s6 + $0xb8] sm:$0xff]
  %v2202 = vld [vmem:[%s6 + $0xc0] sm:$0xff]
  %v2203 = vld [vmem:[%s6 + $0xc8] sm:$0xff]
  %v2204 = vld [vmem:[%s6 + $0xd0] sm:$0xff]
  %v2205 = vld [vmem:[%s6 + $0xd8] sm:$0xff]
  %v2206 = vld [vmem:[%s6 + $0xe0] sm:$0xff]
  %v2207 = vld [vmem:[%s6 + $0xe8] sm:$0xff]
  %v2208 = vld [vmem:[%s6 + $0xf0] sm:$0xff]
  %v2209 = vld [vmem:[%s6 + $0xf8] sm:$0xff]
  %v2210 = vld [vmem:[%s6 + $0x100] sm:$0xff]
  %v2211 = vld [vmem:[%s6 + $0x108] sm:$0xff]
  %v2212 = vld [vmem:[%s6 + $0x110] sm:$0xff]
  %v2213 = vld [vmem:[%s6 + $0x118] sm:$0xff]
  %v2214 = vld [vmem:[%s6 + $0x120] sm:$0xff]
  %v2215 = vld [vmem:[%s6 + $0x128] sm:$0xff]
  %v2216 = vld [vmem:[%s6 + $0x130] sm:$0xff]
  %v2217 = vld [vmem:[%s6 + $0x138] sm:$0xff]
  %v2218 = vld [vmem:[%s6 + $0x140] sm:$0xff]
  %v2219 = vld [vmem:[%s6 + $0x148] sm:$0xff]
  %v2220 = vld [vmem:[%s6 + $0x150] sm:$0xff]
  %v2221 = vld [vmem:[%s6 + $0x158] sm:$0xff]
  %v2222 = vld [vmem:[%s6 + $0x160] sm:$0xff]
  %v2223 = vld [vmem:[%s6 + $0x168] sm:$0xff]
  %v2224 = vld [vmem:[%s6 + $0x170] sm:$0xff]
  %v2225 = vld [vmem:[%s6 + $0x178] sm:$0xff]
  %2227 = vset.pattern.permute.xlu0 0
  %2228 = vperm.xlu0 %2227, %v2178
  %v2229 = vpop.permute.xlu0 %2228
  %2232 = vset.pattern.permute.xlu0 0
  %2233 = vperm.xlu0 %2232, %v2179
  %v2234 = vpop.permute.xlu0 %2233
  %2237 = vset.pattern.permute.xlu0 0
  %2238 = vperm.xlu0 %2237, %v2180
  %v2239 = vpop.permute.xlu0 %2238
  %2242 = vset.pattern.permute.xlu0 0
  %2243 = vperm.xlu0 %2242, %v2181
  %v2244 = vpop.permute.xlu0 %2243
  %2247 = vset.pattern.permute.xlu0 0
  %2248 = vperm.xlu0 %2247, %v2182
  %v2249 = vpop.permute.xlu0 %2248
  %2252 = vset.pattern.permute.xlu0 0
  %2253 = vperm.xlu0 %2252, %v2183
  %v2254 = vpop.permute.xlu0 %2253
  %2257 = vset.pattern.permute.xlu0 0
  %2258 = vperm.xlu0 %2257, %v2184
  %v2259 = vpop.permute.xlu0 %2258
  %2262 = vset.pattern.permute.xlu0 0
  %2263 = vperm.xlu0 %2262, %v2185
  %v2264 = vpop.permute.xlu0 %2263
  %2267 = vset.pattern.permute.xlu0 0
  %2268 = vperm.xlu0 %2267, %v2186
  %v2269 = vpop.permute.xlu0 %2268
  %2272 = vset.pattern.permute.xlu0 0
  %2273 = vperm.xlu0 %2272, %v2187
  %v2274 = vpop.permute.xlu0 %2273
  %2277 = vset.pattern.permute.xlu0 0
  %2278 = vperm.xlu0 %2277, %v2188
  %v2279 = vpop.permute.xlu0 %2278
  %2282 = vset.pattern.permute.xlu0 0
  %2283 = vperm.xlu0 %2282, %v2189
  %v2284 = vpop.permute.xlu0 %2283
  %2287 = vset.pattern.permute.xlu0 0
  %2288 = vperm.xlu0 %2287, %v2190
  %v2289 = vpop.permute.xlu0 %2288
  %2292 = vset.pattern.permute.xlu0 0
  %2293 = vperm.xlu0 %2292, %v2191
  %v2294 = vpop.permute.xlu0 %2293
  %2297 = vset.pattern.permute.xlu0 0
  %2298 = vperm.xlu0 %2297, %v2192
  %v2299 = vpop.permute.xlu0 %2298
  %2302 = vset.pattern.permute.xlu0 0
  %2303 = vperm.xlu0 %2302, %v2193
  %v2304 = vpop.permute.xlu0 %2303
  %2307 = vset.pattern.permute.xlu0 0
  %2308 = vperm.xlu0 %2307, %v2194
  %v2309 = vpop.permute.xlu0 %2308
  %2312 = vset.pattern.permute.xlu0 0
  %2313 = vperm.xlu0 %2312, %v2195
  %v2314 = vpop.permute.xlu0 %2313
  %2317 = vset.pattern.permute.xlu0 0
  %2318 = vperm.xlu0 %2317, %v2196
  %v2319 = vpop.permute.xlu0 %2318
  %2322 = vset.pattern.permute.xlu0 0
  %2323 = vperm.xlu0 %2322, %v2197
  %v2324 = vpop.permute.xlu0 %2323
  %2327 = vset.pattern.permute.xlu0 0
  %2328 = vperm.xlu0 %2327, %v2198
  %v2329 = vpop.permute.xlu0 %2328
  %2332 = vset.pattern.permute.xlu0 0
  %2333 = vperm.xlu0 %2332, %v2199
  %v2334 = vpop.permute.xlu0 %2333
  %2337 = vset.pattern.permute.xlu0 0
  %2338 = vperm.xlu0 %2337, %v2200
  %v2339 = vpop.permute.xlu0 %2338
  %2342 = vset.pattern.permute.xlu0 0
  %2343 = vperm.xlu0 %2342, %v2201
  %v2344 = vpop.permute.xlu0 %2343
  %2347 = vset.pattern.permute.xlu0 0
  %2348 = vperm.xlu0 %2347, %v2202
  %v2349 = vpop.permute.xlu0 %2348
  %2352 = vset.pattern.permute.xlu0 0
  %2353 = vperm.xlu0 %2352, %v2203
  %v2354 = vpop.permute.xlu0 %2353
  %2357 = vset.pattern.permute.xlu0 0
  %2358 = vperm.xlu0 %2357, %v2204
  %v2359 = vpop.permute.xlu0 %2358
  %2362 = vset.pattern.permute.xlu0 0
  %2363 = vperm.xlu0 %2362, %v2205
  %v2364 = vpop.permute.xlu0 %2363
  %2367 = vset.pattern.permute.xlu0 0
  %2368 = vperm.xlu0 %2367, %v2206
  %v2369 = vpop.permute.xlu0 %2368
  %2372 = vset.pattern.permute.xlu0 0
  %2373 = vperm.xlu0 %2372, %v2207
  %v2374 = vpop.permute.xlu0 %2373
  %2377 = vset.pattern.permute.xlu0 0
  %2378 = vperm.xlu0 %2377, %v2208
  %v2379 = vpop.permute.xlu0 %2378
  %2382 = vset.pattern.permute.xlu0 0
  %2383 = vperm.xlu0 %2382, %v2209
  %v2384 = vpop.permute.xlu0 %2383
  %2387 = vset.pattern.permute.xlu0 0
  %2388 = vperm.xlu0 %2387, %v2210
  %v2389 = vpop.permute.xlu0 %2388
  %2392 = vset.pattern.permute.xlu0 0
  %2393 = vperm.xlu0 %2392, %v2211
  %v2394 = vpop.permute.xlu0 %2393
  %2397 = vset.pattern.permute.xlu0 0
  %2398 = vperm.xlu0 %2397, %v2212
  %v2399 = vpop.permute.xlu0 %2398
  %2402 = vset.pattern.permute.xlu0 0
  %2403 = vperm.xlu0 %2402, %v2213
  %v2404 = vpop.permute.xlu0 %2403
  %2407 = vset.pattern.permute.xlu0 0
  %2408 = vperm.xlu0 %2407, %v2214
  %v2409 = vpop.permute.xlu0 %2408
  %2412 = vset.pattern.permute.xlu0 0
  %2413 = vperm.xlu0 %2412, %v2215
  %v2414 = vpop.permute.xlu0 %2413
  %2417 = vset.pattern.permute.xlu0 0
  %2418 = vperm.xlu0 %2417, %v2216
  %v2419 = vpop.permute.xlu0 %2418
  %2422 = vset.pattern.permute.xlu0 0
  %2423 = vperm.xlu0 %2422, %v2217
  %v2424 = vpop.permute.xlu0 %2423
  %2427 = vset.pattern.permute.xlu0 0
  %2428 = vperm.xlu0 %2427, %v2218
  %v2429 = vpop.permute.xlu0 %2428
  %2432 = vset.pattern.permute.xlu0 0
  %2433 = vperm.xlu0 %2432, %v2219
  %v2434 = vpop.permute.xlu0 %2433
  %2437 = vset.pattern.permute.xlu0 0
  %2438 = vperm.xlu0 %2437, %v2220
  %v2439 = vpop.permute.xlu0 %2438
  %2442 = vset.pattern.permute.xlu0 0
  %2443 = vperm.xlu0 %2442, %v2221
  %v2444 = vpop.permute.xlu0 %2443
  %2447 = vset.pattern.permute.xlu0 0
  %2448 = vperm.xlu0 %2447, %v2222
  %v2449 = vpop.permute.xlu0 %2448
  %2452 = vset.pattern.permute.xlu0 0
  %2453 = vperm.xlu0 %2452, %v2223
  %v2454 = vpop.permute.xlu0 %2453
  %2457 = vset.pattern.permute.xlu0 0
  %2458 = vperm.xlu0 %2457, %v2224
  %v2459 = vpop.permute.xlu0 %2458
  %2462 = vset.pattern.permute.xlu0 0
  %2463 = vperm.xlu0 %2462, %v2225
  %v2464 = vpop.permute.xlu0 %2463
  %v2466 = vadd.f32 %v2130, %v2229
  %v2467 = vadd.f32 %v2131, %v2234
  %v2468 = vadd.f32 %v2132, %v2239
  %v2469 = vadd.f32 %v2133, %v2244
  %v2470 = vadd.f32 %v2134, %v2249
  %v2471 = vadd.f32 %v2135, %v2254
  %v2472 = vadd.f32 %v2136, %v2259
  %v2473 = vadd.f32 %v2137, %v2264
  %v2474 = vadd.f32 %v2138, %v2269
  %v2475 = vadd.f32 %v2139, %v2274
  %v2476 = vadd.f32 %v2140, %v2279
  %v2477 = vadd.f32 %v2141, %v2284
  %v2478 = vadd.f32 %v2142, %v2289
  %v2479 = vadd.f32 %v2143, %v2294
  %v2480 = vadd.f32 %v2144, %v2299
  %v2481 = vadd.f32 %v2145, %v2304
  %v2482 = vadd.f32 %v2146, %v2309
  %v2483 = vadd.f32 %v2147, %v2314
  %v2484 = vadd.f32 %v2148, %v2319
  %v2485 = vadd.f32 %v2149, %v2324
  %v2486 = vadd.f32 %v2150, %v2329
  %v2487 = vadd.f32 %v2151, %v2334
  %v2488 = vadd.f32 %v2152, %v2339
  %v2489 = vadd.f32 %v2153, %v2344
  %v2490 = vadd.f32 %v2154, %v2349
  %v2491 = vadd.f32 %v2155, %v2354
  %v2492 = vadd.f32 %v2156, %v2359
  %v2493 = vadd.f32 %v2157, %v2364
  %v2494 = vadd.f32 %v2158, %v2369
  %v2495 = vadd.f32 %v2159, %v2374
  %v2496 = vadd.f32 %v2160, %v2379
  %v2497 = vadd.f32 %v2161, %v2384
  %v2498 = vadd.f32 %v2162, %v2389
  %v2499 = vadd.f32 %v2163, %v2394
  %v2500 = vadd.f32 %v2164, %v2399
  %v2501 = vadd.f32 %v2165, %v2404
  %v2502 = vadd.f32 %v2166, %v2409
  %v2503 = vadd.f32 %v2167, %v2414
  %v2504 = vadd.f32 %v2168, %v2419
  %v2505 = vadd.f32 %v2169, %v2424
  %v2506 = vadd.f32 %v2170, %v2429
  %v2507 = vadd.f32 %v2171, %v2434
  %v2508 = vadd.f32 %v2172, %v2439
  %v2509 = vadd.f32 %v2173, %v2444
  %v2510 = vadd.f32 %v2174, %v2449
  %v2511 = vadd.f32 %v2175, %v2454
  %v2512 = vadd.f32 %v2176, %v2459
  %v2513 = vadd.f32 %v2177, %v2464
  %v2514 = vmax.f32 %v2466, 0.0
  %v2515 = vmax.f32 %v2467, 0.0
  %v2516 = vmax.f32 %v2468, 0.0
  %v2517 = vmax.f32 %v2469, 0.0
  %v2518 = vmax.f32 %v2470, 0.0
  %v2519 = vmax.f32 %v2471, 0.0
  %v2520 = vmax.f32 %v2472, 0.0
  %v2521 = vmax.f32 %v2473, 0.0
  %v2522 = vmax.f32 %v2474, 0.0
  %v2523 = vmax.f32 %v2475, 0.0
  %v2524 = vmax.f32 %v2476, 0.0
  %v2525 = vmax.f32 %v2477, 0.0
  %v2526 = vmax.f32 %v2478, 0.0
  %v2527 = vmax.f32 %v2479, 0.0
  %v2528 = vmax.f32 %v2480, 0.0
  %v2529 = vmax.f32 %v2481, 0.0
  %v2530 = vmax.f32 %v2482, 0.0
  %v2531 = vmax.f32 %v2483, 0.0
  %v2532 = vmax.f32 %v2484, 0.0
  %v2533 = vmax.f32 %v2485, 0.0
  %v2534 = vmax.f32 %v2486, 0.0
  %v2535 = vmax.f32 %v2487, 0.0
  %v2536 = vmax.f32 %v2488, 0.0
  %v2537 = vmax.f32 %v2489, 0.0
  %v2538 = vmax.f32 %v2490, 0.0
  %v2539 = vmax.f32 %v2491, 0.0
  %v2540 = vmax.f32 %v2492, 0.0
  %v2541 = vmax.f32 %v2493, 0.0
  %v2542 = vmax.f32 %v2494, 0.0
  %v2543 = vmax.f32 %v2495, 0.0
  %v2544 = vmax.f32 %v2496, 0.0
  %v2545 = vmax.f32 %v2497, 0.0
  %v2546 = vmax.f32 %v2498, 0.0
  %v2547 = vmax.f32 %v2499, 0.0
  %v2548 = vmax.f32 %v2500, 0.0
  %v2549 = vmax.f32 %v2501, 0.0
  %v2550 = vmax.f32 %v2502, 0.0
  %v2551 = vmax.f32 %v2503, 0.0
  %v2552 = vmax.f32 %v2504, 0.0
  %v2553 = vmax.f32 %v2505, 0.0
  %v2554 = vmax.f32 %v2506, 0.0
  %v2555 = vmax.f32 %v2507, 0.0
  %v2556 = vmax.f32 %v2508, 0.0
  %v2557 = vmax.f32 %v2509, 0.0
  %v2558 = vmax.f32 %v2510, 0.0
  %v2559 = vmax.f32 %v2511, 0.0
  %v2560 = vmax.f32 %v2512, 0.0
  %v2561 = vmax.f32 %v2513, 0.0
  %v2562 = vld [vmem:[%s7] sm:$0xff]
  %v2563 = vld [vmem:[%s7 + $0x8] sm:$0xff]
  %v2564 = vld [vmem:[%s7 + $0x10] sm:$0xff]
  %v2565 = vld [vmem:[%s7 + $0x18] sm:$0xff]
  %v2566 = vld [vmem:[%s7 + $0x20] sm:$0xff]
  %v2567 = vld [vmem:[%s7 + $0x28] sm:$0xff]
  %v2568 = vld [vmem:[%s7 + $0x30] sm:$0xff]
  %v2569 = vld [vmem:[%s7 + $0x38] sm:$0xff]
  %v2570 = vld [vmem:[%s7 + $0x40] sm:$0xff]
  %v2571 = vld [vmem:[%s7 + $0x48] sm:$0xff]
  %v2572 = vld [vmem:[%s7 + $0x50] sm:$0xff]
  %v2573 = vld [vmem:[%s7 + $0x58] sm:$0xff]
  %v2574 = vld [vmem:[%s7 + $0x60] sm:$0xff]
  %v2575 = vld [vmem:[%s7 + $0x68] sm:$0xff]
  %v2576 = vld [vmem:[%s7 + $0x70] sm:$0xff]
  %v2577 = vld [vmem:[%s7 + $0x78] sm:$0xff]
  %v2578 = vld [vmem:[%s7 + $0x80] sm:$0xff]
  %v2579 = vld [vmem:[%s7 + $0x88] sm:$0xff]
  %v2580 = vld [vmem:[%s7 + $0x90] sm:$0xff]
  %v2581 = vld [vmem:[%s7 + $0x98] sm:$0xff]
  %v2582 = vld [vmem:[%s7 + $0xa0] sm:$0xff]
  %v2583 = vld [vmem:[%s7 + $0xa8] sm:$0xff]
  %v2584 = vld [vmem:[%s7 + $0xb0] sm:$0xff]
  %v2585 = vld [vmem:[%s7 + $0xb8] sm:$0xff]
  %v2586 = vld [vmem:[%s7 + $0xc0] sm:$0xff]
  %v2587 = vld [vmem:[%s7 + $0xc8] sm:$0xff]
  %v2588 = vld [vmem:[%s7 + $0xd0] sm:$0xff]
  %v2589 = vld [vmem:[%s7 + $0xd8] sm:$0xff]
  %v2590 = vld [vmem:[%s7 + $0xe0] sm:$0xff]
  %v2591 = vld [vmem:[%s7 + $0xe8] sm:$0xff]
  %v2592 = vld [vmem:[%s7 + $0xf0] sm:$0xff]
  %v2593 = vld [vmem:[%s7 + $0xf8] sm:$0xff]
  %v2594 = vld [vmem:[%s7 + $0x100] sm:$0xff]
  %v2595 = vld [vmem:[%s7 + $0x108] sm:$0xff]
  %v2596 = vld [vmem:[%s7 + $0x110] sm:$0xff]
  %v2597 = vld [vmem:[%s7 + $0x118] sm:$0xff]
  %v2598 = vld [vmem:[%s7 + $0x120] sm:$0xff]
  %v2599 = vld [vmem:[%s7 + $0x128] sm:$0xff]
  %v2600 = vld [vmem:[%s7 + $0x130] sm:$0xff]
  %v2601 = vld [vmem:[%s7 + $0x138] sm:$0xff]
  %v2602 = vld [vmem:[%s7 + $0x140] sm:$0xff]
  %v2603 = vld [vmem:[%s7 + $0x148] sm:$0xff]
  %v2604 = vld [vmem:[%s7 + $0x150] sm:$0xff]
  %v2605 = vld [vmem:[%s7 + $0x158] sm:$0xff]
  %v2606 = vld [vmem:[%s7 + $0x160] sm:$0xff]
  %v2607 = vld [vmem:[%s7 + $0x168] sm:$0xff]
  %v2608 = vld [vmem:[%s7 + $0x170] sm:$0xff]
  %v2609 = vld [vmem:[%s7 + $0x178] sm:$0xff]
  %v2610 = vld [vmem:[%s7 + $0x180] sm:$0xff]
  %v2611 = vld [vmem:[%s7 + $0x188] sm:$0xff]
  %v2612 = vld [vmem:[%s7 + $0x190] sm:$0xff]
  %v2613 = vld [vmem:[%s7 + $0x198] sm:$0xff]
  %v2614 = vld [vmem:[%s7 + $0x1a0] sm:$0xff]
  %v2615 = vld [vmem:[%s7 + $0x1a8] sm:$0xff]
  %v2616 = vld [vmem:[%s7 + $0x1b0] sm:$0xff]
  %v2617 = vld [vmem:[%s7 + $0x1b8] sm:$0xff]
  %v2618 = vld [vmem:[%s7 + $0x1c0] sm:$0xff]
  %v2619 = vld [vmem:[%s7 + $0x1c8] sm:$0xff]
  %v2620 = vld [vmem:[%s7 + $0x1d0] sm:$0xff]
  %v2621 = vld [vmem:[%s7 + $0x1d8] sm:$0xff]
  %v2622 = vld [vmem:[%s7 + $0x1e0] sm:$0xff]
  %v2623 = vld [vmem:[%s7 + $0x1e8] sm:$0xff]
  %v2624 = vld [vmem:[%s7 + $0x1f0] sm:$0xff]
  %v2625 = vld [vmem:[%s7 + $0x1f8] sm:$0xff]
  %v2626 = vld [vmem:[%s7 + $0x200] sm:$0xff]
  %v2627 = vld [vmem:[%s7 + $0x208] sm:$0xff]
  %v2628 = vld [vmem:[%s7 + $0x210] sm:$0xff]
  %v2629 = vld [vmem:[%s7 + $0x218] sm:$0xff]
  %v2630 = vld [vmem:[%s7 + $0x220] sm:$0xff]
  %v2631 = vld [vmem:[%s7 + $0x228] sm:$0xff]
  %v2632 = vld [vmem:[%s7 + $0x230] sm:$0xff]
  %v2633 = vld [vmem:[%s7 + $0x238] sm:$0xff]
  %2634 = vmatprep.subr.mxu0 0.0
  %2635 = vmatpush1.msra.mxu0 %v2514
  %2636 = vmatprep.subr.mxu0 0.0
  %2637 = vmatpush1.msra.mxu0 %v2515
  %2638 = vmatprep.subr.mxu0 0.0
  %2639 = vmatpush1.msra.mxu0 %v2516
  %2640 = vmatprep.subr.mxu0 0.0
  %2641 = vmatpush1.msra.mxu0 %v2517
  %2642 = vmatprep.subr.mxu0 0.0
  %2643 = vmatpush1.msra.mxu0 %v2518
  %2644 = vmatprep.subr.mxu0 0.0
  %2645 = vmatpush1.msra.mxu0 %v2519
  %2646 = vmatprep.subr.mxu0 0.0
  %2647 = vmatpush1.msra.mxu0 %v2520
  %2648 = vmatprep.subr.mxu0 0.0
  %2649 = vmatpush1.msra.mxu0 %v2521
  %2650 = vmatprep.subr.mxu0 0.0
  %2651 = vmatpush1.msra.mxu0 %v2522
  %2652 = vmatprep.subr.mxu0 0.0
  %2653 = vmatpush1.msra.mxu0 %v2523
  %2654 = vmatprep.subr.mxu0 0.0
  %2655 = vmatpush1.msra.mxu0 %v2524
  %2656 = vmatprep.subr.mxu0 0.0
  %2657 = vmatpush1.msra.mxu0 %v2525
  %2658 = vmatprep.subr.mxu0 0.0
  %2659 = vmatpush1.msra.mxu0 %v2526
  %2660 = vmatprep.subr.mxu0 0.0
  %2661 = vmatpush1.msra.mxu0 %v2527
  %2662 = vmatprep.subr.mxu0 0.0
  %2663 = vmatpush1.msra.mxu0 %v2528
  %2664 = vmatprep.subr.mxu0 0.0
  %2665 = vmatpush1.msra.mxu0 %v2529
  %2666 = vmatprep.subr.mxu0 0.0
  %2667 = vmatpush1.msra.mxu0 %v2530
  %2668 = vmatprep.subr.mxu0 0.0
  %2669 = vmatpush1.msra.mxu0 %v2531
  %2670 = vmatprep.subr.mxu0 0.0
  %2671 = vmatpush1.msra.mxu0 %v2532
  %2672 = vmatprep.subr.mxu0 0.0
  %2673 = vmatpush1.msra.mxu0 %v2533
  %2674 = vmatprep.subr.mxu0 0.0
  %2675 = vmatpush1.msra.mxu0 %v2534
  %2676 = vmatprep.subr.mxu0 0.0
  %2677 = vmatpush1.msra.mxu0 %v2535
  %2678 = vmatprep.subr.mxu0 0.0
  %2679 = vmatpush1.msra.mxu0 %v2536
  %2680 = vmatprep.subr.mxu0 0.0
  %2681 = vmatpush1.msra.mxu0 %v2537
  %2682 = vmatprep.subr.mxu0 0.0
  %2683 = vmatpush1.msra.mxu0 %v2538
  %2684 = vmatprep.subr.mxu0 0.0
  %2685 = vmatpush1.msra.mxu0 %v2539
  %2686 = vmatprep.subr.mxu0 0.0
  %2687 = vmatpush1.msra.mxu0 %v2540
  %2688 = vmatprep.subr.mxu0 0.0
  %2689 = vmatpush1.msra.mxu0 %v2541
  %2690 = vmatprep.subr.mxu0 0.0
  %2691 = vmatpush1.msra.mxu0 %v2542
  %2692 = vmatprep.subr.mxu0 0.0
  %2693 = vmatpush1.msra.mxu0 %v2543
  %2694 = vmatprep.subr.mxu0 0.0
  %2695 = vmatpush1.msra.mxu0 %v2544
  %2696 = vmatprep.subr.mxu0 0.0
  %2697 = vmatpush1.msra.mxu0 %v2545
  %2698 = vmatprep.mubr.f32.mxu0 %v2563
  %2699 = vmatmul.mubr.f32.gmra.mrb[0].mxu0 %v2562
  %v2700 = vpop.f32.mrb[0].mxu0
  %v2701 = vadd.f32 0.0, %v2700
  %v2702 = vpop.f32.mrb[0].mxu0
  %2703 = vmatprep.mubr.f32.mxu0 %v2566
  %2704 = vmatmul.mubr.f32.gmra.mrb[0].mxu0 %v2565
  %v2705 = vpop.f32.mrb[0].mxu0
  %v2706 = vadd.f32 0.0, %v2705
  %v2707 = vpop.f32.mrb[0].mxu0
  %2708 = vmatprep.mubr.f32.mxu0 %v2569
  %2709 = vmatmul.mubr.f32.gmra.mrb[0].mxu0 %v2568
  %v2710 = vpop.f32.mrb[0].mxu0
  %v2711 = vadd.f32 0.0, %v2710
  %v2712 = vpop.f32.mrb[0].mxu0
  %2713 = vmatprep.mubr.f32.mxu0 %v2572
  %2714 = vmatmul.mubr.f32.gmra.mrb[0].mxu0 %v2571
  %v2715 = vpop.f32.mrb[0].mxu0
  %v2716 = vadd.f32 0.0, %v2715
  %v2717 = vpop.f32.mrb[0].mxu0
  %2718 = vmatprep.mubr.f32.mxu0 %v2575
  %2719 = vmatmul.mubr.f32.gmra.mrb[0].mxu0 %v2574
  %v2720 = vpop.f32.mrb[0].mxu0
  %v2721 = vadd.f32 0.0, %v2720
  %v2722 = vpop.f32.mrb[0].mxu0
  %2723 = vmatprep.mubr.f32.mxu0 %v2578
  %2724 = vmatmul.mubr.f32.gmra.mrb[0].mxu0 %v2577
  %v2725 = vpop.f32.mrb[0].mxu0
  %v2726 = vadd.f32 0.0, %v2725
  %v2727 = vpop.f32.mrb[0].mxu0
  %2728 = vmatprep.mubr.f32.mxu0 %v2581
  %2729 = vmatmul.mubr.f32.gmra.mrb[0].mxu0 %v2580
  %v2730 = vpop.f32.mrb[0].mxu0
  %v2731 = vadd.f32 0.0, %v2730
  %v2732 = vpop.f32.mrb[0].mxu0
  %2733 = vmatprep.mubr.f32.mxu0 %v2584
  %2734 = vmatmul.mubr.f32.gmra.mrb[0].mxu0 %v2583
  %v2735 = vpop.f32.mrb[0].mxu0
  %v2736 = vadd.f32 0.0, %v2735
  %v2737 = vpop.f32.mrb[0].mxu0
  %2738 = vmatprep.mubr.f32.mxu0 %v2587
  %2739 = vmatmul.mubr.f32.gmra.mrb[0].mxu0 %v2586
  %v2740 = vpop.f32.mrb[0].mxu0
  %v2741 = vadd.f32 0.0, %v2740
  %v2742 = vpop.f32.mrb[0].mxu0
  %2743 = vmatprep.mubr.f32.mxu0 %v2590
  %2744 = vmatmul.mubr.f32.gmra.mrb[0].mxu0 %v2589
  %v2745 = vpop.f32.mrb[0].mxu0
  %v2746 = vadd.f32 0.0, %v2745
  %v2747 = vpop.f32.mrb[0].mxu0
  %2748 = vmatprep.mubr.f32.mxu0 %v2593
  %2749 = vmatmul.mubr.f32.gmra.mrb[0].mxu0 %v2592
  %v2750 = vpop.f32.mrb[0].mxu0
  %v2751 = vadd.f32 0.0, %v2750
  %v2752 = vpop.f32.mrb[0].mxu0
  %2753 = vmatprep.mubr.f32.mxu0 %v2596
  %2754 = vmatmul.mubr.f32.gmra.mrb[0].mxu0 %v2595
  %v2755 = vpop.f32.mrb[0].mxu0
  %v2756 = vadd.f32 0.0, %v2755
  %v2757 = vpop.f32.mrb[0].mxu0
  %2758 = vmatprep.mubr.f32.mxu0 %v2599
  %2759 = vmatmul.mubr.f32.gmra.mrb[0].mxu0 %v2598
  %v2760 = vpop.f32.mrb[0].mxu0
  %v2761 = vadd.f32 0.0, %v2760
  %v2762 = vpop.f32.mrb[0].mxu0
  %2763 = vmatprep.mubr.f32.mxu0 %v2602
  %2764 = vmatmul.mubr.f32.gmra.mrb[0].mxu0 %v2601
  %v2765 = vpop.f32.mrb[0].mxu0
  %v2766 = vadd.f32 0.0, %v2765
  %v2767 = vpop.f32.mrb[0].mxu0
  %2768 = vmatprep.mubr.f32.mxu0 %v2605
  %2769 = vmatmul.mubr.f32.gmra.mrb[0].mxu0 %v2604
  %v2770 = vpop.f32.mrb[0].mxu0
  %v2771 = vadd.f32 0.0, %v2770
  %v2772 = vpop.f32.mrb[0].mxu0
  %2773 = vmatprep.mubr.f32.mxu0 %v2608
  %2774 = vmatmul.mubr.f32.gmra.mrb[0].mxu0 %v2607
  %v2775 = vpop.f32.mrb[0].mxu0
  %v2776 = vadd.f32 0.0, %v2775
  %v2777 = vpop.f32.mrb[0].mxu0
  %2778 = vmatprep.mubr.f32.mxu0 %v2611
  %2779 = vmatmul.mubr.f32.gmra.mrb[0].mxu0 %v2610
  %v2780 = vpop.f32.mrb[0].mxu0
  %v2781 = vadd.f32 0.0, %v2780
  %v2782 = vpop.f32.mrb[0].mxu0
  %2783 = vmatprep.mubr.f32.mxu0 %v2614
  %2784 = vmatmul.mubr.f32.gmra.mrb[0].mxu0 %v2613
  %v2785 = vpop.f32.mrb[0].mxu0
  %v2786 = vadd.f32 0.0, %v2785
  %v2787 = vpop.f32.mrb[0].mxu0
  %2788 = vmatprep.mubr.f32.mxu0 %v2617
  %2789 = vmatmul.mubr.f32.gmra.mrb[0].mxu0 %v2616
  %v2790 = vpop.f32.mrb[0].mxu0
  %v2791 = vadd.f32 0.0, %v2790
  %v2792 = vpop.f32.mrb[0].mxu0
  %2793 = vmatprep.mubr.f32.mxu0 %v2620
  %2794 = vmatmul.mubr.f32.gmra.mrb[0].mxu0 %v2619
  %v2795 = vpop.f32.mrb[0].mxu0
  %v2796 = vadd.f32 0.0, %v2795
  %v2797 = vpop.f32.mrb[0].mxu0
  %2798 = vmatprep.mubr.f32.mxu0 %v2623
  %2799 = vmatmul.mubr.f32.gmra.mrb[0].mxu0 %v2622
  %v2800 = vpop.f32.mrb[0].mxu0
  %v2801 = vadd.f32 0.0, %v2800
  %v2802 = vpop.f32.mrb[0].mxu0
  %2803 = vmatprep.mubr.f32.mxu0 %v2626
  %2804 = vmatmul.mubr.f32.gmra.mrb[0].mxu0 %v2625
  %v2805 = vpop.f32.mrb[0].mxu0
  %v2806 = vadd.f32 0.0, %v2805
  %v2807 = vpop.f32.mrb[0].mxu0
  %2808 = vmatprep.mubr.f32.mxu0 %v2629
  %2809 = vmatmul.mubr.f32.gmra.mrb[0].mxu0 %v2628
  %v2810 = vpop.f32.mrb[0].mxu0
  %v2811 = vadd.f32 0.0, %v2810
  %v2812 = vpop.f32.mrb[0].mxu0
  %2813 = vmatprep.mubr.f32.mxu0 %v2632
  %2814 = vmatmul.mubr.f32.gmra.mrb[0].mxu0 %v2631
  %v2815 = vpop.f32.mrb[0].mxu0
  %v2816 = vadd.f32 0.0, %v2815
  %v2817 = vpop.f32.mrb[0].mxu0
  %2818 = vdwg.mxu0
  %2819 = vmatprep.subr.mxu0 0.0
  %2820 = vmatpush1.msra.mxu0 %v2546
  %2821 = vmatprep.subr.mxu0 0.0
  %2822 = vmatpush1.msra.mxu0 %v2547
  %2823 = vmatprep.subr.mxu0 0.0
  %2824 = vmatpush1.msra.mxu0 %v2548
  %2825 = vmatprep.subr.mxu0 0.0
  %2826 = vmatpush1.msra.mxu0 %v2549
  %2827 = vmatprep.subr.mxu0 0.0
  %2828 = vmatpush1.msra.mxu0 %v2550
  %2829 = vmatprep.subr.mxu0 0.0
  %2830 = vmatpush1.msra.mxu0 %v2551
  %2831 = vmatprep.subr.mxu0 0.0
  %2832 = vmatpush1.msra.mxu0 %v2552
  %2833 = vmatprep.subr.mxu0 0.0
  %2834 = vmatpush1.msra.mxu0 %v2553
  %2835 = vmatprep.subr.mxu0 0.0
  %2836 = vmatpush1.msra.mxu0 %v2554
  %2837 = vmatprep.subr.mxu0 0.0
  %2838 = vmatpush1.msra.mxu0 %v2555
  %2839 = vmatprep.subr.mxu0 0.0
  %2840 = vmatpush1.msra.mxu0 %v2556
  %2841 = vmatprep.subr.mxu0 0.0
  %2842 = vmatpush1.msra.mxu0 %v2557
  %2843 = vmatprep.subr.mxu0 0.0
  %2844 = vmatpush1.msra.mxu0 %v2558
  %2845 = vmatprep.subr.mxu0 0.0
  %2846 = vmatpush1.msra.mxu0 %v2559
  %2847 = vmatprep.subr.mxu0 0.0
  %2848 = vmatpush1.msra.mxu0 %v2560
  %2849 = vmatprep.subr.mxu0 0.0
  %2850 = vmatpush1.msra.mxu0 %v2561
  %2851 = vmatprep.subr.mxu0 0.0
  %2852 = vmatpush1.msra.mxu0 0.0
  %2853 = vmatprep.subr.mxu0 0.0
  %2854 = vmatpush1.msra.mxu0 0.0
  %2855 = vmatprep.subr.mxu0 0.0
  %2856 = vmatpush1.msra.mxu0 0.0
  %2857 = vmatprep.subr.mxu0 0.0
  %2858 = vmatpush1.msra.mxu0 0.0
  %2859 = vmatprep.subr.mxu0 0.0
  %2860 = vmatpush1.msra.mxu0 0.0
  %2861 = vmatprep.subr.mxu0 0.0
  %2862 = vmatpush1.msra.mxu0 0.0
  %2863 = vmatprep.subr.mxu0 0.0
  %2864 = vmatpush1.msra.mxu0 0.0
  %2865 = vmatprep.subr.mxu0 0.0
  %2866 = vmatpush1.msra.mxu0 0.0
  %2867 = vmatprep.subr.mxu0 0.0
  %2868 = vmatpush1.msra.mxu0 0.0
  %2869 = vmatprep.subr.mxu0 0.0
  %2870 = vmatpush1.msra.mxu0 0.0
  %2871 = vmatprep.subr.mxu0 0.0
  %2872 = vmatpush1.msra.mxu0 0.0
  %2873 = vmatprep.subr.mxu0 0.0
  %2874 = vmatpush1.msra.mxu0 0.0
  %2875 = vmatprep.subr.mxu0 0.0
  %2876 = vmatpush1.msra.mxu0 0.0
  %2877 = vmatprep.subr.mxu0 0.0
  %2878 = vmatpush1.msra.mxu0 0.0
  %2879 = vmatprep.subr.mxu0 0.0
  %2880 = vmatpush1.msra.mxu0 0.0
  %2881 = vmatprep.subr.mxu0 0.0
  %2882 = vmatpush1.msra.mxu0 0.0
  %2883 = vmatprep.mubr.f32.mxu0 0.0
  %2884 = vmatmul.mubr.f32.gmra.mrb[0].mxu0 %v2564
  %v2885 = vpop.f32.mrb[0].mxu0
  %v2886 = vadd.f32 %v2701, %v2885
  %v2887 = vpop.f32.mrb[0].mxu0
  %2888 = vmatprep.mubr.f32.mxu0 0.0
  %2889 = vmatmul.mubr.f32.gmra.mrb[0].mxu0 %v2567
  %v2890 = vpop.f32.mrb[0].mxu0
  %v2891 = vadd.f32 %v2706, %v2890
  %v2892 = vpop.f32.mrb[0].mxu0
  %2893 = vmatprep.mubr.f32.mxu0 0.0
  %2894 = vmatmul.mubr.f32.gmra.mrb[0].mxu0 %v2570
  %v2895 = vpop.f32.mrb[0].mxu0
  %v2896 = vadd.f32 %v2711, %v2895
  %v2897 = vpop.f32.mrb[0].mxu0
  %2898 = vmatprep.mubr.f32.mxu0 0.0
  %2899 = vmatmul.mubr.f32.gmra.mrb[0].mxu0 %v2573
  %v2900 = vpop.f32.mrb[0].mxu0
  %v2901 = vadd.f32 %v2716, %v2900
  %v2902 = vpop.f32.mrb[0].mxu0
  %2903 = vmatprep.mubr.f32.mxu0 0.0
  %2904 = vmatmul.mubr.f32.gmra.mrb[0].mxu0 %v2576
  %v2905 = vpop.f32.mrb[0].mxu0
  %v2906 = vadd.f32 %v2721, %v2905
  %v2907 = vpop.f32.mrb[0].mxu0
  %2908 = vmatprep.mubr.f32.mxu0 0.0
  %2909 = vmatmul.mubr.f32.gmra.mrb[0].mxu0 %v2579
  %v2910 = vpop.f32.mrb[0].mxu0
  %v2911 = vadd.f32 %v2726, %v2910
  %v2912 = vpop.f32.mrb[0].mxu0
  %2913 = vmatprep.mubr.f32.mxu0 0.0
  %2914 = vmatmul.mubr.f32.gmra.mrb[0].mxu0 %v2582
  %v2915 = vpop.f32.mrb[0].mxu0
  %v2916 = vadd.f32 %v2731, %v2915
  %v2917 = vpop.f32.mrb[0].mxu0
  %2918 = vmatprep.mubr.f32.mxu0 0.0
  %2919 = vmatmul.mubr.f32.gmra.mrb[0].mxu0 %v2585
  %v2920 = vpop.f32.mrb[0].mxu0
  %v2921 = vadd.f32 %v2736, %v2920
  %v2922 = vpop.f32.mrb[0].mxu0
  %2923 = vmatprep.mubr.f32.mxu0 0.0
  %2924 = vmatmul.mubr.f32.gmra.mrb[0].mxu0 %v2588
  %v2925 = vpop.f32.mrb[0].mxu0
  %v2926 = vadd.f32 %v2741, %v2925
  %v2927 = vpop.f32.mrb[0].mxu0
  %2928 = vmatprep.mubr.f32.mxu0 0.0
  %2929 = vmatmul.mubr.f32.gmra.mrb[0].mxu0 %v2591
  %v2930 = vpop.f32.mrb[0].mxu0
  %v2931 = vadd.f32 %v2746, %v2930
  %v2932 = vpop.f32.mrb[0].mxu0
  %2933 = vmatprep.mubr.f32.mxu0 0.0
  %2934 = vmatmul.mubr.f32.gmra.mrb[0].mxu0 %v2594
  %v2935 = vpop.f32.mrb[0].mxu0
  %v2936 = vadd.f32 %v2751, %v2935
  %v2937 = vpop.f32.mrb[0].mxu0
  %2938 = vmatprep.mubr.f32.mxu0 0.0
  %2939 = vmatmul.mubr.f32.gmra.mrb[0].mxu0 %v2597
  %v2940 = vpop.f32.mrb[0].mxu0
  %v2941 = vadd.f32 %v2756, %v2940
  %v2942 = vpop.f32.mrb[0].mxu0
  %2943 = vmatprep.mubr.f32.mxu0 0.0
  %2944 = vmatmul.mubr.f32.gmra.mrb[0].mxu0 %v2600
  %v2945 = vpop.f32.mrb[0].mxu0
  %v2946 = vadd.f32 %v2761, %v2945
  %v2947 = vpop.f32.mrb[0].mxu0
  %2948 = vmatprep.mubr.f32.mxu0 0.0
  %2949 = vmatmul.mubr.f32.gmra.mrb[0].mxu0 %v2603
  %v2950 = vpop.f32.mrb[0].mxu0
  %v2951 = vadd.f32 %v2766, %v2950
  %v2952 = vpop.f32.mrb[0].mxu0
  %2953 = vmatprep.mubr.f32.mxu0 0.0
  %2954 = vmatmul.mubr.f32.gmra.mrb[0].mxu0 %v2606
  %v2955 = vpop.f32.mrb[0].mxu0
  %v2956 = vadd.f32 %v2771, %v2955
  %v2957 = vpop.f32.mrb[0].mxu0
  %2958 = vmatprep.mubr.f32.mxu0 0.0
  %2959 = vmatmul.mubr.f32.gmra.mrb[0].mxu0 %v2609
  %v2960 = vpop.f32.mrb[0].mxu0
  %v2961 = vadd.f32 %v2776, %v2960
  %v2962 = vpop.f32.mrb[0].mxu0
  %2963 = vmatprep.mubr.f32.mxu0 0.0
  %2964 = vmatmul.mubr.f32.gmra.mrb[0].mxu0 %v2612
  %v2965 = vpop.f32.mrb[0].mxu0
  %v2966 = vadd.f32 %v2781, %v2965
  %v2967 = vpop.f32.mrb[0].mxu0
  %2968 = vmatprep.mubr.f32.mxu0 0.0
  %2969 = vmatmul.mubr.f32.gmra.mrb[0].mxu0 %v2615
  %v2970 = vpop.f32.mrb[0].mxu0
  %v2971 = vadd.f32 %v2786, %v2970
  %v2972 = vpop.f32.mrb[0].mxu0
  %2973 = vmatprep.mubr.f32.mxu0 0.0
  %2974 = vmatmul.mubr.f32.gmra.mrb[0].mxu0 %v2618
  %v2975 = vpop.f32.mrb[0].mxu0
  %v2976 = vadd.f32 %v2791, %v2975
  %v2977 = vpop.f32.mrb[0].mxu0
  %2978 = vmatprep.mubr.f32.mxu0 0.0
  %2979 = vmatmul.mubr.f32.gmra.mrb[0].mxu0 %v2621
  %v2980 = vpop.f32.mrb[0].mxu0
  %v2981 = vadd.f32 %v2796, %v2980
  %v2982 = vpop.f32.mrb[0].mxu0
  %2983 = vmatprep.mubr.f32.mxu0 0.0
  %2984 = vmatmul.mubr.f32.gmra.mrb[0].mxu0 %v2624
  %v2985 = vpop.f32.mrb[0].mxu0
  %v2986 = vadd.f32 %v2801, %v2985
  %v2987 = vpop.f32.mrb[0].mxu0
  %2988 = vmatprep.mubr.f32.mxu0 0.0
  %2989 = vmatmul.mubr.f32.gmra.mrb[0].mxu0 %v2627
  %v2990 = vpop.f32.mrb[0].mxu0
  %v2991 = vadd.f32 %v2806, %v2990
  %v2992 = vpop.f32.mrb[0].mxu0
  %2993 = vmatprep.mubr.f32.mxu0 0.0
  %2994 = vmatmul.mubr.f32.gmra.mrb[0].mxu0 %v2630
  %v2995 = vpop.f32.mrb[0].mxu0
  %v2996 = vadd.f32 %v2811, %v2995
  %v2997 = vpop.f32.mrb[0].mxu0
  %2998 = vmatprep.mubr.f32.mxu0 0.0
  %2999 = vmatmul.mubr.f32.gmra.mrb[0].mxu0 %v2633
  %v3000 = vpop.f32.mrb[0].mxu0
  %v3001 = vadd.f32 %v2816, %v3000
  %v3002 = vpop.f32.mrb[0].mxu0
  %3003 = vdwg.mxu0
  %v3004 = vld [vmem:[%s8] sm:$0xff]
  %v3005 = vld [vmem:[%s8 + $0x8] sm:$0xff]
  %v3006 = vld [vmem:[%s8 + $0x10] sm:$0xff]
  %v3007 = vld [vmem:[%s8 + $0x18] sm:$0xff]
  %v3008 = vld [vmem:[%s8 + $0x20] sm:$0xff]
  %v3009 = vld [vmem:[%s8 + $0x28] sm:$0xff]
  %v3010 = vld [vmem:[%s8 + $0x30] sm:$0xff]
  %v3011 = vld [vmem:[%s8 + $0x38] sm:$0xff]
  %v3012 = vld [vmem:[%s8 + $0x40] sm:$0xff]
  %v3013 = vld [vmem:[%s8 + $0x48] sm:$0xff]
  %v3014 = vld [vmem:[%s8 + $0x50] sm:$0xff]
  %v3015 = vld [vmem:[%s8 + $0x58] sm:$0xff]
  %v3016 = vld [vmem:[%s8 + $0x60] sm:$0xff]
  %v3017 = vld [vmem:[%s8 + $0x68] sm:$0xff]
  %v3018 = vld [vmem:[%s8 + $0x70] sm:$0xff]
  %v3019 = vld [vmem:[%s8 + $0x78] sm:$0xff]
  %v3020 = vld [vmem:[%s8 + $0x80] sm:$0xff]
  %v3021 = vld [vmem:[%s8 + $0x88] sm:$0xff]
  %v3022 = vld [vmem:[%s8 + $0x90] sm:$0xff]
  %v3023 = vld [vmem:[%s8 + $0x98] sm:$0xff]
  %v3024 = vld [vmem:[%s8 + $0xa0] sm:$0xff]
  %v3025 = vld [vmem:[%s8 + $0xa8] sm:$0xff]
  %v3026 = vld [vmem:[%s8 + $0xb0] sm:$0xff]
  %v3027 = vld [vmem:[%s8 + $0xb8] sm:$0xff]
  %v3028 = vld [vmem:[%s8 + $0xc0] sm:$0xff]
  %v3029 = vld [vmem:[%s8 + $0xc8] sm:$0xff]
  %v3030 = vld [vmem:[%s8 + $0xd0] sm:$0xff]
  %v3031 = vld [vmem:[%s8 + $0xd8] sm:$0xff]
  %v3032 = vld [vmem:[%s8 + $0xe0] sm:$0xff]
  %v3033 = vld [vmem:[%s8 + $0xe8] sm:$0xff]
  %v3034 = vld [vmem:[%s8 + $0xf0] sm:$0xff]
  %v3035 = vld [vmem:[%s8 + $0xf8] sm:$0xff]
  %v3036 = vld [vmem:[%s8 + $0x100] sm:$0xff]
  %v3037 = vld [vmem:[%s8 + $0x108] sm:$0xff]
  %v3038 = vld [vmem:[%s8 + $0x110] sm:$0xff]
  %v3039 = vld [vmem:[%s8 + $0x118] sm:$0xff]
  %v3040 = vld [vmem:[%s8 + $0x120] sm:$0xff]
  %v3041 = vld [vmem:[%s8 + $0x128] sm:$0xff]
  %v3042 = vld [vmem:[%s8 + $0x130] sm:$0xff]
  %v3043 = vld [vmem:[%s8 + $0x138] sm:$0xff]
  %v3044 = vld [vmem:[%s8 + $0x140] sm:$0xff]
  %v3045 = vld [vmem:[%s8 + $0x148] sm:$0xff]
  %v3046 = vld [vmem:[%s8 + $0x150] sm:$0xff]
  %v3047 = vld [vmem:[%s8 + $0x158] sm:$0xff]
  %v3048 = vld [vmem:[%s8 + $0x160] sm:$0xff]
  %v3049 = vld [vmem:[%s8 + $0x168] sm:$0xff]
  %v3050 = vld [vmem:[%s8 + $0x170] sm:$0xff]
  %v3051 = vld [vmem:[%s8 + $0x178] sm:$0xff]
  %v3052 = vld [vmem:[%s8 + $0x180] sm:$0xff]
  %v3053 = vld [vmem:[%s8 + $0x188] sm:$0xff]
  %v3054 = vld [vmem:[%s8 + $0x190] sm:$0xff]
  %v3055 = vld [vmem:[%s8 + $0x198] sm:$0xff]
  %v3056 = vld [vmem:[%s8 + $0x1a0] sm:$0xff]
  %v3057 = vld [vmem:[%s8 + $0x1a8] sm:$0xff]
  %v3058 = vld [vmem:[%s8 + $0x1b0] sm:$0xff]
  %v3059 = vld [vmem:[%s8 + $0x1b8] sm:$0xff]
  %v3060 = vld [vmem:[%s8 + $0x1c0] sm:$0xff]
  %v3061 = vld [vmem:[%s8 + $0x1c8] sm:$0xff]
  %v3062 = vld [vmem:[%s8 + $0x1d0] sm:$0xff]
  %v3063 = vld [vmem:[%s8 + $0x1d8] sm:$0xff]
  %v3064 = vld [vmem:[%s8 + $0x1e0] sm:$0xff]
  %v3065 = vld [vmem:[%s8 + $0x1e8] sm:$0xff]
  %v3066 = vld [vmem:[%s8 + $0x1f0] sm:$0xff]
  %v3067 = vld [vmem:[%s8 + $0x1f8] sm:$0xff]
  %v3068 = vld [vmem:[%s8 + $0x200] sm:$0xff]
  %v3069 = vld [vmem:[%s8 + $0x208] sm:$0xff]
  %v3070 = vld [vmem:[%s8 + $0x210] sm:$0xff]
  %v3071 = vld [vmem:[%s8 + $0x218] sm:$0xff]
  %v3072 = vld [vmem:[%s8 + $0x220] sm:$0xff]
  %v3073 = vld [vmem:[%s8 + $0x228] sm:$0xff]
  %v3074 = vld [vmem:[%s8 + $0x230] sm:$0xff]
  %v3075 = vld [vmem:[%s8 + $0x238] sm:$0xff]
  %3076 = vmatprep.subr.mxu0 0.0
  %3077 = vmatpush1.msra.mxu0 %v2514
  %3078 = vmatprep.subr.mxu0 0.0
  %3079 = vmatpush1.msra.mxu0 %v2515
  %3080 = vmatprep.subr.mxu0 0.0
  %3081 = vmatpush1.msra.mxu0 %v2516
  %3082 = vmatprep.subr.mxu0 0.0
  %3083 = vmatpush1.msra.mxu0 %v2517
  %3084 = vmatprep.subr.mxu0 0.0
  %3085 = vmatpush1.msra.mxu0 %v2518
  %3086 = vmatprep.subr.mxu0 0.0
  %3087 = vmatpush1.msra.mxu0 %v2519
  %3088 = vmatprep.subr.mxu0 0.0
  %3089 = vmatpush1.msra.mxu0 %v2520
  %3090 = vmatprep.subr.mxu0 0.0
  %3091 = vmatpush1.msra.mxu0 %v2521
  %3092 = vmatprep.subr.mxu0 0.0
  %3093 = vmatpush1.msra.mxu0 %v2522
  %3094 = vmatprep.subr.mxu0 0.0
  %3095 = vmatpush1.msra.mxu0 %v2523
  %3096 = vmatprep.subr.mxu0 0.0
  %3097 = vmatpush1.msra.mxu0 %v2524
  %3098 = vmatprep.subr.mxu0 0.0
  %3099 = vmatpush1.msra.mxu0 %v2525
  %3100 = vmatprep.subr.mxu0 0.0
  %3101 = vmatpush1.msra.mxu0 %v2526
  %3102 = vmatprep.subr.mxu0 0.0
  %3103 = vmatpush1.msra.mxu0 %v2527
  %3104 = vmatprep.subr.mxu0 0.0
  %3105 = vmatpush1.msra.mxu0 %v2528
  %3106 = vmatprep.subr.mxu0 0.0
  %3107 = vmatpush1.msra.mxu0 %v2529
  %3108 = vmatprep.subr.mxu0 0.0
  %3109 = vmatpush1.msra.mxu0 %v2530
  %3110 = vmatprep.subr.mxu0 0.0
  %3111 = vmatpush1.msra.mxu0 %v2531
  %3112 = vmatprep.subr.mxu0 0.0
  %3113 = vmatpush1.msra.mxu0 %v2532
  %3114 = vmatprep.subr.mxu0 0.0
  %3115 = vmatpush1.msra.mxu0 %v2533
  %3116 = vmatprep.subr.mxu0 0.0
  %3117 = vmatpush1.msra.mxu0 %v2534
  %3118 = vmatprep.subr.mxu0 0.0
  %3119 = vmatpush1.msra.mxu0 %v2535
  %3120 = vmatprep.subr.mxu0 0.0
  %3121 = vmatpush1.msra.mxu0 %v2536
  %3122 = vmatprep.subr.mxu0 0.0
  %3123 = vmatpush1.msra.mxu0 %v2537
  %3124 = vmatprep.subr.mxu0 0.0
  %3125 = vmatpush1.msra.mxu0 %v2538
  %3126 = vmatprep.subr.mxu0 0.0
  %3127 = vmatpush1.msra.mxu0 %v2539
  %3128 = vmatprep.subr.mxu0 0.0
  %3129 = vmatpush1.msra.mxu0 %v2540
  %3130 = vmatprep.subr.mxu0 0.0
  %3131 = vmatpush1.msra.mxu0 %v2541
  %3132 = vmatprep.subr.mxu0 0.0
  %3133 = vmatpush1.msra.mxu0 %v2542
  %3134 = vmatprep.subr.mxu0 0.0
  %3135 = vmatpush1.msra.mxu0 %v2543
  %3136 = vmatprep.subr.mxu0 0.0
  %3137 = vmatpush1.msra.mxu0 %v2544
  %3138 = vmatprep.subr.mxu0 0.0
  %3139 = vmatpush1.msra.mxu0 %v2545
  %3140 = vmatprep.mubr.f32.mxu0 %v3005
  %3141 = vmatmul.mubr.f32.gmra.mrb[0].mxu0 %v3004
  %v3142 = vpop.f32.mrb[0].mxu0
  %v3143 = vadd.f32 0.0, %v3142
  %v3144 = vpop.f32.mrb[0].mxu0
  %3145 = vmatprep.mubr.f32.mxu0 %v3008
  %3146 = vmatmul.mubr.f32.gmra.mrb[0].mxu0 %v3007
  %v3147 = vpop.f32.mrb[0].mxu0
  %v3148 = vadd.f32 0.0, %v3147
  %v3149 = vpop.f32.mrb[0].mxu0
  %3150 = vmatprep.mubr.f32.mxu0 %v3011
  %3151 = vmatmul.mubr.f32.gmra.mrb[0].mxu0 %v3010
  %v3152 = vpop.f32.mrb[0].mxu0
  %v3153 = vadd.f32 0.0, %v3152
  %v3154 = vpop.f32.mrb[0].mxu0
  %3155 = vmatprep.mubr.f32.mxu0 %v3014
  %3156 = vmatmul.mubr.f32.gmra.mrb[0].mxu0 %v3013
  %v3157 = vpop.f32.mrb[0].mxu0
  %v3158 = vadd.f32 0.0, %v3157
  %v3159 = vpop.f32.mrb[0].mxu0
  %3160 = vmatprep.mubr.f32.mxu0 %v3017
  %3161 = vmatmul.mubr.f32.gmra.mrb[0].mxu0 %v3016
  %v3162 = vpop.f32.mrb[0].mxu0
  %v3163 = vadd.f32 0.0, %v3162
  %v3164 = vpop.f32.mrb[0].mxu0
  %3165 = vmatprep.mubr.f32.mxu0 %v3020
  %3166 = vmatmul.mubr.f32.gmra.mrb[0].mxu0 %v3019
  %v3167 = vpop.f32.mrb[0].mxu0
  %v3168 = vadd.f32 0.0, %v3167
  %v3169 = vpop.f32.mrb[0].mxu0
  %3170 = vmatprep.mubr.f32.mxu0 %v3023
  %3171 = vmatmul.mubr.f32.gmra.mrb[0].mxu0 %v3022
  %v3172 = vpop.f32.mrb[0].mxu0
  %v3173 = vadd.f32 0.0, %v3172
  %v3174 = vpop.f32.mrb[0].mxu0
  %3175 = vmatprep.mubr.f32.mxu0 %v3026
  %3176 = vmatmul.mubr.f32.gmra.mrb[0].mxu0 %v3025
  %v3177 = vpop.f32.mrb[0].mxu0
  %v3178 = vadd.f32 0.0, %v3177
  %v3179 = vpop.f32.mrb[0].mxu0
  %3180 = vmatprep.mubr.f32.mxu0 %v3029
  %3181 = vmatmul.mubr.f32.gmra.mrb[0].mxu0 %v3028
  %v3182 = vpop.f32.mrb[0].mxu0
  %v3183 = vadd.f32 0.0, %v3182
  %v3184 = vpop.f32.mrb[0].mxu0
  %3185 = vmatprep.mubr.f32.mxu0 %v3032
  %3186 = vmatmul.mubr.f32.gmra.mrb[0].mxu0 %v3031
  %v3187 = vpop.f32.mrb[0].mxu0
  %v3188 = vadd.f32 0.0, %v3187
  %v3189 = vpop.f32.mrb[0].mxu0
  %3190 = vmatprep.mubr.f32.mxu0 %v3035
  %3191 = vmatmul.mubr.f32.gmra.mrb[0].mxu0 %v3034
  %v3192 = vpop.f32.mrb[0].mxu0
  %v3193 = vadd.f32 0.0, %v3192
  %v3194 = vpop.f32.mrb[0].mxu0
  %3195 = vmatprep.mubr.f32.mxu0 %v3038
  %3196 = vmatmul.mubr.f32.gmra.mrb[0].mxu0 %v3037
  %v3197 = vpop.f32.mrb[0].mxu0
  %v3198 = vadd.f32 0.0, %v3197
  %v3199 = vpop.f32.mrb[0].mxu0
  %3200 = vmatprep.mubr.f32.mxu0 %v3041
  %3201 = vmatmul.mubr.f32.gmra.mrb[0].mxu0 %v3040
  %v3202 = vpop.f32.mrb[0].mxu0
  %v3203 = vadd.f32 0.0, %v3202
  %v3204 = vpop.f32.mrb[0].mxu0
  %3205 = vmatprep.mubr.f32.mxu0 %v3044
  %3206 = vmatmul.mubr.f32.gmra.mrb[0].mxu0 %v3043
  %v3207 = vpop.f32.mrb[0].mxu0
  %v3208 = vadd.f32 0.0, %v3207
  %v3209 = vpop.f32.mrb[0].mxu0
  %3210 = vmatprep.mubr.f32.mxu0 %v3047
  %3211 = vmatmul.mubr.f32.gmra.mrb[0].mxu0 %v3046
  %v3212 = vpop.f32.mrb[0].mxu0
  %v3213 = vadd.f32 0.0, %v3212
  %v3214 = vpop.f32.mrb[0].mxu0
  %3215 = vmatprep.mubr.f32.mxu0 %v3050
  %3216 = vmatmul.mubr.f32.gmra.mrb[0].mxu0 %v3049
  %v3217 = vpop.f32.mrb[0].mxu0
  %v3218 = vadd.f32 0.0, %v3217
  %v3219 = vpop.f32.mrb[0].mxu0
  %3220 = vmatprep.mubr.f32.mxu0 %v3053
  %3221 = vmatmul.mubr.f32.gmra.mrb[0].mxu0 %v3052
  %v3222 = vpop.f32.mrb[0].mxu0
  %v3223 = vadd.f32 0.0, %v3222
  %v3224 = vpop.f32.mrb[0].mxu0
  %3225 = vmatprep.mubr.f32.mxu0 %v3056
  %3226 = vmatmul.mubr.f32.gmra.mrb[0].mxu0 %v3055
  %v3227 = vpop.f32.mrb[0].mxu0
  %v3228 = vadd.f32 0.0, %v3227
  %v3229 = vpop.f32.mrb[0].mxu0
  %3230 = vmatprep.mubr.f32.mxu0 %v3059
  %3231 = vmatmul.mubr.f32.gmra.mrb[0].mxu0 %v3058
  %v3232 = vpop.f32.mrb[0].mxu0
  %v3233 = vadd.f32 0.0, %v3232
  %v3234 = vpop.f32.mrb[0].mxu0
  %3235 = vmatprep.mubr.f32.mxu0 %v3062
  %3236 = vmatmul.mubr.f32.gmra.mrb[0].mxu0 %v3061
  %v3237 = vpop.f32.mrb[0].mxu0
  %v3238 = vadd.f32 0.0, %v3237
  %v3239 = vpop.f32.mrb[0].mxu0
  %3240 = vmatprep.mubr.f32.mxu0 %v3065
  %3241 = vmatmul.mubr.f32.gmra.mrb[0].mxu0 %v3064
  %v3242 = vpop.f32.mrb[0].mxu0
  %v3243 = vadd.f32 0.0, %v3242
  %v3244 = vpop.f32.mrb[0].mxu0
  %3245 = vmatprep.mubr.f32.mxu0 %v3068
  %3246 = vmatmul.mubr.f32.gmra.mrb[0].mxu0 %v3067
  %v3247 = vpop.f32.mrb[0].mxu0
  %v3248 = vadd.f32 0.0, %v3247
  %v3249 = vpop.f32.mrb[0].mxu0
  %3250 = vmatprep.mubr.f32.mxu0 %v3071
  %3251 = vmatmul.mubr.f32.gmra.mrb[0].mxu0 %v3070
  %v3252 = vpop.f32.mrb[0].mxu0
  %v3253 = vadd.f32 0.0, %v3252
  %v3254 = vpop.f32.mrb[0].mxu0
  %3255 = vmatprep.mubr.f32.mxu0 %v3074
  %3256 = vmatmul.mubr.f32.gmra.mrb[0].mxu0 %v3073
  %v3257 = vpop.f32.mrb[0].mxu0
  %v3258 = vadd.f32 0.0, %v3257
  %v3259 = vpop.f32.mrb[0].mxu0
  %3260 = vdwg.mxu0
  %3261 = vmatprep.subr.mxu0 0.0
  %3262 = vmatpush1.msra.mxu0 %v2546
  %3263 = vmatprep.subr.mxu0 0.0
  %3264 = vmatpush1.msra.mxu0 %v2547
  %3265 = vmatprep.subr.mxu0 0.0
  %3266 = vmatpush1.msra.mxu0 %v2548
  %3267 = vmatprep.subr.mxu0 0.0
  %3268 = vmatpush1.msra.mxu0 %v2549
  %3269 = vmatprep.subr.mxu0 0.0
  %3270 = vmatpush1.msra.mxu0 %v2550
  %3271 = vmatprep.subr.mxu0 0.0
  %3272 = vmatpush1.msra.mxu0 %v2551
  %3273 = vmatprep.subr.mxu0 0.0
  %3274 = vmatpush1.msra.mxu0 %v2552
  %3275 = vmatprep.subr.mxu0 0.0
  %3276 = vmatpush1.msra.mxu0 %v2553
  %3277 = vmatprep.subr.mxu0 0.0
  %3278 = vmatpush1.msra.mxu0 %v2554
  %3279 = vmatprep.subr.mxu0 0.0
  %3280 = vmatpush1.msra.mxu0 %v2555
  %3281 = vmatprep.subr.mxu0 0.0
  %3282 = vmatpush1.msra.mxu0 %v2556
  %3283 = vmatprep.subr.mxu0 0.0
  %3284 = vmatpush1.msra.mxu0 %v2557
  %3285 = vmatprep.subr.mxu0 0.0
  %3286 = vmatpush1.msra.mxu0 %v2558
  %3287 = vmatprep.subr.mxu0 0.0
  %3288 = vmatpush1.msra.mxu0 %v2559
  %3289 = vmatprep.subr.mxu0 0.0
  %3290 = vmatpush1.msra.mxu0 %v2560
  %3291 = vmatprep.subr.mxu0 0.0
  %3292 = vmatpush1.msra.mxu0 %v2561
  %3293 = vmatprep.subr.mxu0 0.0
  %3294 = vmatpush1.msra.mxu0 0.0
  %3295 = vmatprep.subr.mxu0 0.0
  %3296 = vmatpush1.msra.mxu0 0.0
  %3297 = vmatprep.subr.mxu0 0.0
  %3298 = vmatpush1.msra.mxu0 0.0
  %3299 = vmatprep.subr.mxu0 0.0
  %3300 = vmatpush1.msra.mxu0 0.0
  %3301 = vmatprep.subr.mxu0 0.0
  %3302 = vmatpush1.msra.mxu0 0.0
  %3303 = vmatprep.subr.mxu0 0.0
  %3304 = vmatpush1.msra.mxu0 0.0
  %3305 = vmatprep.subr.mxu0 0.0
  %3306 = vmatpush1.msra.mxu0 0.0
  %3307 = vmatprep.subr.mxu0 0.0
  %3308 = vmatpush1.msra.mxu0 0.0
  %3309 = vmatprep.subr.mxu0 0.0
  %3310 = vmatpush1.msra.mxu0 0.0
  %3311 = vmatprep.subr.mxu0 0.0
  %3312 = vmatpush1.msra.mxu0 0.0
  %3313 = vmatprep.subr.mxu0 0.0
  %3314 = vmatpush1.msra.mxu0 0.0
  %3315 = vmatprep.subr.mxu0 0.0
  %3316 = vmatpush1.msra.mxu0 0.0
  %3317 = vmatprep.subr.mxu0 0.0
  %3318 = vmatpush1.msra.mxu0 0.0
  %3319 = vmatprep.subr.mxu0 0.0
  %3320 = vmatpush1.msra.mxu0 0.0
  %3321 = vmatprep.subr.mxu0 0.0
  %3322 = vmatpush1.msra.mxu0 0.0
  %3323 = vmatprep.subr.mxu0 0.0
  %3324 = vmatpush1.msra.mxu0 0.0
  %3325 = vmatprep.mubr.f32.mxu0 0.0
  %3326 = vmatmul.mubr.f32.gmra.mrb[0].mxu0 %v3006
  %v3327 = vpop.f32.mrb[0].mxu0
  %v3328 = vadd.f32 %v3143, %v3327
  %v3329 = vpop.f32.mrb[0].mxu0
  %3330 = vmatprep.mubr.f32.mxu0 0.0
  %3331 = vmatmul.mubr.f32.gmra.mrb[0].mxu0 %v3009
  %v3332 = vpop.f32.mrb[0].mxu0
  %v3333 = vadd.f32 %v3148, %v3332
  %v3334 = vpop.f32.mrb[0].mxu0
  %3335 = vmatprep.mubr.f32.mxu0 0.0
  %3336 = vmatmul.mubr.f32.gmra.mrb[0].mxu0 %v3012
  %v3337 = vpop.f32.mrb[0].mxu0
  %v3338 = vadd.f32 %v3153, %v3337
  %v3339 = vpop.f32.mrb[0].mxu0
  %3340 = vmatprep.mubr.f32.mxu0 0.0
  %3341 = vmatmul.mubr.f32.gmra.mrb[0].mxu0 %v3015
  %v3342 = vpop.f32.mrb[0].mxu0
  %v3343 = vadd.f32 %v3158, %v3342
  %v3344 = vpop.f32.mrb[0].mxu0
  %3345 = vmatprep.mubr.f32.mxu0 0.0
  %3346 = vmatmul.mubr.f32.gmra.mrb[0].mxu0 %v3018
  %v3347 = vpop.f32.mrb[0].mxu0
  %v3348 = vadd.f32 %v3163, %v3347
  %v3349 = vpop.f32.mrb[0].mxu0
  %3350 = vmatprep.mubr.f32.mxu0 0.0
  %3351 = vmatmul.mubr.f32.gmra.mrb[0].mxu0 %v3021
  %v3352 = vpop.f32.mrb[0].mxu0
  %v3353 = vadd.f32 %v3168, %v3352
  %v3354 = vpop.f32.mrb[0].mxu0
  %3355 = vmatprep.mubr.f32.mxu0 0.0
  %3356 = vmatmul.mubr.f32.gmra.mrb[0].mxu0 %v3024
  %v3357 = vpop.f32.mrb[0].mxu0
  %v3358 = vadd.f32 %v3173, %v3357
  %v3359 = vpop.f32.mrb[0].mxu0
  %3360 = vmatprep.mubr.f32.mxu0 0.0
  %3361 = vmatmul.mubr.f32.gmra.mrb[0].mxu0 %v3027
  %v3362 = vpop.f32.mrb[0].mxu0
  %v3363 = vadd.f32 %v3178, %v3362
  %v3364 = vpop.f32.mrb[0].mxu0
  %3365 = vmatprep.mubr.f32.mxu0 0.0
  %3366 = vmatmul.mubr.f32.gmra.mrb[0].mxu0 %v3030
  %v3367 = vpop.f32.mrb[0].mxu0
  %v3368 = vadd.f32 %v3183, %v3367
  %v3369 = vpop.f32.mrb[0].mxu0
  %3370 = vmatprep.mubr.f32.mxu0 0.0
  %3371 = vmatmul.mubr.f32.gmra.mrb[0].mxu0 %v3033
  %v3372 = vpop.f32.mrb[0].mxu0
  %v3373 = vadd.f32 %v3188, %v3372
  %v3374 = vpop.f32.mrb[0].mxu0
  %3375 = vmatprep.mubr.f32.mxu0 0.0
  %3376 = vmatmul.mubr.f32.gmra.mrb[0].mxu0 %v3036
  %v3377 = vpop.f32.mrb[0].mxu0
  %v3378 = vadd.f32 %v3193, %v3377
  %v3379 = vpop.f32.mrb[0].mxu0
  %3380 = vmatprep.mubr.f32.mxu0 0.0
  %3381 = vmatmul.mubr.f32.gmra.mrb[0].mxu0 %v3039
  %v3382 = vpop.f32.mrb[0].mxu0
  %v3383 = vadd.f32 %v3198, %v3382
  %v3384 = vpop.f32.mrb[0].mxu0
  %3385 = vmatprep.mubr.f32.mxu0 0.0
  %3386 = vmatmul.mubr.f32.gmra.mrb[0].mxu0 %v3042
  %v3387 = vpop.f32.mrb[0].mxu0
  %v3388 = vadd.f32 %v3203, %v3387
  %v3389 = vpop.f32.mrb[0].mxu0
  %3390 = vmatprep.mubr.f32.mxu0 0.0
  %3391 = vmatmul.mubr.f32.gmra.mrb[0].mxu0 %v3045
  %v3392 = vpop.f32.mrb[0].mxu0
  %v3393 = vadd.f32 %v3208, %v3392
  %v3394 = vpop.f32.mrb[0].mxu0
  %3395 = vmatprep.mubr.f32.mxu0 0.0
  %3396 = vmatmul.mubr.f32.gmra.mrb[0].mxu0 %v3048
  %v3397 = vpop.f32.mrb[0].mxu0
  %v3398 = vadd.f32 %v3213, %v3397
  %v3399 = vpop.f32.mrb[0].mxu0
  %3400 = vmatprep.mubr.f32.mxu0 0.0
  %3401 = vmatmul.mubr.f32.gmra.mrb[0].mxu0 %v3051
  %v3402 = vpop.f32.mrb[0].mxu0
  %v3403 = vadd.f32 %v3218, %v3402
  %v3404 = vpop.f32.mrb[0].mxu0
  %3405 = vmatprep.mubr.f32.mxu0 0.0
  %3406 = vmatmul.mubr.f32.gmra.mrb[0].mxu0 %v3054
  %v3407 = vpop.f32.mrb[0].mxu0
  %v3408 = vadd.f32 %v3223, %v3407
  %v3409 = vpop.f32.mrb[0].mxu0
  %3410 = vmatprep.mubr.f32.mxu0 0.0
  %3411 = vmatmul.mubr.f32.gmra.mrb[0].mxu0 %v3057
  %v3412 = vpop.f32.mrb[0].mxu0
  %v3413 = vadd.f32 %v3228, %v3412
  %v3414 = vpop.f32.mrb[0].mxu0
  %3415 = vmatprep.mubr.f32.mxu0 0.0
  %3416 = vmatmul.mubr.f32.gmra.mrb[0].mxu0 %v3060
  %v3417 = vpop.f32.mrb[0].mxu0
  %v3418 = vadd.f32 %v3233, %v3417
  %v3419 = vpop.f32.mrb[0].mxu0
  %3420 = vmatprep.mubr.f32.mxu0 0.0
  %3421 = vmatmul.mubr.f32.gmra.mrb[0].mxu0 %v3063
  %v3422 = vpop.f32.mrb[0].mxu0
  %v3423 = vadd.f32 %v3238, %v3422
  %v3424 = vpop.f32.mrb[0].mxu0
  %3425 = vmatprep.mubr.f32.mxu0 0.0
  %3426 = vmatmul.mubr.f32.gmra.mrb[0].mxu0 %v3066
  %v3427 = vpop.f32.mrb[0].mxu0
  %v3428 = vadd.f32 %v3243, %v3427
  %v3429 = vpop.f32.mrb[0].mxu0
  %3430 = vmatprep.mubr.f32.mxu0 0.0
  %3431 = vmatmul.mubr.f32.gmra.mrb[0].mxu0 %v3069
  %v3432 = vpop.f32.mrb[0].mxu0
  %v3433 = vadd.f32 %v3248, %v3432
  %v3434 = vpop.f32.mrb[0].mxu0
  %3435 = vmatprep.mubr.f32.mxu0 0.0
  %3436 = vmatmul.mubr.f32.gmra.mrb[0].mxu0 %v3072
  %v3437 = vpop.f32.mrb[0].mxu0
  %v3438 = vadd.f32 %v3253, %v3437
  %v3439 = vpop.f32.mrb[0].mxu0
  %3440 = vmatprep.mubr.f32.mxu0 0.0
  %3441 = vmatmul.mubr.f32.gmra.mrb[0].mxu0 %v3075
  %v3442 = vpop.f32.mrb[0].mxu0
  %v3443 = vadd.f32 %v3258, %v3442
  %v3444 = vpop.f32.mrb[0].mxu0
  %3445 = vdwg.mxu0
  %v3446 = vmax.f32 %v2886, %v3328
  %v3447 = vmax.f32 %v2891, %v3333
  %v3448 = vmax.f32 %v2896, %v3338
  %v3449 = vmax.f32 %v2901, %v3343
  %v3450 = vmax.f32 %v2906, %v3348
  %v3451 = vmax.f32 %v2911, %v3353
  %v3452 = vmax.f32 %v2916, %v3358
  %v3453 = vmax.f32 %v2921, %v3363
  %v3454 = vmax.f32 %v2926, %v3368
  %v3455 = vmax.f32 %v2931, %v3373
  %v3456 = vmax.f32 %v2936, %v3378
  %v3457 = vmax.f32 %v2941, %v3383
  %v3458 = vmax.f32 %v2946, %v3388
  %v3459 = vmax.f32 %v2951, %v3393
  %v3460 = vmax.f32 %v2956, %v3398
  %v3461 = vmax.f32 %v2961, %v3403
  %v3462 = vmax.f32 %v2966, %v3408
  %v3463 = vmax.f32 %v2971, %v3413
  %v3464 = vmax.f32 %v2976, %v3418
  %v3465 = vmax.f32 %v2981, %v3423
  %v3466 = vmax.f32 %v2986, %v3428
  %v3467 = vmax.f32 %v2991, %v3433
  %v3468 = vmax.f32 %v2996, %v3438
  %v3469 = vmax.f32 %v3001, %v3443
  %v3470 = vld [vmem:[%s9] sm:$0xff]
  %v3471 = vld [vmem:[%s9 + $0x8] sm:$0xff]
  %v3472 = vld [vmem:[%s9 + $0x10] sm:$0xff]
  %v3473 = vld [vmem:[%s9 + $0x18] sm:$0xff]
  %v3474 = vld [vmem:[%s9 + $0x20] sm:$0xff]
  %v3475 = vld [vmem:[%s9 + $0x28] sm:$0xff]
  %v3476 = vld [vmem:[%s9 + $0x30] sm:$0xff]
  %v3477 = vld [vmem:[%s9 + $0x38] sm:$0xff]
  %v3478 = vld [vmem:[%s9 + $0x40] sm:$0xff]
  %v3479 = vld [vmem:[%s9 + $0x48] sm:$0xff]
  %v3480 = vld [vmem:[%s9 + $0x50] sm:$0xff]
  %v3481 = vld [vmem:[%s9 + $0x58] sm:$0xff]
  %v3482 = vld [vmem:[%s9 + $0x60] sm:$0xff]
  %v3483 = vld [vmem:[%s9 + $0x68] sm:$0xff]
  %v3484 = vld [vmem:[%s9 + $0x70] sm:$0xff]
  %v3485 = vld [vmem:[%s9 + $0x78] sm:$0xff]
  %3486 = vmatprep.subr.mxu0 0.0
  %3487 = vmatpush1.msra.mxu0 %v3470
  %3488 = vmatprep.subr.mxu0 0.0
  %3489 = vmatpush1.msra.mxu0 %v3471
  %3490 = vmatprep.subr.mxu0 0.0
  %3491 = vmatpush1.msra.mxu0 %v3472
  %3492 = vmatprep.subr.mxu0 0.0
  %3493 = vmatpush1.msra.mxu0 %v3473
  %3494 = vmatprep.subr.mxu0 0.0
  %3495 = vmatpush1.msra.mxu0 %v3474
  %3496 = vmatprep.subr.mxu0 0.0
  %3497 = vmatpush1.msra.mxu0 %v3475
  %3498 = vmatprep.subr.mxu0 0.0
  %3499 = vmatpush1.msra.mxu0 %v3476
  %3500 = vmatprep.subr.mxu0 0.0
  %3501 = vmatpush1.msra.mxu0 %v3477
  %3502 = vmatprep.subr.mxu0 0.0
  %3503 = vmatpush1.msra.mxu0 %v3478
  %3504 = vmatprep.subr.mxu0 0.0
  %3505 = vmatpush1.msra.mxu0 %v3479
  %3506 = vmatprep.subr.mxu0 0.0
  %3507 = vmatpush1.msra.mxu0 %v3480
  %3508 = vmatprep.subr.mxu0 0.0
  %3509 = vmatpush1.msra.mxu0 %v3481
  %3510 = vmatprep.subr.mxu0 0.0
  %3511 = vmatpush1.msra.mxu0 %v3482
  %3512 = vmatprep.subr.mxu0 0.0
  %3513 = vmatpush1.msra.mxu0 %v3483
  %3514 = vmatprep.subr.mxu0 0.0
  %3515 = vmatpush1.msra.mxu0 %v3484
  %3516 = vmatprep.subr.mxu0 0.0
  %3517 = vmatpush1.msra.mxu0 %v3485
  %3518 = vmatprep.subr.mxu0 0.0
  %3519 = vmatpush1.msra.mxu0 0.0
  %3520 = vmatprep.subr.mxu0 0.0
  %3521 = vmatpush1.msra.mxu0 0.0
  %3522 = vmatprep.subr.mxu0 0.0
  %3523 = vmatpush1.msra.mxu0 0.0
  %3524 = vmatprep.subr.mxu0 0.0
  %3525 = vmatpush1.msra.mxu0 0.0
  %3526 = vmatprep.subr.mxu0 0.0
  %3527 = vmatpush1.msra.mxu0 0.0
  %3528 = vmatprep.subr.mxu0 0.0
  %3529 = vmatpush1.msra.mxu0 0.0
  %3530 = vmatprep.subr.mxu0 0.0
  %3531 = vmatpush1.msra.mxu0 0.0
  %3532 = vmatprep.subr.mxu0 0.0
  %3533 = vmatpush1.msra.mxu0 0.0
  %3534 = vmatprep.subr.mxu0 0.0
  %3535 = vmatpush1.msra.mxu0 0.0
  %3536 = vmatprep.subr.mxu0 0.0
  %3537 = vmatpush1.msra.mxu0 0.0
  %3538 = vmatprep.subr.mxu0 0.0
  %3539 = vmatpush1.msra.mxu0 0.0
  %3540 = vmatprep.subr.mxu0 0.0
  %3541 = vmatpush1.msra.mxu0 0.0
  %3542 = vmatprep.subr.mxu0 0.0
  %3543 = vmatpush1.msra.mxu0 0.0
  %3544 = vmatprep.subr.mxu0 0.0
  %3545 = vmatpush1.msra.mxu0 0.0
  %3546 = vmatprep.subr.mxu0 0.0
  %3547 = vmatpush1.msra.mxu0 0.0
  %3548 = vmatprep.subr.mxu0 0.0
  %3549 = vmatpush1.msra.mxu0 0.0
  %3550 = vmatprep.mubr.f32.mxu0 0.0
  %3551 = vmatmul.mubr.f32.gmra.mrb[0].mxu0 %v3446
  %v3552 = vpop.f32.mrb[0].mxu0
  %v3553 = vadd.f32 0.0, %v3552
  %v3554 = vpop.f32.mrb[0].mxu0
  %3555 = vmatprep.mubr.f32.mxu0 0.0
  %3556 = vmatmul.mubr.f32.gmra.mrb[0].mxu0 %v3447
  %v3557 = vpop.f32.mrb[0].mxu0
  %v3558 = vadd.f32 0.0, %v3557
  %v3559 = vpop.f32.mrb[0].mxu0
  %3560 = vmatprep.mubr.f32.mxu0 0.0
  %3561 = vmatmul.mubr.f32.gmra.mrb[0].mxu0 %v3448
  %v3562 = vpop.f32.mrb[0].mxu0
  %v3563 = vadd.f32 0.0, %v3562
  %v3564 = vpop.f32.mrb[0].mxu0
  %3565 = vmatprep.mubr.f32.mxu0 0.0
  %3566 = vmatmul.mubr.f32.gmra.mrb[0].mxu0 %v3449
  %v3567 = vpop.f32.mrb[0].mxu0
  %v3568 = vadd.f32 0.0, %v3567
  %v3569 = vpop.f32.mrb[0].mxu0
  %3570 = vmatprep.mubr.f32.mxu0 0.0
  %3571 = vmatmul.mubr.f32.gmra.mrb[0].mxu0 %v3450
  %v3572 = vpop.f32.mrb[0].mxu0
  %v3573 = vadd.f32 0.0, %v3572
  %v3574 = vpop.f32.mrb[0].mxu0
  %3575 = vmatprep.mubr.f32.mxu0 0.0
  %3576 = vmatmul.mubr.f32.gmra.mrb[0].mxu0 %v3451
  %v3577 = vpop.f32.mrb[0].mxu0
  %v3578 = vadd.f32 0.0, %v3577
  %v3579 = vpop.f32.mrb[0].mxu0
  %3580 = vmatprep.mubr.f32.mxu0 0.0
  %3581 = vmatmul.mubr.f32.gmra.mrb[0].mxu0 %v3452
  %v3582 = vpop.f32.mrb[0].mxu0
  %v3583 = vadd.f32 0.0, %v3582
  %v3584 = vpop.f32.mrb[0].mxu0
  %3585 = vmatprep.mubr.f32.mxu0 0.0
  %3586 = vmatmul.mubr.f32.gmra.mrb[0].mxu0 %v3453
  %v3587 = vpop.f32.mrb[0].mxu0
  %v3588 = vadd.f32 0.0, %v3587
  %v3589 = vpop.f32.mrb[0].mxu0
  %3590 = vmatprep.mubr.f32.mxu0 0.0
  %3591 = vmatmul.mubr.f32.gmra.mrb[0].mxu0 %v3454
  %v3592 = vpop.f32.mrb[0].mxu0
  %v3593 = vadd.f32 0.0, %v3592
  %v3594 = vpop.f32.mrb[0].mxu0
  %3595 = vmatprep.mubr.f32.mxu0 0.0
  %3596 = vmatmul.mubr.f32.gmra.mrb[0].mxu0 %v3455
  %v3597 = vpop.f32.mrb[0].mxu0
  %v3598 = vadd.f32 0.0, %v3597
  %v3599 = vpop.f32.mrb[0].mxu0
  %3600 = vmatprep.mubr.f32.mxu0 0.0
  %3601 = vmatmul.mubr.f32.gmra.mrb[0].mxu0 %v3456
  %v3602 = vpop.f32.mrb[0].mxu0
  %v3603 = vadd.f32 0.0, %v3602
  %v3604 = vpop.f32.mrb[0].mxu0
  %3605 = vmatprep.mubr.f32.mxu0 0.0
  %3606 = vmatmul.mubr.f32.gmra.mrb[0].mxu0 %v3457
  %v3607 = vpop.f32.mrb[0].mxu0
  %v3608 = vadd.f32 0.0, %v3607
  %v3609 = vpop.f32.mrb[0].mxu0
  %3610 = vmatprep.mubr.f32.mxu0 0.0
  %3611 = vmatmul.mubr.f32.gmra.mrb[0].mxu0 %v3458
  %v3612 = vpop.f32.mrb[0].mxu0
  %v3613 = vadd.f32 0.0, %v3612
  %v3614 = vpop.f32.mrb[0].mxu0
  %3615 = vmatprep.mubr.f32.mxu0 0.0
  %3616 = vmatmul.mubr.f32.gmra.mrb[0].mxu0 %v3459
  %v3617 = vpop.f32.mrb[0].mxu0
  %v3618 = vadd.f32 0.0, %v3617
  %v3619 = vpop.f32.mrb[0].mxu0
  %3620 = vmatprep.mubr.f32.mxu0 0.0
  %3621 = vmatmul.mubr.f32.gmra.mrb[0].mxu0 %v3460
  %v3622 = vpop.f32.mrb[0].mxu0
  %v3623 = vadd.f32 0.0, %v3622
  %v3624 = vpop.f32.mrb[0].mxu0
  %3625 = vmatprep.mubr.f32.mxu0 0.0
  %3626 = vmatmul.mubr.f32.gmra.mrb[0].mxu0 %v3461
  %v3627 = vpop.f32.mrb[0].mxu0
  %v3628 = vadd.f32 0.0, %v3627
  %v3629 = vpop.f32.mrb[0].mxu0
  %3630 = vmatprep.mubr.f32.mxu0 0.0
  %3631 = vmatmul.mubr.f32.gmra.mrb[0].mxu0 %v3462
  %v3632 = vpop.f32.mrb[0].mxu0
  %v3633 = vadd.f32 0.0, %v3632
  %v3634 = vpop.f32.mrb[0].mxu0
  %3635 = vmatprep.mubr.f32.mxu0 0.0
  %3636 = vmatmul.mubr.f32.gmra.mrb[0].mxu0 %v3463
  %v3637 = vpop.f32.mrb[0].mxu0
  %v3638 = vadd.f32 0.0, %v3637
  %v3639 = vpop.f32.mrb[0].mxu0
  %3640 = vmatprep.mubr.f32.mxu0 0.0
  %3641 = vmatmul.mubr.f32.gmra.mrb[0].mxu0 %v3464
  %v3642 = vpop.f32.mrb[0].mxu0
  %v3643 = vadd.f32 0.0, %v3642
  %v3644 = vpop.f32.mrb[0].mxu0
  %3645 = vmatprep.mubr.f32.mxu0 0.0
  %3646 = vmatmul.mubr.f32.gmra.mrb[0].mxu0 %v3465
  %v3647 = vpop.f32.mrb[0].mxu0
  %v3648 = vadd.f32 0.0, %v3647
  %v3649 = vpop.f32.mrb[0].mxu0
  %3650 = vmatprep.mubr.f32.mxu0 0.0
  %3651 = vmatmul.mubr.f32.gmra.mrb[0].mxu0 %v3466
  %v3652 = vpop.f32.mrb[0].mxu0
  %v3653 = vadd.f32 0.0, %v3652
  %v3654 = vpop.f32.mrb[0].mxu0
  %3655 = vmatprep.mubr.f32.mxu0 0.0
  %3656 = vmatmul.mubr.f32.gmra.mrb[0].mxu0 %v3467
  %v3657 = vpop.f32.mrb[0].mxu0
  %v3658 = vadd.f32 0.0, %v3657
  %v3659 = vpop.f32.mrb[0].mxu0
  %3660 = vmatprep.mubr.f32.mxu0 0.0
  %3661 = vmatmul.mubr.f32.gmra.mrb[0].mxu0 %v3468
  %v3662 = vpop.f32.mrb[0].mxu0
  %v3663 = vadd.f32 0.0, %v3662
  %v3664 = vpop.f32.mrb[0].mxu0
  %3665 = vmatprep.mubr.f32.mxu0 0.0
  %3666 = vmatmul.mubr.f32.gmra.mrb[0].mxu0 %v3469
  %v3667 = vpop.f32.mrb[0].mxu0
  %v3668 = vadd.f32 0.0, %v3667
  %v3669 = vpop.f32.mrb[0].mxu0
  %3670 = vdwg.mxu0
  %v3671 = vld [vmem:[%s10] sm:$0xff]
  %v3672 = vld [vmem:[%s10 + $0x8] sm:$0xff]
  %v3673 = vld [vmem:[%s10 + $0x10] sm:$0xff]
  %v3674 = vld [vmem:[%s10 + $0x18] sm:$0xff]
  %v3675 = vld [vmem:[%s10 + $0x20] sm:$0xff]
  %v3676 = vld [vmem:[%s10 + $0x28] sm:$0xff]
  %v3677 = vld [vmem:[%s10 + $0x30] sm:$0xff]
  %v3678 = vld [vmem:[%s10 + $0x38] sm:$0xff]
  %v3679 = vld [vmem:[%s10 + $0x40] sm:$0xff]
  %v3680 = vld [vmem:[%s10 + $0x48] sm:$0xff]
  %v3681 = vld [vmem:[%s10 + $0x50] sm:$0xff]
  %v3682 = vld [vmem:[%s10 + $0x58] sm:$0xff]
  %v3683 = vld [vmem:[%s10 + $0x60] sm:$0xff]
  %v3684 = vld [vmem:[%s10 + $0x68] sm:$0xff]
  %v3685 = vld [vmem:[%s10 + $0x70] sm:$0xff]
  %v3686 = vld [vmem:[%s10 + $0x78] sm:$0xff]
  %3687 = vmatprep.subr.mxu0 0.0
  %3688 = vmatpush1.msra.mxu0 %v3671
  %3689 = vmatprep.subr.mxu0 0.0
  %3690 = vmatpush1.msra.mxu0 %v3672
  %3691 = vmatprep.subr.mxu0 0.0
  %3692 = vmatpush1.msra.mxu0 %v3673
  %3693 = vmatprep.subr.mxu0 0.0
  %3694 = vmatpush1.msra.mxu0 %v3674
  %3695 = vmatprep.subr.mxu0 0.0
  %3696 = vmatpush1.msra.mxu0 %v3675
  %3697 = vmatprep.subr.mxu0 0.0
  %3698 = vmatpush1.msra.mxu0 %v3676
  %3699 = vmatprep.subr.mxu0 0.0
  %3700 = vmatpush1.msra.mxu0 %v3677
  %3701 = vmatprep.subr.mxu0 0.0
  %3702 = vmatpush1.msra.mxu0 %v3678
  %3703 = vmatprep.subr.mxu0 0.0
  %3704 = vmatpush1.msra.mxu0 %v3679
  %3705 = vmatprep.subr.mxu0 0.0
  %3706 = vmatpush1.msra.mxu0 %v3680
  %3707 = vmatprep.subr.mxu0 0.0
  %3708 = vmatpush1.msra.mxu0 %v3681
  %3709 = vmatprep.subr.mxu0 0.0
  %3710 = vmatpush1.msra.mxu0 %v3682
  %3711 = vmatprep.subr.mxu0 0.0
  %3712 = vmatpush1.msra.mxu0 %v3683
  %3713 = vmatprep.subr.mxu0 0.0
  %3714 = vmatpush1.msra.mxu0 %v3684
  %3715 = vmatprep.subr.mxu0 0.0
  %3716 = vmatpush1.msra.mxu0 %v3685
  %3717 = vmatprep.subr.mxu0 0.0
  %3718 = vmatpush1.msra.mxu0 %v3686
  %3719 = vmatprep.subr.mxu0 0.0
  %3720 = vmatpush1.msra.mxu0 0.0
  %3721 = vmatprep.subr.mxu0 0.0
  %3722 = vmatpush1.msra.mxu0 0.0
  %3723 = vmatprep.subr.mxu0 0.0
  %3724 = vmatpush1.msra.mxu0 0.0
  %3725 = vmatprep.subr.mxu0 0.0
  %3726 = vmatpush1.msra.mxu0 0.0
  %3727 = vmatprep.subr.mxu0 0.0
  %3728 = vmatpush1.msra.mxu0 0.0
  %3729 = vmatprep.subr.mxu0 0.0
  %3730 = vmatpush1.msra.mxu0 0.0
  %3731 = vmatprep.subr.mxu0 0.0
  %3732 = vmatpush1.msra.mxu0 0.0
  %3733 = vmatprep.subr.mxu0 0.0
  %3734 = vmatpush1.msra.mxu0 0.0
  %3735 = vmatprep.subr.mxu0 0.0
  %3736 = vmatpush1.msra.mxu0 0.0
  %3737 = vmatprep.subr.mxu0 0.0
  %3738 = vmatpush1.msra.mxu0 0.0
  %3739 = vmatprep.subr.mxu0 0.0
  %3740 = vmatpush1.msra.mxu0 0.0
  %3741 = vmatprep.subr.mxu0 0.0
  %3742 = vmatpush1.msra.mxu0 0.0
  %3743 = vmatprep.subr.mxu0 0.0
  %3744 = vmatpush1.msra.mxu0 0.0
  %3745 = vmatprep.subr.mxu0 0.0
  %3746 = vmatpush1.msra.mxu0 0.0
  %3747 = vmatprep.subr.mxu0 0.0
  %3748 = vmatpush1.msra.mxu0 0.0
  %3749 = vmatprep.subr.mxu0 0.0
  %3750 = vmatpush1.msra.mxu0 0.0
  %3751 = vmatprep.mubr.f32.mxu0 0.0
  %3752 = vmatmul.mubr.f32.gmra.mrb[0].mxu0 %v3446
  %v3753 = vpop.f32.mrb[0].mxu0
  %v3754 = vadd.f32 0.0, %v3753
  %v3755 = vpop.f32.mrb[0].mxu0
  %3756 = vmatprep.mubr.f32.mxu0 0.0
  %3757 = vmatmul.mubr.f32.gmra.mrb[0].mxu0 %v3447
  %v3758 = vpop.f32.mrb[0].mxu0
  %v3759 = vadd.f32 0.0, %v3758
  %v3760 = vpop.f32.mrb[0].mxu0
  %3761 = vmatprep.mubr.f32.mxu0 0.0
  %3762 = vmatmul.mubr.f32.gmra.mrb[0].mxu0 %v3448
  %v3763 = vpop.f32.mrb[0].mxu0
  %v3764 = vadd.f32 0.0, %v3763
  %v3765 = vpop.f32.mrb[0].mxu0
  %3766 = vmatprep.mubr.f32.mxu0 0.0
  %3767 = vmatmul.mubr.f32.gmra.mrb[0].mxu0 %v3449
  %v3768 = vpop.f32.mrb[0].mxu0
  %v3769 = vadd.f32 0.0, %v3768
  %v3770 = vpop.f32.mrb[0].mxu0
  %3771 = vmatprep.mubr.f32.mxu0 0.0
  %3772 = vmatmul.mubr.f32.gmra.mrb[0].mxu0 %v3450
  %v3773 = vpop.f32.mrb[0].mxu0
  %v3774 = vadd.f32 0.0, %v3773
  %v3775 = vpop.f32.mrb[0].mxu0
  %3776 = vmatprep.mubr.f32.mxu0 0.0
  %3777 = vmatmul.mubr.f32.gmra.mrb[0].mxu0 %v3451
  %v3778 = vpop.f32.mrb[0].mxu0
  %v3779 = vadd.f32 0.0, %v3778
  %v3780 = vpop.f32.mrb[0].mxu0
  %3781 = vmatprep.mubr.f32.mxu0 0.0
  %3782 = vmatmul.mubr.f32.gmra.mrb[0].mxu0 %v3452
  %v3783 = vpop.f32.mrb[0].mxu0
  %v3784 = vadd.f32 0.0, %v3783
  %v3785 = vpop.f32.mrb[0].mxu0
  %3786 = vmatprep.mubr.f32.mxu0 0.0
  %3787 = vmatmul.mubr.f32.gmra.mrb[0].mxu0 %v3453
  %v3788 = vpop.f32.mrb[0].mxu0
  %v3789 = vadd.f32 0.0, %v3788
  %v3790 = vpop.f32.mrb[0].mxu0
  %3791 = vmatprep.mubr.f32.mxu0 0.0
  %3792 = vmatmul.mubr.f32.gmra.mrb[0].mxu0 %v3454
  %v3793 = vpop.f32.mrb[0].mxu0
  %v3794 = vadd.f32 0.0, %v3793
  %v3795 = vpop.f32.mrb[0].mxu0
  %3796 = vmatprep.mubr.f32.mxu0 0.0
  %3797 = vmatmul.mubr.f32.gmra.mrb[0].mxu0 %v3455
  %v3798 = vpop.f32.mrb[0].mxu0
  %v3799 = vadd.f32 0.0, %v3798
  %v3800 = vpop.f32.mrb[0].mxu0
  %3801 = vmatprep.mubr.f32.mxu0 0.0
  %3802 = vmatmul.mubr.f32.gmra.mrb[0].mxu0 %v3456
  %v3803 = vpop.f32.mrb[0].mxu0
  %v3804 = vadd.f32 0.0, %v3803
  %v3805 = vpop.f32.mrb[0].mxu0
  %3806 = vmatprep.mubr.f32.mxu0 0.0
  %3807 = vmatmul.mubr.f32.gmra.mrb[0].mxu0 %v3457
  %v3808 = vpop.f32.mrb[0].mxu0
  %v3809 = vadd.f32 0.0, %v3808
  %v3810 = vpop.f32.mrb[0].mxu0
  %3811 = vmatprep.mubr.f32.mxu0 0.0
  %3812 = vmatmul.mubr.f32.gmra.mrb[0].mxu0 %v3458
  %v3813 = vpop.f32.mrb[0].mxu0
  %v3814 = vadd.f32 0.0, %v3813
  %v3815 = vpop.f32.mrb[0].mxu0
  %3816 = vmatprep.mubr.f32.mxu0 0.0
  %3817 = vmatmul.mubr.f32.gmra.mrb[0].mxu0 %v3459
  %v3818 = vpop.f32.mrb[0].mxu0
  %v3819 = vadd.f32 0.0, %v3818
  %v3820 = vpop.f32.mrb[0].mxu0
  %3821 = vmatprep.mubr.f32.mxu0 0.0
  %3822 = vmatmul.mubr.f32.gmra.mrb[0].mxu0 %v3460
  %v3823 = vpop.f32.mrb[0].mxu0
  %v3824 = vadd.f32 0.0, %v3823
  %v3825 = vpop.f32.mrb[0].mxu0
  %3826 = vmatprep.mubr.f32.mxu0 0.0
  %3827 = vmatmul.mubr.f32.gmra.mrb[0].mxu0 %v3461
  %v3828 = vpop.f32.mrb[0].mxu0
  %v3829 = vadd.f32 0.0, %v3828
  %v3830 = vpop.f32.mrb[0].mxu0
  %3831 = vmatprep.mubr.f32.mxu0 0.0
  %3832 = vmatmul.mubr.f32.gmra.mrb[0].mxu0 %v3462
  %v3833 = vpop.f32.mrb[0].mxu0
  %v3834 = vadd.f32 0.0, %v3833
  %v3835 = vpop.f32.mrb[0].mxu0
  %3836 = vmatprep.mubr.f32.mxu0 0.0
  %3837 = vmatmul.mubr.f32.gmra.mrb[0].mxu0 %v3463
  %v3838 = vpop.f32.mrb[0].mxu0
  %v3839 = vadd.f32 0.0, %v3838
  %v3840 = vpop.f32.mrb[0].mxu0
  %3841 = vmatprep.mubr.f32.mxu0 0.0
  %3842 = vmatmul.mubr.f32.gmra.mrb[0].mxu0 %v3464
  %v3843 = vpop.f32.mrb[0].mxu0
  %v3844 = vadd.f32 0.0, %v3843
  %v3845 = vpop.f32.mrb[0].mxu0
  %3846 = vmatprep.mubr.f32.mxu0 0.0
  %3847 = vmatmul.mubr.f32.gmra.mrb[0].mxu0 %v3465
  %v3848 = vpop.f32.mrb[0].mxu0
  %v3849 = vadd.f32 0.0, %v3848
  %v3850 = vpop.f32.mrb[0].mxu0
  %3851 = vmatprep.mubr.f32.mxu0 0.0
  %3852 = vmatmul.mubr.f32.gmra.mrb[0].mxu0 %v3466
  %v3853 = vpop.f32.mrb[0].mxu0
  %v3854 = vadd.f32 0.0, %v3853
  %v3855 = vpop.f32.mrb[0].mxu0
  %3856 = vmatprep.mubr.f32.mxu0 0.0
  %3857 = vmatmul.mubr.f32.gmra.mrb[0].mxu0 %v3467
  %v3858 = vpop.f32.mrb[0].mxu0
  %v3859 = vadd.f32 0.0, %v3858
  %v3860 = vpop.f32.mrb[0].mxu0
  %3861 = vmatprep.mubr.f32.mxu0 0.0
  %3862 = vmatmul.mubr.f32.gmra.mrb[0].mxu0 %v3468
  %v3863 = vpop.f32.mrb[0].mxu0
  %v3864 = vadd.f32 0.0, %v3863
  %v3865 = vpop.f32.mrb[0].mxu0
  %3866 = vmatprep.mubr.f32.mxu0 0.0
  %3867 = vmatmul.mubr.f32.gmra.mrb[0].mxu0 %v3469
  %v3868 = vpop.f32.mrb[0].mxu0
  %v3869 = vadd.f32 0.0, %v3868
  %v3870 = vpop.f32.mrb[0].mxu0
  %3871 = vdwg.mxu0
  %v3872 = vmax.f32 %v3553, %v3754
  %v3873 = vmax.f32 %v3558, %v3759
  %v3874 = vmax.f32 %v3563, %v3764
  %v3875 = vmax.f32 %v3568, %v3769
  %v3876 = vmax.f32 %v3573, %v3774
  %v3877 = vmax.f32 %v3578, %v3779
  %v3878 = vmax.f32 %v3583, %v3784
  %v3879 = vmax.f32 %v3588, %v3789
  %v3880 = vmax.f32 %v3593, %v3794
  %v3881 = vmax.f32 %v3598, %v3799
  %v3882 = vmax.f32 %v3603, %v3804
  %v3883 = vmax.f32 %v3608, %v3809
  %v3884 = vmax.f32 %v3613, %v3814
  %v3885 = vmax.f32 %v3618, %v3819
  %v3886 = vmax.f32 %v3623, %v3824
  %v3887 = vmax.f32 %v3628, %v3829
  %v3888 = vmax.f32 %v3633, %v3834
  %v3889 = vmax.f32 %v3638, %v3839
  %v3890 = vmax.f32 %v3643, %v3844
  %v3891 = vmax.f32 %v3648, %v3849
  %v3892 = vmax.f32 %v3653, %v3854
  %v3893 = vmax.f32 %v3658, %v3859
  %v3894 = vmax.f32 %v3663, %v3864
  %v3895 = vmax.f32 %v3668, %v3869
  %v3896 = vld [vmem:[%s12] sm:$0xff]
  %v3897 = vld [vmem:[%s12 + $0x8] sm:$0xff]
  %v3898 = vld [vmem:[%s12 + $0x10] sm:$0xff]
  %v3899 = vld [vmem:[%s12 + $0x18] sm:$0xff]
  %v3900 = vld [vmem:[%s12 + $0x20] sm:$0xff]
  %v3901 = vld [vmem:[%s12 + $0x28] sm:$0xff]
  %v3902 = vld [vmem:[%s12 + $0x30] sm:$0xff]
  %v3903 = vld [vmem:[%s12 + $0x38] sm:$0xff]
  %v3904 = vld [vmem:[%s12 + $0x40] sm:$0xff]
  %v3905 = vld [vmem:[%s12 + $0x48] sm:$0xff]
  %v3906 = vld [vmem:[%s12 + $0x50] sm:$0xff]
  %v3907 = vld [vmem:[%s12 + $0x58] sm:$0xff]
  %v3908 = vld [vmem:[%s12 + $0x60] sm:$0xff]
  %v3909 = vld [vmem:[%s12 + $0x68] sm:$0xff]
  %v3910 = vld [vmem:[%s12 + $0x70] sm:$0xff]
  %v3911 = vld [vmem:[%s12 + $0x78] sm:$0xff]
  %v3912 = vld [vmem:[%s12 + $0x80] sm:$0xff]
  %v3913 = vld [vmem:[%s12 + $0x88] sm:$0xff]
  %v3914 = vld [vmem:[%s12 + $0x90] sm:$0xff]
  %v3915 = vld [vmem:[%s12 + $0x98] sm:$0xff]
  %v3916 = vld [vmem:[%s12 + $0xa0] sm:$0xff]
  %v3917 = vld [vmem:[%s12 + $0xa8] sm:$0xff]
  %v3918 = vld [vmem:[%s12 + $0xb0] sm:$0xff]
  %v3919 = vld [vmem:[%s12 + $0xb8] sm:$0xff]
  %v3920 = vld [vmem:[%s12 + $0xc0] sm:$0xff]
  %v3921 = vld [vmem:[%s12 + $0xc8] sm:$0xff]
  %v3922 = vld [vmem:[%s12 + $0xd0] sm:$0xff]
  %v3923 = vld [vmem:[%s12 + $0xd8] sm:$0xff]
  %v3924 = vld [vmem:[%s12 + $0xe0] sm:$0xff]
  %v3925 = vld [vmem:[%s12 + $0xe8] sm:$0xff]
  %v3926 = vld [vmem:[%s12 + $0xf0] sm:$0xff]
  %v3927 = vld [vmem:[%s12 + $0xf8] sm:$0xff]
  %v3928 = vld [vmem:[%s12 + $0x100] sm:$0xff]
  %v3929 = vld [vmem:[%s12 + $0x108] sm:$0xff]
  %v3930 = vld [vmem:[%s12 + $0x110] sm:$0xff]
  %v3931 = vld [vmem:[%s12 + $0x118] sm:$0xff]
  %v3932 = vld [vmem:[%s12 + $0x120] sm:$0xff]
  %v3933 = vld [vmem:[%s12 + $0x128] sm:$0xff]
  %v3934 = vld [vmem:[%s12 + $0x130] sm:$0xff]
  %v3935 = vld [vmem:[%s12 + $0x138] sm:$0xff]
  %v3936 = vld [vmem:[%s12 + $0x140] sm:$0xff]
  %v3937 = vld [vmem:[%s12 + $0x148] sm:$0xff]
  %v3938 = vld [vmem:[%s12 + $0x150] sm:$0xff]
  %v3939 = vld [vmem:[%s12 + $0x158] sm:$0xff]
  %v3940 = vld [vmem:[%s12 + $0x160] sm:$0xff]
  %v3941 = vld [vmem:[%s12 + $0x168] sm:$0xff]
  %v3942 = vld [vmem:[%s12 + $0x170] sm:$0xff]
  %v3943 = vld [vmem:[%s12 + $0x178] sm:$0xff]
  %v3944 = vld [vmem:[%s12 + $0x180] sm:$0xff]
  %v3945 = vld [vmem:[%s12 + $0x188] sm:$0xff]
  %v3946 = vld [vmem:[%s12 + $0x190] sm:$0xff]
  %v3947 = vld [vmem:[%s12 + $0x198] sm:$0xff]
  %v3948 = vld [vmem:[%s12 + $0x1a0] sm:$0xff]
  %v3949 = vld [vmem:[%s12 + $0x1a8] sm:$0xff]
  %v3950 = vld [vmem:[%s12 + $0x1b0] sm:$0xff]
  %v3951 = vld [vmem:[%s12 + $0x1b8] sm:$0xff]
  %v3952 = vld [vmem:[%s12 + $0x1c0] sm:$0xff]
  %v3953 = vld [vmem:[%s12 + $0x1c8] sm:$0xff]
  %v3954 = vld [vmem:[%s12 + $0x1d0] sm:$0xff]
  %v3955 = vld [vmem:[%s12 + $0x1d8] sm:$0xff]
  %v3956 = vld [vmem:[%s12 + $0x1e0] sm:$0xff]
  %v3957 = vld [vmem:[%s12 + $0x1e8] sm:$0xff]
  %v3958 = vld [vmem:[%s12 + $0x1f0] sm:$0xff]
  %v3959 = vld [vmem:[%s12 + $0x1f8] sm:$0xff]
  %v3960 = vld [vmem:[%s12 + $0x200] sm:$0xff]
  %v3961 = vld [vmem:[%s12 + $0x208] sm:$0xff]
  %v3962 = vld [vmem:[%s12 + $0x210] sm:$0xff]
  %v3963 = vld [vmem:[%s12 + $0x218] sm:$0xff]
  %v3964 = vld [vmem:[%s12 + $0x220] sm:$0xff]
  %v3965 = vld [vmem:[%s12 + $0x228] sm:$0xff]
  %v3966 = vld [vmem:[%s12 + $0x230] sm:$0xff]
  %v3967 = vld [vmem:[%s12 + $0x238] sm:$0xff]
  %v3968 = vld [vmem:[%s12 + $0x240] sm:$0xff]
  %v3969 = vld [vmem:[%s12 + $0x248] sm:$0xff]
  %v3970 = vld [vmem:[%s12 + $0x250] sm:$0xff]
  %v3971 = vld [vmem:[%s12 + $0x258] sm:$0xff]
  %v3972 = vld [vmem:[%s12 + $0x260] sm:$0xff]
  %v3973 = vld [vmem:[%s12 + $0x268] sm:$0xff]
  %v3974 = vld [vmem:[%s12 + $0x270] sm:$0xff]
  %v3975 = vld [vmem:[%s12 + $0x278] sm:$0xff]
  %v3976 = vld [vmem:[%s12 + $0x280] sm:$0xff]
  %v3977 = vld [vmem:[%s12 + $0x288] sm:$0xff]
  %v3978 = vld [vmem:[%s12 + $0x290] sm:$0xff]
  %v3979 = vld [vmem:[%s12 + $0x298] sm:$0xff]
  %v3980 = vld [vmem:[%s12 + $0x2a0] sm:$0xff]
  %v3981 = vld [vmem:[%s12 + $0x2a8] sm:$0xff]
  %v3982 = vld [vmem:[%s12 + $0x2b0] sm:$0xff]
  %v3983 = vld [vmem:[%s12 + $0x2b8] sm:$0xff]
  %v3984 = vld [vmem:[%s12 + $0x2c0] sm:$0xff]
  %v3985 = vld [vmem:[%s12 + $0x2c8] sm:$0xff]
  %v3986 = vld [vmem:[%s12 + $0x2d0] sm:$0xff]
  %v3987 = vld [vmem:[%s12 + $0x2d8] sm:$0xff]
  %v3988 = vld [vmem:[%s12 + $0x2e0] sm:$0xff]
  %v3989 = vld [vmem:[%s12 + $0x2e8] sm:$0xff]
  %v3990 = vld [vmem:[%s12 + $0x2f0] sm:$0xff]
  %v3991 = vld [vmem:[%s12 + $0x2f8] sm:$0xff]
  %v3992 = vld [vmem:[%s11] sm:$0xff]
  %v3993 = vld [vmem:[%s11 + $0x8] sm:$0xff]
  %v3994 = vld [vmem:[%s11 + $0x10] sm:$0xff]
  %v3995 = vld [vmem:[%s11 + $0x18] sm:$0xff]
  %v3996 = vld [vmem:[%s11 + $0x20] sm:$0xff]
  %v3997 = vld [vmem:[%s11 + $0x28] sm:$0xff]
  %v3998 = vld [vmem:[%s11 + $0x30] sm:$0xff]
  %v3999 = vld [vmem:[%s11 + $0x38] sm:$0xff]
  %v4000 = vld [vmem:[%s11 + $0x40] sm:$0xff]
  %v4001 = vld [vmem:[%s11 + $0x48] sm:$0xff]
  %v4002 = vld [vmem:[%s11 + $0x50] sm:$0xff]
  %v4003 = vld [vmem:[%s11 + $0x58] sm:$0xff]
  %v4004 = vld [vmem:[%s11 + $0x60] sm:$0xff]
  %v4005 = vld [vmem:[%s11 + $0x68] sm:$0xff]
  %v4006 = vld [vmem:[%s11 + $0x70] sm:$0xff]
  %v4007 = vld [vmem:[%s11 + $0x78] sm:$0xff]
  %v4008 = vld [vmem:[%s11 + $0x80] sm:$0xff]
  %v4009 = vld [vmem:[%s11 + $0x88] sm:$0xff]
  %v4010 = vld [vmem:[%s11 + $0x90] sm:$0xff]
  %v4011 = vld [vmem:[%s11 + $0x98] sm:$0xff]
  %v4012 = vld [vmem:[%s11 + $0xa0] sm:$0xff]
  %v4013 = vld [vmem:[%s11 + $0xa8] sm:$0xff]
  %v4014 = vld [vmem:[%s11 + $0xb0] sm:$0xff]
  %v4015 = vld [vmem:[%s11 + $0xb8] sm:$0xff]
  %v4016 = vld [vmem:[%s11 + $0xc0] sm:$0xff]
  %v4017 = vld [vmem:[%s11 + $0xc8] sm:$0xff]
  %v4018 = vld [vmem:[%s11 + $0xd0] sm:$0xff]
  %v4019 = vld [vmem:[%s11 + $0xd8] sm:$0xff]
  %v4020 = vld [vmem:[%s11 + $0xe0] sm:$0xff]
  %v4021 = vld [vmem:[%s11 + $0xe8] sm:$0xff]
  %v4022 = vld [vmem:[%s11 + $0xf0] sm:$0xff]
  %v4023 = vld [vmem:[%s11 + $0xf8] sm:$0xff]
  %v4024 = vld [vmem:[%s11 + $0x100] sm:$0xff]
  %v4025 = vld [vmem:[%s11 + $0x108] sm:$0xff]
  %v4026 = vld [vmem:[%s11 + $0x110] sm:$0xff]
  %v4027 = vld [vmem:[%s11 + $0x118] sm:$0xff]
  %v4028 = vld [vmem:[%s11 + $0x120] sm:$0xff]
  %v4029 = vld [vmem:[%s11 + $0x128] sm:$0xff]
  %v4030 = vld [vmem:[%s11 + $0x130] sm:$0xff]
  %v4031 = vld [vmem:[%s11 + $0x138] sm:$0xff]
  %v4032 = vld [vmem:[%s11 + $0x140] sm:$0xff]
  %v4033 = vld [vmem:[%s11 + $0x148] sm:$0xff]
  %v4034 = vld [vmem:[%s11 + $0x150] sm:$0xff]
  %v4035 = vld [vmem:[%s11 + $0x158] sm:$0xff]
  %v4036 = vld [vmem:[%s11 + $0x160] sm:$0xff]
  %v4037 = vld [vmem:[%s11 + $0x168] sm:$0xff]
  %v4038 = vld [vmem:[%s11 + $0x170] sm:$0xff]
  %v4039 = vld [vmem:[%s11 + $0x178] sm:$0xff]
  %v4040 = vld [vmem:[%s11 + $0x180] sm:$0xff]
  %v4041 = vld [vmem:[%s11 + $0x188] sm:$0xff]
  %v4042 = vld [vmem:[%s11 + $0x190] sm:$0xff]
  %v4043 = vld [vmem:[%s11 + $0x198] sm:$0xff]
  %v4044 = vld [vmem:[%s11 + $0x1a0] sm:$0xff]
  %v4045 = vld [vmem:[%s11 + $0x1a8] sm:$0xff]
  %v4046 = vld [vmem:[%s11 + $0x1b0] sm:$0xff]
  %v4047 = vld [vmem:[%s11 + $0x1b8] sm:$0xff]
  %v4048 = vld [vmem:[%s11 + $0x1c0] sm:$0xff]
  %v4049 = vld [vmem:[%s11 + $0x1c8] sm:$0xff]
  %v4050 = vld [vmem:[%s11 + $0x1d0] sm:$0xff]
  %v4051 = vld [vmem:[%s11 + $0x1d8] sm:$0xff]
  %v4052 = vld [vmem:[%s11 + $0x1e0] sm:$0xff]
  %v4053 = vld [vmem:[%s11 + $0x1e8] sm:$0xff]
  %v4054 = vld [vmem:[%s11 + $0x1f0] sm:$0xff]
  %v4055 = vld [vmem:[%s11 + $0x1f8] sm:$0xff]
  %v4056 = vld [vmem:[%s11 + $0x200] sm:$0xff]
  %v4057 = vld [vmem:[%s11 + $0x208] sm:$0xff]
  %v4058 = vld [vmem:[%s11 + $0x210] sm:$0xff]
  %v4059 = vld [vmem:[%s11 + $0x218] sm:$0xff]
  %v4060 = vld [vmem:[%s11 + $0x220] sm:$0xff]
  %v4061 = vld [vmem:[%s11 + $0x228] sm:$0xff]
  %v4062 = vld [vmem:[%s11 + $0x230] sm:$0xff]
  %v4063 = vld [vmem:[%s11 + $0x238] sm:$0xff]
  %v4064 = vld [vmem:[%s11 + $0x240] sm:$0xff]
  %v4065 = vld [vmem:[%s11 + $0x248] sm:$0xff]
  %v4066 = vld [vmem:[%s11 + $0x250] sm:$0xff]
  %v4067 = vld [vmem:[%s11 + $0x258] sm:$0xff]
  %v4068 = vld [vmem:[%s11 + $0x260] sm:$0xff]
  %v4069 = vld [vmem:[%s11 + $0x268] sm:$0xff]
  %v4070 = vld [vmem:[%s11 + $0x270] sm:$0xff]
  %v4071 = vld [vmem:[%s11 + $0x278] sm:$0xff]
  %v4072 = vld [vmem:[%s11 + $0x280] sm:$0xff]
  %v4073 = vld [vmem:[%s11 + $0x288] sm:$0xff]
  %v4074 = vld [vmem:[%s11 + $0x290] sm:$0xff]
  %v4075 = vld [vmem:[%s11 + $0x298] sm:$0xff]
  %v4076 = vld [vmem:[%s11 + $0x2a0] sm:$0xff]
  %v4077 = vld [vmem:[%s11 + $0x2a8] sm:$0xff]
  %v4078 = vld [vmem:[%s11 + $0x2b0] sm:$0xff]
  %v4079 = vld [vmem:[%s11 + $0x2b8] sm:$0xff]
  %v4080 = vld [vmem:[%s11 + $0x2c0] sm:$0xff]
  %v4081 = vld [vmem:[%s11 + $0x2c8] sm:$0xff]
  %v4082 = vld [vmem:[%s11 + $0x2d0] sm:$0xff]
  %v4083 = vld [vmem:[%s11 + $0x2d8] sm:$0xff]
  %v4084 = vld [vmem:[%s11 + $0x2e0] sm:$0xff]
  %v4085 = vld [vmem:[%s11 + $0x2e8] sm:$0xff]
  %v4086 = vld [vmem:[%s11 + $0x2f0] sm:$0xff]
  %v4087 = vld [vmem:[%s11 + $0x2f8] sm:$0xff]
  %v4088 = vld [vmem:[%s14] sm:$0xff]
  %v4089 = vld [vmem:[%s14 + $0x8] sm:$0xff]
  %v4090 = vld [vmem:[%s14 + $0x10] sm:$0xff]
  %v4091 = vld [vmem:[%s14 + $0x18] sm:$0xff]
  %v4092 = vld [vmem:[%s14 + $0x20] sm:$0xff]
  %v4093 = vld [vmem:[%s14 + $0x28] sm:$0xff]
  %v4094 = vld [vmem:[%s14 + $0x30] sm:$0xff]
  %v4095 = vld [vmem:[%s14 + $0x38] sm:$0xff]
  %v4097 = vsel %vm485, %v3872, 0
  %v4100 = vsel %vm485, %v3873, 0
  %v4103 = vsel %vm485, %v3874, 0
  %v4106 = vsel %vm485, %v3875, 0
  %v4109 = vsel %vm485, %v3876, 0
  %v4112 = vsel %vm485, %v3877, 0
  %v4115 = vsel %vm485, %v3878, 0
  %v4118 = vsel %vm485, %v3879, 0
  %v4121 = vsel %vm485, %v3880, 0
  %v4124 = vsel %vm485, %v3881, 0
  %v4127 = vsel %vm485, %v3882, 0
  %v4130 = vsel %vm485, %v3883, 0
  %v4133 = vsel %vm485, %v3884, 0
  %v4136 = vsel %vm485, %v3885, 0
  %v4139 = vsel %vm485, %v3886, 0
  %v4142 = vsel %vm485, %v3887, 0
  %v4145 = vsel %vm485, %v3888, 0
  %v4148 = vsel %vm485, %v3889, 0
  %v4151 = vsel %vm485, %v3890, 0
  %v4154 = vsel %vm485, %v3891, 0
  %v4157 = vsel %vm485, %v3892, 0
  %v4160 = vsel %vm485, %v3893, 0
  %v4163 = vsel %vm485, %v3894, 0
  %v4166 = vsel %vm485, %v3895, 0
  %4168 = vmatprep.subr.mxu0 0.0
  %4169 = vmatpush1.msra.mxu0 %v4088
  %4170 = vmatprep.subr.mxu0 0.0
  %4171 = vmatpush1.msra.mxu0 %v4089
  %4172 = vmatprep.subr.mxu0 0.0
  %4173 = vmatpush1.msra.mxu0 %v4090
  %4174 = vmatprep.subr.mxu0 0.0
  %4175 = vmatpush1.msra.mxu0 %v4091
  %4176 = vmatprep.subr.mxu0 0.0
  %4177 = vmatpush1.msra.mxu0 %v4092
  %4178 = vmatprep.subr.mxu0 0.0
  %4179 = vmatpush1.msra.mxu0 %v4093
  %4180 = vmatprep.subr.mxu0 0.0
  %4181 = vmatpush1.msra.mxu0 %v4094
  %4182 = vmatprep.subr.mxu0 0.0
  %4183 = vmatpush1.msra.mxu0 %v4095
  %4184 = vmatprep.subr.mxu0 0.0
  %4185 = vmatpush1.msra.mxu0 0.0
  %4186 = vmatprep.subr.mxu0 0.0
  %4187 = vmatpush1.msra.mxu0 0.0
  %4188 = vmatprep.subr.mxu0 0.0
  %4189 = vmatpush1.msra.mxu0 0.0
  %4190 = vmatprep.subr.mxu0 0.0
  %4191 = vmatpush1.msra.mxu0 0.0
  %4192 = vmatprep.subr.mxu0 0.0
  %4193 = vmatpush1.msra.mxu0 0.0
  %4194 = vmatprep.subr.mxu0 0.0
  %4195 = vmatpush1.msra.mxu0 0.0
  %4196 = vmatprep.subr.mxu0 0.0
  %4197 = vmatpush1.msra.mxu0 0.0
  %4198 = vmatprep.subr.mxu0 0.0
  %4199 = vmatpush1.msra.mxu0 0.0
  %4200 = vmatprep.subr.mxu0 0.0
  %4201 = vmatpush1.msra.mxu0 0.0
  %4202 = vmatprep.subr.mxu0 0.0
  %4203 = vmatpush1.msra.mxu0 0.0
  %4204 = vmatprep.subr.mxu0 0.0
  %4205 = vmatpush1.msra.mxu0 0.0
  %4206 = vmatprep.subr.mxu0 0.0
  %4207 = vmatpush1.msra.mxu0 0.0
  %4208 = vmatprep.subr.mxu0 0.0
  %4209 = vmatpush1.msra.mxu0 0.0
  %4210 = vmatprep.subr.mxu0 0.0
  %4211 = vmatpush1.msra.mxu0 0.0
  %4212 = vmatprep.subr.mxu0 0.0
  %4213 = vmatpush1.msra.mxu0 0.0
  %4214 = vmatprep.subr.mxu0 0.0
  %4215 = vmatpush1.msra.mxu0 0.0
  %4216 = vmatprep.subr.mxu0 0.0
  %4217 = vmatpush1.msra.mxu0 0.0
  %4218 = vmatprep.subr.mxu0 0.0
  %4219 = vmatpush1.msra.mxu0 0.0
  %4220 = vmatprep.subr.mxu0 0.0
  %4221 = vmatpush1.msra.mxu0 0.0
  %4222 = vmatprep.subr.mxu0 0.0
  %4223 = vmatpush1.msra.mxu0 0.0
  %4224 = vmatprep.subr.mxu0 0.0
  %4225 = vmatpush1.msra.mxu0 0.0
  %4226 = vmatprep.subr.mxu0 0.0
  %4227 = vmatpush1.msra.mxu0 0.0
  %4228 = vmatprep.subr.mxu0 0.0
  %4229 = vmatpush1.msra.mxu0 0.0
  %4230 = vmatprep.subr.mxu0 0.0
  %4231 = vmatpush1.msra.mxu0 0.0
  %4232 = vmatprep.mubr.f32.mxu0 0.0
  %4233 = vmatmul.mubr.f32.gmra.mrb[0].mxu0 %v4097
  %v4234 = vpop.f32.mrb[0].mxu0
  %v4235 = vadd.f32 0.0, %v4234
  %v4236 = vpop.f32.mrb[0].mxu0
  %4237 = vmatprep.mubr.f32.mxu0 0.0
  %4238 = vmatmul.mubr.f32.gmra.mrb[0].mxu0 %v4100
  %v4239 = vpop.f32.mrb[0].mxu0
  %v4240 = vadd.f32 0.0, %v4239
  %v4241 = vpop.f32.mrb[0].mxu0
  %4242 = vmatprep.mubr.f32.mxu0 0.0
  %4243 = vmatmul.mubr.f32.gmra.mrb[0].mxu0 %v4103
  %v4244 = vpop.f32.mrb[0].mxu0
  %v4245 = vadd.f32 0.0, %v4244
  %v4246 = vpop.f32.mrb[0].mxu0
  %4247 = vmatprep.mubr.f32.mxu0 0.0
  %4248 = vmatmul.mubr.f32.gmra.mrb[0].mxu0 %v4106
  %v4249 = vpop.f32.mrb[0].mxu0
  %v4250 = vadd.f32 0.0, %v4249
  %v4251 = vpop.f32.mrb[0].mxu0
  %4252 = vmatprep.mubr.f32.mxu0 0.0
  %4253 = vmatmul.mubr.f32.gmra.mrb[0].mxu0 %v4109
  %v4254 = vpop.f32.mrb[0].mxu0
  %v4255 = vadd.f32 0.0, %v4254
  %v4256 = vpop.f32.mrb[0].mxu0
  %4257 = vmatprep.mubr.f32.mxu0 0.0
  %4258 = vmatmul.mubr.f32.gmra.mrb[0].mxu0 %v4112
  %v4259 = vpop.f32.mrb[0].mxu0
  %v4260 = vadd.f32 0.0, %v4259
  %v4261 = vpop.f32.mrb[0].mxu0
  %4262 = vmatprep.mubr.f32.mxu0 0.0
  %4263 = vmatmul.mubr.f32.gmra.mrb[0].mxu0 %v4115
  %v4264 = vpop.f32.mrb[0].mxu0
  %v4265 = vadd.f32 0.0, %v4264
  %v4266 = vpop.f32.mrb[0].mxu0
  %4267 = vmatprep.mubr.f32.mxu0 0.0
  %4268 = vmatmul.mubr.f32.gmra.mrb[0].mxu0 %v4118
  %v4269 = vpop.f32.mrb[0].mxu0
  %v4270 = vadd.f32 0.0, %v4269
  %v4271 = vpop.f32.mrb[0].mxu0
  %4272 = vmatprep.mubr.f32.mxu0 0.0
  %4273 = vmatmul.mubr.f32.gmra.mrb[0].mxu0 %v4121
  %v4274 = vpop.f32.mrb[0].mxu0
  %v4275 = vadd.f32 0.0, %v4274
  %v4276 = vpop.f32.mrb[0].mxu0
  %4277 = vmatprep.mubr.f32.mxu0 0.0
  %4278 = vmatmul.mubr.f32.gmra.mrb[0].mxu0 %v4124
  %v4279 = vpop.f32.mrb[0].mxu0
  %v4280 = vadd.f32 0.0, %v4279
  %v4281 = vpop.f32.mrb[0].mxu0
  %4282 = vmatprep.mubr.f32.mxu0 0.0
  %4283 = vmatmul.mubr.f32.gmra.mrb[0].mxu0 %v4127
  %v4284 = vpop.f32.mrb[0].mxu0
  %v4285 = vadd.f32 0.0, %v4284
  %v4286 = vpop.f32.mrb[0].mxu0
  %4287 = vmatprep.mubr.f32.mxu0 0.0
  %4288 = vmatmul.mubr.f32.gmra.mrb[0].mxu0 %v4130
  %v4289 = vpop.f32.mrb[0].mxu0
  %v4290 = vadd.f32 0.0, %v4289
  %v4291 = vpop.f32.mrb[0].mxu0
  %4292 = vmatprep.mubr.f32.mxu0 0.0
  %4293 = vmatmul.mubr.f32.gmra.mrb[0].mxu0 %v4133
  %v4294 = vpop.f32.mrb[0].mxu0
  %v4295 = vadd.f32 0.0, %v4294
  %v4296 = vpop.f32.mrb[0].mxu0
  %4297 = vmatprep.mubr.f32.mxu0 0.0
  %4298 = vmatmul.mubr.f32.gmra.mrb[0].mxu0 %v4136
  %v4299 = vpop.f32.mrb[0].mxu0
  %v4300 = vadd.f32 0.0, %v4299
  %v4301 = vpop.f32.mrb[0].mxu0
  %4302 = vmatprep.mubr.f32.mxu0 0.0
  %4303 = vmatmul.mubr.f32.gmra.mrb[0].mxu0 %v4139
  %v4304 = vpop.f32.mrb[0].mxu0
  %v4305 = vadd.f32 0.0, %v4304
  %v4306 = vpop.f32.mrb[0].mxu0
  %4307 = vmatprep.mubr.f32.mxu0 0.0
  %4308 = vmatmul.mubr.f32.gmra.mrb[0].mxu0 %v4142
  %v4309 = vpop.f32.mrb[0].mxu0
  %v4310 = vadd.f32 0.0, %v4309
  %v4311 = vpop.f32.mrb[0].mxu0
  %4312 = vmatprep.mubr.f32.mxu0 0.0
  %4313 = vmatmul.mubr.f32.gmra.mrb[0].mxu0 %v4145
  %v4314 = vpop.f32.mrb[0].mxu0
  %v4315 = vadd.f32 0.0, %v4314
  %v4316 = vpop.f32.mrb[0].mxu0
  %4317 = vmatprep.mubr.f32.mxu0 0.0
  %4318 = vmatmul.mubr.f32.gmra.mrb[0].mxu0 %v4148
  %v4319 = vpop.f32.mrb[0].mxu0
  %v4320 = vadd.f32 0.0, %v4319
  %v4321 = vpop.f32.mrb[0].mxu0
  %4322 = vmatprep.mubr.f32.mxu0 0.0
  %4323 = vmatmul.mubr.f32.gmra.mrb[0].mxu0 %v4151
  %v4324 = vpop.f32.mrb[0].mxu0
  %v4325 = vadd.f32 0.0, %v4324
  %v4326 = vpop.f32.mrb[0].mxu0
  %4327 = vmatprep.mubr.f32.mxu0 0.0
  %4328 = vmatmul.mubr.f32.gmra.mrb[0].mxu0 %v4154
  %v4329 = vpop.f32.mrb[0].mxu0
  %v4330 = vadd.f32 0.0, %v4329
  %v4331 = vpop.f32.mrb[0].mxu0
  %4332 = vmatprep.mubr.f32.mxu0 0.0
  %4333 = vmatmul.mubr.f32.gmra.mrb[0].mxu0 %v4157
  %v4334 = vpop.f32.mrb[0].mxu0
  %v4335 = vadd.f32 0.0, %v4334
  %v4336 = vpop.f32.mrb[0].mxu0
  %4337 = vmatprep.mubr.f32.mxu0 0.0
  %4338 = vmatmul.mubr.f32.gmra.mrb[0].mxu0 %v4160
  %v4339 = vpop.f32.mrb[0].mxu0
  %v4340 = vadd.f32 0.0, %v4339
  %v4341 = vpop.f32.mrb[0].mxu0
  %4342 = vmatprep.mubr.f32.mxu0 0.0
  %4343 = vmatmul.mubr.f32.gmra.mrb[0].mxu0 %v4163
  %v4344 = vpop.f32.mrb[0].mxu0
  %v4345 = vadd.f32 0.0, %v4344
  %v4346 = vpop.f32.mrb[0].mxu0
  %4347 = vmatprep.mubr.f32.mxu0 0.0
  %4348 = vmatmul.mubr.f32.gmra.mrb[0].mxu0 %v4166
  %v4349 = vpop.f32.mrb[0].mxu0
  %v4350 = vadd.f32 0.0, %v4349
  %v4351 = vpop.f32.mrb[0].mxu0
  %4352 = vdwg.mxu0
  %v4354 = vsel %vm485, %v3993, 0
  %v4357 = vsel %vm485, %v3995, 0
  %v4360 = vsel %vm485, %v3997, 0
  %v4363 = vsel %vm485, %v3999, 0
  %v4366 = vsel %vm485, %v4001, 0
  %v4369 = vsel %vm485, %v4003, 0
  %v4372 = vsel %vm485, %v4005, 0
  %v4375 = vsel %vm485, %v4007, 0
  %v4378 = vsel %vm485, %v4009, 0
  %v4381 = vsel %vm485, %v4011, 0
  %v4384 = vsel %vm485, %v4013, 0
  %v4387 = vsel %vm485, %v4015, 0
  %v4390 = vsel %vm485, %v4017, 0
  %v4393 = vsel %vm485, %v4019, 0
  %v4396 = vsel %vm485, %v4021, 0
  %v4399 = vsel %vm485, %v4023, 0
  %v4402 = vsel %vm485, %v4025, 0
  %v4405 = vsel %vm485, %v4027, 0
  %v4408 = vsel %vm485, %v4029, 0
  %v4411 = vsel %vm485, %v4031, 0
  %v4414 = vsel %vm485, %v4033, 0
  %v4417 = vsel %vm485, %v4035, 0
  %v4420 = vsel %vm485, %v4037, 0
  %v4423 = vsel %vm485, %v4039, 0
  %v4426 = vsel %vm485, %v4041, 0
  %v4429 = vsel %vm485, %v4043, 0
  %v4432 = vsel %vm485, %v4045, 0
  %v4435 = vsel %vm485, %v4047, 0
  %v4438 = vsel %vm485, %v4049, 0
  %v4441 = vsel %vm485, %v4051, 0
  %v4444 = vsel %vm485, %v4053, 0
  %v4447 = vsel %vm485, %v4055, 0
  %v4450 = vsel %vm485, %v4057, 0
  %v4453 = vsel %vm485, %v4059, 0
  %v4456 = vsel %vm485, %v4061, 0
  %v4459 = vsel %vm485, %v4063, 0
  %v4462 = vsel %vm485, %v4065, 0
  %v4465 = vsel %vm485, %v4067, 0
  %v4468 = vsel %vm485, %v4069, 0
  %v4471 = vsel %vm485, %v4071, 0
  %v4474 = vsel %vm485, %v4073, 0
  %v4477 = vsel %vm485, %v4075, 0
  %v4480 = vsel %vm485, %v4077, 0
  %v4483 = vsel %vm485, %v4079, 0
  %v4486 = vsel %vm485, %v4081, 0
  %v4489 = vsel %vm485, %v4083, 0
  %v4492 = vsel %vm485, %v4085, 0
  %v4495 = vsel %vm485, %v4087, 0
  %4497 = vmatprep.subr.mxu0 0.0
  %4498 = vmatpush1.msra.mxu0 %v4235
  %4499 = vmatprep.subr.mxu0 0.0
  %4500 = vmatpush1.msra.mxu0 %v4240
  %4501 = vmatprep.subr.mxu0 0.0
  %4502 = vmatpush1.msra.mxu0 %v4245
  %4503 = vmatprep.subr.mxu0 0.0
  %4504 = vmatpush1.msra.mxu0 %v4250
  %4505 = vmatprep.subr.mxu0 0.0
  %4506 = vmatpush1.msra.mxu0 %v4255
  %4507 = vmatprep.subr.mxu0 0.0
  %4508 = vmatpush1.msra.mxu0 %v4260
  %4509 = vmatprep.subr.mxu0 0.0
  %4510 = vmatpush1.msra.mxu0 %v4265
  %4511 = vmatprep.subr.mxu0 0.0
  %4512 = vmatpush1.msra.mxu0 %v4270
  %4513 = vmatprep.subr.mxu0 0.0
  %4514 = vmatpush1.msra.mxu0 %v4275
  %4515 = vmatprep.subr.mxu0 0.0
  %4516 = vmatpush1.msra.mxu0 %v4280
  %4517 = vmatprep.subr.mxu0 0.0
  %4518 = vmatpush1.msra.mxu0 %v4285
  %4519 = vmatprep.subr.mxu0 0.0
  %4520 = vmatpush1.msra.mxu0 %v4290
  %4521 = vmatprep.subr.mxu0 0.0
  %4522 = vmatpush1.msra.mxu0 %v4295
  %4523 = vmatprep.subr.mxu0 0.0
  %4524 = vmatpush1.msra.mxu0 %v4300
  %4525 = vmatprep.subr.mxu0 0.0
  %4526 = vmatpush1.msra.mxu0 %v4305
  %4527 = vmatprep.subr.mxu0 0.0
  %4528 = vmatpush1.msra.mxu0 %v4310
  %4529 = vmatprep.subr.mxu0 0.0
  %4530 = vmatpush1.msra.mxu0 %v4315
  %4531 = vmatprep.subr.mxu0 0.0
  %4532 = vmatpush1.msra.mxu0 %v4320
  %4533 = vmatprep.subr.mxu0 0.0
  %4534 = vmatpush1.msra.mxu0 %v4325
  %4535 = vmatprep.subr.mxu0 0.0
  %4536 = vmatpush1.msra.mxu0 %v4330
  %4537 = vmatprep.subr.mxu0 0.0
  %4538 = vmatpush1.msra.mxu0 %v4335
  %4539 = vmatprep.subr.mxu0 0.0
  %4540 = vmatpush1.msra.mxu0 %v4340
  %4541 = vmatprep.subr.mxu0 0.0
  %4542 = vmatpush1.msra.mxu0 %v4345
  %4543 = vmatprep.subr.mxu0 0.0
  %4544 = vmatpush1.msra.mxu0 %v4350
  %4545 = vmatprep.subr.mxu0 0.0
  %4546 = vmatpush1.msra.mxu0 0.0
  %4547 = vmatprep.subr.mxu0 0.0
  %4548 = vmatpush1.msra.mxu0 0.0
  %4549 = vmatprep.subr.mxu0 0.0
  %4550 = vmatpush1.msra.mxu0 0.0
  %4551 = vmatprep.subr.mxu0 0.0
  %4552 = vmatpush1.msra.mxu0 0.0
  %4553 = vmatprep.subr.mxu0 0.0
  %4554 = vmatpush1.msra.mxu0 0.0
  %4555 = vmatprep.subr.mxu0 0.0
  %4556 = vmatpush1.msra.mxu0 0.0
  %4557 = vmatprep.subr.mxu0 0.0
  %4558 = vmatpush1.msra.mxu0 0.0
  %4559 = vmatprep.subr.mxu0 0.0
  %4560 = vmatpush1.msra.mxu0 0.0
  %4561 = vmatprep.mubr.f32.mxu0 %v4354
  %4562 = vmatmul.mubr.f32.gmra.mrb[0].mxu0 %v3992
  %v4563 = vpop.f32.mrb[0].mxu0
  %v4564 = vadd.f32 0.0, %v4563
  %v4565 = vpop.f32.mrb[0].mxu0
  %4566 = vmatprep.mubr.f32.mxu0 %v4357
  %4567 = vmatmul.mubr.f32.gmra.mrb[0].mxu0 %v3994
  %v4568 = vpop.f32.mrb[0].mxu0
  %v4569 = vadd.f32 0.0, %v4568
  %v4570 = vpop.f32.mrb[0].mxu0
  %4571 = vmatprep.mubr.f32.mxu0 %v4360
  %4572 = vmatmul.mubr.f32.gmra.mrb[0].mxu0 %v3996
  %v4573 = vpop.f32.mrb[0].mxu0
  %v4574 = vadd.f32 0.0, %v4573
  %v4575 = vpop.f32.mrb[0].mxu0
  %4576 = vmatprep.mubr.f32.mxu0 %v4363
  %4577 = vmatmul.mubr.f32.gmra.mrb[0].mxu0 %v3998
  %v4578 = vpop.f32.mrb[0].mxu0
  %v4579 = vadd.f32 0.0, %v4578
  %v4580 = vpop.f32.mrb[0].mxu0
  %4581 = vmatprep.mubr.f32.mxu0 %v4366
  %4582 = vmatmul.mubr.f32.gmra.mrb[0].mxu0 %v4000
  %v4583 = vpop.f32.mrb[0].mxu0
  %v4584 = vadd.f32 0.0, %v4583
  %v4585 = vpop.f32.mrb[0].mxu0
  %4586 = vmatprep.mubr.f32.mxu0 %v4369
  %4587 = vmatmul.mubr.f32.gmra.mrb[0].mxu0 %v4002
  %v4588 = vpop.f32.mrb[0].mxu0
  %v4589 = vadd.f32 0.0, %v4588
  %v4590 = vpop.f32.mrb[0].mxu0
  %4591 = vmatprep.mubr.f32.mxu0 %v4372
  %4592 = vmatmul.mubr.f32.gmra.mrb[0].mxu0 %v4004
  %v4593 = vpop.f32.mrb[0].mxu0
  %v4594 = vadd.f32 0.0, %v4593
  %v4595 = vpop.f32.mrb[0].mxu0
  %4596 = vmatprep.mubr.f32.mxu0 %v4375
  %4597 = vmatmul.mubr.f32.gmra.mrb[0].mxu0 %v4006
  %v4598 = vpop.f32.mrb[0].mxu0
  %v4599 = vadd.f32 0.0, %v4598
  %v4600 = vpop.f32.mrb[0].mxu0
  %4601 = vmatprep.mubr.f32.mxu0 %v4378
  %4602 = vmatmul.mubr.f32.gmra.mrb[0].mxu0 %v4008
  %v4603 = vpop.f32.mrb[0].mxu0
  %v4604 = vadd.f32 0.0, %v4603
  %v4605 = vpop.f32.mrb[0].mxu0
  %4606 = vmatprep.mubr.f32.mxu0 %v4381
  %4607 = vmatmul.mubr.f32.gmra.mrb[0].mxu0 %v4010
  %v4608 = vpop.f32.mrb[0].mxu0
  %v4609 = vadd.f32 0.0, %v4608
  %v4610 = vpop.f32.mrb[0].mxu0
  %4611 = vmatprep.mubr.f32.mxu0 %v4384
  %4612 = vmatmul.mubr.f32.gmra.mrb[0].mxu0 %v4012
  %v4613 = vpop.f32.mrb[0].mxu0
  %v4614 = vadd.f32 0.0, %v4613
  %v4615 = vpop.f32.mrb[0].mxu0
  %4616 = vmatprep.mubr.f32.mxu0 %v4387
  %4617 = vmatmul.mubr.f32.gmra.mrb[0].mxu0 %v4014
  %v4618 = vpop.f32.mrb[0].mxu0
  %v4619 = vadd.f32 0.0, %v4618
  %v4620 = vpop.f32.mrb[0].mxu0
  %4621 = vmatprep.mubr.f32.mxu0 %v4390
  %4622 = vmatmul.mubr.f32.gmra.mrb[0].mxu0 %v4016
  %v4623 = vpop.f32.mrb[0].mxu0
  %v4624 = vadd.f32 0.0, %v4623
  %v4625 = vpop.f32.mrb[0].mxu0
  %4626 = vmatprep.mubr.f32.mxu0 %v4393
  %4627 = vmatmul.mubr.f32.gmra.mrb[0].mxu0 %v4018
  %v4628 = vpop.f32.mrb[0].mxu0
  %v4629 = vadd.f32 0.0, %v4628
  %v4630 = vpop.f32.mrb[0].mxu0
  %4631 = vmatprep.mubr.f32.mxu0 %v4396
  %4632 = vmatmul.mubr.f32.gmra.mrb[0].mxu0 %v4020
  %v4633 = vpop.f32.mrb[0].mxu0
  %v4634 = vadd.f32 0.0, %v4633
  %v4635 = vpop.f32.mrb[0].mxu0
  %4636 = vmatprep.mubr.f32.mxu0 %v4399
  %4637 = vmatmul.mubr.f32.gmra.mrb[0].mxu0 %v4022
  %v4638 = vpop.f32.mrb[0].mxu0
  %v4639 = vadd.f32 0.0, %v4638
  %v4640 = vpop.f32.mrb[0].mxu0
  %4641 = vmatprep.mubr.f32.mxu0 %v4402
  %4642 = vmatmul.mubr.f32.gmra.mrb[0].mxu0 %v4024
  %v4643 = vpop.f32.mrb[0].mxu0
  %v4644 = vadd.f32 0.0, %v4643
  %v4645 = vpop.f32.mrb[0].mxu0
  %4646 = vmatprep.mubr.f32.mxu0 %v4405
  %4647 = vmatmul.mubr.f32.gmra.mrb[0].mxu0 %v4026
  %v4648 = vpop.f32.mrb[0].mxu0
  %v4649 = vadd.f32 0.0, %v4648
  %v4650 = vpop.f32.mrb[0].mxu0
  %4651 = vmatprep.mubr.f32.mxu0 %v4408
  %4652 = vmatmul.mubr.f32.gmra.mrb[0].mxu0 %v4028
  %v4653 = vpop.f32.mrb[0].mxu0
  %v4654 = vadd.f32 0.0, %v4653
  %v4655 = vpop.f32.mrb[0].mxu0
  %4656 = vmatprep.mubr.f32.mxu0 %v4411
  %4657 = vmatmul.mubr.f32.gmra.mrb[0].mxu0 %v4030
  %v4658 = vpop.f32.mrb[0].mxu0
  %v4659 = vadd.f32 0.0, %v4658
  %v4660 = vpop.f32.mrb[0].mxu0
  %4661 = vmatprep.mubr.f32.mxu0 %v4414
  %4662 = vmatmul.mubr.f32.gmra.mrb[0].mxu0 %v4032
  %v4663 = vpop.f32.mrb[0].mxu0
  %v4664 = vadd.f32 0.0, %v4663
  %v4665 = vpop.f32.mrb[0].mxu0
  %4666 = vmatprep.mubr.f32.mxu0 %v4417
  %4667 = vmatmul.mubr.f32.gmra.mrb[0].mxu0 %v4034
  %v4668 = vpop.f32.mrb[0].mxu0
  %v4669 = vadd.f32 0.0, %v4668
  %v4670 = vpop.f32.mrb[0].mxu0
  %4671 = vmatprep.mubr.f32.mxu0 %v4420
  %4672 = vmatmul.mubr.f32.gmra.mrb[0].mxu0 %v4036
  %v4673 = vpop.f32.mrb[0].mxu0
  %v4674 = vadd.f32 0.0, %v4673
  %v4675 = vpop.f32.mrb[0].mxu0
  %4676 = vmatprep.mubr.f32.mxu0 %v4423
  %4677 = vmatmul.mubr.f32.gmra.mrb[0].mxu0 %v4038
  %v4678 = vpop.f32.mrb[0].mxu0
  %v4679 = vadd.f32 0.0, %v4678
  %v4680 = vpop.f32.mrb[0].mxu0
  %4681 = vmatprep.mubr.f32.mxu0 %v4426
  %4682 = vmatmul.mubr.f32.gmra.mrb[0].mxu0 %v4040
  %v4683 = vpop.f32.mrb[0].mxu0
  %v4684 = vadd.f32 0.0, %v4683
  %v4685 = vpop.f32.mrb[0].mxu0
  %4686 = vmatprep.mubr.f32.mxu0 %v4429
  %4687 = vmatmul.mubr.f32.gmra.mrb[0].mxu0 %v4042
  %v4688 = vpop.f32.mrb[0].mxu0
  %v4689 = vadd.f32 0.0, %v4688
  %v4690 = vpop.f32.mrb[0].mxu0
  %4691 = vmatprep.mubr.f32.mxu0 %v4432
  %4692 = vmatmul.mubr.f32.gmra.mrb[0].mxu0 %v4044
  %v4693 = vpop.f32.mrb[0].mxu0
  %v4694 = vadd.f32 0.0, %v4693
  %v4695 = vpop.f32.mrb[0].mxu0
  %4696 = vmatprep.mubr.f32.mxu0 %v4435
  %4697 = vmatmul.mubr.f32.gmra.mrb[0].mxu0 %v4046
  %v4698 = vpop.f32.mrb[0].mxu0
  %v4699 = vadd.f32 0.0, %v4698
  %v4700 = vpop.f32.mrb[0].mxu0
  %4701 = vmatprep.mubr.f32.mxu0 %v4438
  %4702 = vmatmul.mubr.f32.gmra.mrb[0].mxu0 %v4048
  %v4703 = vpop.f32.mrb[0].mxu0
  %v4704 = vadd.f32 0.0, %v4703
  %v4705 = vpop.f32.mrb[0].mxu0
  %4706 = vmatprep.mubr.f32.mxu0 %v4441
  %4707 = vmatmul.mubr.f32.gmra.mrb[0].mxu0 %v4050
  %v4708 = vpop.f32.mrb[0].mxu0
  %v4709 = vadd.f32 0.0, %v4708
  %v4710 = vpop.f32.mrb[0].mxu0
  %4711 = vmatprep.mubr.f32.mxu0 %v4444
  %4712 = vmatmul.mubr.f32.gmra.mrb[0].mxu0 %v4052
  %v4713 = vpop.f32.mrb[0].mxu0
  %v4714 = vadd.f32 0.0, %v4713
  %v4715 = vpop.f32.mrb[0].mxu0
  %4716 = vmatprep.mubr.f32.mxu0 %v4447
  %4717 = vmatmul.mubr.f32.gmra.mrb[0].mxu0 %v4054
  %v4718 = vpop.f32.mrb[0].mxu0
  %v4719 = vadd.f32 0.0, %v4718
  %v4720 = vpop.f32.mrb[0].mxu0
  %4721 = vmatprep.mubr.f32.mxu0 %v4450
  %4722 = vmatmul.mubr.f32.gmra.mrb[0].mxu0 %v4056
  %v4723 = vpop.f32.mrb[0].mxu0
  %v4724 = vadd.f32 0.0, %v4723
  %v4725 = vpop.f32.mrb[0].mxu0
  %4726 = vmatprep.mubr.f32.mxu0 %v4453
  %4727 = vmatmul.mubr.f32.gmra.mrb[0].mxu0 %v4058
  %v4728 = vpop.f32.mrb[0].mxu0
  %v4729 = vadd.f32 0.0, %v4728
  %v4730 = vpop.f32.mrb[0].mxu0
  %4731 = vmatprep.mubr.f32.mxu0 %v4456
  %4732 = vmatmul.mubr.f32.gmra.mrb[0].mxu0 %v4060
  %v4733 = vpop.f32.mrb[0].mxu0
  %v4734 = vadd.f32 0.0, %v4733
  %v4735 = vpop.f32.mrb[0].mxu0
  %4736 = vmatprep.mubr.f32.mxu0 %v4459
  %4737 = vmatmul.mubr.f32.gmra.mrb[0].mxu0 %v4062
  %v4738 = vpop.f32.mrb[0].mxu0
  %v4739 = vadd.f32 0.0, %v4738
  %v4740 = vpop.f32.mrb[0].mxu0
  %4741 = vmatprep.mubr.f32.mxu0 %v4462
  %4742 = vmatmul.mubr.f32.gmra.mrb[0].mxu0 %v4064
  %v4743 = vpop.f32.mrb[0].mxu0
  %v4744 = vadd.f32 0.0, %v4743
  %v4745 = vpop.f32.mrb[0].mxu0
  %4746 = vmatprep.mubr.f32.mxu0 %v4465
  %4747 = vmatmul.mubr.f32.gmra.mrb[0].mxu0 %v4066
  %v4748 = vpop.f32.mrb[0].mxu0
  %v4749 = vadd.f32 0.0, %v4748
  %v4750 = vpop.f32.mrb[0].mxu0
  %4751 = vmatprep.mubr.f32.mxu0 %v4468
  %4752 = vmatmul.mubr.f32.gmra.mrb[0].mxu0 %v4068
  %v4753 = vpop.f32.mrb[0].mxu0
  %v4754 = vadd.f32 0.0, %v4753
  %v4755 = vpop.f32.mrb[0].mxu0
  %4756 = vmatprep.mubr.f32.mxu0 %v4471
  %4757 = vmatmul.mubr.f32.gmra.mrb[0].mxu0 %v4070
  %v4758 = vpop.f32.mrb[0].mxu0
  %v4759 = vadd.f32 0.0, %v4758
  %v4760 = vpop.f32.mrb[0].mxu0
  %4761 = vmatprep.mubr.f32.mxu0 %v4474
  %4762 = vmatmul.mubr.f32.gmra.mrb[0].mxu0 %v4072
  %v4763 = vpop.f32.mrb[0].mxu0
  %v4764 = vadd.f32 0.0, %v4763
  %v4765 = vpop.f32.mrb[0].mxu0
  %4766 = vmatprep.mubr.f32.mxu0 %v4477
  %4767 = vmatmul.mubr.f32.gmra.mrb[0].mxu0 %v4074
  %v4768 = vpop.f32.mrb[0].mxu0
  %v4769 = vadd.f32 0.0, %v4768
  %v4770 = vpop.f32.mrb[0].mxu0
  %4771 = vmatprep.mubr.f32.mxu0 %v4480
  %4772 = vmatmul.mubr.f32.gmra.mrb[0].mxu0 %v4076
  %v4773 = vpop.f32.mrb[0].mxu0
  %v4774 = vadd.f32 0.0, %v4773
  %v4775 = vpop.f32.mrb[0].mxu0
  %4776 = vmatprep.mubr.f32.mxu0 %v4483
  %4777 = vmatmul.mubr.f32.gmra.mrb[0].mxu0 %v4078
  %v4778 = vpop.f32.mrb[0].mxu0
  %v4779 = vadd.f32 0.0, %v4778
  %v4780 = vpop.f32.mrb[0].mxu0
  %4781 = vmatprep.mubr.f32.mxu0 %v4486
  %4782 = vmatmul.mubr.f32.gmra.mrb[0].mxu0 %v4080
  %v4783 = vpop.f32.mrb[0].mxu0
  %v4784 = vadd.f32 0.0, %v4783
  %v4785 = vpop.f32.mrb[0].mxu0
  %4786 = vmatprep.mubr.f32.mxu0 %v4489
  %4787 = vmatmul.mubr.f32.gmra.mrb[0].mxu0 %v4082
  %v4788 = vpop.f32.mrb[0].mxu0
  %v4789 = vadd.f32 0.0, %v4788
  %v4790 = vpop.f32.mrb[0].mxu0
  %4791 = vmatprep.mubr.f32.mxu0 %v4492
  %4792 = vmatmul.mubr.f32.gmra.mrb[0].mxu0 %v4084
  %v4793 = vpop.f32.mrb[0].mxu0
  %v4794 = vadd.f32 0.0, %v4793
  %v4795 = vpop.f32.mrb[0].mxu0
  %4796 = vmatprep.mubr.f32.mxu0 %v4495
  %4797 = vmatmul.mubr.f32.gmra.mrb[0].mxu0 %v4086
  %v4798 = vpop.f32.mrb[0].mxu0
  %v4799 = vadd.f32 0.0, %v4798
  %v4800 = vpop.f32.mrb[0].mxu0
  %4801 = vdwg.mxu0
  %v4803 = vsel %vm485, %v3897, 0
  %v4806 = vsel %vm485, %v3899, 0
  %v4809 = vsel %vm485, %v3901, 0
  %v4812 = vsel %vm485, %v3903, 0
  %v4815 = vsel %vm485, %v3905, 0
  %v4818 = vsel %vm485, %v3907, 0
  %v4821 = vsel %vm485, %v3909, 0
  %v4824 = vsel %vm485, %v3911, 0
  %v4827 = vsel %vm485, %v3913, 0
  %v4830 = vsel %vm485, %v3915, 0
  %v4833 = vsel %vm485, %v3917, 0
  %v4836 = vsel %vm485, %v3919, 0
  %v4839 = vsel %vm485, %v3921, 0
  %v4842 = vsel %vm485, %v3923, 0
  %v4845 = vsel %vm485, %v3925, 0
  %v4848 = vsel %vm485, %v3927, 0
  %v4851 = vsel %vm485, %v3929, 0
  %v4854 = vsel %vm485, %v3931, 0
  %v4857 = vsel %vm485, %v3933, 0
  %v4860 = vsel %vm485, %v3935, 0
  %v4863 = vsel %vm485, %v3937, 0
  %v4866 = vsel %vm485, %v3939, 0
  %v4869 = vsel %vm485, %v3941, 0
  %v4872 = vsel %vm485, %v3943, 0
  %v4875 = vsel %vm485, %v3945, 0
  %v4878 = vsel %vm485, %v3947, 0
  %v4881 = vsel %vm485, %v3949, 0
  %v4884 = vsel %vm485, %v3951, 0
  %v4887 = vsel %vm485, %v3953, 0
  %v4890 = vsel %vm485, %v3955, 0
  %v4893 = vsel %vm485, %v3957, 0
  %v4896 = vsel %vm485, %v3959, 0
  %v4899 = vsel %vm485, %v3961, 0
  %v4902 = vsel %vm485, %v3963, 0
  %v4905 = vsel %vm485, %v3965, 0
  %v4908 = vsel %vm485, %v3967, 0
  %v4911 = vsel %vm485, %v3969, 0
  %v4914 = vsel %vm485, %v3971, 0
  %v4917 = vsel %vm485, %v3973, 0
  %v4920 = vsel %vm485, %v3975, 0
  %v4923 = vsel %vm485, %v3977, 0
  %v4926 = vsel %vm485, %v3979, 0
  %v4929 = vsel %vm485, %v3981, 0
  %v4932 = vsel %vm485, %v3983, 0
  %v4935 = vsel %vm485, %v3985, 0
  %v4938 = vsel %vm485, %v3987, 0
  %v4941 = vsel %vm485, %v3989, 0
  %v4944 = vsel %vm485, %v3991, 0
  %4946 = vmatprep.subr.mxu0 0.0
  %4947 = vmatpush1.msra.mxu0 %v3872
  %4948 = vmatprep.subr.mxu0 0.0
  %4949 = vmatpush1.msra.mxu0 %v3873
  %4950 = vmatprep.subr.mxu0 0.0
  %4951 = vmatpush1.msra.mxu0 %v3874
  %4952 = vmatprep.subr.mxu0 0.0
  %4953 = vmatpush1.msra.mxu0 %v3875
  %4954 = vmatprep.subr.mxu0 0.0
  %4955 = vmatpush1.msra.mxu0 %v3876
  %4956 = vmatprep.subr.mxu0 0.0
  %4957 = vmatpush1.msra.mxu0 %v3877
  %4958 = vmatprep.subr.mxu0 0.0
  %4959 = vmatpush1.msra.mxu0 %v3878
  %4960 = vmatprep.subr.mxu0 0.0
  %4961 = vmatpush1.msra.mxu0 %v3879
  %4962 = vmatprep.subr.mxu0 0.0
  %4963 = vmatpush1.msra.mxu0 %v3880
  %4964 = vmatprep.subr.mxu0 0.0
  %4965 = vmatpush1.msra.mxu0 %v3881
  %4966 = vmatprep.subr.mxu0 0.0
  %4967 = vmatpush1.msra.mxu0 %v3882
  %4968 = vmatprep.subr.mxu0 0.0
  %4969 = vmatpush1.msra.mxu0 %v3883
  %4970 = vmatprep.subr.mxu0 0.0
  %4971 = vmatpush1.msra.mxu0 %v3884
  %4972 = vmatprep.subr.mxu0 0.0
  %4973 = vmatpush1.msra.mxu0 %v3885
  %4974 = vmatprep.subr.mxu0 0.0
  %4975 = vmatpush1.msra.mxu0 %v3886
  %4976 = vmatprep.subr.mxu0 0.0
  %4977 = vmatpush1.msra.mxu0 %v3887
  %4978 = vmatprep.subr.mxu0 0.0
  %4979 = vmatpush1.msra.mxu0 %v3888
  %4980 = vmatprep.subr.mxu0 0.0
  %4981 = vmatpush1.msra.mxu0 %v3889
  %4982 = vmatprep.subr.mxu0 0.0
  %4983 = vmatpush1.msra.mxu0 %v3890
  %4984 = vmatprep.subr.mxu0 0.0
  %4985 = vmatpush1.msra.mxu0 %v3891
  %4986 = vmatprep.subr.mxu0 0.0
  %4987 = vmatpush1.msra.mxu0 %v3892
  %4988 = vmatprep.subr.mxu0 0.0
  %4989 = vmatpush1.msra.mxu0 %v3893
  %4990 = vmatprep.subr.mxu0 0.0
  %4991 = vmatpush1.msra.mxu0 %v3894
  %4992 = vmatprep.subr.mxu0 0.0
  %4993 = vmatpush1.msra.mxu0 %v3895
  %4994 = vmatprep.subr.mxu0 0.0
  %4995 = vmatpush1.msra.mxu0 0.0
  %4996 = vmatprep.subr.mxu0 0.0
  %4997 = vmatpush1.msra.mxu0 0.0
  %4998 = vmatprep.subr.mxu0 0.0
  %4999 = vmatpush1.msra.mxu0 0.0
  %5000 = vmatprep.subr.mxu0 0.0
  %5001 = vmatpush1.msra.mxu0 0.0
  %5002 = vmatprep.subr.mxu0 0.0
  %5003 = vmatpush1.msra.mxu0 0.0
  %5004 = vmatprep.subr.mxu0 0.0
  %5005 = vmatpush1.msra.mxu0 0.0
  %5006 = vmatprep.subr.mxu0 0.0
  %5007 = vmatpush1.msra.mxu0 0.0
  %5008 = vmatprep.subr.mxu0 0.0
  %5009 = vmatpush1.msra.mxu0 0.0
  %5010 = vmatprep.mubr.f32.mxu0 %v4803
  %5011 = vmatmul.mubr.f32.gmra.mrb[0].mxu0 %v3896
  %v5012 = vpop.f32.mrb[0].mxu0
  %v5013 = vadd.f32 %v4564, %v5012
  %v5014 = vpop.f32.mrb[0].mxu0
  %5015 = vmatprep.mubr.f32.mxu0 %v4806
  %5016 = vmatmul.mubr.f32.gmra.mrb[0].mxu0 %v3898
  %v5017 = vpop.f32.mrb[0].mxu0
  %v5018 = vadd.f32 %v4569, %v5017
  %v5019 = vpop.f32.mrb[0].mxu0
  %5020 = vmatprep.mubr.f32.mxu0 %v4809
  %5021 = vmatmul.mubr.f32.gmra.mrb[0].mxu0 %v3900
  %v5022 = vpop.f32.mrb[0].mxu0
  %v5023 = vadd.f32 %v4574, %v5022
  %v5024 = vpop.f32.mrb[0].mxu0
  %5025 = vmatprep.mubr.f32.mxu0 %v4812
  %5026 = vmatmul.mubr.f32.gmra.mrb[0].mxu0 %v3902
  %v5027 = vpop.f32.mrb[0].mxu0
  %v5028 = vadd.f32 %v4579, %v5027
  %v5029 = vpop.f32.mrb[0].mxu0
  %5030 = vmatprep.mubr.f32.mxu0 %v4815
  %5031 = vmatmul.mubr.f32.gmra.mrb[0].mxu0 %v3904
  %v5032 = vpop.f32.mrb[0].mxu0
  %v5033 = vadd.f32 %v4584, %v5032
  %v5034 = vpop.f32.mrb[0].mxu0
  %5035 = vmatprep.mubr.f32.mxu0 %v4818
  %5036 = vmatmul.mubr.f32.gmra.mrb[0].mxu0 %v3906
  %v5037 = vpop.f32.mrb[0].mxu0
  %v5038 = vadd.f32 %v4589, %v5037
  %v5039 = vpop.f32.mrb[0].mxu0
  %5040 = vmatprep.mubr.f32.mxu0 %v4821
  %5041 = vmatmul.mubr.f32.gmra.mrb[0].mxu0 %v3908
  %v5042 = vpop.f32.mrb[0].mxu0
  %v5043 = vadd.f32 %v4594, %v5042
  %v5044 = vpop.f32.mrb[0].mxu0
  %5045 = vmatprep.mubr.f32.mxu0 %v4824
  %5046 = vmatmul.mubr.f32.gmra.mrb[0].mxu0 %v3910
  %v5047 = vpop.f32.mrb[0].mxu0
  %v5048 = vadd.f32 %v4599, %v5047
  %v5049 = vpop.f32.mrb[0].mxu0
  %5050 = vmatprep.mubr.f32.mxu0 %v4827
  %5051 = vmatmul.mubr.f32.gmra.mrb[0].mxu0 %v3912
  %v5052 = vpop.f32.mrb[0].mxu0
  %v5053 = vadd.f32 %v4604, %v5052
  %v5054 = vpop.f32.mrb[0].mxu0
  %5055 = vmatprep.mubr.f32.mxu0 %v4830
  %5056 = vmatmul.mubr.f32.gmra.mrb[0].mxu0 %v3914
  %v5057 = vpop.f32.mrb[0].mxu0
  %v5058 = vadd.f32 %v4609, %v5057
  %v5059 = vpop.f32.mrb[0].mxu0
  %5060 = vmatprep.mubr.f32.mxu0 %v4833
  %5061 = vmatmul.mubr.f32.gmra.mrb[0].mxu0 %v3916
  %v5062 = vpop.f32.mrb[0].mxu0
  %v5063 = vadd.f32 %v4614, %v5062
  %v5064 = vpop.f32.mrb[0].mxu0
  %5065 = vmatprep.mubr.f32.mxu0 %v4836
  %5066 = vmatmul.mubr.f32.gmra.mrb[0].mxu0 %v3918
  %v5067 = vpop.f32.mrb[0].mxu0
  %v5068 = vadd.f32 %v4619, %v5067
  %v5069 = vpop.f32.mrb[0].mxu0
  %5070 = vmatprep.mubr.f32.mxu0 %v4839
  %5071 = vmatmul.mubr.f32.gmra.mrb[0].mxu0 %v3920
  %v5072 = vpop.f32.mrb[0].mxu0
  %v5073 = vadd.f32 %v4624, %v5072
  %v5074 = vpop.f32.mrb[0].mxu0
  %5075 = vmatprep.mubr.f32.mxu0 %v4842
  %5076 = vmatmul.mubr.f32.gmra.mrb[0].mxu0 %v3922
  %v5077 = vpop.f32.mrb[0].mxu0
  %v5078 = vadd.f32 %v4629, %v5077
  %v5079 = vpop.f32.mrb[0].mxu0
  %5080 = vmatprep.mubr.f32.mxu0 %v4845
  %5081 = vmatmul.mubr.f32.gmra.mrb[0].mxu0 %v3924
  %v5082 = vpop.f32.mrb[0].mxu0
  %v5083 = vadd.f32 %v4634, %v5082
  %v5084 = vpop.f32.mrb[0].mxu0
  %5085 = vmatprep.mubr.f32.mxu0 %v4848
  %5086 = vmatmul.mubr.f32.gmra.mrb[0].mxu0 %v3926
  %v5087 = vpop.f32.mrb[0].mxu0
  %v5088 = vadd.f32 %v4639, %v5087
  %v5089 = vpop.f32.mrb[0].mxu0
  %5090 = vmatprep.mubr.f32.mxu0 %v4851
  %5091 = vmatmul.mubr.f32.gmra.mrb[0].mxu0 %v3928
  %v5092 = vpop.f32.mrb[0].mxu0
  %v5093 = vadd.f32 %v4644, %v5092
  %v5094 = vpop.f32.mrb[0].mxu0
  %5095 = vmatprep.mubr.f32.mxu0 %v4854
  %5096 = vmatmul.mubr.f32.gmra.mrb[0].mxu0 %v3930
  %v5097 = vpop.f32.mrb[0].mxu0
  %v5098 = vadd.f32 %v4649, %v5097
  %v5099 = vpop.f32.mrb[0].mxu0
  %5100 = vmatprep.mubr.f32.mxu0 %v4857
  %5101 = vmatmul.mubr.f32.gmra.mrb[0].mxu0 %v3932
  %v5102 = vpop.f32.mrb[0].mxu0
  %v5103 = vadd.f32 %v4654, %v5102
  %v5104 = vpop.f32.mrb[0].mxu0
  %5105 = vmatprep.mubr.f32.mxu0 %v4860
  %5106 = vmatmul.mubr.f32.gmra.mrb[0].mxu0 %v3934
  %v5107 = vpop.f32.mrb[0].mxu0
  %v5108 = vadd.f32 %v4659, %v5107
  %v5109 = vpop.f32.mrb[0].mxu0
  %5110 = vmatprep.mubr.f32.mxu0 %v4863
  %5111 = vmatmul.mubr.f32.gmra.mrb[0].mxu0 %v3936
  %v5112 = vpop.f32.mrb[0].mxu0
  %v5113 = vadd.f32 %v4664, %v5112
  %v5114 = vpop.f32.mrb[0].mxu0
  %5115 = vmatprep.mubr.f32.mxu0 %v4866
  %5116 = vmatmul.mubr.f32.gmra.mrb[0].mxu0 %v3938
  %v5117 = vpop.f32.mrb[0].mxu0
  %v5118 = vadd.f32 %v4669, %v5117
  %v5119 = vpop.f32.mrb[0].mxu0
  %5120 = vmatprep.mubr.f32.mxu0 %v4869
  %5121 = vmatmul.mubr.f32.gmra.mrb[0].mxu0 %v3940
  %v5122 = vpop.f32.mrb[0].mxu0
  %v5123 = vadd.f32 %v4674, %v5122
  %v5124 = vpop.f32.mrb[0].mxu0
  %5125 = vmatprep.mubr.f32.mxu0 %v4872
  %5126 = vmatmul.mubr.f32.gmra.mrb[0].mxu0 %v3942
  %v5127 = vpop.f32.mrb[0].mxu0
  %v5128 = vadd.f32 %v4679, %v5127
  %v5129 = vpop.f32.mrb[0].mxu0
  %5130 = vmatprep.mubr.f32.mxu0 %v4875
  %5131 = vmatmul.mubr.f32.gmra.mrb[0].mxu0 %v3944
  %v5132 = vpop.f32.mrb[0].mxu0
  %v5133 = vadd.f32 %v4684, %v5132
  %v5134 = vpop.f32.mrb[0].mxu0
  %5135 = vmatprep.mubr.f32.mxu0 %v4878
  %5136 = vmatmul.mubr.f32.gmra.mrb[0].mxu0 %v3946
  %v5137 = vpop.f32.mrb[0].mxu0
  %v5138 = vadd.f32 %v4689, %v5137
  %v5139 = vpop.f32.mrb[0].mxu0
  %5140 = vmatprep.mubr.f32.mxu0 %v4881
  %5141 = vmatmul.mubr.f32.gmra.mrb[0].mxu0 %v3948
  %v5142 = vpop.f32.mrb[0].mxu0
  %v5143 = vadd.f32 %v4694, %v5142
  %v5144 = vpop.f32.mrb[0].mxu0
  %5145 = vmatprep.mubr.f32.mxu0 %v4884
  %5146 = vmatmul.mubr.f32.gmra.mrb[0].mxu0 %v3950
  %v5147 = vpop.f32.mrb[0].mxu0
  %v5148 = vadd.f32 %v4699, %v5147
  %v5149 = vpop.f32.mrb[0].mxu0
  %5150 = vmatprep.mubr.f32.mxu0 %v4887
  %5151 = vmatmul.mubr.f32.gmra.mrb[0].mxu0 %v3952
  %v5152 = vpop.f32.mrb[0].mxu0
  %v5153 = vadd.f32 %v4704, %v5152
  %v5154 = vpop.f32.mrb[0].mxu0
  %5155 = vmatprep.mubr.f32.mxu0 %v4890
  %5156 = vmatmul.mubr.f32.gmra.mrb[0].mxu0 %v3954
  %v5157 = vpop.f32.mrb[0].mxu0
  %v5158 = vadd.f32 %v4709, %v5157
  %v5159 = vpop.f32.mrb[0].mxu0
  %5160 = vmatprep.mubr.f32.mxu0 %v4893
  %5161 = vmatmul.mubr.f32.gmra.mrb[0].mxu0 %v3956
  %v5162 = vpop.f32.mrb[0].mxu0
  %v5163 = vadd.f32 %v4714, %v5162
  %v5164 = vpop.f32.mrb[0].mxu0
  %5165 = vmatprep.mubr.f32.mxu0 %v4896
  %5166 = vmatmul.mubr.f32.gmra.mrb[0].mxu0 %v3958
  %v5167 = vpop.f32.mrb[0].mxu0
  %v5168 = vadd.f32 %v4719, %v5167
  %v5169 = vpop.f32.mrb[0].mxu0
  %5170 = vmatprep.mubr.f32.mxu0 %v4899
  %5171 = vmatmul.mubr.f32.gmra.mrb[0].mxu0 %v3960
  %v5172 = vpop.f32.mrb[0].mxu0
  %v5173 = vadd.f32 %v4724, %v5172
  %v5174 = vpop.f32.mrb[0].mxu0
  %5175 = vmatprep.mubr.f32.mxu0 %v4902
  %5176 = vmatmul.mubr.f32.gmra.mrb[0].mxu0 %v3962
  %v5177 = vpop.f32.mrb[0].mxu0
  %v5178 = vadd.f32 %v4729, %v5177
  %v5179 = vpop.f32.mrb[0].mxu0
  %5180 = vmatprep.mubr.f32.mxu0 %v4905
  %5181 = vmatmul.mubr.f32.gmra.mrb[0].mxu0 %v3964
  %v5182 = vpop.f32.mrb[0].mxu0
  %v5183 = vadd.f32 %v4734, %v5182
  %v5184 = vpop.f32.mrb[0].mxu0
  %5185 = vmatprep.mubr.f32.mxu0 %v4908
  %5186 = vmatmul.mubr.f32.gmra.mrb[0].mxu0 %v3966
  %v5187 = vpop.f32.mrb[0].mxu0
  %v5188 = vadd.f32 %v4739, %v5187
  %v5189 = vpop.f32.mrb[0].mxu0
  %5190 = vmatprep.mubr.f32.mxu0 %v4911
  %5191 = vmatmul.mubr.f32.gmra.mrb[0].mxu0 %v3968
  %v5192 = vpop.f32.mrb[0].mxu0
  %v5193 = vadd.f32 %v4744, %v5192
  %v5194 = vpop.f32.mrb[0].mxu0
  %5195 = vmatprep.mubr.f32.mxu0 %v4914
  %5196 = vmatmul.mubr.f32.gmra.mrb[0].mxu0 %v3970
  %v5197 = vpop.f32.mrb[0].mxu0
  %v5198 = vadd.f32 %v4749, %v5197
  %v5199 = vpop.f32.mrb[0].mxu0
  %5200 = vmatprep.mubr.f32.mxu0 %v4917
  %5201 = vmatmul.mubr.f32.gmra.mrb[0].mxu0 %v3972
  %v5202 = vpop.f32.mrb[0].mxu0
  %v5203 = vadd.f32 %v4754, %v5202
  %v5204 = vpop.f32.mrb[0].mxu0
  %5205 = vmatprep.mubr.f32.mxu0 %v4920
  %5206 = vmatmul.mubr.f32.gmra.mrb[0].mxu0 %v3974
  %v5207 = vpop.f32.mrb[0].mxu0
  %v5208 = vadd.f32 %v4759, %v5207
  %v5209 = vpop.f32.mrb[0].mxu0
  %5210 = vmatprep.mubr.f32.mxu0 %v4923
  %5211 = vmatmul.mubr.f32.gmra.mrb[0].mxu0 %v3976
  %v5212 = vpop.f32.mrb[0].mxu0
  %v5213 = vadd.f32 %v4764, %v5212
  %v5214 = vpop.f32.mrb[0].mxu0
  %5215 = vmatprep.mubr.f32.mxu0 %v4926
  %5216 = vmatmul.mubr.f32.gmra.mrb[0].mxu0 %v3978
  %v5217 = vpop.f32.mrb[0].mxu0
  %v5218 = vadd.f32 %v4769, %v5217
  %v5219 = vpop.f32.mrb[0].mxu0
  %5220 = vmatprep.mubr.f32.mxu0 %v4929
  %5221 = vmatmul.mubr.f32.gmra.mrb[0].mxu0 %v3980
  %v5222 = vpop.f32.mrb[0].mxu0
  %v5223 = vadd.f32 %v4774, %v5222
  %v5224 = vpop.f32.mrb[0].mxu0
  %5225 = vmatprep.mubr.f32.mxu0 %v4932
  %5226 = vmatmul.mubr.f32.gmra.mrb[0].mxu0 %v3982
  %v5227 = vpop.f32.mrb[0].mxu0
  %v5228 = vadd.f32 %v4779, %v5227
  %v5229 = vpop.f32.mrb[0].mxu0
  %5230 = vmatprep.mubr.f32.mxu0 %v4935
  %5231 = vmatmul.mubr.f32.gmra.mrb[0].mxu0 %v3984
  %v5232 = vpop.f32.mrb[0].mxu0
  %v5233 = vadd.f32 %v4784, %v5232
  %v5234 = vpop.f32.mrb[0].mxu0
  %5235 = vmatprep.mubr.f32.mxu0 %v4938
  %5236 = vmatmul.mubr.f32.gmra.mrb[0].mxu0 %v3986
  %v5237 = vpop.f32.mrb[0].mxu0
  %v5238 = vadd.f32 %v4789, %v5237
  %v5239 = vpop.f32.mrb[0].mxu0
  %5240 = vmatprep.mubr.f32.mxu0 %v4941
  %5241 = vmatmul.mubr.f32.gmra.mrb[0].mxu0 %v3988
  %v5242 = vpop.f32.mrb[0].mxu0
  %v5243 = vadd.f32 %v4794, %v5242
  %v5244 = vpop.f32.mrb[0].mxu0
  %5245 = vmatprep.mubr.f32.mxu0 %v4944
  %5246 = vmatmul.mubr.f32.gmra.mrb[0].mxu0 %v3990
  %v5247 = vpop.f32.mrb[0].mxu0
  %v5248 = vadd.f32 %v4799, %v5247
  %v5249 = vpop.f32.mrb[0].mxu0
  %5250 = vdwg.mxu0
  %v5251 = vld [vmem:[%s13] sm:$0xff]
  %v5252 = vld [vmem:[%s13 + $0x8] sm:$0xff]
  %v5253 = vld [vmem:[%s13 + $0x10] sm:$0xff]
  %v5254 = vld [vmem:[%s13 + $0x18] sm:$0xff]
  %v5255 = vld [vmem:[%s13 + $0x20] sm:$0xff]
  %v5256 = vld [vmem:[%s13 + $0x28] sm:$0xff]
  %v5257 = vld [vmem:[%s13 + $0x30] sm:$0xff]
  %v5258 = vld [vmem:[%s13 + $0x38] sm:$0xff]
  %v5259 = vld [vmem:[%s13 + $0x40] sm:$0xff]
  %v5260 = vld [vmem:[%s13 + $0x48] sm:$0xff]
  %v5261 = vld [vmem:[%s13 + $0x50] sm:$0xff]
  %v5262 = vld [vmem:[%s13 + $0x58] sm:$0xff]
  %v5263 = vld [vmem:[%s13 + $0x60] sm:$0xff]
  %v5264 = vld [vmem:[%s13 + $0x68] sm:$0xff]
  %v5265 = vld [vmem:[%s13 + $0x70] sm:$0xff]
  %v5266 = vld [vmem:[%s13 + $0x78] sm:$0xff]
  %v5267 = vld [vmem:[%s13 + $0x80] sm:$0xff]
  %v5268 = vld [vmem:[%s13 + $0x88] sm:$0xff]
  %v5269 = vld [vmem:[%s13 + $0x90] sm:$0xff]
  %v5270 = vld [vmem:[%s13 + $0x98] sm:$0xff]
  %v5271 = vld [vmem:[%s13 + $0xa0] sm:$0xff]
  %v5272 = vld [vmem:[%s13 + $0xa8] sm:$0xff]
  %v5273 = vld [vmem:[%s13 + $0xb0] sm:$0xff]
  %v5274 = vld [vmem:[%s13 + $0xb8] sm:$0xff]
  %v5275 = vld [vmem:[%s13 + $0xc0] sm:$0xff]
  %v5276 = vld [vmem:[%s13 + $0xc8] sm:$0xff]
  %v5277 = vld [vmem:[%s13 + $0xd0] sm:$0xff]
  %v5278 = vld [vmem:[%s13 + $0xd8] sm:$0xff]
  %v5279 = vld [vmem:[%s13 + $0xe0] sm:$0xff]
  %v5280 = vld [vmem:[%s13 + $0xe8] sm:$0xff]
  %v5281 = vld [vmem:[%s13 + $0xf0] sm:$0xff]
  %v5282 = vld [vmem:[%s13 + $0xf8] sm:$0xff]
  %v5283 = vld [vmem:[%s13 + $0x100] sm:$0xff]
  %v5284 = vld [vmem:[%s13 + $0x108] sm:$0xff]
  %v5285 = vld [vmem:[%s13 + $0x110] sm:$0xff]
  %v5286 = vld [vmem:[%s13 + $0x118] sm:$0xff]
  %v5287 = vld [vmem:[%s13 + $0x120] sm:$0xff]
  %v5288 = vld [vmem:[%s13 + $0x128] sm:$0xff]
  %v5289 = vld [vmem:[%s13 + $0x130] sm:$0xff]
  %v5290 = vld [vmem:[%s13 + $0x138] sm:$0xff]
  %v5291 = vld [vmem:[%s13 + $0x140] sm:$0xff]
  %v5292 = vld [vmem:[%s13 + $0x148] sm:$0xff]
  %v5293 = vld [vmem:[%s13 + $0x150] sm:$0xff]
  %v5294 = vld [vmem:[%s13 + $0x158] sm:$0xff]
  %v5295 = vld [vmem:[%s13 + $0x160] sm:$0xff]
  %v5296 = vld [vmem:[%s13 + $0x168] sm:$0xff]
  %v5297 = vld [vmem:[%s13 + $0x170] sm:$0xff]
  %v5298 = vld [vmem:[%s13 + $0x178] sm:$0xff]
  %v5299 = vld [vmem:[%s13 + $0x180] sm:$0xff]
  %v5300 = vld [vmem:[%s13 + $0x188] sm:$0xff]
  %v5301 = vld [vmem:[%s13 + $0x190] sm:$0xff]
  %v5302 = vld [vmem:[%s13 + $0x198] sm:$0xff]
  %v5303 = vld [vmem:[%s13 + $0x1a0] sm:$0xff]
  %v5304 = vld [vmem:[%s13 + $0x1a8] sm:$0xff]
  %v5305 = vld [vmem:[%s13 + $0x1b0] sm:$0xff]
  %v5306 = vld [vmem:[%s13 + $0x1b8] sm:$0xff]
  %v5307 = vld [vmem:[%s13 + $0x1c0] sm:$0xff]
  %v5308 = vld [vmem:[%s13 + $0x1c8] sm:$0xff]
  %v5309 = vld [vmem:[%s13 + $0x1d0] sm:$0xff]
  %v5310 = vld [vmem:[%s13 + $0x1d8] sm:$0xff]
  %v5311 = vld [vmem:[%s13 + $0x1e0] sm:$0xff]
  %v5312 = vld [vmem:[%s13 + $0x1e8] sm:$0xff]
  %v5313 = vld [vmem:[%s13 + $0x1f0] sm:$0xff]
  %v5314 = vld [vmem:[%s13 + $0x1f8] sm:$0xff]
  %v5315 = vld [vmem:[%s13 + $0x200] sm:$0xff]
  %v5316 = vld [vmem:[%s13 + $0x208] sm:$0xff]
  %v5317 = vld [vmem:[%s13 + $0x210] sm:$0xff]
  %v5318 = vld [vmem:[%s13 + $0x218] sm:$0xff]
  %v5319 = vld [vmem:[%s13 + $0x220] sm:$0xff]
  %v5320 = vld [vmem:[%s13 + $0x228] sm:$0xff]
  %v5321 = vld [vmem:[%s13 + $0x230] sm:$0xff]
  %v5322 = vld [vmem:[%s13 + $0x238] sm:$0xff]
  %v5323 = vld [vmem:[%s13 + $0x240] sm:$0xff]
  %v5324 = vld [vmem:[%s13 + $0x248] sm:$0xff]
  %v5325 = vld [vmem:[%s13 + $0x250] sm:$0xff]
  %v5326 = vld [vmem:[%s13 + $0x258] sm:$0xff]
  %v5327 = vld [vmem:[%s13 + $0x260] sm:$0xff]
  %v5328 = vld [vmem:[%s13 + $0x268] sm:$0xff]
  %v5329 = vld [vmem:[%s13 + $0x270] sm:$0xff]
  %v5330 = vld [vmem:[%s13 + $0x278] sm:$0xff]
  %v5331 = vld [vmem:[%s13 + $0x280] sm:$0xff]
  %v5332 = vld [vmem:[%s13 + $0x288] sm:$0xff]
  %v5333 = vld [vmem:[%s13 + $0x290] sm:$0xff]
  %v5334 = vld [vmem:[%s13 + $0x298] sm:$0xff]
  %v5335 = vld [vmem:[%s13 + $0x2a0] sm:$0xff]
  %v5336 = vld [vmem:[%s13 + $0x2a8] sm:$0xff]
  %v5337 = vld [vmem:[%s13 + $0x2b0] sm:$0xff]
  %v5338 = vld [vmem:[%s13 + $0x2b8] sm:$0xff]
  %v5339 = vld [vmem:[%s13 + $0x2c0] sm:$0xff]
  %v5340 = vld [vmem:[%s13 + $0x2c8] sm:$0xff]
  %v5341 = vld [vmem:[%s13 + $0x2d0] sm:$0xff]
  %v5342 = vld [vmem:[%s13 + $0x2d8] sm:$0xff]
  %v5343 = vld [vmem:[%s13 + $0x2e0] sm:$0xff]
  %v5344 = vld [vmem:[%s13 + $0x2e8] sm:$0xff]
  %v5345 = vld [vmem:[%s13 + $0x2f0] sm:$0xff]
  %v5346 = vld [vmem:[%s13 + $0x2f8] sm:$0xff]
  %v5347 = vld [vmem:[%s15] sm:$0xff]
  %v5348 = vld [vmem:[%s15 + $0x8] sm:$0xff]
  %v5349 = vld [vmem:[%s15 + $0x10] sm:$0xff]
  %v5350 = vld [vmem:[%s15 + $0x18] sm:$0xff]
  %v5351 = vld [vmem:[%s15 + $0x20] sm:$0xff]
  %v5352 = vld [vmem:[%s15 + $0x28] sm:$0xff]
  %v5353 = vld [vmem:[%s15 + $0x30] sm:$0xff]
  %v5354 = vld [vmem:[%s15 + $0x38] sm:$0xff]
  %5355 = vmatprep.subr.mxu0 0.0
  %5356 = vmatpush1.msra.mxu0 %v5347
  %5357 = vmatprep.subr.mxu0 0.0
  %5358 = vmatpush1.msra.mxu0 %v5348
  %5359 = vmatprep.subr.mxu0 0.0
  %5360 = vmatpush1.msra.mxu0 %v5349
  %5361 = vmatprep.subr.mxu0 0.0
  %5362 = vmatpush1.msra.mxu0 %v5350
  %5363 = vmatprep.subr.mxu0 0.0
  %5364 = vmatpush1.msra.mxu0 %v5351
  %5365 = vmatprep.subr.mxu0 0.0
  %5366 = vmatpush1.msra.mxu0 %v5352
  %5367 = vmatprep.subr.mxu0 0.0
  %5368 = vmatpush1.msra.mxu0 %v5353
  %5369 = vmatprep.subr.mxu0 0.0
  %5370 = vmatpush1.msra.mxu0 %v5354
  %5371 = vmatprep.subr.mxu0 0.0
  %5372 = vmatpush1.msra.mxu0 0.0
  %5373 = vmatprep.subr.mxu0 0.0
  %5374 = vmatpush1.msra.mxu0 0.0
  %5375 = vmatprep.subr.mxu0 0.0
  %5376 = vmatpush1.msra.mxu0 0.0
  %5377 = vmatprep.subr.mxu0 0.0
  %5378 = vmatpush1.msra.mxu0 0.0
  %5379 = vmatprep.subr.mxu0 0.0
  %5380 = vmatpush1.msra.mxu0 0.0
  %5381 = vmatprep.subr.mxu0 0.0
  %5382 = vmatpush1.msra.mxu0 0.0
  %5383 = vmatprep.subr.mxu0 0.0
  %5384 = vmatpush1.msra.mxu0 0.0
  %5385 = vmatprep.subr.mxu0 0.0
  %5386 = vmatpush1.msra.mxu0 0.0
  %5387 = vmatprep.subr.mxu0 0.0
  %5388 = vmatpush1.msra.mxu0 0.0
  %5389 = vmatprep.subr.mxu0 0.0
  %5390 = vmatpush1.msra.mxu0 0.0
  %5391 = vmatprep.subr.mxu0 0.0
  %5392 = vmatpush1.msra.mxu0 0.0
  %5393 = vmatprep.subr.mxu0 0.0
  %5394 = vmatpush1.msra.mxu0 0.0
  %5395 = vmatprep.subr.mxu0 0.0
  %5396 = vmatpush1.msra.mxu0 0.0
  %5397 = vmatprep.subr.mxu0 0.0
  %5398 = vmatpush1.msra.mxu0 0.0
  %5399 = vmatprep.subr.mxu0 0.0
  %5400 = vmatpush1.msra.mxu0 0.0
  %5401 = vmatprep.subr.mxu0 0.0
  %5402 = vmatpush1.msra.mxu0 0.0
  %5403 = vmatprep.subr.mxu0 0.0
  %5404 = vmatpush1.msra.mxu0 0.0
  %5405 = vmatprep.subr.mxu0 0.0
  %5406 = vmatpush1.msra.mxu0 0.0
  %5407 = vmatprep.subr.mxu0 0.0
  %5408 = vmatpush1.msra.mxu0 0.0
  %5409 = vmatprep.subr.mxu0 0.0
  %5410 = vmatpush1.msra.mxu0 0.0
  %5411 = vmatprep.subr.mxu0 0.0
  %5412 = vmatpush1.msra.mxu0 0.0
  %5413 = vmatprep.subr.mxu0 0.0
  %5414 = vmatpush1.msra.mxu0 0.0
  %5415 = vmatprep.subr.mxu0 0.0
  %5416 = vmatpush1.msra.mxu0 0.0
  %5417 = vmatprep.subr.mxu0 0.0
  %5418 = vmatpush1.msra.mxu0 0.0
  %5419 = vmatprep.mubr.f32.mxu0 0.0
  %5420 = vmatmul.mubr.f32.gmra.mrb[0].mxu0 %v4097
  %v5421 = vpop.f32.mrb[0].mxu0
  %v5422 = vadd.f32 0.0, %v5421
  %v5423 = vpop.f32.mrb[0].mxu0
  %5424 = vmatprep.mubr.f32.mxu0 0.0
  %5425 = vmatmul.mubr.f32.gmra.mrb[0].mxu0 %v4100
  %v5426 = vpop.f32.mrb[0].mxu0
  %v5427 = vadd.f32 0.0, %v5426
  %v5428 = vpop.f32.mrb[0].mxu0
  %5429 = vmatprep.mubr.f32.mxu0 0.0
  %5430 = vmatmul.mubr.f32.gmra.mrb[0].mxu0 %v4103
  %v5431 = vpop.f32.mrb[0].mxu0
  %v5432 = vadd.f32 0.0, %v5431
  %v5433 = vpop.f32.mrb[0].mxu0
  %5434 = vmatprep.mubr.f32.mxu0 0.0
  %5435 = vmatmul.mubr.f32.gmra.mrb[0].mxu0 %v4106
  %v5436 = vpop.f32.mrb[0].mxu0
  %v5437 = vadd.f32 0.0, %v5436
  %v5438 = vpop.f32.mrb[0].mxu0
  %5439 = vmatprep.mubr.f32.mxu0 0.0
  %5440 = vmatmul.mubr.f32.gmra.mrb[0].mxu0 %v4109
  %v5441 = vpop.f32.mrb[0].mxu0
  %v5442 = vadd.f32 0.0, %v5441
  %v5443 = vpop.f32.mrb[0].mxu0
  %5444 = vmatprep.mubr.f32.mxu0 0.0
  %5445 = vmatmul.mubr.f32.gmra.mrb[0].mxu0 %v4112
  %v5446 = vpop.f32.mrb[0].mxu0
  %v5447 = vadd.f32 0.0, %v5446
  %v5448 = vpop.f32.mrb[0].mxu0
  %5449 = vmatprep.mubr.f32.mxu0 0.0
  %5450 = vmatmul.mubr.f32.gmra.mrb[0].mxu0 %v4115
  %v5451 = vpop.f32.mrb[0].mxu0
  %v5452 = vadd.f32 0.0, %v5451
  %v5453 = vpop.f32.mrb[0].mxu0
  %5454 = vmatprep.mubr.f32.mxu0 0.0
  %5455 = vmatmul.mubr.f32.gmra.mrb[0].mxu0 %v4118
  %v5456 = vpop.f32.mrb[0].mxu0
  %v5457 = vadd.f32 0.0, %v5456
  %v5458 = vpop.f32.mrb[0].mxu0
  %5459 = vmatprep.mubr.f32.mxu0 0.0
  %5460 = vmatmul.mubr.f32.gmra.mrb[0].mxu0 %v4121
  %v5461 = vpop.f32.mrb[0].mxu0
  %v5462 = vadd.f32 0.0, %v5461
  %v5463 = vpop.f32.mrb[0].mxu0
  %5464 = vmatprep.mubr.f32.mxu0 0.0
  %5465 = vmatmul.mubr.f32.gmra.mrb[0].mxu0 %v4124
  %v5466 = vpop.f32.mrb[0].mxu0
  %v5467 = vadd.f32 0.0, %v5466
  %v5468 = vpop.f32.mrb[0].mxu0
  %5469 = vmatprep.mubr.f32.mxu0 0.0
  %5470 = vmatmul.mubr.f32.gmra.mrb[0].mxu0 %v4127
  %v5471 = vpop.f32.mrb[0].mxu0
  %v5472 = vadd.f32 0.0, %v5471
  %v5473 = vpop.f32.mrb[0].mxu0
  %5474 = vmatprep.mubr.f32.mxu0 0.0
  %5475 = vmatmul.mubr.f32.gmra.mrb[0].mxu0 %v4130
  %v5476 = vpop.f32.mrb[0].mxu0
  %v5477 = vadd.f32 0.0, %v5476
  %v5478 = vpop.f32.mrb[0].mxu0
  %5479 = vmatprep.mubr.f32.mxu0 0.0
  %5480 = vmatmul.mubr.f32.gmra.mrb[0].mxu0 %v4133
  %v5481 = vpop.f32.mrb[0].mxu0
  %v5482 = vadd.f32 0.0, %v5481
  %v5483 = vpop.f32.mrb[0].mxu0
  %5484 = vmatprep.mubr.f32.mxu0 0.0
  %5485 = vmatmul.mubr.f32.gmra.mrb[0].mxu0 %v4136
  %v5486 = vpop.f32.mrb[0].mxu0
  %v5487 = vadd.f32 0.0, %v5486
  %v5488 = vpop.f32.mrb[0].mxu0
  %5489 = vmatprep.mubr.f32.mxu0 0.0
  %5490 = vmatmul.mubr.f32.gmra.mrb[0].mxu0 %v4139
  %v5491 = vpop.f32.mrb[0].mxu0
  %v5492 = vadd.f32 0.0, %v5491
  %v5493 = vpop.f32.mrb[0].mxu0
  %5494 = vmatprep.mubr.f32.mxu0 0.0
  %5495 = vmatmul.mubr.f32.gmra.mrb[0].mxu0 %v4142
  %v5496 = vpop.f32.mrb[0].mxu0
  %v5497 = vadd.f32 0.0, %v5496
  %v5498 = vpop.f32.mrb[0].mxu0
  %5499 = vmatprep.mubr.f32.mxu0 0.0
  %5500 = vmatmul.mubr.f32.gmra.mrb[0].mxu0 %v4145
  %v5501 = vpop.f32.mrb[0].mxu0
  %v5502 = vadd.f32 0.0, %v5501
  %v5503 = vpop.f32.mrb[0].mxu0
  %5504 = vmatprep.mubr.f32.mxu0 0.0
  %5505 = vmatmul.mubr.f32.gmra.mrb[0].mxu0 %v4148
  %v5506 = vpop.f32.mrb[0].mxu0
  %v5507 = vadd.f32 0.0, %v5506
  %v5508 = vpop.f32.mrb[0].mxu0
  %5509 = vmatprep.mubr.f32.mxu0 0.0
  %5510 = vmatmul.mubr.f32.gmra.mrb[0].mxu0 %v4151
  %v5511 = vpop.f32.mrb[0].mxu0
  %v5512 = vadd.f32 0.0, %v5511
  %v5513 = vpop.f32.mrb[0].mxu0
  %5514 = vmatprep.mubr.f32.mxu0 0.0
  %5515 = vmatmul.mubr.f32.gmra.mrb[0].mxu0 %v4154
  %v5516 = vpop.f32.mrb[0].mxu0
  %v5517 = vadd.f32 0.0, %v5516
  %v5518 = vpop.f32.mrb[0].mxu0
  %5519 = vmatprep.mubr.f32.mxu0 0.0
  %5520 = vmatmul.mubr.f32.gmra.mrb[0].mxu0 %v4157
  %v5521 = vpop.f32.mrb[0].mxu0
  %v5522 = vadd.f32 0.0, %v5521
  %v5523 = vpop.f32.mrb[0].mxu0
  %5524 = vmatprep.mubr.f32.mxu0 0.0
  %5525 = vmatmul.mubr.f32.gmra.mrb[0].mxu0 %v4160
  %v5526 = vpop.f32.mrb[0].mxu0
  %v5527 = vadd.f32 0.0, %v5526
  %v5528 = vpop.f32.mrb[0].mxu0
  %5529 = vmatprep.mubr.f32.mxu0 0.0
  %5530 = vmatmul.mubr.f32.gmra.mrb[0].mxu0 %v4163
  %v5531 = vpop.f32.mrb[0].mxu0
  %v5532 = vadd.f32 0.0, %v5531
  %v5533 = vpop.f32.mrb[0].mxu0
  %5534 = vmatprep.mubr.f32.mxu0 0.0
  %5535 = vmatmul.mubr.f32.gmra.mrb[0].mxu0 %v4166
  %v5536 = vpop.f32.mrb[0].mxu0
  %v5537 = vadd.f32 0.0, %v5536
  %v5538 = vpop.f32.mrb[0].mxu0
  %5539 = vdwg.mxu0
  %v5541 = vsel %vm485, %v5252, 0
  %v5544 = vsel %vm485, %v5254, 0
  %v5547 = vsel %vm485, %v5256, 0
  %v5550 = vsel %vm485, %v5258, 0
  %v5553 = vsel %vm485, %v5260, 0
  %v5556 = vsel %vm485, %v5262, 0
  %v5559 = vsel %vm485, %v5264, 0
  %v5562 = vsel %vm485, %v5266, 0
  %v5565 = vsel %vm485, %v5268, 0
  %v5568 = vsel %vm485, %v5270, 0
  %v5571 = vsel %vm485, %v5272, 0
  %v5574 = vsel %vm485, %v5274, 0
  %v5577 = vsel %vm485, %v5276, 0
  %v5580 = vsel %vm485, %v5278, 0
  %v5583 = vsel %vm485, %v5280, 0
  %v5586 = vsel %vm485, %v5282, 0
  %v5589 = vsel %vm485, %v5284, 0
  %v5592 = vsel %vm485, %v5286, 0
  %v5595 = vsel %vm485, %v5288, 0
  %v5598 = vsel %vm485, %v5290, 0
  %v5601 = vsel %vm485, %v5292, 0
  %v5604 = vsel %vm485, %v5294, 0
  %v5607 = vsel %vm485, %v5296, 0
  %v5610 = vsel %vm485, %v5298, 0
  %v5613 = vsel %vm485, %v5300, 0
  %v5616 = vsel %vm485, %v5302, 0
  %v5619 = vsel %vm485, %v5304, 0
  %v5622 = vsel %vm485, %v5306, 0
  %v5625 = vsel %vm485, %v5308, 0
  %v5628 = vsel %vm485, %v5310, 0
  %v5631 = vsel %vm485, %v5312, 0
  %v5634 = vsel %vm485, %v5314, 0
  %v5637 = vsel %vm485, %v5316, 0
  %v5640 = vsel %vm485, %v5318, 0
  %v5643 = vsel %vm485, %v5320, 0
  %v5646 = vsel %vm485, %v5322, 0
  %v5649 = vsel %vm485, %v5324, 0
  %v5652 = vsel %vm485, %v5326, 0
  %v5655 = vsel %vm485, %v5328, 0
  %v5658 = vsel %vm485, %v5330, 0
  %v5661 = vsel %vm485, %v5332, 0
  %v5664 = vsel %vm485, %v5334, 0
  %v5667 = vsel %vm485, %v5336, 0
  %v5670 = vsel %vm485, %v5338, 0
  %v5673 = vsel %vm485, %v5340, 0
  %v5676 = vsel %vm485, %v5342, 0
  %v5679 = vsel %vm485, %v5344, 0
  %v5682 = vsel %vm485, %v5346, 0
  %5684 = vmatprep.subr.mxu0 0.0
  %5685 = vmatpush1.msra.mxu0 %v5422
  %5686 = vmatprep.subr.mxu0 0.0
  %5687 = vmatpush1.msra.mxu0 %v5427
  %5688 = vmatprep.subr.mxu0 0.0
  %5689 = vmatpush1.msra.mxu0 %v5432
  %5690 = vmatprep.subr.mxu0 0.0
  %5691 = vmatpush1.msra.mxu0 %v5437
  %5692 = vmatprep.subr.mxu0 0.0
  %5693 = vmatpush1.msra.mxu0 %v5442
  %5694 = vmatprep.subr.mxu0 0.0
  %5695 = vmatpush1.msra.mxu0 %v5447
  %5696 = vmatprep.subr.mxu0 0.0
  %5697 = vmatpush1.msra.mxu0 %v5452
  %5698 = vmatprep.subr.mxu0 0.0
  %5699 = vmatpush1.msra.mxu0 %v5457
  %5700 = vmatprep.subr.mxu0 0.0
  %5701 = vmatpush1.msra.mxu0 %v5462
  %5702 = vmatprep.subr.mxu0 0.0
  %5703 = vmatpush1.msra.mxu0 %v5467
  %5704 = vmatprep.subr.mxu0 0.0
  %5705 = vmatpush1.msra.mxu0 %v5472
  %5706 = vmatprep.subr.mxu0 0.0
  %5707 = vmatpush1.msra.mxu0 %v5477
  %5708 = vmatprep.subr.mxu0 0.0
  %5709 = vmatpush1.msra.mxu0 %v5482
  %5710 = vmatprep.subr.mxu0 0.0
  %5711 = vmatpush1.msra.mxu0 %v5487
  %5712 = vmatprep.subr.mxu0 0.0
  %5713 = vmatpush1.msra.mxu0 %v5492
  %5714 = vmatprep.subr.mxu0 0.0
  %5715 = vmatpush1.msra.mxu0 %v5497
  %5716 = vmatprep.subr.mxu0 0.0
  %5717 = vmatpush1.msra.mxu0 %v5502
  %5718 = vmatprep.subr.mxu0 0.0
  %5719 = vmatpush1.msra.mxu0 %v5507
  %5720 = vmatprep.subr.mxu0 0.0
  %5721 = vmatpush1.msra.mxu0 %v5512
  %5722 = vmatprep.subr.mxu0 0.0
  %5723 = vmatpush1.msra.mxu0 %v5517
  %5724 = vmatprep.subr.mxu0 0.0
  %5725 = vmatpush1.msra.mxu0 %v5522
  %5726 = vmatprep.subr.mxu0 0.0
  %5727 = vmatpush1.msra.mxu0 %v5527
  %5728 = vmatprep.subr.mxu0 0.0
  %5729 = vmatpush1.msra.mxu0 %v5532
  %5730 = vmatprep.subr.mxu0 0.0
  %5731 = vmatpush1.msra.mxu0 %v5537
  %5732 = vmatprep.subr.mxu0 0.0
  %5733 = vmatpush1.msra.mxu0 0.0
  %5734 = vmatprep.subr.mxu0 0.0
  %5735 = vmatpush1.msra.mxu0 0.0
  %5736 = vmatprep.subr.mxu0 0.0
  %5737 = vmatpush1.msra.mxu0 0.0
  %5738 = vmatprep.subr.mxu0 0.0
  %5739 = vmatpush1.msra.mxu0 0.0
  %5740 = vmatprep.subr.mxu0 0.0
  %5741 = vmatpush1.msra.mxu0 0.0
  %5742 = vmatprep.subr.mxu0 0.0
  %5743 = vmatpush1.msra.mxu0 0.0
  %5744 = vmatprep.subr.mxu0 0.0
  %5745 = vmatpush1.msra.mxu0 0.0
  %5746 = vmatprep.subr.mxu0 0.0
  %5747 = vmatpush1.msra.mxu0 0.0
  %5748 = vmatprep.mubr.f32.mxu0 %v5541
  %5749 = vmatmul.mubr.f32.gmra.mrb[0].mxu0 %v5251
  %v5750 = vpop.f32.mrb[0].mxu0
  %v5751 = vadd.f32 0.0, %v5750
  %v5752 = vpop.f32.mrb[0].mxu0
  %5753 = vmatprep.mubr.f32.mxu0 %v5544
  %5754 = vmatmul.mubr.f32.gmra.mrb[0].mxu0 %v5253
  %v5755 = vpop.f32.mrb[0].mxu0
  %v5756 = vadd.f32 0.0, %v5755
  %v5757 = vpop.f32.mrb[0].mxu0
  %5758 = vmatprep.mubr.f32.mxu0 %v5547
  %5759 = vmatmul.mubr.f32.gmra.mrb[0].mxu0 %v5255
  %v5760 = vpop.f32.mrb[0].mxu0
  %v5761 = vadd.f32 0.0, %v5760
  %v5762 = vpop.f32.mrb[0].mxu0
  %5763 = vmatprep.mubr.f32.mxu0 %v5550
  %5764 = vmatmul.mubr.f32.gmra.mrb[0].mxu0 %v5257
  %v5765 = vpop.f32.mrb[0].mxu0
  %v5766 = vadd.f32 0.0, %v5765
  %v5767 = vpop.f32.mrb[0].mxu0
  %5768 = vmatprep.mubr.f32.mxu0 %v5553
  %5769 = vmatmul.mubr.f32.gmra.mrb[0].mxu0 %v5259
  %v5770 = vpop.f32.mrb[0].mxu0
  %v5771 = vadd.f32 0.0, %v5770
  %v5772 = vpop.f32.mrb[0].mxu0
  %5773 = vmatprep.mubr.f32.mxu0 %v5556
  %5774 = vmatmul.mubr.f32.gmra.mrb[0].mxu0 %v5261
  %v5775 = vpop.f32.mrb[0].mxu0
  %v5776 = vadd.f32 0.0, %v5775
  %v5777 = vpop.f32.mrb[0].mxu0
  %5778 = vmatprep.mubr.f32.mxu0 %v5559
  %5779 = vmatmul.mubr.f32.gmra.mrb[0].mxu0 %v5263
  %v5780 = vpop.f32.mrb[0].mxu0
  %v5781 = vadd.f32 0.0, %v5780
  %v5782 = vpop.f32.mrb[0].mxu0
  %5783 = vmatprep.mubr.f32.mxu0 %v5562
  %5784 = vmatmul.mubr.f32.gmra.mrb[0].mxu0 %v5265
  %v5785 = vpop.f32.mrb[0].mxu0
  %v5786 = vadd.f32 0.0, %v5785
  %v5787 = vpop.f32.mrb[0].mxu0
  %5788 = vmatprep.mubr.f32.mxu0 %v5565
  %5789 = vmatmul.mubr.f32.gmra.mrb[0].mxu0 %v5267
  %v5790 = vpop.f32.mrb[0].mxu0
  %v5791 = vadd.f32 0.0, %v5790
  %v5792 = vpop.f32.mrb[0].mxu0
  %5793 = vmatprep.mubr.f32.mxu0 %v5568
  %5794 = vmatmul.mubr.f32.gmra.mrb[0].mxu0 %v5269
  %v5795 = vpop.f32.mrb[0].mxu0
  %v5796 = vadd.f32 0.0, %v5795
  %v5797 = vpop.f32.mrb[0].mxu0
  %5798 = vmatprep.mubr.f32.mxu0 %v5571
  %5799 = vmatmul.mubr.f32.gmra.mrb[0].mxu0 %v5271
  %v5800 = vpop.f32.mrb[0].mxu0
  %v5801 = vadd.f32 0.0, %v5800
  %v5802 = vpop.f32.mrb[0].mxu0
  %5803 = vmatprep.mubr.f32.mxu0 %v5574
  %5804 = vmatmul.mubr.f32.gmra.mrb[0].mxu0 %v5273
  %v5805 = vpop.f32.mrb[0].mxu0
  %v5806 = vadd.f32 0.0, %v5805
  %v5807 = vpop.f32.mrb[0].mxu0
  %5808 = vmatprep.mubr.f32.mxu0 %v5577
  %5809 = vmatmul.mubr.f32.gmra.mrb[0].mxu0 %v5275
  %v5810 = vpop.f32.mrb[0].mxu0
  %v5811 = vadd.f32 0.0, %v5810
  %v5812 = vpop.f32.mrb[0].mxu0
  %5813 = vmatprep.mubr.f32.mxu0 %v5580
  %5814 = vmatmul.mubr.f32.gmra.mrb[0].mxu0 %v5277
  %v5815 = vpop.f32.mrb[0].mxu0
  %v5816 = vadd.f32 0.0, %v5815
  %v5817 = vpop.f32.mrb[0].mxu0
  %5818 = vmatprep.mubr.f32.mxu0 %v5583
  %5819 = vmatmul.mubr.f32.gmra.mrb[0].mxu0 %v5279
  %v5820 = vpop.f32.mrb[0].mxu0
  %v5821 = vadd.f32 0.0, %v5820
  %v5822 = vpop.f32.mrb[0].mxu0
  %5823 = vmatprep.mubr.f32.mxu0 %v5586
  %5824 = vmatmul.mubr.f32.gmra.mrb[0].mxu0 %v5281
  %v5825 = vpop.f32.mrb[0].mxu0
  %v5826 = vadd.f32 0.0, %v5825
  %v5827 = vpop.f32.mrb[0].mxu0
  %5828 = vmatprep.mubr.f32.mxu0 %v5589
  %5829 = vmatmul.mubr.f32.gmra.mrb[0].mxu0 %v5283
  %v5830 = vpop.f32.mrb[0].mxu0
  %v5831 = vadd.f32 0.0, %v5830
  %v5832 = vpop.f32.mrb[0].mxu0
  %5833 = vmatprep.mubr.f32.mxu0 %v5592
  %5834 = vmatmul.mubr.f32.gmra.mrb[0].mxu0 %v5285
  %v5835 = vpop.f32.mrb[0].mxu0
  %v5836 = vadd.f32 0.0, %v5835
  %v5837 = vpop.f32.mrb[0].mxu0
  %5838 = vmatprep.mubr.f32.mxu0 %v5595
  %5839 = vmatmul.mubr.f32.gmra.mrb[0].mxu0 %v5287
  %v5840 = vpop.f32.mrb[0].mxu0
  %v5841 = vadd.f32 0.0, %v5840
  %v5842 = vpop.f32.mrb[0].mxu0
  %5843 = vmatprep.mubr.f32.mxu0 %v5598
  %5844 = vmatmul.mubr.f32.gmra.mrb[0].mxu0 %v5289
  %v5845 = vpop.f32.mrb[0].mxu0
  %v5846 = vadd.f32 0.0, %v5845
  %v5847 = vpop.f32.mrb[0].mxu0
  %5848 = vmatprep.mubr.f32.mxu0 %v5601
  %5849 = vmatmul.mubr.f32.gmra.mrb[0].mxu0 %v5291
  %v5850 = vpop.f32.mrb[0].mxu0
  %v5851 = vadd.f32 0.0, %v5850
  %v5852 = vpop.f32.mrb[0].mxu0
  %5853 = vmatprep.mubr.f32.mxu0 %v5604
  %5854 = vmatmul.mubr.f32.gmra.mrb[0].mxu0 %v5293
  %v5855 = vpop.f32.mrb[0].mxu0
  %v5856 = vadd.f32 0.0, %v5855
  %v5857 = vpop.f32.mrb[0].mxu0
  %5858 = vmatprep.mubr.f32.mxu0 %v5607
  %5859 = vmatmul.mubr.f32.gmra.mrb[0].mxu0 %v5295
  %v5860 = vpop.f32.mrb[0].mxu0
  %v5861 = vadd.f32 0.0, %v5860
  %v5862 = vpop.f32.mrb[0].mxu0
  %5863 = vmatprep.mubr.f32.mxu0 %v5610
  %5864 = vmatmul.mubr.f32.gmra.mrb[0].mxu0 %v5297
  %v5865 = vpop.f32.mrb[0].mxu0
  %v5866 = vadd.f32 0.0, %v5865
  %v5867 = vpop.f32.mrb[0].mxu0
  %5868 = vmatprep.mubr.f32.mxu0 %v5613
  %5869 = vmatmul.mubr.f32.gmra.mrb[0].mxu0 %v5299
  %v5870 = vpop.f32.mrb[0].mxu0
  %v5871 = vadd.f32 0.0, %v5870
  %v5872 = vpop.f32.mrb[0].mxu0
  %5873 = vmatprep.mubr.f32.mxu0 %v5616
  %5874 = vmatmul.mubr.f32.gmra.mrb[0].mxu0 %v5301
  %v5875 = vpop.f32.mrb[0].mxu0
  %v5876 = vadd.f32 0.0, %v5875
  %v5877 = vpop.f32.mrb[0].mxu0
  %5878 = vmatprep.mubr.f32.mxu0 %v5619
  %5879 = vmatmul.mubr.f32.gmra.mrb[0].mxu0 %v5303
  %v5880 = vpop.f32.mrb[0].mxu0
  %v5881 = vadd.f32 0.0, %v5880
  %v5882 = vpop.f32.mrb[0].mxu0
  %5883 = vmatprep.mubr.f32.mxu0 %v5622
  %5884 = vmatmul.mubr.f32.gmra.mrb[0].mxu0 %v5305
  %v5885 = vpop.f32.mrb[0].mxu0
  %v5886 = vadd.f32 0.0, %v5885
  %v5887 = vpop.f32.mrb[0].mxu0
  %5888 = vmatprep.mubr.f32.mxu0 %v5625
  %5889 = vmatmul.mubr.f32.gmra.mrb[0].mxu0 %v5307
  %v5890 = vpop.f32.mrb[0].mxu0
  %v5891 = vadd.f32 0.0, %v5890
  %v5892 = vpop.f32.mrb[0].mxu0
  %5893 = vmatprep.mubr.f32.mxu0 %v5628
  %5894 = vmatmul.mubr.f32.gmra.mrb[0].mxu0 %v5309
  %v5895 = vpop.f32.mrb[0].mxu0
  %v5896 = vadd.f32 0.0, %v5895
  %v5897 = vpop.f32.mrb[0].mxu0
  %5898 = vmatprep.mubr.f32.mxu0 %v5631
  %5899 = vmatmul.mubr.f32.gmra.mrb[0].mxu0 %v5311
  %v5900 = vpop.f32.mrb[0].mxu0
  %v5901 = vadd.f32 0.0, %v5900
  %v5902 = vpop.f32.mrb[0].mxu0
  %5903 = vmatprep.mubr.f32.mxu0 %v5634
  %5904 = vmatmul.mubr.f32.gmra.mrb[0].mxu0 %v5313
  %v5905 = vpop.f32.mrb[0].mxu0
  %v5906 = vadd.f32 0.0, %v5905
  %v5907 = vpop.f32.mrb[0].mxu0
  %5908 = vmatprep.mubr.f32.mxu0 %v5637
  %5909 = vmatmul.mubr.f32.gmra.mrb[0].mxu0 %v5315
  %v5910 = vpop.f32.mrb[0].mxu0
  %v5911 = vadd.f32 0.0, %v5910
  %v5912 = vpop.f32.mrb[0].mxu0
  %5913 = vmatprep.mubr.f32.mxu0 %v5640
  %5914 = vmatmul.mubr.f32.gmra.mrb[0].mxu0 %v5317
  %v5915 = vpop.f32.mrb[0].mxu0
  %v5916 = vadd.f32 0.0, %v5915
  %v5917 = vpop.f32.mrb[0].mxu0
  %5918 = vmatprep.mubr.f32.mxu0 %v5643
  %5919 = vmatmul.mubr.f32.gmra.mrb[0].mxu0 %v5319
  %v5920 = vpop.f32.mrb[0].mxu0
  %v5921 = vadd.f32 0.0, %v5920
  %v5922 = vpop.f32.mrb[0].mxu0
  %5923 = vmatprep.mubr.f32.mxu0 %v5646
  %5924 = vmatmul.mubr.f32.gmra.mrb[0].mxu0 %v5321
  %v5925 = vpop.f32.mrb[0].mxu0
  %v5926 = vadd.f32 0.0, %v5925
  %v5927 = vpop.f32.mrb[0].mxu0
  %5928 = vmatprep.mubr.f32.mxu0 %v5649
  %5929 = vmatmul.mubr.f32.gmra.mrb[0].mxu0 %v5323
  %v5930 = vpop.f32.mrb[0].mxu0
  %v5931 = vadd.f32 0.0, %v5930
  %v5932 = vpop.f32.mrb[0].mxu0
  %5933 = vmatprep.mubr.f32.mxu0 %v5652
  %5934 = vmatmul.mubr.f32.gmra.mrb[0].mxu0 %v5325
  %v5935 = vpop.f32.mrb[0].mxu0
  %v5936 = vadd.f32 0.0, %v5935
  %v5937 = vpop.f32.mrb[0].mxu0
  %5938 = vmatprep.mubr.f32.mxu0 %v5655
  %5939 = vmatmul.mubr.f32.gmra.mrb[0].mxu0 %v5327
  %v5940 = vpop.f32.mrb[0].mxu0
  %v5941 = vadd.f32 0.0, %v5940
  %v5942 = vpop.f32.mrb[0].mxu0
  %5943 = vmatprep.mubr.f32.mxu0 %v5658
  %5944 = vmatmul.mubr.f32.gmra.mrb[0].mxu0 %v5329
  %v5945 = vpop.f32.mrb[0].mxu0
  %v5946 = vadd.f32 0.0, %v5945
  %v5947 = vpop.f32.mrb[0].mxu0
  %5948 = vmatprep.mubr.f32.mxu0 %v5661
  %5949 = vmatmul.mubr.f32.gmra.mrb[0].mxu0 %v5331
  %v5950 = vpop.f32.mrb[0].mxu0
  %v5951 = vadd.f32 0.0, %v5950
  %v5952 = vpop.f32.mrb[0].mxu0
  %5953 = vmatprep.mubr.f32.mxu0 %v5664
  %5954 = vmatmul.mubr.f32.gmra.mrb[0].mxu0 %v5333
  %v5955 = vpop.f32.mrb[0].mxu0
  %v5956 = vadd.f32 0.0, %v5955
  %v5957 = vpop.f32.mrb[0].mxu0
  %5958 = vmatprep.mubr.f32.mxu0 %v5667
  %5959 = vmatmul.mubr.f32.gmra.mrb[0].mxu0 %v5335
  %v5960 = vpop.f32.mrb[0].mxu0
  %v5961 = vadd.f32 0.0, %v5960
  %v5962 = vpop.f32.mrb[0].mxu0
  %5963 = vmatprep.mubr.f32.mxu0 %v5670
  %5964 = vmatmul.mubr.f32.gmra.mrb[0].mxu0 %v5337
  %v5965 = vpop.f32.mrb[0].mxu0
  %v5966 = vadd.f32 0.0, %v5965
  %v5967 = vpop.f32.mrb[0].mxu0
  %5968 = vmatprep.mubr.f32.mxu0 %v5673
  %5969 = vmatmul.mubr.f32.gmra.mrb[0].mxu0 %v5339
  %v5970 = vpop.f32.mrb[0].mxu0
  %v5971 = vadd.f32 0.0, %v5970
  %v5972 = vpop.f32.mrb[0].mxu0
  %5973 = vmatprep.mubr.f32.mxu0 %v5676
  %5974 = vmatmul.mubr.f32.gmra.mrb[0].mxu0 %v5341
  %v5975 = vpop.f32.mrb[0].mxu0
  %v5976 = vadd.f32 0.0, %v5975
  %v5977 = vpop.f32.mrb[0].mxu0
  %5978 = vmatprep.mubr.f32.mxu0 %v5679
  %5979 = vmatmul.mubr.f32.gmra.mrb[0].mxu0 %v5343
  %v5980 = vpop.f32.mrb[0].mxu0
  %v5981 = vadd.f32 0.0, %v5980
  %v5982 = vpop.f32.mrb[0].mxu0
  %5983 = vmatprep.mubr.f32.mxu0 %v5682
  %5984 = vmatmul.mubr.f32.gmra.mrb[0].mxu0 %v5345
  %v5985 = vpop.f32.mrb[0].mxu0
  %v5986 = vadd.f32 0.0, %v5985
  %v5987 = vpop.f32.mrb[0].mxu0
  %5988 = vdwg.mxu0
  %v5989 = vadd.f32 %v5013, %v5751
  %v5990 = vadd.f32 %v5018, %v5756
  %v5991 = vadd.f32 %v5023, %v5761
  %v5992 = vadd.f32 %v5028, %v5766
  %v5993 = vadd.f32 %v5033, %v5771
  %v5994 = vadd.f32 %v5038, %v5776
  %v5995 = vadd.f32 %v5043, %v5781
  %v5996 = vadd.f32 %v5048, %v5786
  %v5997 = vadd.f32 %v5053, %v5791
  %v5998 = vadd.f32 %v5058, %v5796
  %v5999 = vadd.f32 %v5063, %v5801
  %v6000 = vadd.f32 %v5068, %v5806
  %v6001 = vadd.f32 %v5073, %v5811
  %v6002 = vadd.f32 %v5078, %v5816
  %v6003 = vadd.f32 %v5083, %v5821
  %v6004 = vadd.f32 %v5088, %v5826
  %v6005 = vadd.f32 %v5093, %v5831
  %v6006 = vadd.f32 %v5098, %v5836
  %v6007 = vadd.f32 %v5103, %v5841
  %v6008 = vadd.f32 %v5108, %v5846
  %v6009 = vadd.f32 %v5113, %v5851
  %v6010 = vadd.f32 %v5118, %v5856
  %v6011 = vadd.f32 %v5123, %v5861
  %v6012 = vadd.f32 %v5128, %v5866
  %v6013 = vadd.f32 %v5133, %v5871
  %v6014 = vadd.f32 %v5138, %v5876
  %v6015 = vadd.f32 %v5143, %v5881
  %v6016 = vadd.f32 %v5148, %v5886
  %v6017 = vadd.f32 %v5153, %v5891
  %v6018 = vadd.f32 %v5158, %v5896
  %v6019 = vadd.f32 %v5163, %v5901
  %v6020 = vadd.f32 %v5168, %v5906
  %v6021 = vadd.f32 %v5173, %v5911
  %v6022 = vadd.f32 %v5178, %v5916
  %v6023 = vadd.f32 %v5183, %v5921
  %v6024 = vadd.f32 %v5188, %v5926
  %v6025 = vadd.f32 %v5193, %v5931
  %v6026 = vadd.f32 %v5198, %v5936
  %v6027 = vadd.f32 %v5203, %v5941
  %v6028 = vadd.f32 %v5208, %v5946
  %v6029 = vadd.f32 %v5213, %v5951
  %v6030 = vadd.f32 %v5218, %v5956
  %v6031 = vadd.f32 %v5223, %v5961
  %v6032 = vadd.f32 %v5228, %v5966
  %v6033 = vadd.f32 %v5233, %v5971
  %v6034 = vadd.f32 %v5238, %v5976
  %v6035 = vadd.f32 %v5243, %v5981
  %v6036 = vadd.f32 %v5248, %v5986
  %v6037 = vld [vmem:[%s16] sm:$0xff]
  %v6038 = vld [vmem:[%s16 + $0x8] sm:$0xff]
  %v6039 = vld [vmem:[%s16 + $0x10] sm:$0xff]
  %v6040 = vld [vmem:[%s16 + $0x18] sm:$0xff]
  %v6041 = vld [vmem:[%s16 + $0x20] sm:$0xff]
  %v6042 = vld [vmem:[%s16 + $0x28] sm:$0xff]
  %v6043 = vld [vmem:[%s16 + $0x30] sm:$0xff]
  %v6044 = vld [vmem:[%s16 + $0x38] sm:$0xff]
  %v6045 = vld [vmem:[%s16 + $0x40] sm:$0xff]
  %v6046 = vld [vmem:[%s16 + $0x48] sm:$0xff]
  %v6047 = vld [vmem:[%s16 + $0x50] sm:$0xff]
  %v6048 = vld [vmem:[%s16 + $0x58] sm:$0xff]
  %v6049 = vld [vmem:[%s16 + $0x60] sm:$0xff]
  %v6050 = vld [vmem:[%s16 + $0x68] sm:$0xff]
  %v6051 = vld [vmem:[%s16 + $0x70] sm:$0xff]
  %v6052 = vld [vmem:[%s16 + $0x78] sm:$0xff]
  %v6053 = vld [vmem:[%s16 + $0x80] sm:$0xff]
  %v6054 = vld [vmem:[%s16 + $0x88] sm:$0xff]
  %v6055 = vld [vmem:[%s16 + $0x90] sm:$0xff]
  %v6056 = vld [vmem:[%s16 + $0x98] sm:$0xff]
  %v6057 = vld [vmem:[%s16 + $0xa0] sm:$0xff]
  %v6058 = vld [vmem:[%s16 + $0xa8] sm:$0xff]
  %v6059 = vld [vmem:[%s16 + $0xb0] sm:$0xff]
  %v6060 = vld [vmem:[%s16 + $0xb8] sm:$0xff]
  %v6061 = vld [vmem:[%s16 + $0xc0] sm:$0xff]
  %v6062 = vld [vmem:[%s16 + $0xc8] sm:$0xff]
  %v6063 = vld [vmem:[%s16 + $0xd0] sm:$0xff]
  %v6064 = vld [vmem:[%s16 + $0xd8] sm:$0xff]
  %v6065 = vld [vmem:[%s16 + $0xe0] sm:$0xff]
  %v6066 = vld [vmem:[%s16 + $0xe8] sm:$0xff]
  %v6067 = vld [vmem:[%s16 + $0xf0] sm:$0xff]
  %v6068 = vld [vmem:[%s16 + $0xf8] sm:$0xff]
  %v6069 = vld [vmem:[%s16 + $0x100] sm:$0xff]
  %v6070 = vld [vmem:[%s16 + $0x108] sm:$0xff]
  %v6071 = vld [vmem:[%s16 + $0x110] sm:$0xff]
  %v6072 = vld [vmem:[%s16 + $0x118] sm:$0xff]
  %v6073 = vld [vmem:[%s16 + $0x120] sm:$0xff]
  %v6074 = vld [vmem:[%s16 + $0x128] sm:$0xff]
  %v6075 = vld [vmem:[%s16 + $0x130] sm:$0xff]
  %v6076 = vld [vmem:[%s16 + $0x138] sm:$0xff]
  %v6077 = vld [vmem:[%s16 + $0x140] sm:$0xff]
  %v6078 = vld [vmem:[%s16 + $0x148] sm:$0xff]
  %v6079 = vld [vmem:[%s16 + $0x150] sm:$0xff]
  %v6080 = vld [vmem:[%s16 + $0x158] sm:$0xff]
  %v6081 = vld [vmem:[%s16 + $0x160] sm:$0xff]
  %v6082 = vld [vmem:[%s16 + $0x168] sm:$0xff]
  %v6083 = vld [vmem:[%s16 + $0x170] sm:$0xff]
  %v6084 = vld [vmem:[%s16 + $0x178] sm:$0xff]
  %6086 = vset.pattern.permute.xlu0 0
  %6087 = vperm.xlu0 %6086, %v6037
  %v6088 = vpop.permute.xlu0 %6087
  %6091 = vset.pattern.permute.xlu0 0
  %6092 = vperm.xlu0 %6091, %v6038
  %v6093 = vpop.permute.xlu0 %6092
  %6096 = vset.pattern.permute.xlu0 0
  %6097 = vperm.xlu0 %6096, %v6039
  %v6098 = vpop.permute.xlu0 %6097
  %6101 = vset.pattern.permute.xlu0 0
  %6102 = vperm.xlu0 %6101, %v6040
  %v6103 = vpop.permute.xlu0 %6102
  %6106 = vset.pattern.permute.xlu0 0
  %6107 = vperm.xlu0 %6106, %v6041
  %v6108 = vpop.permute.xlu0 %6107
  %6111 = vset.pattern.permute.xlu0 0
  %6112 = vperm.xlu0 %6111, %v6042
  %v6113 = vpop.permute.xlu0 %6112
  %6116 = vset.pattern.permute.xlu0 0
  %6117 = vperm.xlu0 %6116, %v6043
  %v6118 = vpop.permute.xlu0 %6117
  %6121 = vset.pattern.permute.xlu0 0
  %6122 = vperm.xlu0 %6121, %v6044
  %v6123 = vpop.permute.xlu0 %6122
  %6126 = vset.pattern.permute.xlu0 0
  %6127 = vperm.xlu0 %6126, %v6045
  %v6128 = vpop.permute.xlu0 %6127
  %6131 = vset.pattern.permute.xlu0 0
  %6132 = vperm.xlu0 %6131, %v6046
  %v6133 = vpop.permute.xlu0 %6132
  %6136 = vset.pattern.permute.xlu0 0
  %6137 = vperm.xlu0 %6136, %v6047
  %v6138 = vpop.permute.xlu0 %6137
  %6141 = vset.pattern.permute.xlu0 0
  %6142 = vperm.xlu0 %6141, %v6048
  %v6143 = vpop.permute.xlu0 %6142
  %6146 = vset.pattern.permute.xlu0 0
  %6147 = vperm.xlu0 %6146, %v6049
  %v6148 = vpop.permute.xlu0 %6147
  %6151 = vset.pattern.permute.xlu0 0
  %6152 = vperm.xlu0 %6151, %v6050
  %v6153 = vpop.permute.xlu0 %6152
  %6156 = vset.pattern.permute.xlu0 0
  %6157 = vperm.xlu0 %6156, %v6051
  %v6158 = vpop.permute.xlu0 %6157
  %6161 = vset.pattern.permute.xlu0 0
  %6162 = vperm.xlu0 %6161, %v6052
  %v6163 = vpop.permute.xlu0 %6162
  %6166 = vset.pattern.permute.xlu0 0
  %6167 = vperm.xlu0 %6166, %v6053
  %v6168 = vpop.permute.xlu0 %6167
  %6171 = vset.pattern.permute.xlu0 0
  %6172 = vperm.xlu0 %6171, %v6054
  %v6173 = vpop.permute.xlu0 %6172
  %6176 = vset.pattern.permute.xlu0 0
  %6177 = vperm.xlu0 %6176, %v6055
  %v6178 = vpop.permute.xlu0 %6177
  %6181 = vset.pattern.permute.xlu0 0
  %6182 = vperm.xlu0 %6181, %v6056
  %v6183 = vpop.permute.xlu0 %6182
  %6186 = vset.pattern.permute.xlu0 0
  %6187 = vperm.xlu0 %6186, %v6057
  %v6188 = vpop.permute.xlu0 %6187
  %6191 = vset.pattern.permute.xlu0 0
  %6192 = vperm.xlu0 %6191, %v6058
  %v6193 = vpop.permute.xlu0 %6192
  %6196 = vset.pattern.permute.xlu0 0
  %6197 = vperm.xlu0 %6196, %v6059
  %v6198 = vpop.permute.xlu0 %6197
  %6201 = vset.pattern.permute.xlu0 0
  %6202 = vperm.xlu0 %6201, %v6060
  %v6203 = vpop.permute.xlu0 %6202
  %6206 = vset.pattern.permute.xlu0 0
  %6207 = vperm.xlu0 %6206, %v6061
  %v6208 = vpop.permute.xlu0 %6207
  %6211 = vset.pattern.permute.xlu0 0
  %6212 = vperm.xlu0 %6211, %v6062
  %v6213 = vpop.permute.xlu0 %6212
  %6216 = vset.pattern.permute.xlu0 0
  %6217 = vperm.xlu0 %6216, %v6063
  %v6218 = vpop.permute.xlu0 %6217
  %6221 = vset.pattern.permute.xlu0 0
  %6222 = vperm.xlu0 %6221, %v6064
  %v6223 = vpop.permute.xlu0 %6222
  %6226 = vset.pattern.permute.xlu0 0
  %6227 = vperm.xlu0 %6226, %v6065
  %v6228 = vpop.permute.xlu0 %6227
  %6231 = vset.pattern.permute.xlu0 0
  %6232 = vperm.xlu0 %6231, %v6066
  %v6233 = vpop.permute.xlu0 %6232
  %6236 = vset.pattern.permute.xlu0 0
  %6237 = vperm.xlu0 %6236, %v6067
  %v6238 = vpop.permute.xlu0 %6237
  %6241 = vset.pattern.permute.xlu0 0
  %6242 = vperm.xlu0 %6241, %v6068
  %v6243 = vpop.permute.xlu0 %6242
  %6246 = vset.pattern.permute.xlu0 0
  %6247 = vperm.xlu0 %6246, %v6069
  %v6248 = vpop.permute.xlu0 %6247
  %6251 = vset.pattern.permute.xlu0 0
  %6252 = vperm.xlu0 %6251, %v6070
  %v6253 = vpop.permute.xlu0 %6252
  %6256 = vset.pattern.permute.xlu0 0
  %6257 = vperm.xlu0 %6256, %v6071
  %v6258 = vpop.permute.xlu0 %6257
  %6261 = vset.pattern.permute.xlu0 0
  %6262 = vperm.xlu0 %6261, %v6072
  %v6263 = vpop.permute.xlu0 %6262
  %6266 = vset.pattern.permute.xlu0 0
  %6267 = vperm.xlu0 %6266, %v6073
  %v6268 = vpop.permute.xlu0 %6267
  %6271 = vset.pattern.permute.xlu0 0
  %6272 = vperm.xlu0 %6271, %v6074
  %v6273 = vpop.permute.xlu0 %6272
  %6276 = vset.pattern.permute.xlu0 0
  %6277 = vperm.xlu0 %6276, %v6075
  %v6278 = vpop.permute.xlu0 %6277
  %6281 = vset.pattern.permute.xlu0 0
  %6282 = vperm.xlu0 %6281, %v6076
  %v6283 = vpop.permute.xlu0 %6282
  %6286 = vset.pattern.permute.xlu0 0
  %6287 = vperm.xlu0 %6286, %v6077
  %v6288 = vpop.permute.xlu0 %6287
  %6291 = vset.pattern.permute.xlu0 0
  %6292 = vperm.xlu0 %6291, %v6078
  %v6293 = vpop.permute.xlu0 %6292
  %6296 = vset.pattern.permute.xlu0 0
  %6297 = vperm.xlu0 %6296, %v6079
  %v6298 = vpop.permute.xlu0 %6297
  %6301 = vset.pattern.permute.xlu0 0
  %6302 = vperm.xlu0 %6301, %v6080
  %v6303 = vpop.permute.xlu0 %6302
  %6306 = vset.pattern.permute.xlu0 0
  %6307 = vperm.xlu0 %6306, %v6081
  %v6308 = vpop.permute.xlu0 %6307
  %6311 = vset.pattern.permute.xlu0 0
  %6312 = vperm.xlu0 %6311, %v6082
  %v6313 = vpop.permute.xlu0 %6312
  %6316 = vset.pattern.permute.xlu0 0
  %6317 = vperm.xlu0 %6316, %v6083
  %v6318 = vpop.permute.xlu0 %6317
  %6321 = vset.pattern.permute.xlu0 0
  %6322 = vperm.xlu0 %6321, %v6084
  %v6323 = vpop.permute.xlu0 %6322
  %v6325 = vadd.f32 %v5989, %v6088
  %v6326 = vadd.f32 %v5990, %v6093
  %v6327 = vadd.f32 %v5991, %v6098
  %v6328 = vadd.f32 %v5992, %v6103
  %v6329 = vadd.f32 %v5993, %v6108
  %v6330 = vadd.f32 %v5994, %v6113
  %v6331 = vadd.f32 %v5995, %v6118
  %v6332 = vadd.f32 %v5996, %v6123
  %v6333 = vadd.f32 %v5997, %v6128
  %v6334 = vadd.f32 %v5998, %v6133
  %v6335 = vadd.f32 %v5999, %v6138
  %v6336 = vadd.f32 %v6000, %v6143
  %v6337 = vadd.f32 %v6001, %v6148
  %v6338 = vadd.f32 %v6002, %v6153
  %v6339 = vadd.f32 %v6003, %v6158
  %v6340 = vadd.f32 %v6004, %v6163
  %v6341 = vadd.f32 %v6005, %v6168
  %v6342 = vadd.f32 %v6006, %v6173
  %v6343 = vadd.f32 %v6007, %v6178
  %v6344 = vadd.f32 %v6008, %v6183
  %v6345 = vadd.f32 %v6009, %v6188
  %v6346 = vadd.f32 %v6010, %v6193
  %v6347 = vadd.f32 %v6011, %v6198
  %v6348 = vadd.f32 %v6012, %v6203
  %v6349 = vadd.f32 %v6013, %v6208
  %v6350 = vadd.f32 %v6014, %v6213
  %v6351 = vadd.f32 %v6015, %v6218
  %v6352 = vadd.f32 %v6016, %v6223
  %v6353 = vadd.f32 %v6017, %v6228
  %v6354 = vadd.f32 %v6018, %v6233
  %v6355 = vadd.f32 %v6019, %v6238
  %v6356 = vadd.f32 %v6020, %v6243
  %v6357 = vadd.f32 %v6021, %v6248
  %v6358 = vadd.f32 %v6022, %v6253
  %v6359 = vadd.f32 %v6023, %v6258
  %v6360 = vadd.f32 %v6024, %v6263
  %v6361 = vadd.f32 %v6025, %v6268
  %v6362 = vadd.f32 %v6026, %v6273
  %v6363 = vadd.f32 %v6027, %v6278
  %v6364 = vadd.f32 %v6028, %v6283
  %v6365 = vadd.f32 %v6029, %v6288
  %v6366 = vadd.f32 %v6030, %v6293
  %v6367 = vadd.f32 %v6031, %v6298
  %v6368 = vadd.f32 %v6032, %v6303
  %v6369 = vadd.f32 %v6033, %v6308
  %v6370 = vadd.f32 %v6034, %v6313
  %v6371 = vadd.f32 %v6035, %v6318
  %v6372 = vadd.f32 %v6036, %v6323
  %v6373 = vmax.f32 %v6325, 0.0
  %v6374 = vmax.f32 %v6326, 0.0
  %v6375 = vmax.f32 %v6327, 0.0
  %v6376 = vmax.f32 %v6328, 0.0
  %v6377 = vmax.f32 %v6329, 0.0
  %v6378 = vmax.f32 %v6330, 0.0
  %v6379 = vmax.f32 %v6331, 0.0
  %v6380 = vmax.f32 %v6332, 0.0
  %v6381 = vmax.f32 %v6333, 0.0
  %v6382 = vmax.f32 %v6334, 0.0
  %v6383 = vmax.f32 %v6335, 0.0
  %v6384 = vmax.f32 %v6336, 0.0
  %v6385 = vmax.f32 %v6337, 0.0
  %v6386 = vmax.f32 %v6338, 0.0
  %v6387 = vmax.f32 %v6339, 0.0
  %v6388 = vmax.f32 %v6340, 0.0
  %v6389 = vmax.f32 %v6341, 0.0
  %v6390 = vmax.f32 %v6342, 0.0
  %v6391 = vmax.f32 %v6343, 0.0
  %v6392 = vmax.f32 %v6344, 0.0
  %v6393 = vmax.f32 %v6345, 0.0
  %v6394 = vmax.f32 %v6346, 0.0
  %v6395 = vmax.f32 %v6347, 0.0
  %v6396 = vmax.f32 %v6348, 0.0
  %v6397 = vmax.f32 %v6349, 0.0
  %v6398 = vmax.f32 %v6350, 0.0
  %v6399 = vmax.f32 %v6351, 0.0
  %v6400 = vmax.f32 %v6352, 0.0
  %v6401 = vmax.f32 %v6353, 0.0
  %v6402 = vmax.f32 %v6354, 0.0
  %v6403 = vmax.f32 %v6355, 0.0
  %v6404 = vmax.f32 %v6356, 0.0
  %v6405 = vmax.f32 %v6357, 0.0
  %v6406 = vmax.f32 %v6358, 0.0
  %v6407 = vmax.f32 %v6359, 0.0
  %v6408 = vmax.f32 %v6360, 0.0
  %v6409 = vmax.f32 %v6361, 0.0
  %v6410 = vmax.f32 %v6362, 0.0
  %v6411 = vmax.f32 %v6363, 0.0
  %v6412 = vmax.f32 %v6364, 0.0
  %v6413 = vmax.f32 %v6365, 0.0
  %v6414 = vmax.f32 %v6366, 0.0
  %v6415 = vmax.f32 %v6367, 0.0
  %v6416 = vmax.f32 %v6368, 0.0
  %v6417 = vmax.f32 %v6369, 0.0
  %v6418 = vmax.f32 %v6370, 0.0
  %v6419 = vmax.f32 %v6371, 0.0
  %v6420 = vmax.f32 %v6372, 0.0
  %v6421 = vld [vmem:[%s17] sm:$0xff]
  %v6422 = vld [vmem:[%s17 + $0x8] sm:$0xff]
  %v6423 = vld [vmem:[%s17 + $0x10] sm:$0xff]
  %v6424 = vld [vmem:[%s17 + $0x18] sm:$0xff]
  %v6425 = vld [vmem:[%s17 + $0x20] sm:$0xff]
  %v6426 = vld [vmem:[%s17 + $0x28] sm:$0xff]
  %v6427 = vld [vmem:[%s17 + $0x30] sm:$0xff]
  %v6428 = vld [vmem:[%s17 + $0x38] sm:$0xff]
  %v6429 = vld [vmem:[%s17 + $0x40] sm:$0xff]
  %v6430 = vld [vmem:[%s17 + $0x48] sm:$0xff]
  %v6431 = vld [vmem:[%s17 + $0x50] sm:$0xff]
  %v6432 = vld [vmem:[%s17 + $0x58] sm:$0xff]
  %v6433 = vld [vmem:[%s17 + $0x60] sm:$0xff]
  %v6434 = vld [vmem:[%s17 + $0x68] sm:$0xff]
  %v6435 = vld [vmem:[%s17 + $0x70] sm:$0xff]
  %v6436 = vld [vmem:[%s17 + $0x78] sm:$0xff]
  %v6437 = vld [vmem:[%s17 + $0x80] sm:$0xff]
  %v6438 = vld [vmem:[%s17 + $0x88] sm:$0xff]
  %v6439 = vld [vmem:[%s17 + $0x90] sm:$0xff]
  %v6440 = vld [vmem:[%s17 + $0x98] sm:$0xff]
  %v6441 = vld [vmem:[%s17 + $0xa0] sm:$0xff]
  %v6442 = vld [vmem:[%s17 + $0xa8] sm:$0xff]
  %v6443 = vld [vmem:[%s17 + $0xb0] sm:$0xff]
  %v6444 = vld [vmem:[%s17 + $0xb8] sm:$0xff]
  %v6445 = vld [vmem:[%s17 + $0xc0] sm:$0xff]
  %v6446 = vld [vmem:[%s17 + $0xc8] sm:$0xff]
  %v6447 = vld [vmem:[%s17 + $0xd0] sm:$0xff]
  %v6448 = vld [vmem:[%s17 + $0xd8] sm:$0xff]
  %v6449 = vld [vmem:[%s17 + $0xe0] sm:$0xff]
  %v6450 = vld [vmem:[%s17 + $0xe8] sm:$0xff]
  %v6451 = vld [vmem:[%s17 + $0xf0] sm:$0xff]
  %v6452 = vld [vmem:[%s17 + $0xf8] sm:$0xff]
  %v6453 = vld [vmem:[%s17 + $0x100] sm:$0xff]
  %v6454 = vld [vmem:[%s17 + $0x108] sm:$0xff]
  %v6455 = vld [vmem:[%s17 + $0x110] sm:$0xff]
  %v6456 = vld [vmem:[%s17 + $0x118] sm:$0xff]
  %v6457 = vld [vmem:[%s17 + $0x120] sm:$0xff]
  %v6458 = vld [vmem:[%s17 + $0x128] sm:$0xff]
  %v6459 = vld [vmem:[%s17 + $0x130] sm:$0xff]
  %v6460 = vld [vmem:[%s17 + $0x138] sm:$0xff]
  %v6461 = vld [vmem:[%s17 + $0x140] sm:$0xff]
  %v6462 = vld [vmem:[%s17 + $0x148] sm:$0xff]
  %v6463 = vld [vmem:[%s17 + $0x150] sm:$0xff]
  %v6464 = vld [vmem:[%s17 + $0x158] sm:$0xff]
  %v6465 = vld [vmem:[%s17 + $0x160] sm:$0xff]
  %v6466 = vld [vmem:[%s17 + $0x168] sm:$0xff]
  %v6467 = vld [vmem:[%s17 + $0x170] sm:$0xff]
  %v6468 = vld [vmem:[%s17 + $0x178] sm:$0xff]
  %v6469 = vld [vmem:[%s17 + $0x180] sm:$0xff]
  %v6470 = vld [vmem:[%s17 + $0x188] sm:$0xff]
  %v6471 = vld [vmem:[%s17 + $0x190] sm:$0xff]
  %v6472 = vld [vmem:[%s17 + $0x198] sm:$0xff]
  %v6473 = vld [vmem:[%s17 + $0x1a0] sm:$0xff]
  %v6474 = vld [vmem:[%s17 + $0x1a8] sm:$0xff]
  %v6475 = vld [vmem:[%s17 + $0x1b0] sm:$0xff]
  %v6476 = vld [vmem:[%s17 + $0x1b8] sm:$0xff]
  %v6477 = vld [vmem:[%s17 + $0x1c0] sm:$0xff]
  %v6478 = vld [vmem:[%s17 + $0x1c8] sm:$0xff]
  %v6479 = vld [vmem:[%s17 + $0x1d0] sm:$0xff]
  %v6480 = vld [vmem:[%s17 + $0x1d8] sm:$0xff]
  %v6481 = vld [vmem:[%s17 + $0x1e0] sm:$0xff]
  %v6482 = vld [vmem:[%s17 + $0x1e8] sm:$0xff]
  %v6483 = vld [vmem:[%s17 + $0x1f0] sm:$0xff]
  %v6484 = vld [vmem:[%s17 + $0x1f8] sm:$0xff]
  %v6485 = vld [vmem:[%s17 + $0x200] sm:$0xff]
  %v6486 = vld [vmem:[%s17 + $0x208] sm:$0xff]
  %v6487 = vld [vmem:[%s17 + $0x210] sm:$0xff]
  %v6488 = vld [vmem:[%s17 + $0x218] sm:$0xff]
  %v6489 = vld [vmem:[%s17 + $0x220] sm:$0xff]
  %v6490 = vld [vmem:[%s17 + $0x228] sm:$0xff]
  %v6491 = vld [vmem:[%s17 + $0x230] sm:$0xff]
  %v6492 = vld [vmem:[%s17 + $0x238] sm:$0xff]
  %6493 = vmatprep.subr.mxu0 0.0
  %6494 = vmatpush1.msra.mxu0 %v6373
  %6495 = vmatprep.subr.mxu0 0.0
  %6496 = vmatpush1.msra.mxu0 %v6374
  %6497 = vmatprep.subr.mxu0 0.0
  %6498 = vmatpush1.msra.mxu0 %v6375
  %6499 = vmatprep.subr.mxu0 0.0
  %6500 = vmatpush1.msra.mxu0 %v6376
  %6501 = vmatprep.subr.mxu0 0.0
  %6502 = vmatpush1.msra.mxu0 %v6377
  %6503 = vmatprep.subr.mxu0 0.0
  %6504 = vmatpush1.msra.mxu0 %v6378
  %6505 = vmatprep.subr.mxu0 0.0
  %6506 = vmatpush1.msra.mxu0 %v6379
  %6507 = vmatprep.subr.mxu0 0.0
  %6508 = vmatpush1.msra.mxu0 %v6380
  %6509 = vmatprep.subr.mxu0 0.0
  %6510 = vmatpush1.msra.mxu0 %v6381
  %6511 = vmatprep.subr.mxu0 0.0
  %6512 = vmatpush1.msra.mxu0 %v6382
  %6513 = vmatprep.subr.mxu0 0.0
  %6514 = vmatpush1.msra.mxu0 %v6383
  %6515 = vmatprep.subr.mxu0 0.0
  %6516 = vmatpush1.msra.mxu0 %v6384
  %6517 = vmatprep.subr.mxu0 0.0
  %6518 = vmatpush1.msra.mxu0 %v6385
  %6519 = vmatprep.subr.mxu0 0.0
  %6520 = vmatpush1.msra.mxu0 %v6386
  %6521 = vmatprep.subr.mxu0 0.0
  %6522 = vmatpush1.msra.mxu0 %v6387
  %6523 = vmatprep.subr.mxu0 0.0
  %6524 = vmatpush1.msra.mxu0 %v6388
  %6525 = vmatprep.subr.mxu0 0.0
  %6526 = vmatpush1.msra.mxu0 %v6389
  %6527 = vmatprep.subr.mxu0 0.0
  %6528 = vmatpush1.msra.mxu0 %v6390
  %6529 = vmatprep.subr.mxu0 0.0
  %6530 = vmatpush1.msra.mxu0 %v6391
  %6531 = vmatprep.subr.mxu0 0.0
  %6532 = vmatpush1.msra.mxu0 %v6392
  %6533 = vmatprep.subr.mxu0 0.0
  %6534 = vmatpush1.msra.mxu0 %v6393
  %6535 = vmatprep.subr.mxu0 0.0
  %6536 = vmatpush1.msra.mxu0 %v6394
  %6537 = vmatprep.subr.mxu0 0.0
  %6538 = vmatpush1.msra.mxu0 %v6395
  %6539 = vmatprep.subr.mxu0 0.0
  %6540 = vmatpush1.msra.mxu0 %v6396
  %6541 = vmatprep.subr.mxu0 0.0
  %6542 = vmatpush1.msra.mxu0 %v6397
  %6543 = vmatprep.subr.mxu0 0.0
  %6544 = vmatpush1.msra.mxu0 %v6398
  %6545 = vmatprep.subr.mxu0 0.0
  %6546 = vmatpush1.msra.mxu0 %v6399
  %6547 = vmatprep.subr.mxu0 0.0
  %6548 = vmatpush1.msra.mxu0 %v6400
  %6549 = vmatprep.subr.mxu0 0.0
  %6550 = vmatpush1.msra.mxu0 %v6401
  %6551 = vmatprep.subr.mxu0 0.0
  %6552 = vmatpush1.msra.mxu0 %v6402
  %6553 = vmatprep.subr.mxu0 0.0
  %6554 = vmatpush1.msra.mxu0 %v6403
  %6555 = vmatprep.subr.mxu0 0.0
  %6556 = vmatpush1.msra.mxu0 %v6404
  %6557 = vmatprep.mubr.f32.mxu0 %v6422
  %6558 = vmatmul.mubr.f32.gmra.mrb[0].mxu0 %v6421
  %v6559 = vpop.f32.mrb[0].mxu0
  %v6560 = vadd.f32 0.0, %v6559
  %v6561 = vpop.f32.mrb[0].mxu0
  %6562 = vmatprep.mubr.f32.mxu0 %v6425
  %6563 = vmatmul.mubr.f32.gmra.mrb[0].mxu0 %v6424
  %v6564 = vpop.f32.mrb[0].mxu0
  %v6565 = vadd.f32 0.0, %v6564
  %v6566 = vpop.f32.mrb[0].mxu0
  %6567 = vmatprep.mubr.f32.mxu0 %v6428
  %6568 = vmatmul.mubr.f32.gmra.mrb[0].mxu0 %v6427
  %v6569 = vpop.f32.mrb[0].mxu0
  %v6570 = vadd.f32 0.0, %v6569
  %v6571 = vpop.f32.mrb[0].mxu0
  %6572 = vmatprep.mubr.f32.mxu0 %v6431
  %6573 = vmatmul.mubr.f32.gmra.mrb[0].mxu0 %v6430
  %v6574 = vpop.f32.mrb[0].mxu0
  %v6575 = vadd.f32 0.0, %v6574
  %v6576 = vpop.f32.mrb[0].mxu0
  %6577 = vmatprep.mubr.f32.mxu0 %v6434
  %6578 = vmatmul.mubr.f32.gmra.mrb[0].mxu0 %v6433
  %v6579 = vpop.f32.mrb[0].mxu0
  %v6580 = vadd.f32 0.0, %v6579
  %v6581 = vpop.f32.mrb[0].mxu0
  %6582 = vmatprep.mubr.f32.mxu0 %v6437
  %6583 = vmatmul.mubr.f32.gmra.mrb[0].mxu0 %v6436
  %v6584 = vpop.f32.mrb[0].mxu0
  %v6585 = vadd.f32 0.0, %v6584
  %v6586 = vpop.f32.mrb[0].mxu0
  %6587 = vmatprep.mubr.f32.mxu0 %v6440
  %6588 = vmatmul.mubr.f32.gmra.mrb[0].mxu0 %v6439
  %v6589 = vpop.f32.mrb[0].mxu0
  %v6590 = vadd.f32 0.0, %v6589
  %v6591 = vpop.f32.mrb[0].mxu0
  %6592 = vmatprep.mubr.f32.mxu0 %v6443
  %6593 = vmatmul.mubr.f32.gmra.mrb[0].mxu0 %v6442
  %v6594 = vpop.f32.mrb[0].mxu0
  %v6595 = vadd.f32 0.0, %v6594
  %v6596 = vpop.f32.mrb[0].mxu0
  %6597 = vmatprep.mubr.f32.mxu0 %v6446
  %6598 = vmatmul.mubr.f32.gmra.mrb[0].mxu0 %v6445
  %v6599 = vpop.f32.mrb[0].mxu0
  %v6600 = vadd.f32 0.0, %v6599
  %v6601 = vpop.f32.mrb[0].mxu0
  %6602 = vmatprep.mubr.f32.mxu0 %v6449
  %6603 = vmatmul.mubr.f32.gmra.mrb[0].mxu0 %v6448
  %v6604 = vpop.f32.mrb[0].mxu0
  %v6605 = vadd.f32 0.0, %v6604
  %v6606 = vpop.f32.mrb[0].mxu0
  %6607 = vmatprep.mubr.f32.mxu0 %v6452
  %6608 = vmatmul.mubr.f32.gmra.mrb[0].mxu0 %v6451
  %v6609 = vpop.f32.mrb[0].mxu0
  %v6610 = vadd.f32 0.0, %v6609
  %v6611 = vpop.f32.mrb[0].mxu0
  %6612 = vmatprep.mubr.f32.mxu0 %v6455
  %6613 = vmatmul.mubr.f32.gmra.mrb[0].mxu0 %v6454
  %v6614 = vpop.f32.mrb[0].mxu0
  %v6615 = vadd.f32 0.0, %v6614
  %v6616 = vpop.f32.mrb[0].mxu0
  %6617 = vmatprep.mubr.f32.mxu0 %v6458
  %6618 = vmatmul.mubr.f32.gmra.mrb[0].mxu0 %v6457
  %v6619 = vpop.f32.mrb[0].mxu0
  %v6620 = vadd.f32 0.0, %v6619
  %v6621 = vpop.f32.mrb[0].mxu0
  %6622 = vmatprep.mubr.f32.mxu0 %v6461
  %6623 = vmatmul.mubr.f32.gmra.mrb[0].mxu0 %v6460
  %v6624 = vpop.f32.mrb[0].mxu0
  %v6625 = vadd.f32 0.0, %v6624
  %v6626 = vpop.f32.mrb[0].mxu0
  %6627 = vmatprep.mubr.f32.mxu0 %v6464
  %6628 = vmatmul.mubr.f32.gmra.mrb[0].mxu0 %v6463
  %v6629 = vpop.f32.mrb[0].mxu0
  %v6630 = vadd.f32 0.0, %v6629
  %v6631 = vpop.f32.mrb[0].mxu0
  %6632 = vmatprep.mubr.f32.mxu0 %v6467
  %6633 = vmatmul.mubr.f32.gmra.mrb[0].mxu0 %v6466
  %v6634 = vpop.f32.mrb[0].mxu0
  %v6635 = vadd.f32 0.0, %v6634
  %v6636 = vpop.f32.mrb[0].mxu0
  %6637 = vmatprep.mubr.f32.mxu0 %v6470
  %6638 = vmatmul.mubr.f32.gmra.mrb[0].mxu0 %v6469
  %v6639 = vpop.f32.mrb[0].mxu0
  %v6640 = vadd.f32 0.0, %v6639
  %v6641 = vpop.f32.mrb[0].mxu0
  %6642 = vmatprep.mubr.f32.mxu0 %v6473
  %6643 = vmatmul.mubr.f32.gmra.mrb[0].mxu0 %v6472
  %v6644 = vpop.f32.mrb[0].mxu0
  %v6645 = vadd.f32 0.0, %v6644
  %v6646 = vpop.f32.mrb[0].mxu0
  %6647 = vmatprep.mubr.f32.mxu0 %v6476
  %6648 = vmatmul.mubr.f32.gmra.mrb[0].mxu0 %v6475
  %v6649 = vpop.f32.mrb[0].mxu0
  %v6650 = vadd.f32 0.0, %v6649
  %v6651 = vpop.f32.mrb[0].mxu0
  %6652 = vmatprep.mubr.f32.mxu0 %v6479
  %6653 = vmatmul.mubr.f32.gmra.mrb[0].mxu0 %v6478
  %v6654 = vpop.f32.mrb[0].mxu0
  %v6655 = vadd.f32 0.0, %v6654
  %v6656 = vpop.f32.mrb[0].mxu0
  %6657 = vmatprep.mubr.f32.mxu0 %v6482
  %6658 = vmatmul.mubr.f32.gmra.mrb[0].mxu0 %v6481
  %v6659 = vpop.f32.mrb[0].mxu0
  %v6660 = vadd.f32 0.0, %v6659
  %v6661 = vpop.f32.mrb[0].mxu0
  %6662 = vmatprep.mubr.f32.mxu0 %v6485
  %6663 = vmatmul.mubr.f32.gmra.mrb[0].mxu0 %v6484
  %v6664 = vpop.f32.mrb[0].mxu0
  %v6665 = vadd.f32 0.0, %v6664
  %v6666 = vpop.f32.mrb[0].mxu0
  %6667 = vmatprep.mubr.f32.mxu0 %v6488
  %6668 = vmatmul.mubr.f32.gmra.mrb[0].mxu0 %v6487
  %v6669 = vpop.f32.mrb[0].mxu0
  %v6670 = vadd.f32 0.0, %v6669
  %v6671 = vpop.f32.mrb[0].mxu0
  %6672 = vmatprep.mubr.f32.mxu0 %v6491
  %6673 = vmatmul.mubr.f32.gmra.mrb[0].mxu0 %v6490
  %v6674 = vpop.f32.mrb[0].mxu0
  %v6675 = vadd.f32 0.0, %v6674
  %v6676 = vpop.f32.mrb[0].mxu0
  %6677 = vdwg.mxu0
  %6678 = vmatprep.subr.mxu0 0.0
  %6679 = vmatpush1.msra.mxu0 %v6405
  %6680 = vmatprep.subr.mxu0 0.0
  %6681 = vmatpush1.msra.mxu0 %v6406
  %6682 = vmatprep.subr.mxu0 0.0
  %6683 = vmatpush1.msra.mxu0 %v6407
  %6684 = vmatprep.subr.mxu0 0.0
  %6685 = vmatpush1.msra.mxu0 %v6408
  %6686 = vmatprep.subr.mxu0 0.0
  %6687 = vmatpush1.msra.mxu0 %v6409
  %6688 = vmatprep.subr.mxu0 0.0
  %6689 = vmatpush1.msra.mxu0 %v6410
  %6690 = vmatprep.subr.mxu0 0.0
  %6691 = vmatpush1.msra.mxu0 %v6411
  %6692 = vmatprep.subr.mxu0 0.0
  %6693 = vmatpush1.msra.mxu0 %v6412
  %6694 = vmatprep.subr.mxu0 0.0
  %6695 = vmatpush1.msra.mxu0 %v6413
  %6696 = vmatprep.subr.mxu0 0.0
  %6697 = vmatpush1.msra.mxu0 %v6414
  %6698 = vmatprep.subr.mxu0 0.0
  %6699 = vmatpush1.msra.mxu0 %v6415
  %6700 = vmatprep.subr.mxu0 0.0
  %6701 = vmatpush1.msra.mxu0 %v6416
  %6702 = vmatprep.subr.mxu0 0.0
  %6703 = vmatpush1.msra.mxu0 %v6417
  %6704 = vmatprep.subr.mxu0 0.0
  %6705 = vmatpush1.msra.mxu0 %v6418
  %6706 = vmatprep.subr.mxu0 0.0
  %6707 = vmatpush1.msra.mxu0 %v6419
  %6708 = vmatprep.subr.mxu0 0.0
  %6709 = vmatpush1.msra.mxu0 %v6420
  %6710 = vmatprep.subr.mxu0 0.0
  %6711 = vmatpush1.msra.mxu0 0.0
  %6712 = vmatprep.subr.mxu0 0.0
  %6713 = vmatpush1.msra.mxu0 0.0
  %6714 = vmatprep.subr.mxu0 0.0
  %6715 = vmatpush1.msra.mxu0 0.0
  %6716 = vmatprep.subr.mxu0 0.0
  %6717 = vmatpush1.msra.mxu0 0.0
  %6718 = vmatprep.subr.mxu0 0.0
  %6719 = vmatpush1.msra.mxu0 0.0
  %6720 = vmatprep.subr.mxu0 0.0
  %6721 = vmatpush1.msra.mxu0 0.0
  %6722 = vmatprep.subr.mxu0 0.0
  %6723 = vmatpush1.msra.mxu0 0.0
  %6724 = vmatprep.subr.mxu0 0.0
  %6725 = vmatpush1.msra.mxu0 0.0
  %6726 = vmatprep.subr.mxu0 0.0
  %6727 = vmatpush1.msra.mxu0 0.0
  %6728 = vmatprep.subr.mxu0 0.0
  %6729 = vmatpush1.msra.mxu0 0.0
  %6730 = vmatprep.subr.mxu0 0.0
  %6731 = vmatpush1.msra.mxu0 0.0
  %6732 = vmatprep.subr.mxu0 0.0
  %6733 = vmatpush1.msra.mxu0 0.0
  %6734 = vmatprep.subr.mxu0 0.0
  %6735 = vmatpush1.msra.mxu0 0.0
  %6736 = vmatprep.subr.mxu0 0.0
  %6737 = vmatpush1.msra.mxu0 0.0
  %6738 = vmatprep.subr.mxu0 0.0
  %6739 = vmatpush1.msra.mxu0 0.0
  %6740 = vmatprep.subr.mxu0 0.0
  %6741 = vmatpush1.msra.mxu0 0.0
  %6742 = vmatprep.mubr.f32.mxu0 0.0
  %6743 = vmatmul.mubr.f32.gmra.mrb[0].mxu0 %v6423
  %v6744 = vpop.f32.mrb[0].mxu0
  %v6745 = vadd.f32 %v6560, %v6744
  %v6746 = vpop.f32.mrb[0].mxu0
  %6747 = vmatprep.mubr.f32.mxu0 0.0
  %6748 = vmatmul.mubr.f32.gmra.mrb[0].mxu0 %v6426
  %v6749 = vpop.f32.mrb[0].mxu0
  %v6750 = vadd.f32 %v6565, %v6749
  %v6751 = vpop.f32.mrb[0].mxu0
  %6752 = vmatprep.mubr.f32.mxu0 0.0
  %6753 = vmatmul.mubr.f32.gmra.mrb[0].mxu0 %v6429
  %v6754 = vpop.f32.mrb[0].mxu0
  %v6755 = vadd.f32 %v6570, %v6754
  %v6756 = vpop.f32.mrb[0].mxu0
  %6757 = vmatprep.mubr.f32.mxu0 0.0
  %6758 = vmatmul.mubr.f32.gmra.mrb[0].mxu0 %v6432
  %v6759 = vpop.f32.mrb[0].mxu0
  %v6760 = vadd.f32 %v6575, %v6759
  %v6761 = vpop.f32.mrb[0].mxu0
  %6762 = vmatprep.mubr.f32.mxu0 0.0
  %6763 = vmatmul.mubr.f32.gmra.mrb[0].mxu0 %v6435
  %v6764 = vpop.f32.mrb[0].mxu0
  %v6765 = vadd.f32 %v6580, %v6764
  %v6766 = vpop.f32.mrb[0].mxu0
  %6767 = vmatprep.mubr.f32.mxu0 0.0
  %6768 = vmatmul.mubr.f32.gmra.mrb[0].mxu0 %v6438
  %v6769 = vpop.f32.mrb[0].mxu0
  %v6770 = vadd.f32 %v6585, %v6769
  %v6771 = vpop.f32.mrb[0].mxu0
  %6772 = vmatprep.mubr.f32.mxu0 0.0
  %6773 = vmatmul.mubr.f32.gmra.mrb[0].mxu0 %v6441
  %v6774 = vpop.f32.mrb[0].mxu0
  %v6775 = vadd.f32 %v6590, %v6774
  %v6776 = vpop.f32.mrb[0].mxu0
  %6777 = vmatprep.mubr.f32.mxu0 0.0
  %6778 = vmatmul.mubr.f32.gmra.mrb[0].mxu0 %v6444
  %v6779 = vpop.f32.mrb[0].mxu0
  %v6780 = vadd.f32 %v6595, %v6779
  %v6781 = vpop.f32.mrb[0].mxu0
  %6782 = vmatprep.mubr.f32.mxu0 0.0
  %6783 = vmatmul.mubr.f32.gmra.mrb[0].mxu0 %v6447
  %v6784 = vpop.f32.mrb[0].mxu0
  %v6785 = vadd.f32 %v6600, %v6784
  %v6786 = vpop.f32.mrb[0].mxu0
  %6787 = vmatprep.mubr.f32.mxu0 0.0
  %6788 = vmatmul.mubr.f32.gmra.mrb[0].mxu0 %v6450
  %v6789 = vpop.f32.mrb[0].mxu0
  %v6790 = vadd.f32 %v6605, %v6789
  %v6791 = vpop.f32.mrb[0].mxu0
  %6792 = vmatprep.mubr.f32.mxu0 0.0
  %6793 = vmatmul.mubr.f32.gmra.mrb[0].mxu0 %v6453
  %v6794 = vpop.f32.mrb[0].mxu0
  %v6795 = vadd.f32 %v6610, %v6794
  %v6796 = vpop.f32.mrb[0].mxu0
  %6797 = vmatprep.mubr.f32.mxu0 0.0
  %6798 = vmatmul.mubr.f32.gmra.mrb[0].mxu0 %v6456
  %v6799 = vpop.f32.mrb[0].mxu0
  %v6800 = vadd.f32 %v6615, %v6799
  %v6801 = vpop.f32.mrb[0].mxu0
  %6802 = vmatprep.mubr.f32.mxu0 0.0
  %6803 = vmatmul.mubr.f32.gmra.mrb[0].mxu0 %v6459
  %v6804 = vpop.f32.mrb[0].mxu0
  %v6805 = vadd.f32 %v6620, %v6804
  %v6806 = vpop.f32.mrb[0].mxu0
  %6807 = vmatprep.mubr.f32.mxu0 0.0
  %6808 = vmatmul.mubr.f32.gmra.mrb[0].mxu0 %v6462
  %v6809 = vpop.f32.mrb[0].mxu0
  %v6810 = vadd.f32 %v6625, %v6809
  %v6811 = vpop.f32.mrb[0].mxu0
  %6812 = vmatprep.mubr.f32.mxu0 0.0
  %6813 = vmatmul.mubr.f32.gmra.mrb[0].mxu0 %v6465
  %v6814 = vpop.f32.mrb[0].mxu0
  %v6815 = vadd.f32 %v6630, %v6814
  %v6816 = vpop.f32.mrb[0].mxu0
  %6817 = vmatprep.mubr.f32.mxu0 0.0
  %6818 = vmatmul.mubr.f32.gmra.mrb[0].mxu0 %v6468
  %v6819 = vpop.f32.mrb[0].mxu0
  %v6820 = vadd.f32 %v6635, %v6819
  %v6821 = vpop.f32.mrb[0].mxu0
  %6822 = vmatprep.mubr.f32.mxu0 0.0
  %6823 = vmatmul.mubr.f32.gmra.mrb[0].mxu0 %v6471
  %v6824 = vpop.f32.mrb[0].mxu0
  %v6825 = vadd.f32 %v6640, %v6824
  %v6826 = vpop.f32.mrb[0].mxu0
  %6827 = vmatprep.mubr.f32.mxu0 0.0
  %6828 = vmatmul.mubr.f32.gmra.mrb[0].mxu0 %v6474
  %v6829 = vpop.f32.mrb[0].mxu0
  %v6830 = vadd.f32 %v6645, %v6829
  %v6831 = vpop.f32.mrb[0].mxu0
  %6832 = vmatprep.mubr.f32.mxu0 0.0
  %6833 = vmatmul.mubr.f32.gmra.mrb[0].mxu0 %v6477
  %v6834 = vpop.f32.mrb[0].mxu0
  %v6835 = vadd.f32 %v6650, %v6834
  %v6836 = vpop.f32.mrb[0].mxu0
  %6837 = vmatprep.mubr.f32.mxu0 0.0
  %6838 = vmatmul.mubr.f32.gmra.mrb[0].mxu0 %v6480
  %v6839 = vpop.f32.mrb[0].mxu0
  %v6840 = vadd.f32 %v6655, %v6839
  %v6841 = vpop.f32.mrb[0].mxu0
  %6842 = vmatprep.mubr.f32.mxu0 0.0
  %6843 = vmatmul.mubr.f32.gmra.mrb[0].mxu0 %v6483
  %v6844 = vpop.f32.mrb[0].mxu0
  %v6845 = vadd.f32 %v6660, %v6844
  %v6846 = vpop.f32.mrb[0].mxu0
  %6847 = vmatprep.mubr.f32.mxu0 0.0
  %6848 = vmatmul.mubr.f32.gmra.mrb[0].mxu0 %v6486
  %v6849 = vpop.f32.mrb[0].mxu0
  %v6850 = vadd.f32 %v6665, %v6849
  %v6851 = vpop.f32.mrb[0].mxu0
  %6852 = vmatprep.mubr.f32.mxu0 0.0
  %6853 = vmatmul.mubr.f32.gmra.mrb[0].mxu0 %v6489
  %v6854 = vpop.f32.mrb[0].mxu0
  %v6855 = vadd.f32 %v6670, %v6854
  %v6856 = vpop.f32.mrb[0].mxu0
  %6857 = vmatprep.mubr.f32.mxu0 0.0
  %6858 = vmatmul.mubr.f32.gmra.mrb[0].mxu0 %v6492
  %v6859 = vpop.f32.mrb[0].mxu0
  %v6860 = vadd.f32 %v6675, %v6859
  %v6861 = vpop.f32.mrb[0].mxu0
  %6862 = vdwg.mxu0
  %v6863 = vld [vmem:[%s18] sm:$0xff]
  %v6864 = vld [vmem:[%s18 + $0x8] sm:$0xff]
  %v6865 = vld [vmem:[%s18 + $0x10] sm:$0xff]
  %v6866 = vld [vmem:[%s18 + $0x18] sm:$0xff]
  %v6867 = vld [vmem:[%s18 + $0x20] sm:$0xff]
  %v6868 = vld [vmem:[%s18 + $0x28] sm:$0xff]
  %v6869 = vld [vmem:[%s18 + $0x30] sm:$0xff]
  %v6870 = vld [vmem:[%s18 + $0x38] sm:$0xff]
  %v6871 = vld [vmem:[%s18 + $0x40] sm:$0xff]
  %v6872 = vld [vmem:[%s18 + $0x48] sm:$0xff]
  %v6873 = vld [vmem:[%s18 + $0x50] sm:$0xff]
  %v6874 = vld [vmem:[%s18 + $0x58] sm:$0xff]
  %v6875 = vld [vmem:[%s18 + $0x60] sm:$0xff]
  %v6876 = vld [vmem:[%s18 + $0x68] sm:$0xff]
  %v6877 = vld [vmem:[%s18 + $0x70] sm:$0xff]
  %v6878 = vld [vmem:[%s18 + $0x78] sm:$0xff]
  %v6879 = vld [vmem:[%s18 + $0x80] sm:$0xff]
  %v6880 = vld [vmem:[%s18 + $0x88] sm:$0xff]
  %v6881 = vld [vmem:[%s18 + $0x90] sm:$0xff]
  %v6882 = vld [vmem:[%s18 + $0x98] sm:$0xff]
  %v6883 = vld [vmem:[%s18 + $0xa0] sm:$0xff]
  %v6884 = vld [vmem:[%s18 + $0xa8] sm:$0xff]
  %v6885 = vld [vmem:[%s18 + $0xb0] sm:$0xff]
  %v6886 = vld [vmem:[%s18 + $0xb8] sm:$0xff]
  %v6887 = vld [vmem:[%s18 + $0xc0] sm:$0xff]
  %v6888 = vld [vmem:[%s18 + $0xc8] sm:$0xff]
  %v6889 = vld [vmem:[%s18 + $0xd0] sm:$0xff]
  %v6890 = vld [vmem:[%s18 + $0xd8] sm:$0xff]
  %v6891 = vld [vmem:[%s18 + $0xe0] sm:$0xff]
  %v6892 = vld [vmem:[%s18 + $0xe8] sm:$0xff]
  %v6893 = vld [vmem:[%s18 + $0xf0] sm:$0xff]
  %v6894 = vld [vmem:[%s18 + $0xf8] sm:$0xff]
  %v6895 = vld [vmem:[%s18 + $0x100] sm:$0xff]
  %v6896 = vld [vmem:[%s18 + $0x108] sm:$0xff]
  %v6897 = vld [vmem:[%s18 + $0x110] sm:$0xff]
  %v6898 = vld [vmem:[%s18 + $0x118] sm:$0xff]
  %v6899 = vld [vmem:[%s18 + $0x120] sm:$0xff]
  %v6900 = vld [vmem:[%s18 + $0x128] sm:$0xff]
  %v6901 = vld [vmem:[%s18 + $0x130] sm:$0xff]
  %v6902 = vld [vmem:[%s18 + $0x138] sm:$0xff]
  %v6903 = vld [vmem:[%s18 + $0x140] sm:$0xff]
  %v6904 = vld [vmem:[%s18 + $0x148] sm:$0xff]
  %v6905 = vld [vmem:[%s18 + $0x150] sm:$0xff]
  %v6906 = vld [vmem:[%s18 + $0x158] sm:$0xff]
  %v6907 = vld [vmem:[%s18 + $0x160] sm:$0xff]
  %v6908 = vld [vmem:[%s18 + $0x168] sm:$0xff]
  %v6909 = vld [vmem:[%s18 + $0x170] sm:$0xff]
  %v6910 = vld [vmem:[%s18 + $0x178] sm:$0xff]
  %v6911 = vld [vmem:[%s18 + $0x180] sm:$0xff]
  %v6912 = vld [vmem:[%s18 + $0x188] sm:$0xff]
  %v6913 = vld [vmem:[%s18 + $0x190] sm:$0xff]
  %v6914 = vld [vmem:[%s18 + $0x198] sm:$0xff]
  %v6915 = vld [vmem:[%s18 + $0x1a0] sm:$0xff]
  %v6916 = vld [vmem:[%s18 + $0x1a8] sm:$0xff]
  %v6917 = vld [vmem:[%s18 + $0x1b0] sm:$0xff]
  %v6918 = vld [vmem:[%s18 + $0x1b8] sm:$0xff]
  %v6919 = vld [vmem:[%s18 + $0x1c0] sm:$0xff]
  %v6920 = vld [vmem:[%s18 + $0x1c8] sm:$0xff]
  %v6921 = vld [vmem:[%s18 + $0x1d0] sm:$0xff]
  %v6922 = vld [vmem:[%s18 + $0x1d8] sm:$0xff]
  %v6923 = vld [vmem:[%s18 + $0x1e0] sm:$0xff]
  %v6924 = vld [vmem:[%s18 + $0x1e8] sm:$0xff]
  %v6925 = vld [vmem:[%s18 + $0x1f0] sm:$0xff]
  %v6926 = vld [vmem:[%s18 + $0x1f8] sm:$0xff]
  %v6927 = vld [vmem:[%s18 + $0x200] sm:$0xff]
  %v6928 = vld [vmem:[%s18 + $0x208] sm:$0xff]
  %v6929 = vld [vmem:[%s18 + $0x210] sm:$0xff]
  %v6930 = vld [vmem:[%s18 + $0x218] sm:$0xff]
  %v6931 = vld [vmem:[%s18 + $0x220] sm:$0xff]
  %v6932 = vld [vmem:[%s18 + $0x228] sm:$0xff]
  %v6933 = vld [vmem:[%s18 + $0x230] sm:$0xff]
  %v6934 = vld [vmem:[%s18 + $0x238] sm:$0xff]
  %6935 = vmatprep.subr.mxu0 0.0
  %6936 = vmatpush1.msra.mxu0 %v6373
  %6937 = vmatprep.subr.mxu0 0.0
  %6938 = vmatpush1.msra.mxu0 %v6374
  %6939 = vmatprep.subr.mxu0 0.0
  %6940 = vmatpush1.msra.mxu0 %v6375
  %6941 = vmatprep.subr.mxu0 0.0
  %6942 = vmatpush1.msra.mxu0 %v6376
  %6943 = vmatprep.subr.mxu0 0.0
  %6944 = vmatpush1.msra.mxu0 %v6377
  %6945 = vmatprep.subr.mxu0 0.0
  %6946 = vmatpush1.msra.mxu0 %v6378
  %6947 = vmatprep.subr.mxu0 0.0
  %6948 = vmatpush1.msra.mxu0 %v6379
  %6949 = vmatprep.subr.mxu0 0.0
  %6950 = vmatpush1.msra.mxu0 %v6380
  %6951 = vmatprep.subr.mxu0 0.0
  %6952 = vmatpush1.msra.mxu0 %v6381
  %6953 = vmatprep.subr.mxu0 0.0
  %6954 = vmatpush1.msra.mxu0 %v6382
  %6955 = vmatprep.subr.mxu0 0.0
  %6956 = vmatpush1.msra.mxu0 %v6383
  %6957 = vmatprep.subr.mxu0 0.0
  %6958 = vmatpush1.msra.mxu0 %v6384
  %6959 = vmatprep.subr.mxu0 0.0
  %6960 = vmatpush1.msra.mxu0 %v6385
  %6961 = vmatprep.subr.mxu0 0.0
  %6962 = vmatpush1.msra.mxu0 %v6386
  %6963 = vmatprep.subr.mxu0 0.0
  %6964 = vmatpush1.msra.mxu0 %v6387
  %6965 = vmatprep.subr.mxu0 0.0
  %6966 = vmatpush1.msra.mxu0 %v6388
  %6967 = vmatprep.subr.mxu0 0.0
  %6968 = vmatpush1.msra.mxu0 %v6389
  %6969 = vmatprep.subr.mxu0 0.0
  %6970 = vmatpush1.msra.mxu0 %v6390
  %6971 = vmatprep.subr.mxu0 0.0
  %6972 = vmatpush1.msra.mxu0 %v6391
  %6973 = vmatprep.subr.mxu0 0.0
  %6974 = vmatpush1.msra.mxu0 %v6392
  %6975 = vmatprep.subr.mxu0 0.0
  %6976 = vmatpush1.msra.mxu0 %v6393
  %6977 = vmatprep.subr.mxu0 0.0
  %6978 = vmatpush1.msra.mxu0 %v6394
  %6979 = vmatprep.subr.mxu0 0.0
  %6980 = vmatpush1.msra.mxu0 %v6395
  %6981 = vmatprep.subr.mxu0 0.0
  %6982 = vmatpush1.msra.mxu0 %v6396
  %6983 = vmatprep.subr.mxu0 0.0
  %6984 = vmatpush1.msra.mxu0 %v6397
  %6985 = vmatprep.subr.mxu0 0.0
  %6986 = vmatpush1.msra.mxu0 %v6398
  %6987 = vmatprep.subr.mxu0 0.0
  %6988 = vmatpush1.msra.mxu0 %v6399
  %6989 = vmatprep.subr.mxu0 0.0
  %6990 = vmatpush1.msra.mxu0 %v6400
  %6991 = vmatprep.subr.mxu0 0.0
  %6992 = vmatpush1.msra.mxu0 %v6401
  %6993 = vmatprep.subr.mxu0 0.0
  %6994 = vmatpush1.msra.mxu0 %v6402
  %6995 = vmatprep.subr.mxu0 0.0
  %6996 = vmatpush1.msra.mxu0 %v6403
  %6997 = vmatprep.subr.mxu0 0.0
  %6998 = vmatpush1.msra.mxu0 %v6404
  %6999 = vmatprep.mubr.f32.mxu0 %v6864
  %7000 = vmatmul.mubr.f32.gmra.mrb[0].mxu0 %v6863
  %v7001 = vpop.f32.mrb[0].mxu0
  %v7002 = vadd.f32 0.0, %v7001
  %v7003 = vpop.f32.mrb[0].mxu0
  %7004 = vmatprep.mubr.f32.mxu0 %v6867
  %7005 = vmatmul.mubr.f32.gmra.mrb[0].mxu0 %v6866
  %v7006 = vpop.f32.mrb[0].mxu0
  %v7007 = vadd.f32 0.0, %v7006
  %v7008 = vpop.f32.mrb[0].mxu0
  %7009 = vmatprep.mubr.f32.mxu0 %v6870
  %7010 = vmatmul.mubr.f32.gmra.mrb[0].mxu0 %v6869
  %v7011 = vpop.f32.mrb[0].mxu0
  %v7012 = vadd.f32 0.0, %v7011
  %v7013 = vpop.f32.mrb[0].mxu0
  %7014 = vmatprep.mubr.f32.mxu0 %v6873
  %7015 = vmatmul.mubr.f32.gmra.mrb[0].mxu0 %v6872
  %v7016 = vpop.f32.mrb[0].mxu0
  %v7017 = vadd.f32 0.0, %v7016
  %v7018 = vpop.f32.mrb[0].mxu0
  %7019 = vmatprep.mubr.f32.mxu0 %v6876
  %7020 = vmatmul.mubr.f32.gmra.mrb[0].mxu0 %v6875
  %v7021 = vpop.f32.mrb[0].mxu0
  %v7022 = vadd.f32 0.0, %v7021
  %v7023 = vpop.f32.mrb[0].mxu0
  %7024 = vmatprep.mubr.f32.mxu0 %v6879
  %7025 = vmatmul.mubr.f32.gmra.mrb[0].mxu0 %v6878
  %v7026 = vpop.f32.mrb[0].mxu0
  %v7027 = vadd.f32 0.0, %v7026
  %v7028 = vpop.f32.mrb[0].mxu0
  %7029 = vmatprep.mubr.f32.mxu0 %v6882
  %7030 = vmatmul.mubr.f32.gmra.mrb[0].mxu0 %v6881
  %v7031 = vpop.f32.mrb[0].mxu0
  %v7032 = vadd.f32 0.0, %v7031
  %v7033 = vpop.f32.mrb[0].mxu0
  %7034 = vmatprep.mubr.f32.mxu0 %v6885
  %7035 = vmatmul.mubr.f32.gmra.mrb[0].mxu0 %v6884
  %v7036 = vpop.f32.mrb[0].mxu0
  %v7037 = vadd.f32 0.0, %v7036
  %v7038 = vpop.f32.mrb[0].mxu0
  %7039 = vmatprep.mubr.f32.mxu0 %v6888
  %7040 = vmatmul.mubr.f32.gmra.mrb[0].mxu0 %v6887
  %v7041 = vpop.f32.mrb[0].mxu0
  %v7042 = vadd.f32 0.0, %v7041
  %v7043 = vpop.f32.mrb[0].mxu0
  %7044 = vmatprep.mubr.f32.mxu0 %v6891
  %7045 = vmatmul.mubr.f32.gmra.mrb[0].mxu0 %v6890
  %v7046 = vpop.f32.mrb[0].mxu0
  %v7047 = vadd.f32 0.0, %v7046
  %v7048 = vpop.f32.mrb[0].mxu0
  %7049 = vmatprep.mubr.f32.mxu0 %v6894
  %7050 = vmatmul.mubr.f32.gmra.mrb[0].mxu0 %v6893
  %v7051 = vpop.f32.mrb[0].mxu0
  %v7052 = vadd.f32 0.0, %v7051
  %v7053 = vpop.f32.mrb[0].mxu0
  %7054 = vmatprep.mubr.f32.mxu0 %v6897
  %7055 = vmatmul.mubr.f32.gmra.mrb[0].mxu0 %v6896
  %v7056 = vpop.f32.mrb[0].mxu0
  %v7057 = vadd.f32 0.0, %v7056
  %v7058 = vpop.f32.mrb[0].mxu0
  %7059 = vmatprep.mubr.f32.mxu0 %v6900
  %7060 = vmatmul.mubr.f32.gmra.mrb[0].mxu0 %v6899
  %v7061 = vpop.f32.mrb[0].mxu0
  %v7062 = vadd.f32 0.0, %v7061
  %v7063 = vpop.f32.mrb[0].mxu0
  %7064 = vmatprep.mubr.f32.mxu0 %v6903
  %7065 = vmatmul.mubr.f32.gmra.mrb[0].mxu0 %v6902
  %v7066 = vpop.f32.mrb[0].mxu0
  %v7067 = vadd.f32 0.0, %v7066
  %v7068 = vpop.f32.mrb[0].mxu0
  %7069 = vmatprep.mubr.f32.mxu0 %v6906
  %7070 = vmatmul.mubr.f32.gmra.mrb[0].mxu0 %v6905
  %v7071 = vpop.f32.mrb[0].mxu0
  %v7072 = vadd.f32 0.0, %v7071
  %v7073 = vpop.f32.mrb[0].mxu0
  %7074 = vmatprep.mubr.f32.mxu0 %v6909
  %7075 = vmatmul.mubr.f32.gmra.mrb[0].mxu0 %v6908
  %v7076 = vpop.f32.mrb[0].mxu0
  %v7077 = vadd.f32 0.0, %v7076
  %v7078 = vpop.f32.mrb[0].mxu0
  %7079 = vmatprep.mubr.f32.mxu0 %v6912
  %7080 = vmatmul.mubr.f32.gmra.mrb[0].mxu0 %v6911
  %v7081 = vpop.f32.mrb[0].mxu0
  %v7082 = vadd.f32 0.0, %v7081
  %v7083 = vpop.f32.mrb[0].mxu0
  %7084 = vmatprep.mubr.f32.mxu0 %v6915
  %7085 = vmatmul.mubr.f32.gmra.mrb[0].mxu0 %v6914
  %v7086 = vpop.f32.mrb[0].mxu0
  %v7087 = vadd.f32 0.0, %v7086
  %v7088 = vpop.f32.mrb[0].mxu0
  %7089 = vmatprep.mubr.f32.mxu0 %v6918
  %7090 = vmatmul.mubr.f32.gmra.mrb[0].mxu0 %v6917
  %v7091 = vpop.f32.mrb[0].mxu0
  %v7092 = vadd.f32 0.0, %v7091
  %v7093 = vpop.f32.mrb[0].mxu0
  %7094 = vmatprep.mubr.f32.mxu0 %v6921
  %7095 = vmatmul.mubr.f32.gmra.mrb[0].mxu0 %v6920
  %v7096 = vpop.f32.mrb[0].mxu0
  %v7097 = vadd.f32 0.0, %v7096
  %v7098 = vpop.f32.mrb[0].mxu0
  %7099 = vmatprep.mubr.f32.mxu0 %v6924
  %7100 = vmatmul.mubr.f32.gmra.mrb[0].mxu0 %v6923
  %v7101 = vpop.f32.mrb[0].mxu0
  %v7102 = vadd.f32 0.0, %v7101
  %v7103 = vpop.f32.mrb[0].mxu0
  %7104 = vmatprep.mubr.f32.mxu0 %v6927
  %7105 = vmatmul.mubr.f32.gmra.mrb[0].mxu0 %v6926
  %v7106 = vpop.f32.mrb[0].mxu0
  %v7107 = vadd.f32 0.0, %v7106
  %v7108 = vpop.f32.mrb[0].mxu0
  %7109 = vmatprep.mubr.f32.mxu0 %v6930
  %7110 = vmatmul.mubr.f32.gmra.mrb[0].mxu0 %v6929
  %v7111 = vpop.f32.mrb[0].mxu0
  %v7112 = vadd.f32 0.0, %v7111
  %v7113 = vpop.f32.mrb[0].mxu0
  %7114 = vmatprep.mubr.f32.mxu0 %v6933
  %7115 = vmatmul.mubr.f32.gmra.mrb[0].mxu0 %v6932
  %v7116 = vpop.f32.mrb[0].mxu0
  %v7117 = vadd.f32 0.0, %v7116
  %v7118 = vpop.f32.mrb[0].mxu0
  %7119 = vdwg.mxu0
  %7120 = vmatprep.subr.mxu0 0.0
  %7121 = vmatpush1.msra.mxu0 %v6405
  %7122 = vmatprep.subr.mxu0 0.0
  %7123 = vmatpush1.msra.mxu0 %v6406
  %7124 = vmatprep.subr.mxu0 0.0
  %7125 = vmatpush1.msra.mxu0 %v6407
  %7126 = vmatprep.subr.mxu0 0.0
  %7127 = vmatpush1.msra.mxu0 %v6408
  %7128 = vmatprep.subr.mxu0 0.0
  %7129 = vmatpush1.msra.mxu0 %v6409
  %7130 = vmatprep.subr.mxu0 0.0
  %7131 = vmatpush1.msra.mxu0 %v6410
  %7132 = vmatprep.subr.mxu0 0.0
  %7133 = vmatpush1.msra.mxu0 %v6411
  %7134 = vmatprep.subr.mxu0 0.0
  %7135 = vmatpush1.msra.mxu0 %v6412
  %7136 = vmatprep.subr.mxu0 0.0
  %7137 = vmatpush1.msra.mxu0 %v6413
  %7138 = vmatprep.subr.mxu0 0.0
  %7139 = vmatpush1.msra.mxu0 %v6414
  %7140 = vmatprep.subr.mxu0 0.0
  %7141 = vmatpush1.msra.mxu0 %v6415
  %7142 = vmatprep.subr.mxu0 0.0
  %7143 = vmatpush1.msra.mxu0 %v6416
  %7144 = vmatprep.subr.mxu0 0.0
  %7145 = vmatpush1.msra.mxu0 %v6417
  %7146 = vmatprep.subr.mxu0 0.0
  %7147 = vmatpush1.msra.mxu0 %v6418
  %7148 = vmatprep.subr.mxu0 0.0
  %7149 = vmatpush1.msra.mxu0 %v6419
  %7150 = vmatprep.subr.mxu0 0.0
  %7151 = vmatpush1.msra.mxu0 %v6420
  %7152 = vmatprep.subr.mxu0 0.0
  %7153 = vmatpush1.msra.mxu0 0.0
  %7154 = vmatprep.subr.mxu0 0.0
  %7155 = vmatpush1.msra.mxu0 0.0
  %7156 = vmatprep.subr.mxu0 0.0
  %7157 = vmatpush1.msra.mxu0 0.0
  %7158 = vmatprep.subr.mxu0 0.0
  %7159 = vmatpush1.msra.mxu0 0.0
  %7160 = vmatprep.subr.mxu0 0.0
  %7161 = vmatpush1.msra.mxu0 0.0
  %7162 = vmatprep.subr.mxu0 0.0
  %7163 = vmatpush1.msra.mxu0 0.0
  %7164 = vmatprep.subr.mxu0 0.0
  %7165 = vmatpush1.msra.mxu0 0.0
  %7166 = vmatprep.subr.mxu0 0.0
  %7167 = vmatpush1.msra.mxu0 0.0
  %7168 = vmatprep.subr.mxu0 0.0
  %7169 = vmatpush1.msra.mxu0 0.0
  %7170 = vmatprep.subr.mxu0 0.0
  %7171 = vmatpush1.msra.mxu0 0.0
  %7172 = vmatprep.subr.mxu0 0.0
  %7173 = vmatpush1.msra.mxu0 0.0
  %7174 = vmatprep.subr.mxu0 0.0
  %7175 = vmatpush1.msra.mxu0 0.0
  %7176 = vmatprep.subr.mxu0 0.0
  %7177 = vmatpush1.msra.mxu0 0.0
  %7178 = vmatprep.subr.mxu0 0.0
  %7179 = vmatpush1.msra.mxu0 0.0
  %7180 = vmatprep.subr.mxu0 0.0
  %7181 = vmatpush1.msra.mxu0 0.0
  %7182 = vmatprep.subr.mxu0 0.0
  %7183 = vmatpush1.msra.mxu0 0.0
  %7184 = vmatprep.mubr.f32.mxu0 0.0
  %7185 = vmatmul.mubr.f32.gmra.mrb[0].mxu0 %v6865
  %v7186 = vpop.f32.mrb[0].mxu0
  %v7187 = vadd.f32 %v7002, %v7186
  %v7188 = vpop.f32.mrb[0].mxu0
  %7189 = vmatprep.mubr.f32.mxu0 0.0
  %7190 = vmatmul.mubr.f32.gmra.mrb[0].mxu0 %v6868
  %v7191 = vpop.f32.mrb[0].mxu0
  %v7192 = vadd.f32 %v7007, %v7191
  %v7193 = vpop.f32.mrb[0].mxu0
  %7194 = vmatprep.mubr.f32.mxu0 0.0
  %7195 = vmatmul.mubr.f32.gmra.mrb[0].mxu0 %v6871
  %v7196 = vpop.f32.mrb[0].mxu0
  %v7197 = vadd.f32 %v7012, %v7196
  %v7198 = vpop.f32.mrb[0].mxu0
  %7199 = vmatprep.mubr.f32.mxu0 0.0
  %7200 = vmatmul.mubr.f32.gmra.mrb[0].mxu0 %v6874
  %v7201 = vpop.f32.mrb[0].mxu0
  %v7202 = vadd.f32 %v7017, %v7201
  %v7203 = vpop.f32.mrb[0].mxu0
  %7204 = vmatprep.mubr.f32.mxu0 0.0
  %7205 = vmatmul.mubr.f32.gmra.mrb[0].mxu0 %v6877
  %v7206 = vpop.f32.mrb[0].mxu0
  %v7207 = vadd.f32 %v7022, %v7206
  %v7208 = vpop.f32.mrb[0].mxu0
  %7209 = vmatprep.mubr.f32.mxu0 0.0
  %7210 = vmatmul.mubr.f32.gmra.mrb[0].mxu0 %v6880
  %v7211 = vpop.f32.mrb[0].mxu0
  %v7212 = vadd.f32 %v7027, %v7211
  %v7213 = vpop.f32.mrb[0].mxu0
  %7214 = vmatprep.mubr.f32.mxu0 0.0
  %7215 = vmatmul.mubr.f32.gmra.mrb[0].mxu0 %v6883
  %v7216 = vpop.f32.mrb[0].mxu0
  %v7217 = vadd.f32 %v7032, %v7216
  %v7218 = vpop.f32.mrb[0].mxu0
  %7219 = vmatprep.mubr.f32.mxu0 0.0
  %7220 = vmatmul.mubr.f32.gmra.mrb[0].mxu0 %v6886
  %v7221 = vpop.f32.mrb[0].mxu0
  %v7222 = vadd.f32 %v7037, %v7221
  %v7223 = vpop.f32.mrb[0].mxu0
  %7224 = vmatprep.mubr.f32.mxu0 0.0
  %7225 = vmatmul.mubr.f32.gmra.mrb[0].mxu0 %v6889
  %v7226 = vpop.f32.mrb[0].mxu0
  %v7227 = vadd.f32 %v7042, %v7226
  %v7228 = vpop.f32.mrb[0].mxu0
  %7229 = vmatprep.mubr.f32.mxu0 0.0
  %7230 = vmatmul.mubr.f32.gmra.mrb[0].mxu0 %v6892
  %v7231 = vpop.f32.mrb[0].mxu0
  %v7232 = vadd.f32 %v7047, %v7231
  %v7233 = vpop.f32.mrb[0].mxu0
  %7234 = vmatprep.mubr.f32.mxu0 0.0
  %7235 = vmatmul.mubr.f32.gmra.mrb[0].mxu0 %v6895
  %v7236 = vpop.f32.mrb[0].mxu0
  %v7237 = vadd.f32 %v7052, %v7236
  %v7238 = vpop.f32.mrb[0].mxu0
  %7239 = vmatprep.mubr.f32.mxu0 0.0
  %7240 = vmatmul.mubr.f32.gmra.mrb[0].mxu0 %v6898
  %v7241 = vpop.f32.mrb[0].mxu0
  %v7242 = vadd.f32 %v7057, %v7241
  %v7243 = vpop.f32.mrb[0].mxu0
  %7244 = vmatprep.mubr.f32.mxu0 0.0
  %7245 = vmatmul.mubr.f32.gmra.mrb[0].mxu0 %v6901
  %v7246 = vpop.f32.mrb[0].mxu0
  %v7247 = vadd.f32 %v7062, %v7246
  %v7248 = vpop.f32.mrb[0].mxu0
  %7249 = vmatprep.mubr.f32.mxu0 0.0
  %7250 = vmatmul.mubr.f32.gmra.mrb[0].mxu0 %v6904
  %v7251 = vpop.f32.mrb[0].mxu0
  %v7252 = vadd.f32 %v7067, %v7251
  %v7253 = vpop.f32.mrb[0].mxu0
  %7254 = vmatprep.mubr.f32.mxu0 0.0
  %7255 = vmatmul.mubr.f32.gmra.mrb[0].mxu0 %v6907
  %v7256 = vpop.f32.mrb[0].mxu0
  %v7257 = vadd.f32 %v7072, %v7256
  %v7258 = vpop.f32.mrb[0].mxu0
  %7259 = vmatprep.mubr.f32.mxu0 0.0
  %7260 = vmatmul.mubr.f32.gmra.mrb[0].mxu0 %v6910
  %v7261 = vpop.f32.mrb[0].mxu0
  %v7262 = vadd.f32 %v7077, %v7261
  %v7263 = vpop.f32.mrb[0].mxu0
  %7264 = vmatprep.mubr.f32.mxu0 0.0
  %7265 = vmatmul.mubr.f32.gmra.mrb[0].mxu0 %v6913
  %v7266 = vpop.f32.mrb[0].mxu0
  %v7267 = vadd.f32 %v7082, %v7266
  %v7268 = vpop.f32.mrb[0].mxu0
  %7269 = vmatprep.mubr.f32.mxu0 0.0
  %7270 = vmatmul.mubr.f32.gmra.mrb[0].mxu0 %v6916
  %v7271 = vpop.f32.mrb[0].mxu0
  %v7272 = vadd.f32 %v7087, %v7271
  %v7273 = vpop.f32.mrb[0].mxu0
  %7274 = vmatprep.mubr.f32.mxu0 0.0
  %7275 = vmatmul.mubr.f32.gmra.mrb[0].mxu0 %v6919
  %v7276 = vpop.f32.mrb[0].mxu0
  %v7277 = vadd.f32 %v7092, %v7276
  %v7278 = vpop.f32.mrb[0].mxu0
  %7279 = vmatprep.mubr.f32.mxu0 0.0
  %7280 = vmatmul.mubr.f32.gmra.mrb[0].mxu0 %v6922
  %v7281 = vpop.f32.mrb[0].mxu0
  %v7282 = vadd.f32 %v7097, %v7281
  %v7283 = vpop.f32.mrb[0].mxu0
  %7284 = vmatprep.mubr.f32.mxu0 0.0
  %7285 = vmatmul.mubr.f32.gmra.mrb[0].mxu0 %v6925
  %v7286 = vpop.f32.mrb[0].mxu0
  %v7287 = vadd.f32 %v7102, %v7286
  %v7288 = vpop.f32.mrb[0].mxu0
  %7289 = vmatprep.mubr.f32.mxu0 0.0
  %7290 = vmatmul.mubr.f32.gmra.mrb[0].mxu0 %v6928
  %v7291 = vpop.f32.mrb[0].mxu0
  %v7292 = vadd.f32 %v7107, %v7291
  %v7293 = vpop.f32.mrb[0].mxu0
  %7294 = vmatprep.mubr.f32.mxu0 0.0
  %7295 = vmatmul.mubr.f32.gmra.mrb[0].mxu0 %v6931
  %v7296 = vpop.f32.mrb[0].mxu0
  %v7297 = vadd.f32 %v7112, %v7296
  %v7298 = vpop.f32.mrb[0].mxu0
  %7299 = vmatprep.mubr.f32.mxu0 0.0
  %7300 = vmatmul.mubr.f32.gmra.mrb[0].mxu0 %v6934
  %v7301 = vpop.f32.mrb[0].mxu0
  %v7302 = vadd.f32 %v7117, %v7301
  %v7303 = vpop.f32.mrb[0].mxu0
  %7304 = vdwg.mxu0
  %v7305 = vmax.f32 %v6745, %v7187
  %v7306 = vmax.f32 %v6750, %v7192
  %v7307 = vmax.f32 %v6755, %v7197
  %v7308 = vmax.f32 %v6760, %v7202
  %v7309 = vmax.f32 %v6765, %v7207
  %v7310 = vmax.f32 %v6770, %v7212
  %v7311 = vmax.f32 %v6775, %v7217
  %v7312 = vmax.f32 %v6780, %v7222
  %v7313 = vmax.f32 %v6785, %v7227
  %v7314 = vmax.f32 %v6790, %v7232
  %v7315 = vmax.f32 %v6795, %v7237
  %v7316 = vmax.f32 %v6800, %v7242
  %v7317 = vmax.f32 %v6805, %v7247
  %v7318 = vmax.f32 %v6810, %v7252
  %v7319 = vmax.f32 %v6815, %v7257
  %v7320 = vmax.f32 %v6820, %v7262
  %v7321 = vmax.f32 %v6825, %v7267
  %v7322 = vmax.f32 %v6830, %v7272
  %v7323 = vmax.f32 %v6835, %v7277
  %v7324 = vmax.f32 %v6840, %v7282
  %v7325 = vmax.f32 %v6845, %v7287
  %v7326 = vmax.f32 %v6850, %v7292
  %v7327 = vmax.f32 %v6855, %v7297
  %v7328 = vmax.f32 %v6860, %v7302
  %v7329 = vld [vmem:[%s19] sm:$0xff]
  %v7330 = vld [vmem:[%s19 + $0x8] sm:$0xff]
  %v7331 = vld [vmem:[%s19 + $0x10] sm:$0xff]
  %v7332 = vld [vmem:[%s19 + $0x18] sm:$0xff]
  %v7333 = vld [vmem:[%s19 + $0x20] sm:$0xff]
  %v7334 = vld [vmem:[%s19 + $0x28] sm:$0xff]
  %v7335 = vld [vmem:[%s19 + $0x30] sm:$0xff]
  %v7336 = vld [vmem:[%s19 + $0x38] sm:$0xff]
  %v7338 = vsel %vm485, %v7305, 0
  %v7341 = vsel %vm485, %v7306, 0
  %v7344 = vsel %vm485, %v7307, 0
  %v7347 = vsel %vm485, %v7308, 0
  %v7350 = vsel %vm485, %v7309, 0
  %v7353 = vsel %vm485, %v7310, 0
  %v7356 = vsel %vm485, %v7311, 0
  %v7359 = vsel %vm485, %v7312, 0
  %v7362 = vsel %vm485, %v7313, 0
  %v7365 = vsel %vm485, %v7314, 0
  %v7368 = vsel %vm485, %v7315, 0
  %v7371 = vsel %vm485, %v7316, 0
  %v7374 = vsel %vm485, %v7317, 0
  %v7377 = vsel %vm485, %v7318, 0
  %v7380 = vsel %vm485, %v7319, 0
  %v7383 = vsel %vm485, %v7320, 0
  %v7386 = vsel %vm485, %v7321, 0
  %v7389 = vsel %vm485, %v7322, 0
  %v7392 = vsel %vm485, %v7323, 0
  %v7395 = vsel %vm485, %v7324, 0
  %v7398 = vsel %vm485, %v7325, 0
  %v7401 = vsel %vm485, %v7326, 0
  %v7404 = vsel %vm485, %v7327, 0
  %v7407 = vsel %vm485, %v7328, 0
  %7409 = vmatprep.subr.mxu0 0.0
  %7410 = vmatpush1.msra.mxu0 %v7329
  %7411 = vmatprep.subr.mxu0 0.0
  %7412 = vmatpush1.msra.mxu0 %v7330
  %7413 = vmatprep.subr.mxu0 0.0
  %7414 = vmatpush1.msra.mxu0 %v7331
  %7415 = vmatprep.subr.mxu0 0.0
  %7416 = vmatpush1.msra.mxu0 %v7332
  %7417 = vmatprep.subr.mxu0 0.0
  %7418 = vmatpush1.msra.mxu0 %v7333
  %7419 = vmatprep.subr.mxu0 0.0
  %7420 = vmatpush1.msra.mxu0 %v7334
  %7421 = vmatprep.subr.mxu0 0.0
  %7422 = vmatpush1.msra.mxu0 %v7335
  %7423 = vmatprep.subr.mxu0 0.0
  %7424 = vmatpush1.msra.mxu0 %v7336
  %7425 = vmatprep.subr.mxu0 0.0
  %7426 = vmatpush1.msra.mxu0 0.0
  %7427 = vmatprep.subr.mxu0 0.0
  %7428 = vmatpush1.msra.mxu0 0.0
  %7429 = vmatprep.subr.mxu0 0.0
  %7430 = vmatpush1.msra.mxu0 0.0
  %7431 = vmatprep.subr.mxu0 0.0
  %7432 = vmatpush1.msra.mxu0 0.0
  %7433 = vmatprep.subr.mxu0 0.0
  %7434 = vmatpush1.msra.mxu0 0.0
  %7435 = vmatprep.subr.mxu0 0.0
  %7436 = vmatpush1.msra.mxu0 0.0
  %7437 = vmatprep.subr.mxu0 0.0
  %7438 = vmatpush1.msra.mxu0 0.0
  %7439 = vmatprep.subr.mxu0 0.0
  %7440 = vmatpush1.msra.mxu0 0.0
  %7441 = vmatprep.subr.mxu0 0.0
  %7442 = vmatpush1.msra.mxu0 0.0
  %7443 = vmatprep.subr.mxu0 0.0
  %7444 = vmatpush1.msra.mxu0 0.0
  %7445 = vmatprep.subr.mxu0 0.0
  %7446 = vmatpush1.msra.mxu0 0.0
  %7447 = vmatprep.subr.mxu0 0.0
  %7448 = vmatpush1.msra.mxu0 0.0
  %7449 = vmatprep.subr.mxu0 0.0
  %7450 = vmatpush1.msra.mxu0 0.0
  %7451 = vmatprep.subr.mxu0 0.0
  %7452 = vmatpush1.msra.mxu0 0.0
  %7453 = vmatprep.subr.mxu0 0.0
  %7454 = vmatpush1.msra.mxu0 0.0
  %7455 = vmatprep.subr.mxu0 0.0
  %7456 = vmatpush1.msra.mxu0 0.0
  %7457 = vmatprep.subr.mxu0 0.0
  %7458 = vmatpush1.msra.mxu0 0.0
  %7459 = vmatprep.subr.mxu0 0.0
  %7460 = vmatpush1.msra.mxu0 0.0
  %7461 = vmatprep.subr.mxu0 0.0
  %7462 = vmatpush1.msra.mxu0 0.0
  %7463 = vmatprep.subr.mxu0 0.0
  %7464 = vmatpush1.msra.mxu0 0.0
  %7465 = vmatprep.subr.mxu0 0.0
  %7466 = vmatpush1.msra.mxu0 0.0
  %7467 = vmatprep.subr.mxu0 0.0
  %7468 = vmatpush1.msra.mxu0 0.0
  %7469 = vmatprep.subr.mxu0 0.0
  %7470 = vmatpush1.msra.mxu0 0.0
  %7471 = vmatprep.subr.mxu0 0.0
  %7472 = vmatpush1.msra.mxu0 0.0
  %7473 = vmatprep.mubr.f32.mxu0 0.0
  %7474 = vmatmul.mubr.f32.gmra.mrb[0].mxu0 %v7338
  %v7475 = vpop.f32.mrb[0].mxu0
  %v7476 = vadd.f32 0.0, %v7475
  %v7477 = vpop.f32.mrb[0].mxu0
  %7478 = vmatprep.mubr.f32.mxu0 0.0
  %7479 = vmatmul.mubr.f32.gmra.mrb[0].mxu0 %v7341
  %v7480 = vpop.f32.mrb[0].mxu0
  %v7481 = vadd.f32 0.0, %v7480
  %v7482 = vpop.f32.mrb[0].mxu0
  %7483 = vmatprep.mubr.f32.mxu0 0.0
  %7484 = vmatmul.mubr.f32.gmra.mrb[0].mxu0 %v7344
  %v7485 = vpop.f32.mrb[0].mxu0
  %v7486 = vadd.f32 0.0, %v7485
  %v7487 = vpop.f32.mrb[0].mxu0
  %7488 = vmatprep.mubr.f32.mxu0 0.0
  %7489 = vmatmul.mubr.f32.gmra.mrb[0].mxu0 %v7347
  %v7490 = vpop.f32.mrb[0].mxu0
  %v7491 = vadd.f32 0.0, %v7490
  %v7492 = vpop.f32.mrb[0].mxu0
  %7493 = vmatprep.mubr.f32.mxu0 0.0
  %7494 = vmatmul.mubr.f32.gmra.mrb[0].mxu0 %v7350
  %v7495 = vpop.f32.mrb[0].mxu0
  %v7496 = vadd.f32 0.0, %v7495
  %v7497 = vpop.f32.mrb[0].mxu0
  %7498 = vmatprep.mubr.f32.mxu0 0.0
  %7499 = vmatmul.mubr.f32.gmra.mrb[0].mxu0 %v7353
  %v7500 = vpop.f32.mrb[0].mxu0
  %v7501 = vadd.f32 0.0, %v7500
  %v7502 = vpop.f32.mrb[0].mxu0
  %7503 = vmatprep.mubr.f32.mxu0 0.0
  %7504 = vmatmul.mubr.f32.gmra.mrb[0].mxu0 %v7356
  %v7505 = vpop.f32.mrb[0].mxu0
  %v7506 = vadd.f32 0.0, %v7505
  %v7507 = vpop.f32.mrb[0].mxu0
  %7508 = vmatprep.mubr.f32.mxu0 0.0
  %7509 = vmatmul.mubr.f32.gmra.mrb[0].mxu0 %v7359
  %v7510 = vpop.f32.mrb[0].mxu0
  %v7511 = vadd.f32 0.0, %v7510
  %v7512 = vpop.f32.mrb[0].mxu0
  %7513 = vmatprep.mubr.f32.mxu0 0.0
  %7514 = vmatmul.mubr.f32.gmra.mrb[0].mxu0 %v7362
  %v7515 = vpop.f32.mrb[0].mxu0
  %v7516 = vadd.f32 0.0, %v7515
  %v7517 = vpop.f32.mrb[0].mxu0
  %7518 = vmatprep.mubr.f32.mxu0 0.0
  %7519 = vmatmul.mubr.f32.gmra.mrb[0].mxu0 %v7365
  %v7520 = vpop.f32.mrb[0].mxu0
  %v7521 = vadd.f32 0.0, %v7520
  %v7522 = vpop.f32.mrb[0].mxu0
  %7523 = vmatprep.mubr.f32.mxu0 0.0
  %7524 = vmatmul.mubr.f32.gmra.mrb[0].mxu0 %v7368
  %v7525 = vpop.f32.mrb[0].mxu0
  %v7526 = vadd.f32 0.0, %v7525
  %v7527 = vpop.f32.mrb[0].mxu0
  %7528 = vmatprep.mubr.f32.mxu0 0.0
  %7529 = vmatmul.mubr.f32.gmra.mrb[0].mxu0 %v7371
  %v7530 = vpop.f32.mrb[0].mxu0
  %v7531 = vadd.f32 0.0, %v7530
  %v7532 = vpop.f32.mrb[0].mxu0
  %7533 = vmatprep.mubr.f32.mxu0 0.0
  %7534 = vmatmul.mubr.f32.gmra.mrb[0].mxu0 %v7374
  %v7535 = vpop.f32.mrb[0].mxu0
  %v7536 = vadd.f32 0.0, %v7535
  %v7537 = vpop.f32.mrb[0].mxu0
  %7538 = vmatprep.mubr.f32.mxu0 0.0
  %7539 = vmatmul.mubr.f32.gmra.mrb[0].mxu0 %v7377
  %v7540 = vpop.f32.mrb[0].mxu0
  %v7541 = vadd.f32 0.0, %v7540
  %v7542 = vpop.f32.mrb[0].mxu0
  %7543 = vmatprep.mubr.f32.mxu0 0.0
  %7544 = vmatmul.mubr.f32.gmra.mrb[0].mxu0 %v7380
  %v7545 = vpop.f32.mrb[0].mxu0
  %v7546 = vadd.f32 0.0, %v7545
  %v7547 = vpop.f32.mrb[0].mxu0
  %7548 = vmatprep.mubr.f32.mxu0 0.0
  %7549 = vmatmul.mubr.f32.gmra.mrb[0].mxu0 %v7383
  %v7550 = vpop.f32.mrb[0].mxu0
  %v7551 = vadd.f32 0.0, %v7550
  %v7552 = vpop.f32.mrb[0].mxu0
  %7553 = vmatprep.mubr.f32.mxu0 0.0
  %7554 = vmatmul.mubr.f32.gmra.mrb[0].mxu0 %v7386
  %v7555 = vpop.f32.mrb[0].mxu0
  %v7556 = vadd.f32 0.0, %v7555
  %v7557 = vpop.f32.mrb[0].mxu0
  %7558 = vmatprep.mubr.f32.mxu0 0.0
  %7559 = vmatmul.mubr.f32.gmra.mrb[0].mxu0 %v7389
  %v7560 = vpop.f32.mrb[0].mxu0
  %v7561 = vadd.f32 0.0, %v7560
  %v7562 = vpop.f32.mrb[0].mxu0
  %7563 = vmatprep.mubr.f32.mxu0 0.0
  %7564 = vmatmul.mubr.f32.gmra.mrb[0].mxu0 %v7392
  %v7565 = vpop.f32.mrb[0].mxu0
  %v7566 = vadd.f32 0.0, %v7565
  %v7567 = vpop.f32.mrb[0].mxu0
  %7568 = vmatprep.mubr.f32.mxu0 0.0
  %7569 = vmatmul.mubr.f32.gmra.mrb[0].mxu0 %v7395
  %v7570 = vpop.f32.mrb[0].mxu0
  %v7571 = vadd.f32 0.0, %v7570
  %v7572 = vpop.f32.mrb[0].mxu0
  %7573 = vmatprep.mubr.f32.mxu0 0.0
  %7574 = vmatmul.mubr.f32.gmra.mrb[0].mxu0 %v7398
  %v7575 = vpop.f32.mrb[0].mxu0
  %v7576 = vadd.f32 0.0, %v7575
  %v7577 = vpop.f32.mrb[0].mxu0
  %7578 = vmatprep.mubr.f32.mxu0 0.0
  %7579 = vmatmul.mubr.f32.gmra.mrb[0].mxu0 %v7401
  %v7580 = vpop.f32.mrb[0].mxu0
  %v7581 = vadd.f32 0.0, %v7580
  %v7582 = vpop.f32.mrb[0].mxu0
  %7583 = vmatprep.mubr.f32.mxu0 0.0
  %7584 = vmatmul.mubr.f32.gmra.mrb[0].mxu0 %v7404
  %v7585 = vpop.f32.mrb[0].mxu0
  %v7586 = vadd.f32 0.0, %v7585
  %v7587 = vpop.f32.mrb[0].mxu0
  %7588 = vmatprep.mubr.f32.mxu0 0.0
  %7589 = vmatmul.mubr.f32.gmra.mrb[0].mxu0 %v7407
  %v7590 = vpop.f32.mrb[0].mxu0
  %v7591 = vadd.f32 0.0, %v7590
  %v7592 = vpop.f32.mrb[0].mxu0
  %7593 = vdwg.mxu0
  %v7594 = vld [vmem:[%s20] sm:$0xff]
  %v7595 = vld [vmem:[%s20 + $0x8] sm:$0xff]
  %v7596 = vld [vmem:[%s20 + $0x10] sm:$0xff]
  %v7597 = vld [vmem:[%s20 + $0x18] sm:$0xff]
  %v7598 = vld [vmem:[%s20 + $0x20] sm:$0xff]
  %v7599 = vld [vmem:[%s20 + $0x28] sm:$0xff]
  %v7600 = vld [vmem:[%s20 + $0x30] sm:$0xff]
  %v7601 = vld [vmem:[%s20 + $0x38] sm:$0xff]
  %7602 = vmatprep.subr.mxu0 0.0
  %7603 = vmatpush1.msra.mxu0 %v7594
  %7604 = vmatprep.subr.mxu0 0.0
  %7605 = vmatpush1.msra.mxu0 %v7595
  %7606 = vmatprep.subr.mxu0 0.0
  %7607 = vmatpush1.msra.mxu0 %v7596
  %7608 = vmatprep.subr.mxu0 0.0
  %7609 = vmatpush1.msra.mxu0 %v7597
  %7610 = vmatprep.subr.mxu0 0.0
  %7611 = vmatpush1.msra.mxu0 %v7598
  %7612 = vmatprep.subr.mxu0 0.0
  %7613 = vmatpush1.msra.mxu0 %v7599
  %7614 = vmatprep.subr.mxu0 0.0
  %7615 = vmatpush1.msra.mxu0 %v7600
  %7616 = vmatprep.subr.mxu0 0.0
  %7617 = vmatpush1.msra.mxu0 %v7601
  %7618 = vmatprep.subr.mxu0 0.0
  %7619 = vmatpush1.msra.mxu0 0.0
  %7620 = vmatprep.subr.mxu0 0.0
  %7621 = vmatpush1.msra.mxu0 0.0
  %7622 = vmatprep.subr.mxu0 0.0
  %7623 = vmatpush1.msra.mxu0 0.0
  %7624 = vmatprep.subr.mxu0 0.0
  %7625 = vmatpush1.msra.mxu0 0.0
  %7626 = vmatprep.subr.mxu0 0.0
  %7627 = vmatpush1.msra.mxu0 0.0
  %7628 = vmatprep.subr.mxu0 0.0
  %7629 = vmatpush1.msra.mxu0 0.0
  %7630 = vmatprep.subr.mxu0 0.0
  %7631 = vmatpush1.msra.mxu0 0.0
  %7632 = vmatprep.subr.mxu0 0.0
  %7633 = vmatpush1.msra.mxu0 0.0
  %7634 = vmatprep.subr.mxu0 0.0
  %7635 = vmatpush1.msra.mxu0 0.0
  %7636 = vmatprep.subr.mxu0 0.0
  %7637 = vmatpush1.msra.mxu0 0.0
  %7638 = vmatprep.subr.mxu0 0.0
  %7639 = vmatpush1.msra.mxu0 0.0
  %7640 = vmatprep.subr.mxu0 0.0
  %7641 = vmatpush1.msra.mxu0 0.0
  %7642 = vmatprep.subr.mxu0 0.0
  %7643 = vmatpush1.msra.mxu0 0.0
  %7644 = vmatprep.subr.mxu0 0.0
  %7645 = vmatpush1.msra.mxu0 0.0
  %7646 = vmatprep.subr.mxu0 0.0
  %7647 = vmatpush1.msra.mxu0 0.0
  %7648 = vmatprep.subr.mxu0 0.0
  %7649 = vmatpush1.msra.mxu0 0.0
  %7650 = vmatprep.subr.mxu0 0.0
  %7651 = vmatpush1.msra.mxu0 0.0
  %7652 = vmatprep.subr.mxu0 0.0
  %7653 = vmatpush1.msra.mxu0 0.0
  %7654 = vmatprep.subr.mxu0 0.0
  %7655 = vmatpush1.msra.mxu0 0.0
  %7656 = vmatprep.subr.mxu0 0.0
  %7657 = vmatpush1.msra.mxu0 0.0
  %7658 = vmatprep.subr.mxu0 0.0
  %7659 = vmatpush1.msra.mxu0 0.0
  %7660 = vmatprep.subr.mxu0 0.0
  %7661 = vmatpush1.msra.mxu0 0.0
  %7662 = vmatprep.subr.mxu0 0.0
  %7663 = vmatpush1.msra.mxu0 0.0
  %7664 = vmatprep.subr.mxu0 0.0
  %7665 = vmatpush1.msra.mxu0 0.0
  %7666 = vmatprep.mubr.f32.mxu0 0.0
  %7667 = vmatmul.mubr.f32.gmra.mrb[0].mxu0 %v7338
  %v7668 = vpop.f32.mrb[0].mxu0
  %v7669 = vadd.f32 0.0, %v7668
  %v7670 = vpop.f32.mrb[0].mxu0
  %7671 = vmatprep.mubr.f32.mxu0 0.0
  %7672 = vmatmul.mubr.f32.gmra.mrb[0].mxu0 %v7341
  %v7673 = vpop.f32.mrb[0].mxu0
  %v7674 = vadd.f32 0.0, %v7673
  %v7675 = vpop.f32.mrb[0].mxu0
  %7676 = vmatprep.mubr.f32.mxu0 0.0
  %7677 = vmatmul.mubr.f32.gmra.mrb[0].mxu0 %v7344
  %v7678 = vpop.f32.mrb[0].mxu0
  %v7679 = vadd.f32 0.0, %v7678
  %v7680 = vpop.f32.mrb[0].mxu0
  %7681 = vmatprep.mubr.f32.mxu0 0.0
  %7682 = vmatmul.mubr.f32.gmra.mrb[0].mxu0 %v7347
  %v7683 = vpop.f32.mrb[0].mxu0
  %v7684 = vadd.f32 0.0, %v7683
  %v7685 = vpop.f32.mrb[0].mxu0
  %7686 = vmatprep.mubr.f32.mxu0 0.0
  %7687 = vmatmul.mubr.f32.gmra.mrb[0].mxu0 %v7350
  %v7688 = vpop.f32.mrb[0].mxu0
  %v7689 = vadd.f32 0.0, %v7688
  %v7690 = vpop.f32.mrb[0].mxu0
  %7691 = vmatprep.mubr.f32.mxu0 0.0
  %7692 = vmatmul.mubr.f32.gmra.mrb[0].mxu0 %v7353
  %v7693 = vpop.f32.mrb[0].mxu0
  %v7694 = vadd.f32 0.0, %v7693
  %v7695 = vpop.f32.mrb[0].mxu0
  %7696 = vmatprep.mubr.f32.mxu0 0.0
  %7697 = vmatmul.mubr.f32.gmra.mrb[0].mxu0 %v7356
  %v7698 = vpop.f32.mrb[0].mxu0
  %v7699 = vadd.f32 0.0, %v7698
  %v7700 = vpop.f32.mrb[0].mxu0
  %7701 = vmatprep.mubr.f32.mxu0 0.0
  %7702 = vmatmul.mubr.f32.gmra.mrb[0].mxu0 %v7359
  %v7703 = vpop.f32.mrb[0].mxu0
  %v7704 = vadd.f32 0.0, %v7703
  %v7705 = vpop.f32.mrb[0].mxu0
  %7706 = vmatprep.mubr.f32.mxu0 0.0
  %7707 = vmatmul.mubr.f32.gmra.mrb[0].mxu0 %v7362
  %v7708 = vpop.f32.mrb[0].mxu0
  %v7709 = vadd.f32 0.0, %v7708
  %v7710 = vpop.f32.mrb[0].mxu0
  %7711 = vmatprep.mubr.f32.mxu0 0.0
  %7712 = vmatmul.mubr.f32.gmra.mrb[0].mxu0 %v7365
  %v7713 = vpop.f32.mrb[0].mxu0
  %v7714 = vadd.f32 0.0, %v7713
  %v7715 = vpop.f32.mrb[0].mxu0
  %7716 = vmatprep.mubr.f32.mxu0 0.0
  %7717 = vmatmul.mubr.f32.gmra.mrb[0].mxu0 %v7368
  %v7718 = vpop.f32.mrb[0].mxu0
  %v7719 = vadd.f32 0.0, %v7718
  %v7720 = vpop.f32.mrb[0].mxu0
  %7721 = vmatprep.mubr.f32.mxu0 0.0
  %7722 = vmatmul.mubr.f32.gmra.mrb[0].mxu0 %v7371
  %v7723 = vpop.f32.mrb[0].mxu0
  %v7724 = vadd.f32 0.0, %v7723
  %v7725 = vpop.f32.mrb[0].mxu0
  %7726 = vmatprep.mubr.f32.mxu0 0.0
  %7727 = vmatmul.mubr.f32.gmra.mrb[0].mxu0 %v7374
  %v7728 = vpop.f32.mrb[0].mxu0
  %v7729 = vadd.f32 0.0, %v7728
  %v7730 = vpop.f32.mrb[0].mxu0
  %7731 = vmatprep.mubr.f32.mxu0 0.0
  %7732 = vmatmul.mubr.f32.gmra.mrb[0].mxu0 %v7377
  %v7733 = vpop.f32.mrb[0].mxu0
  %v7734 = vadd.f32 0.0, %v7733
  %v7735 = vpop.f32.mrb[0].mxu0
  %7736 = vmatprep.mubr.f32.mxu0 0.0
  %7737 = vmatmul.mubr.f32.gmra.mrb[0].mxu0 %v7380
  %v7738 = vpop.f32.mrb[0].mxu0
  %v7739 = vadd.f32 0.0, %v7738
  %v7740 = vpop.f32.mrb[0].mxu0
  %7741 = vmatprep.mubr.f32.mxu0 0.0
  %7742 = vmatmul.mubr.f32.gmra.mrb[0].mxu0 %v7383
  %v7743 = vpop.f32.mrb[0].mxu0
  %v7744 = vadd.f32 0.0, %v7743
  %v7745 = vpop.f32.mrb[0].mxu0
  %7746 = vmatprep.mubr.f32.mxu0 0.0
  %7747 = vmatmul.mubr.f32.gmra.mrb[0].mxu0 %v7386
  %v7748 = vpop.f32.mrb[0].mxu0
  %v7749 = vadd.f32 0.0, %v7748
  %v7750 = vpop.f32.mrb[0].mxu0
  %7751 = vmatprep.mubr.f32.mxu0 0.0
  %7752 = vmatmul.mubr.f32.gmra.mrb[0].mxu0 %v7389
  %v7753 = vpop.f32.mrb[0].mxu0
  %v7754 = vadd.f32 0.0, %v7753
  %v7755 = vpop.f32.mrb[0].mxu0
  %7756 = vmatprep.mubr.f32.mxu0 0.0
  %7757 = vmatmul.mubr.f32.gmra.mrb[0].mxu0 %v7392
  %v7758 = vpop.f32.mrb[0].mxu0
  %v7759 = vadd.f32 0.0, %v7758
  %v7760 = vpop.f32.mrb[0].mxu0
  %7761 = vmatprep.mubr.f32.mxu0 0.0
  %7762 = vmatmul.mubr.f32.gmra.mrb[0].mxu0 %v7395
  %v7763 = vpop.f32.mrb[0].mxu0
  %v7764 = vadd.f32 0.0, %v7763
  %v7765 = vpop.f32.mrb[0].mxu0
  %7766 = vmatprep.mubr.f32.mxu0 0.0
  %7767 = vmatmul.mubr.f32.gmra.mrb[0].mxu0 %v7398
  %v7768 = vpop.f32.mrb[0].mxu0
  %v7769 = vadd.f32 0.0, %v7768
  %v7770 = vpop.f32.mrb[0].mxu0
  %7771 = vmatprep.mubr.f32.mxu0 0.0
  %7772 = vmatmul.mubr.f32.gmra.mrb[0].mxu0 %v7401
  %v7773 = vpop.f32.mrb[0].mxu0
  %v7774 = vadd.f32 0.0, %v7773
  %v7775 = vpop.f32.mrb[0].mxu0
  %7776 = vmatprep.mubr.f32.mxu0 0.0
  %7777 = vmatmul.mubr.f32.gmra.mrb[0].mxu0 %v7404
  %v7778 = vpop.f32.mrb[0].mxu0
  %v7779 = vadd.f32 0.0, %v7778
  %v7780 = vpop.f32.mrb[0].mxu0
  %7781 = vmatprep.mubr.f32.mxu0 0.0
  %7782 = vmatmul.mubr.f32.gmra.mrb[0].mxu0 %v7407
  %v7783 = vpop.f32.mrb[0].mxu0
  %v7784 = vadd.f32 0.0, %v7783
  %v7785 = vpop.f32.mrb[0].mxu0
  %7786 = vdwg.mxu0
  %v7787 = vmax.f32 %v7476, %v7669
  %v7788 = vmax.f32 %v7481, %v7674
  %v7789 = vmax.f32 %v7486, %v7679
  %v7790 = vmax.f32 %v7491, %v7684
  %v7791 = vmax.f32 %v7496, %v7689
  %v7792 = vmax.f32 %v7501, %v7694
  %v7793 = vmax.f32 %v7506, %v7699
  %v7794 = vmax.f32 %v7511, %v7704
  %v7795 = vmax.f32 %v7516, %v7709
  %v7796 = vmax.f32 %v7521, %v7714
  %v7797 = vmax.f32 %v7526, %v7719
  %v7798 = vmax.f32 %v7531, %v7724
  %v7799 = vmax.f32 %v7536, %v7729
  %v7800 = vmax.f32 %v7541, %v7734
  %v7801 = vmax.f32 %v7546, %v7739
  %v7802 = vmax.f32 %v7551, %v7744
  %v7803 = vmax.f32 %v7556, %v7749
  %v7804 = vmax.f32 %v7561, %v7754
  %v7805 = vmax.f32 %v7566, %v7759
  %v7806 = vmax.f32 %v7571, %v7764
  %v7807 = vmax.f32 %v7576, %v7769
  %v7808 = vmax.f32 %v7581, %v7774
  %v7809 = vmax.f32 %v7586, %v7779
  %v7810 = vmax.f32 %v7591, %v7784
  %vm7811 = vcmask 261120
  %7812 = vst.msk [vmem:[%s21] sm:$0xff] %vm7811, %v7787
  %7813 = vst.msk [vmem:[%s21 + $0x8] sm:$0xff] %vm7811, %v7788
  %7814 = vst.msk [vmem:[%s21 + $0x10] sm:$0xff] %vm7811, %v7789
  %7815 = vst.msk [vmem:[%s21 + $0x18] sm:$0xff] %vm7811, %v7790
  %7816 = vst.msk [vmem:[%s21 + $0x20] sm:$0xff] %vm7811, %v7791
  %7817 = vst.msk [vmem:[%s21 + $0x28] sm:$0xff] %vm7811, %v7792
  %7818 = vst.msk [vmem:[%s21 + $0x30] sm:$0xff] %vm7811, %v7793
  %7819 = vst.msk [vmem:[%s21 + $0x38] sm:$0xff] %vm7811, %v7794
  %7820 = vst.msk [vmem:[%s21 + $0x40] sm:$0xff] %vm7811, %v7795
  %7821 = vst.msk [vmem:[%s21 + $0x48] sm:$0xff] %vm7811, %v7796
  %7822 = vst.msk [vmem:[%s21 + $0x50] sm:$0xff] %vm7811, %v7797
  %7823 = vst.msk [vmem:[%s21 + $0x58] sm:$0xff] %vm7811, %v7798
  %7824 = vst.msk [vmem:[%s21 + $0x60] sm:$0xff] %vm7811, %v7799
  %7825 = vst.msk [vmem:[%s21 + $0x68] sm:$0xff] %vm7811, %v7800
  %7826 = vst.msk [vmem:[%s21 + $0x70] sm:$0xff] %vm7811, %v7801
  %7827 = vst.msk [vmem:[%s21 + $0x78] sm:$0xff] %vm7811, %v7802
  %7828 = vst.msk [vmem:[%s21 + $0x80] sm:$0xff] %vm7811, %v7803
  %7829 = vst.msk [vmem:[%s21 + $0x88] sm:$0xff] %vm7811, %v7804
  %7830 = vst.msk [vmem:[%s21 + $0x90] sm:$0xff] %vm7811, %v7805
  %7831 = vst.msk [vmem:[%s21 + $0x98] sm:$0xff] %vm7811, %v7806
  %7832 = vst.msk [vmem:[%s21 + $0xa0] sm:$0xff] %vm7811, %v7807
  %7833 = vst.msk [vmem:[%s21 + $0xa8] sm:$0xff] %vm7811, %v7808
  %7834 = vst.msk [vmem:[%s21 + $0xb0] sm:$0xff] %vm7811, %v7809
  %7835 = vst.msk [vmem:[%s21 + $0xb8] sm:$0xff] %vm7811, %v7810
  // Predicated region
  $region86: #{ecnn_forward.2} parent=0 // pred_check
    _
  $region87: #{ecnn_forward.2} parent=0 // pred_check_branch
    %7837 = sbr.rel (0) target = $region89
  $region88: #{ecnn_forward.2} parent=0 // pred_region
    _
  $region89: #{ecnn_forward.2} parent=0 // pred_fallthru
    _
  // Predicated region
  $region90: #{ecnn_forward.2} parent=0 // pred_check
    _
  $region91: #{ecnn_forward.2} parent=0 // pred_check_branch
    %7839 = sbr.rel (0) target = $region93
  $region92: #{ecnn_forward.2} parent=0 // pred_region
    _
  $region93: #{ecnn_forward.2} parent=0 // pred_fallthru
    _

</llo_original>
